<compile_context>
chip_gen: v5e
topology: v5e:2x2
jax: 0.10.0
libtpu: 0.0.40
codegen_flags: <defaults>
</compile_context>

<pallas_src>
import jax
import jax.numpy as jnp
from jax.experimental import pallas as pl
from jax.experimental.pallas import tpu as pltpu

EPS = 1e-5


def fused_add_conv1x1_bn_kernel(a_ref, b_ref, w_ref, gamma_ref, beta_ref, o_ref):
    # a_ref, b_ref : (Cin, M)    activations, M = N*H*W
    # w_ref        : (Cout, Cin) 1x1 conv weight
    # gamma/beta   : (Cout, 1)   BN affine params
    # o_ref        : (Cout, M)
    x = a_ref[...] + b_ref[...]                                    # x293 (elementwise add)
    w = w_ref[...]

    # x294: 1x1 conv == (Cout,Cin) @ (Cin,M) on the MXU
    y = jnp.dot(w, x, preferred_element_type=jnp.float32)          # (Cout, M)

    m = y.shape[1]
    inv_m = 1.0 / m

    # Batch mean hoisted through the matmul: mean = (W @ sum_m x) / M
    # (reduces the small (Cin, M) tensor instead of the big (Cout, M) one).
    col_sum = jnp.sum(x, axis=1, keepdims=True)                    # (Cin, 1)
    mean = jnp.dot(w, col_sum, preferred_element_type=jnp.float32) * inv_m  # (Cout, 1)

    # One-pass biased variance: E[y^2] - mean^2  (BN training-mode statistics)
    mean_sq = jnp.sum(y * y, axis=1, keepdims=True) * inv_m        # (Cout, 1)
    var = mean_sq - mean * mean

    # Fold BN into a single per-channel scale/shift applied once to y.
    scale = gamma_ref[...] * jax.lax.rsqrt(var + EPS)              # (Cout, 1)
    shift = beta_ref[...] - mean * scale                           # (Cout, 1)
    o_ref[...] = y * scale + shift                                 # x295


def fused_add_conv1x1_bn(a, b, w, gamma, beta):
    # a, b: (N, Cin, H, W) float32;  w: (Cout, Cin) (1x1 conv weight, squeezed)
    N, Cin, H, W = a.shape
    Cout = w.shape[0]
    M = N * H * W

    if N == 1:
        # NCHW with N==1: reshape to (Cin, H*W) is layout-free (no transpose).
        a2 = a.reshape(Cin, M)
        b2 = b.reshape(Cin, M)
    else:
        # TODO(synk): for N>1 this requires a real transpose (and the kernel
        # still computes correct batch stats over all N*H*W positions).
        a2 = jnp.transpose(a, (1, 0, 2, 3)).reshape(Cin, M)
        b2 = jnp.transpose(b, (1, 0, 2, 3)).reshape(Cin, M)

    g2 = gamma.reshape(Cout, 1)
    be2 = beta.reshape(Cout, 1)

    # Tiny op: everything (~1.5 MB total) fits in VMEM on v5e/v6e/v7x, so use
    # whole-array VMEM specs with no grid (no 1-iteration pipeline machinery).
    vmem_spec = pl.BlockSpec(memory_space=pltpu.MemorySpace.VMEM)
    out = pl.pallas_call(
        fused_add_conv1x1_bn_kernel,
        out_shape=jax.ShapeDtypeStruct((Cout, M), jnp.float32),
        in_specs=[vmem_spec] * 5,
        out_specs=vmem_spec,
    )(a2, b2, w, g2, be2)

    if N == 1:
        # (Cout, H*W) -> (1, Cout, H, W) is layout-free.
        return out.reshape(1, Cout, H, W)
    return jnp.transpose(out.reshape(Cout, N, H, W), (1, 0, 2, 3))


if __name__ == "__main__":
    key = jax.random.PRNGKey(0)
    k1, k2, k3, k4, k5 = jax.random.split(key, 5)

    N, Cin, H, W = 1, 144, 14, 14      # shapes implied by Conv2d(144, 864, 1x1)
    Cout = 864

    x292 = jax.random.normal(k1, (N, Cin, H, W), dtype=jnp.float32)
    x278 = jax.random.normal(k2, (N, Cin, H, W), dtype=jnp.float32)

    # deterministic parameter init (no checkpoint load)
    w = jax.random.normal(k3, (Cout, Cin), dtype=jnp.float32) * 0.05   # conv2d98.weight squeezed from (Cout,Cin,1,1)
    gamma = 1.0 + 0.1 * jax.random.normal(k4, (Cout,), dtype=jnp.float32)  # batchnorm2d58.weight
    beta = 0.1 * jax.random.normal(k5, (Cout,), dtype=jnp.float32)         # batchnorm2d58.bias

    out = fused_add_conv1x1_bn(x292, x278, w, gamma, beta)
    jax.block_until_ready(out)

    # lightweight sanity check against a pure-JAX reference (training-mode BN)
    xs = x292 + x278
    xm = jnp.transpose(xs, (0, 2, 3, 1)).reshape(-1, Cin)
    ym = xm @ w.T
    mean = ym.mean(axis=0)
    var = ym.var(axis=0)
    ref = (ym - mean) / jnp.sqrt(var + EPS) * gamma + beta
    ref = jnp.transpose(ref.reshape(N, H, W, Cout), (0, 3, 1, 2))
    assert jnp.allclose(out, ref, atol=1e-3, rtol=1e-3)

    print("KERNEL_OK")
</pallas_src>

<mosaic_0001>
module attributes {stable_mosaic.version = 11 : i64} {
  func.func @fused_add_conv1x1_bn_kernel(%arg0: memref<144x196xf32, #tpu.memory_space<vmem>>, %arg1: memref<144x196xf32, #tpu.memory_space<vmem>>, %arg2: memref<864x144xf32, #tpu.memory_space<vmem>>, %arg3: memref<864x1xf32, #tpu.memory_space<vmem>>, %arg4: memref<864x1xf32, #tpu.memory_space<vmem>>, %arg5: memref<864x196xf32, #tpu.memory_space<vmem>>) attributes {dimension_semantics = [], scalar_prefetch = 0 : i64, scratch_operands = 0 : i64, tpu.core_type = #tpu.core_type<tc>} {
    %c0 = arith.constant 0 : index
    %c0_0 = arith.constant 0 : index
    %0 = vector.load %arg0[%c0, %c0_0] : memref<144x196xf32, #tpu.memory_space<vmem>>, vector<144x196xf32>
    %c0_1 = arith.constant 0 : index
    %c0_2 = arith.constant 0 : index
    %1 = vector.load %arg1[%c0_1, %c0_2] : memref<144x196xf32, #tpu.memory_space<vmem>>, vector<144x196xf32>
    %2 = arith.addf %0, %1 : vector<144x196xf32>
    %c0_3 = arith.constant 0 : index
    %c0_4 = arith.constant 0 : index
    %3 = vector.load %arg2[%c0_3, %c0_4] : memref<864x144xf32, #tpu.memory_space<vmem>>, vector<864x144xf32>
    %cst = arith.constant dense<0.000000e+00> : vector<864x196xf32>
    %4 = tpu.matmul %3, %2, %cst {dimension_numbers = #tpu.dot_dimension_numbers<[1], [0], [0], [1], [0, 0, 1, 1], [], []>} : vector<864x144xf32>, vector<144x196xf32>, vector<864x196xf32> -> vector<864x196xf32>
    %cst_5 = arith.constant dense<0.000000e+00> : vector<144xf32>
    %5 = vector.multi_reduction <add>, %2, %cst_5 [1] : vector<144x196xf32> to vector<144xf32>
    %6 = vector.shape_cast %5 : vector<144xf32> to vector<144x1xf32>
    %cst_6 = arith.constant dense<0.000000e+00> : vector<864x1xf32>
    %7 = tpu.matmul %3, %6, %cst_6 {dimension_numbers = #tpu.dot_dimension_numbers<[1], [0], [0], [1], [0, 0, 1, 1], [], []>} : vector<864x144xf32>, vector<144x1xf32>, vector<864x1xf32> -> vector<864x1xf32>
    %cst_7 = arith.constant 0.00510204071 : f32
    %8 = vector.broadcast %cst_7 : f32 to vector<864x1xf32>
    %9 = arith.mulf %7, %8 : vector<864x1xf32>
    %10 = arith.mulf %4, %4 : vector<864x196xf32>
    %cst_8 = arith.constant dense<0.000000e+00> : vector<864xf32>
    %11 = vector.multi_reduction <add>, %10, %cst_8 [1] : vector<864x196xf32> to vector<864xf32>
    %12 = vector.shape_cast %11 : vector<864xf32> to vector<864x1xf32>
    %cst_9 = arith.constant 0.00510204071 : f32
    %13 = vector.broadcast %cst_9 : f32 to vector<864x1xf32>
    %14 = arith.mulf %12, %13 : vector<864x1xf32>
    %15 = arith.mulf %9, %9 : vector<864x1xf32>
    %16 = arith.subf %14, %15 : vector<864x1xf32>
    %c0_10 = arith.constant 0 : index
    %c0_11 = arith.constant 0 : index
    %17 = vector.load %arg3[%c0_10, %c0_11] : memref<864x1xf32, #tpu.memory_space<vmem>>, vector<864x1xf32>
    %cst_12 = arith.constant 9.99999974E-6 : f32
    %18 = vector.broadcast %cst_12 : f32 to vector<864x1xf32>
    %19 = arith.addf %16, %18 : vector<864x1xf32>
    %20 = math.rsqrt %19 : vector<864x1xf32>
    %21 = arith.mulf %17, %20 : vector<864x1xf32>
    %c0_13 = arith.constant 0 : index
    %c0_14 = arith.constant 0 : index
    %22 = vector.load %arg4[%c0_13, %c0_14] : memref<864x1xf32, #tpu.memory_space<vmem>>, vector<864x1xf32>
    %23 = arith.mulf %9, %21 : vector<864x1xf32>
    %24 = arith.subf %22, %23 : vector<864x1xf32>
    %25 = vector.broadcast %21 : vector<864x1xf32> to vector<864x196xf32>
    %26 = arith.mulf %4, %25 : vector<864x196xf32>
    %27 = vector.broadcast %24 : vector<864x1xf32> to vector<864x196xf32>
    %28 = arith.addf %26, %27 : vector<864x196xf32>
    %c0_15 = arith.constant 0 : index
    %c0_16 = arith.constant 0 : index
    %29 = vector.load %arg5[%c0_15, %c0_16] : memref<864x196xf32, #tpu.memory_space<vmem>>, vector<864x196xf32>
    tpu.vector_store %arg5[%c0_15, %c0_16], %28 {strides = array<i32>} : memref<864x196xf32, #tpu.memory_space<vmem>>, vector<864x196xf32>,
    return
  }
}

</mosaic_0001>

<llo_original>
// kernel: tpu_custom_call.1
$region0: #{tpu_custom_call.1}
  #allocation0 [shape = 'u32[]', space=smem, size = 0x4, offset = 0x4, fixed_abs, tag = 'smem constant byte address 0x4 - core index']
  #allocation1 [shape = 'u32[72,128]{1,0:T(1,128)}', space=vmem, size = 0x9000, scoped, tag = 'internal scratch']
  %s0 = inlined_call_operand.vmem [shape: f32[144,196], index: 0, kind: input, shape index: {}]
  %s1 = inlined_call_operand.vmem [shape: f32[144,196], index: 1, kind: input, shape index: {}]
  %s2 = inlined_call_operand.vmem [shape: f32[864,144], index: 2, kind: input, shape index: {}]
  %s3 = inlined_call_operand.vmem [shape: f32[864,1], index: 3, kind: input, shape index: {}]
  %s4 = inlined_call_operand.vmem [shape: f32[864,1], index: 4, kind: input, shape index: {}]
  %s5 = inlined_call_operand.vmem [shape: f32[864,196], index: 5, kind: output, shape index: {}]
  %s6 = sld [smem:[#allocation0]]
  $region30: #{tpu_custom_call.1} parent=0
    _
  %s8 = ssub.s32 1, %s6
  %s9 = scalar_select 0, %s8, %s6
  // Predicated region
  $region2: #{tpu_custom_call.1} parent=0 // pred_check
    _
  $region3: #{tpu_custom_call.1} parent=0 // pred_check_branch
    %11 = sbr.rel (0) target = $region5
  $region4: #{tpu_custom_call.1} parent=0 // pred_region
    _
  $region5: #{tpu_custom_call.1} parent=0 // pred_fallthru
    _
  // Predicated region
  $region6: #{tpu_custom_call.1} parent=0 // pred_check
    _
  $region7: #{tpu_custom_call.1} parent=0 // pred_check_branch
    %13 = sbr.rel (0) target = $region9
  $region8: #{tpu_custom_call.1} parent=0 // pred_region
    _
  $region9: #{tpu_custom_call.1} parent=0 // pred_fallthru
    _
  // Predicated region
  $region10: #{tpu_custom_call.1} parent=0 // pred_check
    _
  $region11: #{tpu_custom_call.1} parent=0 // pred_check_branch
    %15 = sbr.rel (0) target = $region13
  $region12: #{tpu_custom_call.1} parent=0 // pred_region
    _
  $region13: #{tpu_custom_call.1} parent=0 // pred_fallthru
    _
  // Predicated region
  $region14: #{tpu_custom_call.1} parent=0 // pred_check
    _
  $region15: #{tpu_custom_call.1} parent=0 // pred_check_branch
    %17 = sbr.rel (0) target = $region17
  $region16: #{tpu_custom_call.1} parent=0 // pred_region
    _
  $region17: #{tpu_custom_call.1} parent=0 // pred_fallthru
    _
  // Predicated region
  $region18: #{tpu_custom_call.1} parent=0 // pred_check
    _
  $region19: #{tpu_custom_call.1} parent=0 // pred_check_branch
    %19 = sbr.rel (0) target = $region21
  $region20: #{tpu_custom_call.1} parent=0 // pred_region
    _
  $region21: #{tpu_custom_call.1} parent=0 // pred_fallthru
    _
  %v20 = vld [vmem:[%s0] sm:$0xff]
  %v21 = vld [vmem:[%s0 + $0x8] sm:$0xff]
  %v22 = vld [vmem:[%s0 + $0x10] sm:$0xff]
  %v23 = vld [vmem:[%s0 + $0x18] sm:$0xff]
  %v24 = vld [vmem:[%s0 + $0x20] sm:$0xff]
  %v25 = vld [vmem:[%s0 + $0x28] sm:$0xff]
  %v26 = vld [vmem:[%s0 + $0x30] sm:$0xff]
  %v27 = vld [vmem:[%s0 + $0x38] sm:$0xff]
  %v28 = vld [vmem:[%s0 + $0x40] sm:$0xff]
  %v29 = vld [vmem:[%s0 + $0x48] sm:$0xff]
  %v30 = vld [vmem:[%s0 + $0x50] sm:$0xff]
  %v31 = vld [vmem:[%s0 + $0x58] sm:$0xff]
  %v32 = vld [vmem:[%s0 + $0x60] sm:$0xff]
  %v33 = vld [vmem:[%s0 + $0x68] sm:$0xff]
  %v34 = vld [vmem:[%s0 + $0x70] sm:$0xff]
  %v35 = vld [vmem:[%s0 + $0x78] sm:$0xff]
  %v36 = vld [vmem:[%s0 + $0x80] sm:$0xff]
  %v37 = vld [vmem:[%s0 + $0x88] sm:$0xff]
  %v38 = vld [vmem:[%s0 + $0x90] sm:$0xff]
  %v39 = vld [vmem:[%s0 + $0x98] sm:$0xff]
  %v40 = vld [vmem:[%s0 + $0xa0] sm:$0xff]
  %v41 = vld [vmem:[%s0 + $0xa8] sm:$0xff]
  %v42 = vld [vmem:[%s0 + $0xb0] sm:$0xff]
  %v43 = vld [vmem:[%s0 + $0xb8] sm:$0xff]
  %v44 = vld [vmem:[%s0 + $0xc0] sm:$0xff]
  %v45 = vld [vmem:[%s0 + $0xc8] sm:$0xff]
  %v46 = vld [vmem:[%s0 + $0xd0] sm:$0xff]
  %v47 = vld [vmem:[%s0 + $0xd8] sm:$0xff]
  %v48 = vld [vmem:[%s0 + $0xe0] sm:$0xff]
  %v49 = vld [vmem:[%s0 + $0xe8] sm:$0xff]
  %v50 = vld [vmem:[%s0 + $0xf0] sm:$0xff]
  %v51 = vld [vmem:[%s0 + $0xf8] sm:$0xff]
  %v52 = vld [vmem:[%s0 + $0x100] sm:$0xff]
  %v53 = vld [vmem:[%s0 + $0x108] sm:$0xff]
  %v54 = vld [vmem:[%s0 + $0x110] sm:$0xff]
  %v55 = vld [vmem:[%s0 + $0x118] sm:$0xff]
  %v56 = vld [vmem:[%s1] sm:$0xff]
  %v57 = vld [vmem:[%s1 + $0x8] sm:$0xff]
  %v58 = vld [vmem:[%s1 + $0x10] sm:$0xff]
  %v59 = vld [vmem:[%s1 + $0x18] sm:$0xff]
  %v60 = vld [vmem:[%s1 + $0x20] sm:$0xff]
  %v61 = vld [vmem:[%s1 + $0x28] sm:$0xff]
  %v62 = vld [vmem:[%s1 + $0x30] sm:$0xff]
  %v63 = vld [vmem:[%s1 + $0x38] sm:$0xff]
  %v64 = vld [vmem:[%s1 + $0x40] sm:$0xff]
  %v65 = vld [vmem:[%s1 + $0x48] sm:$0xff]
  %v66 = vld [vmem:[%s1 + $0x50] sm:$0xff]
  %v67 = vld [vmem:[%s1 + $0x58] sm:$0xff]
  %v68 = vld [vmem:[%s1 + $0x60] sm:$0xff]
  %v69 = vld [vmem:[%s1 + $0x68] sm:$0xff]
  %v70 = vld [vmem:[%s1 + $0x70] sm:$0xff]
  %v71 = vld [vmem:[%s1 + $0x78] sm:$0xff]
  %v72 = vld [vmem:[%s1 + $0x80] sm:$0xff]
  %v73 = vld [vmem:[%s1 + $0x88] sm:$0xff]
  %v74 = vld [vmem:[%s1 + $0x90] sm:$0xff]
  %v75 = vld [vmem:[%s1 + $0x98] sm:$0xff]
  %v76 = vld [vmem:[%s1 + $0xa0] sm:$0xff]
  %v77 = vld [vmem:[%s1 + $0xa8] sm:$0xff]
  %v78 = vld [vmem:[%s1 + $0xb0] sm:$0xff]
  %v79 = vld [vmem:[%s1 + $0xb8] sm:$0xff]
  %v80 = vld [vmem:[%s1 + $0xc0] sm:$0xff]
  %v81 = vld [vmem:[%s1 + $0xc8] sm:$0xff]
  %v82 = vld [vmem:[%s1 + $0xd0] sm:$0xff]
  %v83 = vld [vmem:[%s1 + $0xd8] sm:$0xff]
  %v84 = vld [vmem:[%s1 + $0xe0] sm:$0xff]
  %v85 = vld [vmem:[%s1 + $0xe8] sm:$0xff]
  %v86 = vld [vmem:[%s1 + $0xf0] sm:$0xff]
  %v87 = vld [vmem:[%s1 + $0xf8] sm:$0xff]
  %v88 = vld [vmem:[%s1 + $0x100] sm:$0xff]
  %v89 = vld [vmem:[%s1 + $0x108] sm:$0xff]
  %v90 = vld [vmem:[%s1 + $0x110] sm:$0xff]
  %v91 = vld [vmem:[%s1 + $0x118] sm:$0xff]
  %v92 = vadd.f32 %v20, %v56
  %v93 = vadd.f32 %v21, %v57
  %v94 = vadd.f32 %v22, %v58
  %v95 = vadd.f32 %v23, %v59
  %v96 = vadd.f32 %v24, %v60
  %v97 = vadd.f32 %v25, %v61
  %v98 = vadd.f32 %v26, %v62
  %v99 = vadd.f32 %v27, %v63
  %v100 = vadd.f32 %v28, %v64
  %v101 = vadd.f32 %v29, %v65
  %v102 = vadd.f32 %v30, %v66
  %v103 = vadd.f32 %v31, %v67
  %v104 = vadd.f32 %v32, %v68
  %v105 = vadd.f32 %v33, %v69
  %v106 = vadd.f32 %v34, %v70
  %v107 = vadd.f32 %v35, %v71
  %v108 = vadd.f32 %v36, %v72
  %v109 = vadd.f32 %v37, %v73
  %v110 = vadd.f32 %v38, %v74
  %v111 = vadd.f32 %v39, %v75
  %v112 = vadd.f32 %v40, %v76
  %v113 = vadd.f32 %v41, %v77
  %v114 = vadd.f32 %v42, %v78
  %v115 = vadd.f32 %v43, %v79
  %v116 = vadd.f32 %v44, %v80
  %v117 = vadd.f32 %v45, %v81
  %v118 = vadd.f32 %v46, %v82
  %v119 = vadd.f32 %v47, %v83
  %v120 = vadd.f32 %v48, %v84
  %v121 = vadd.f32 %v49, %v85
  %v122 = vadd.f32 %v50, %v86
  %v123 = vadd.f32 %v51, %v87
  %v124 = vadd.f32 %v52, %v88
  %v125 = vadd.f32 %v53, %v89
  %v126 = vadd.f32 %v54, %v90
  %v127 = vadd.f32 %v55, %v91
  %v128 = vld [vmem:[%s2] sm:$0xff]
  %v129 = vld [vmem:[%s2 + $0x8] sm:$0xff]
  %v130 = vld [vmem:[%s2 + $0x10] sm:$0xff]
  %v131 = vld [vmem:[%s2 + $0x18] sm:$0xff]
  %v132 = vld [vmem:[%s2 + $0x20] sm:$0xff]
  %v133 = vld [vmem:[%s2 + $0x28] sm:$0xff]
  %v134 = vld [vmem:[%s2 + $0x30] sm:$0xff]
  %v135 = vld [vmem:[%s2 + $0x38] sm:$0xff]
  %v136 = vld [vmem:[%s2 + $0x40] sm:$0xff]
  %v137 = vld [vmem:[%s2 + $0x48] sm:$0xff]
  %v138 = vld [vmem:[%s2 + $0x50] sm:$0xff]
  %v139 = vld [vmem:[%s2 + $0x58] sm:$0xff]
  %v140 = vld [vmem:[%s2 + $0x60] sm:$0xff]
  %v141 = vld [vmem:[%s2 + $0x68] sm:$0xff]
  %v142 = vld [vmem:[%s2 + $0x70] sm:$0xff]
  %v143 = vld [vmem:[%s2 + $0x78] sm:$0xff]
  %v144 = vld [vmem:[%s2 + $0x80] sm:$0xff]
  %v145 = vld [vmem:[%s2 + $0x88] sm:$0xff]
  %v146 = vld [vmem:[%s2 + $0x90] sm:$0xff]
  %v147 = vld [vmem:[%s2 + $0x98] sm:$0xff]
  %v148 = vld [vmem:[%s2 + $0xa0] sm:$0xff]
  %v149 = vld [vmem:[%s2 + $0xa8] sm:$0xff]
  %v150 = vld [vmem:[%s2 + $0xb0] sm:$0xff]
  %v151 = vld [vmem:[%s2 + $0xb8] sm:$0xff]
  %v152 = vld [vmem:[%s2 + $0xc0] sm:$0xff]
  %v153 = vld [vmem:[%s2 + $0xc8] sm:$0xff]
  %v154 = vld [vmem:[%s2 + $0xd0] sm:$0xff]
  %v155 = vld [vmem:[%s2 + $0xd8] sm:$0xff]
  %v156 = vld [vmem:[%s2 + $0xe0] sm:$0xff]
  %v157 = vld [vmem:[%s2 + $0xe8] sm:$0xff]
  %v158 = vld [vmem:[%s2 + $0xf0] sm:$0xff]
  %v159 = vld [vmem:[%s2 + $0xf8] sm:$0xff]
  %v160 = vld [vmem:[%s2 + $0x100] sm:$0xff]
  %v161 = vld [vmem:[%s2 + $0x108] sm:$0xff]
  %v162 = vld [vmem:[%s2 + $0x110] sm:$0xff]
  %v163 = vld [vmem:[%s2 + $0x118] sm:$0xff]
  %v164 = vld [vmem:[%s2 + $0x120] sm:$0xff]
  %v165 = vld [vmem:[%s2 + $0x128] sm:$0xff]
  %v166 = vld [vmem:[%s2 + $0x130] sm:$0xff]
  %v167 = vld [vmem:[%s2 + $0x138] sm:$0xff]
  %v168 = vld [vmem:[%s2 + $0x140] sm:$0xff]
  %v169 = vld [vmem:[%s2 + $0x148] sm:$0xff]
  %v170 = vld [vmem:[%s2 + $0x150] sm:$0xff]
  %v171 = vld [vmem:[%s2 + $0x158] sm:$0xff]
  %v172 = vld [vmem:[%s2 + $0x160] sm:$0xff]
  %v173 = vld [vmem:[%s2 + $0x168] sm:$0xff]
  %v174 = vld [vmem:[%s2 + $0x170] sm:$0xff]
  %v175 = vld [vmem:[%s2 + $0x178] sm:$0xff]
  %v176 = vld [vmem:[%s2 + $0x180] sm:$0xff]
  %v177 = vld [vmem:[%s2 + $0x188] sm:$0xff]
  %v178 = vld [vmem:[%s2 + $0x190] sm:$0xff]
  %v179 = vld [vmem:[%s2 + $0x198] sm:$0xff]
  %v180 = vld [vmem:[%s2 + $0x1a0] sm:$0xff]
  %v181 = vld [vmem:[%s2 + $0x1a8] sm:$0xff]
  %v182 = vld [vmem:[%s2 + $0x1b0] sm:$0xff]
  %v183 = vld [vmem:[%s2 + $0x1b8] sm:$0xff]
  %v184 = vld [vmem:[%s2 + $0x1c0] sm:$0xff]
  %v185 = vld [vmem:[%s2 + $0x1c8] sm:$0xff]
  %v186 = vld [vmem:[%s2 + $0x1d0] sm:$0xff]
  %v187 = vld [vmem:[%s2 + $0x1d8] sm:$0xff]
  %v188 = vld [vmem:[%s2 + $0x1e0] sm:$0xff]
  %v189 = vld [vmem:[%s2 + $0x1e8] sm:$0xff]
  %v190 = vld [vmem:[%s2 + $0x1f0] sm:$0xff]
  %v191 = vld [vmem:[%s2 + $0x1f8] sm:$0xff]
  %v192 = vld [vmem:[%s2 + $0x200] sm:$0xff]
  %v193 = vld [vmem:[%s2 + $0x208] sm:$0xff]
  %v194 = vld [vmem:[%s2 + $0x210] sm:$0xff]
  %v195 = vld [vmem:[%s2 + $0x218] sm:$0xff]
  %v196 = vld [vmem:[%s2 + $0x220] sm:$0xff]
  %v197 = vld [vmem:[%s2 + $0x228] sm:$0xff]
  %v198 = vld [vmem:[%s2 + $0x230] sm:$0xff]
  %v199 = vld [vmem:[%s2 + $0x238] sm:$0xff]
  %v200 = vld [vmem:[%s2 + $0x240] sm:$0xff]
  %v201 = vld [vmem:[%s2 + $0x248] sm:$0xff]
  %v202 = vld [vmem:[%s2 + $0x250] sm:$0xff]
  %v203 = vld [vmem:[%s2 + $0x258] sm:$0xff]
  %v204 = vld [vmem:[%s2 + $0x260] sm:$0xff]
  %v205 = vld [vmem:[%s2 + $0x268] sm:$0xff]
  %v206 = vld [vmem:[%s2 + $0x270] sm:$0xff]
  %v207 = vld [vmem:[%s2 + $0x278] sm:$0xff]
  %v208 = vld [vmem:[%s2 + $0x280] sm:$0xff]
  %v209 = vld [vmem:[%s2 + $0x288] sm:$0xff]
  %v210 = vld [vmem:[%s2 + $0x290] sm:$0xff]
  %v211 = vld [vmem:[%s2 + $0x298] sm:$0xff]
  %v212 = vld [vmem:[%s2 + $0x2a0] sm:$0xff]
  %v213 = vld [vmem:[%s2 + $0x2a8] sm:$0xff]
  %v214 = vld [vmem:[%s2 + $0x2b0] sm:$0xff]
  %v215 = vld [vmem:[%s2 + $0x2b8] sm:$0xff]
  %v216 = vld [vmem:[%s2 + $0x2c0] sm:$0xff]
  %v217 = vld [vmem:[%s2 + $0x2c8] sm:$0xff]
  %v218 = vld [vmem:[%s2 + $0x2d0] sm:$0xff]
  %v219 = vld [vmem:[%s2 + $0x2d8] sm:$0xff]
  %v220 = vld [vmem:[%s2 + $0x2e0] sm:$0xff]
  %v221 = vld [vmem:[%s2 + $0x2e8] sm:$0xff]
  %v222 = vld [vmem:[%s2 + $0x2f0] sm:$0xff]
  %v223 = vld [vmem:[%s2 + $0x2f8] sm:$0xff]
  %v224 = vld [vmem:[%s2 + $0x300] sm:$0xff]
  %v225 = vld [vmem:[%s2 + $0x308] sm:$0xff]
  %v226 = vld [vmem:[%s2 + $0x310] sm:$0xff]
  %v227 = vld [vmem:[%s2 + $0x318] sm:$0xff]
  %v228 = vld [vmem:[%s2 + $0x320] sm:$0xff]
  %v229 = vld [vmem:[%s2 + $0x328] sm:$0xff]
  %v230 = vld [vmem:[%s2 + $0x330] sm:$0xff]
  %v231 = vld [vmem:[%s2 + $0x338] sm:$0xff]
  %v232 = vld [vmem:[%s2 + $0x340] sm:$0xff]
  %v233 = vld [vmem:[%s2 + $0x348] sm:$0xff]
  %v234 = vld [vmem:[%s2 + $0x350] sm:$0xff]
  %v235 = vld [vmem:[%s2 + $0x358] sm:$0xff]
  %v236 = vld [vmem:[%s2 + $0x360] sm:$0xff]
  %v237 = vld [vmem:[%s2 + $0x368] sm:$0xff]
  %v238 = vld [vmem:[%s2 + $0x370] sm:$0xff]
  %v239 = vld [vmem:[%s2 + $0x378] sm:$0xff]
  %v240 = vld [vmem:[%s2 + $0x380] sm:$0xff]
  %v241 = vld [vmem:[%s2 + $0x388] sm:$0xff]
  %v242 = vld [vmem:[%s2 + $0x390] sm:$0xff]
  %v243 = vld [vmem:[%s2 + $0x398] sm:$0xff]
  %v244 = vld [vmem:[%s2 + $0x3a0] sm:$0xff]
  %v245 = vld [vmem:[%s2 + $0x3a8] sm:$0xff]
  %v246 = vld [vmem:[%s2 + $0x3b0] sm:$0xff]
  %v247 = vld [vmem:[%s2 + $0x3b8] sm:$0xff]
  %v248 = vld [vmem:[%s2 + $0x3c0] sm:$0xff]
  %v249 = vld [vmem:[%s2 + $0x3c8] sm:$0xff]
  %v250 = vld [vmem:[%s2 + $0x3d0] sm:$0xff]
  %v251 = vld [vmem:[%s2 + $0x3d8] sm:$0xff]
  %v252 = vld [vmem:[%s2 + $0x3e0] sm:$0xff]
  %v253 = vld [vmem:[%s2 + $0x3e8] sm:$0xff]
  %v254 = vld [vmem:[%s2 + $0x3f0] sm:$0xff]
  %v255 = vld [vmem:[%s2 + $0x3f8] sm:$0xff]
  %v256 = vld [vmem:[%s2 + $0x400] sm:$0xff]
  %v257 = vld [vmem:[%s2 + $0x408] sm:$0xff]
  %v258 = vld [vmem:[%s2 + $0x410] sm:$0xff]
  %v259 = vld [vmem:[%s2 + $0x418] sm:$0xff]
  %v260 = vld [vmem:[%s2 + $0x420] sm:$0xff]
  %v261 = vld [vmem:[%s2 + $0x428] sm:$0xff]
  %v262 = vld [vmem:[%s2 + $0x430] sm:$0xff]
  %v263 = vld [vmem:[%s2 + $0x438] sm:$0xff]
  %v264 = vld [vmem:[%s2 + $0x440] sm:$0xff]
  %v265 = vld [vmem:[%s2 + $0x448] sm:$0xff]
  %v266 = vld [vmem:[%s2 + $0x450] sm:$0xff]
  %v267 = vld [vmem:[%s2 + $0x458] sm:$0xff]
  %v268 = vld [vmem:[%s2 + $0x460] sm:$0xff]
  %v269 = vld [vmem:[%s2 + $0x468] sm:$0xff]
  %v270 = vld [vmem:[%s2 + $0x470] sm:$0xff]
  %v271 = vld [vmem:[%s2 + $0x478] sm:$0xff]
  %v272 = vld [vmem:[%s2 + $0x480] sm:$0xff]
  %v273 = vld [vmem:[%s2 + $0x488] sm:$0xff]
  %v274 = vld [vmem:[%s2 + $0x490] sm:$0xff]
  %v275 = vld [vmem:[%s2 + $0x498] sm:$0xff]
  %v276 = vld [vmem:[%s2 + $0x4a0] sm:$0xff]
  %v277 = vld [vmem:[%s2 + $0x4a8] sm:$0xff]
  %v278 = vld [vmem:[%s2 + $0x4b0] sm:$0xff]
  %v279 = vld [vmem:[%s2 + $0x4b8] sm:$0xff]
  %v280 = vld [vmem:[%s2 + $0x4c0] sm:$0xff]
  %v281 = vld [vmem:[%s2 + $0x4c8] sm:$0xff]
  %v282 = vld [vmem:[%s2 + $0x4d0] sm:$0xff]
  %v283 = vld [vmem:[%s2 + $0x4d8] sm:$0xff]
  %v284 = vld [vmem:[%s2 + $0x4e0] sm:$0xff]
  %v285 = vld [vmem:[%s2 + $0x4e8] sm:$0xff]
  %v286 = vld [vmem:[%s2 + $0x4f0] sm:$0xff]
  %v287 = vld [vmem:[%s2 + $0x4f8] sm:$0xff]
  %v288 = vld [vmem:[%s2 + $0x500] sm:$0xff]
  %v289 = vld [vmem:[%s2 + $0x508] sm:$0xff]
  %v290 = vld [vmem:[%s2 + $0x510] sm:$0xff]
  %v291 = vld [vmem:[%s2 + $0x518] sm:$0xff]
  %v292 = vld [vmem:[%s2 + $0x520] sm:$0xff]
  %v293 = vld [vmem:[%s2 + $0x528] sm:$0xff]
  %v294 = vld [vmem:[%s2 + $0x530] sm:$0xff]
  %v295 = vld [vmem:[%s2 + $0x538] sm:$0xff]
  %v296 = vld [vmem:[%s2 + $0x540] sm:$0xff]
  %v297 = vld [vmem:[%s2 + $0x548] sm:$0xff]
  %v298 = vld [vmem:[%s2 + $0x550] sm:$0xff]
  %v299 = vld [vmem:[%s2 + $0x558] sm:$0xff]
  %v300 = vld [vmem:[%s2 + $0x560] sm:$0xff]
  %v301 = vld [vmem:[%s2 + $0x568] sm:$0xff]
  %v302 = vld [vmem:[%s2 + $0x570] sm:$0xff]
  %v303 = vld [vmem:[%s2 + $0x578] sm:$0xff]
  %v304 = vld [vmem:[%s2 + $0x580] sm:$0xff]
  %v305 = vld [vmem:[%s2 + $0x588] sm:$0xff]
  %v306 = vld [vmem:[%s2 + $0x590] sm:$0xff]
  %v307 = vld [vmem:[%s2 + $0x598] sm:$0xff]
  %v308 = vld [vmem:[%s2 + $0x5a0] sm:$0xff]
  %v309 = vld [vmem:[%s2 + $0x5a8] sm:$0xff]
  %v310 = vld [vmem:[%s2 + $0x5b0] sm:$0xff]
  %v311 = vld [vmem:[%s2 + $0x5b8] sm:$0xff]
  %v312 = vld [vmem:[%s2 + $0x5c0] sm:$0xff]
  %v313 = vld [vmem:[%s2 + $0x5c8] sm:$0xff]
  %v314 = vld [vmem:[%s2 + $0x5d0] sm:$0xff]
  %v315 = vld [vmem:[%s2 + $0x5d8] sm:$0xff]
  %v316 = vld [vmem:[%s2 + $0x5e0] sm:$0xff]
  %v317 = vld [vmem:[%s2 + $0x5e8] sm:$0xff]
  %v318 = vld [vmem:[%s2 + $0x5f0] sm:$0xff]
  %v319 = vld [vmem:[%s2 + $0x5f8] sm:$0xff]
  %v320 = vld [vmem:[%s2 + $0x600] sm:$0xff]
  %v321 = vld [vmem:[%s2 + $0x608] sm:$0xff]
  %v322 = vld [vmem:[%s2 + $0x610] sm:$0xff]
  %v323 = vld [vmem:[%s2 + $0x618] sm:$0xff]
  %v324 = vld [vmem:[%s2 + $0x620] sm:$0xff]
  %v325 = vld [vmem:[%s2 + $0x628] sm:$0xff]
  %v326 = vld [vmem:[%s2 + $0x630] sm:$0xff]
  %v327 = vld [vmem:[%s2 + $0x638] sm:$0xff]
  %v328 = vld [vmem:[%s2 + $0x640] sm:$0xff]
  %v329 = vld [vmem:[%s2 + $0x648] sm:$0xff]
  %v330 = vld [vmem:[%s2 + $0x650] sm:$0xff]
  %v331 = vld [vmem:[%s2 + $0x658] sm:$0xff]
  %v332 = vld [vmem:[%s2 + $0x660] sm:$0xff]
  %v333 = vld [vmem:[%s2 + $0x668] sm:$0xff]
  %v334 = vld [vmem:[%s2 + $0x670] sm:$0xff]
  %v335 = vld [vmem:[%s2 + $0x678] sm:$0xff]
  %v336 = vld [vmem:[%s2 + $0x680] sm:$0xff]
  %v337 = vld [vmem:[%s2 + $0x688] sm:$0xff]
  %v338 = vld [vmem:[%s2 + $0x690] sm:$0xff]
  %v339 = vld [vmem:[%s2 + $0x698] sm:$0xff]
  %v340 = vld [vmem:[%s2 + $0x6a0] sm:$0xff]
  %v341 = vld [vmem:[%s2 + $0x6a8] sm:$0xff]
  %v342 = vld [vmem:[%s2 + $0x6b0] sm:$0xff]
  %v343 = vld [vmem:[%s2 + $0x6b8] sm:$0xff]
  %vm344 = vcmask 130048
  %v346 = vsel %vm344, %v129, 0
  %v349 = vsel %vm344, %v131, 0
  %v352 = vsel %vm344, %v133, 0
  %v355 = vsel %vm344, %v135, 0
  %v358 = vsel %vm344, %v137, 0
  %v361 = vsel %vm344, %v139, 0
  %v364 = vsel %vm344, %v141, 0
  %v367 = vsel %vm344, %v143, 0
  %v370 = vsel %vm344, %v145, 0
  %v373 = vsel %vm344, %v147, 0
  %v376 = vsel %vm344, %v149, 0
  %v379 = vsel %vm344, %v151, 0
  %v382 = vsel %vm344, %v153, 0
  %v385 = vsel %vm344, %v155, 0
  %v388 = vsel %vm344, %v157, 0
  %v391 = vsel %vm344, %v159, 0
  %v394 = vsel %vm344, %v161, 0
  %v397 = vsel %vm344, %v163, 0
  %v400 = vsel %vm344, %v165, 0
  %v403 = vsel %vm344, %v167, 0
  %v406 = vsel %vm344, %v169, 0
  %v409 = vsel %vm344, %v171, 0
  %v412 = vsel %vm344, %v173, 0
  %v415 = vsel %vm344, %v175, 0
  %v418 = vsel %vm344, %v177, 0
  %v421 = vsel %vm344, %v179, 0
  %v424 = vsel %vm344, %v181, 0
  %v427 = vsel %vm344, %v183, 0
  %v430 = vsel %vm344, %v185, 0
  %v433 = vsel %vm344, %v187, 0
  %v436 = vsel %vm344, %v189, 0
  %v439 = vsel %vm344, %v191, 0
  %v442 = vsel %vm344, %v193, 0
  %v445 = vsel %vm344, %v195, 0
  %v448 = vsel %vm344, %v197, 0
  %v451 = vsel %vm344, %v199, 0
  %v454 = vsel %vm344, %v201, 0
  %v457 = vsel %vm344, %v203, 0
  %v460 = vsel %vm344, %v205, 0
  %v463 = vsel %vm344, %v207, 0
  %v466 = vsel %vm344, %v209, 0
  %v469 = vsel %vm344, %v211, 0
  %v472 = vsel %vm344, %v213, 0
  %v475 = vsel %vm344, %v215, 0
  %v478 = vsel %vm344, %v217, 0
  %v481 = vsel %vm344, %v219, 0
  %v484 = vsel %vm344, %v221, 0
  %v487 = vsel %vm344, %v223, 0
  %v490 = vsel %vm344, %v225, 0
  %v493 = vsel %vm344, %v227, 0
  %v496 = vsel %vm344, %v229, 0
  %v499 = vsel %vm344, %v231, 0
  %v502 = vsel %vm344, %v233, 0
  %v505 = vsel %vm344, %v235, 0
  %v508 = vsel %vm344, %v237, 0
  %v511 = vsel %vm344, %v239, 0
  %v514 = vsel %vm344, %v241, 0
  %v517 = vsel %vm344, %v243, 0
  %v520 = vsel %vm344, %v245, 0
  %v523 = vsel %vm344, %v247, 0
  %v526 = vsel %vm344, %v249, 0
  %v529 = vsel %vm344, %v251, 0
  %v532 = vsel %vm344, %v253, 0
  %v535 = vsel %vm344, %v255, 0
  %v538 = vsel %vm344, %v257, 0
  %v541 = vsel %vm344, %v259, 0
  %v544 = vsel %vm344, %v261, 0
  %v547 = vsel %vm344, %v263, 0
  %v550 = vsel %vm344, %v265, 0
  %v553 = vsel %vm344, %v267, 0
  %v556 = vsel %vm344, %v269, 0
  %v559 = vsel %vm344, %v271, 0
  %v562 = vsel %vm344, %v273, 0
  %v565 = vsel %vm344, %v275, 0
  %v568 = vsel %vm344, %v277, 0
  %v571 = vsel %vm344, %v279, 0
  %v574 = vsel %vm344, %v281, 0
  %v577 = vsel %vm344, %v283, 0
  %v580 = vsel %vm344, %v285, 0
  %v583 = vsel %vm344, %v287, 0
  %v586 = vsel %vm344, %v289, 0
  %v589 = vsel %vm344, %v291, 0
  %v592 = vsel %vm344, %v293, 0
  %v595 = vsel %vm344, %v295, 0
  %v598 = vsel %vm344, %v297, 0
  %v601 = vsel %vm344, %v299, 0
  %v604 = vsel %vm344, %v301, 0
  %v607 = vsel %vm344, %v303, 0
  %v610 = vsel %vm344, %v305, 0
  %v613 = vsel %vm344, %v307, 0
  %v616 = vsel %vm344, %v309, 0
  %v619 = vsel %vm344, %v311, 0
  %v622 = vsel %vm344, %v313, 0
  %v625 = vsel %vm344, %v315, 0
  %v628 = vsel %vm344, %v317, 0
  %v631 = vsel %vm344, %v319, 0
  %v634 = vsel %vm344, %v321, 0
  %v637 = vsel %vm344, %v323, 0
  %v640 = vsel %vm344, %v325, 0
  %v643 = vsel %vm344, %v327, 0
  %v646 = vsel %vm344, %v329, 0
  %v649 = vsel %vm344, %v331, 0
  %v652 = vsel %vm344, %v333, 0
  %v655 = vsel %vm344, %v335, 0
  %v658 = vsel %vm344, %v337, 0
  %v661 = vsel %vm344, %v339, 0
  %v664 = vsel %vm344, %v341, 0
  %v667 = vsel %vm344, %v343, 0
  %669 = vmatpush.msra.mxu0 %v122
  %670 = vmatpush.msra.mxu0 %v120
  %671 = vmatpush.msra.mxu0 %v118
  %672 = vmatpush.msra.mxu0 %v116
  %673 = vmatpush.msra.mxu0 %v114
  %674 = vmatpush.msra.mxu0 %v112
  %675 = vmatpush.msra.mxu0 %v110
  %676 = vmatpush.msra.mxu0 %v108
  %677 = vmatpush.msra.mxu0 %v106
  %678 = vmatpush.msra.mxu0 %v104
  %679 = vmatpush.msra.mxu0 %v102
  %680 = vmatpush.msra.mxu0 %v100
  %681 = vmatpush.msra.mxu0 %v98
  %682 = vmatpush.msra.mxu0 %v96
  %683 = vmatpush.msra.mxu0 %v94
  %684 = vmatpush.msra.mxu0 %v92
  %685 = vmatmul.f32.gmra.mxu0 %v128
  %v686 = vpop.f32.mrf.mxu0
  %v687 = vadd.f32 0.0, %v686
  %688 = vmatmul.f32.gmra.mxu0 %v130
  %v689 = vpop.f32.mrf.mxu0
  %v690 = vadd.f32 0.0, %v689
  %691 = vmatmul.f32.gmra.mxu0 %v132
  %v692 = vpop.f32.mrf.mxu0
  %v693 = vadd.f32 0.0, %v692
  %694 = vmatmul.f32.gmra.mxu0 %v134
  %v695 = vpop.f32.mrf.mxu0
  %v696 = vadd.f32 0.0, %v695
  %697 = vmatmul.f32.gmra.mxu0 %v136
  %v698 = vpop.f32.mrf.mxu0
  %v699 = vadd.f32 0.0, %v698
  %700 = vmatmul.f32.gmra.mxu0 %v138
  %v701 = vpop.f32.mrf.mxu0
  %v702 = vadd.f32 0.0, %v701
  %703 = vmatmul.f32.gmra.mxu0 %v140
  %v704 = vpop.f32.mrf.mxu0
  %v705 = vadd.f32 0.0, %v704
  %706 = vmatmul.f32.gmra.mxu0 %v142
  %v707 = vpop.f32.mrf.mxu0
  %v708 = vadd.f32 0.0, %v707
  %709 = vmatmul.f32.gmra.mxu0 %v144
  %v710 = vpop.f32.mrf.mxu0
  %v711 = vadd.f32 0.0, %v710
  %712 = vmatmul.f32.gmra.mxu0 %v146
  %v713 = vpop.f32.mrf.mxu0
  %v714 = vadd.f32 0.0, %v713
  %715 = vmatmul.f32.gmra.mxu0 %v148
  %v716 = vpop.f32.mrf.mxu0
  %v717 = vadd.f32 0.0, %v716
  %718 = vmatmul.f32.gmra.mxu0 %v150
  %v719 = vpop.f32.mrf.mxu0
  %v720 = vadd.f32 0.0, %v719
  %721 = vmatmul.f32.gmra.mxu0 %v152
  %v722 = vpop.f32.mrf.mxu0
  %v723 = vadd.f32 0.0, %v722
  %724 = vmatmul.f32.gmra.mxu0 %v154
  %v725 = vpop.f32.mrf.mxu0
  %v726 = vadd.f32 0.0, %v725
  %727 = vmatmul.f32.gmra.mxu0 %v156
  %v728 = vpop.f32.mrf.mxu0
  %v729 = vadd.f32 0.0, %v728
  %730 = vmatmul.f32.gmra.mxu0 %v158
  %v731 = vpop.f32.mrf.mxu0
  %v732 = vadd.f32 0.0, %v731
  %733 = vmatmul.f32.gmra.mxu0 %v160
  %v734 = vpop.f32.mrf.mxu0
  %v735 = vadd.f32 0.0, %v734
  %736 = vmatmul.f32.gmra.mxu0 %v162
  %v737 = vpop.f32.mrf.mxu0
  %v738 = vadd.f32 0.0, %v737
  %739 = vmatmul.f32.gmra.mxu0 %v164
  %v740 = vpop.f32.mrf.mxu0
  %v741 = vadd.f32 0.0, %v740
  %742 = vmatmul.f32.gmra.mxu0 %v166
  %v743 = vpop.f32.mrf.mxu0
  %v744 = vadd.f32 0.0, %v743
  %745 = vmatmul.f32.gmra.mxu0 %v168
  %v746 = vpop.f32.mrf.mxu0
  %v747 = vadd.f32 0.0, %v746
  %748 = vmatmul.f32.gmra.mxu0 %v170
  %v749 = vpop.f32.mrf.mxu0
  %v750 = vadd.f32 0.0, %v749
  %751 = vmatmul.f32.gmra.mxu0 %v172
  %v752 = vpop.f32.mrf.mxu0
  %v753 = vadd.f32 0.0, %v752
  %754 = vmatmul.f32.gmra.mxu0 %v174
  %v755 = vpop.f32.mrf.mxu0
  %v756 = vadd.f32 0.0, %v755
  %757 = vmatmul.f32.gmra.mxu0 %v176
  %v758 = vpop.f32.mrf.mxu0
  %v759 = vadd.f32 0.0, %v758
  %760 = vmatmul.f32.gmra.mxu0 %v178
  %v761 = vpop.f32.mrf.mxu0
  %v762 = vadd.f32 0.0, %v761
  %763 = vmatmul.f32.gmra.mxu0 %v180
  %v764 = vpop.f32.mrf.mxu0
  %v765 = vadd.f32 0.0, %v764
  %766 = vmatmul.f32.gmra.mxu0 %v182
  %v767 = vpop.f32.mrf.mxu0
  %v768 = vadd.f32 0.0, %v767
  %769 = vmatmul.f32.gmra.mxu0 %v184
  %v770 = vpop.f32.mrf.mxu0
  %v771 = vadd.f32 0.0, %v770
  %772 = vmatmul.f32.gmra.mxu0 %v186
  %v773 = vpop.f32.mrf.mxu0
  %v774 = vadd.f32 0.0, %v773
  %775 = vmatmul.f32.gmra.mxu0 %v188
  %v776 = vpop.f32.mrf.mxu0
  %v777 = vadd.f32 0.0, %v776
  %778 = vmatmul.f32.gmra.mxu0 %v190
  %v779 = vpop.f32.mrf.mxu0
  %v780 = vadd.f32 0.0, %v779
  %781 = vmatmul.f32.gmra.mxu0 %v192
  %v782 = vpop.f32.mrf.mxu0
  %v783 = vadd.f32 0.0, %v782
  %784 = vmatmul.f32.gmra.mxu0 %v194
  %v785 = vpop.f32.mrf.mxu0
  %v786 = vadd.f32 0.0, %v785
  %787 = vmatmul.f32.gmra.mxu0 %v196
  %v788 = vpop.f32.mrf.mxu0
  %v789 = vadd.f32 0.0, %v788
  %790 = vmatmul.f32.gmra.mxu0 %v198
  %v791 = vpop.f32.mrf.mxu0
  %v792 = vadd.f32 0.0, %v791
  %793 = vmatmul.f32.gmra.mxu0 %v200
  %v794 = vpop.f32.mrf.mxu0
  %v795 = vadd.f32 0.0, %v794
  %796 = vmatmul.f32.gmra.mxu0 %v202
  %v797 = vpop.f32.mrf.mxu0
  %v798 = vadd.f32 0.0, %v797
  %799 = vmatmul.f32.gmra.mxu0 %v204
  %v800 = vpop.f32.mrf.mxu0
  %v801 = vadd.f32 0.0, %v800
  %802 = vmatmul.f32.gmra.mxu0 %v206
  %v803 = vpop.f32.mrf.mxu0
  %v804 = vadd.f32 0.0, %v803
  %805 = vmatmul.f32.gmra.mxu0 %v208
  %v806 = vpop.f32.mrf.mxu0
  %v807 = vadd.f32 0.0, %v806
  %808 = vmatmul.f32.gmra.mxu0 %v210
  %v809 = vpop.f32.mrf.mxu0
  %v810 = vadd.f32 0.0, %v809
  %811 = vmatmul.f32.gmra.mxu0 %v212
  %v812 = vpop.f32.mrf.mxu0
  %v813 = vadd.f32 0.0, %v812
  %814 = vmatmul.f32.gmra.mxu0 %v214
  %v815 = vpop.f32.mrf.mxu0
  %v816 = vadd.f32 0.0, %v815
  %817 = vmatmul.f32.gmra.mxu0 %v216
  %v818 = vpop.f32.mrf.mxu0
  %v819 = vadd.f32 0.0, %v818
  %820 = vmatmul.f32.gmra.mxu0 %v218
  %v821 = vpop.f32.mrf.mxu0
  %v822 = vadd.f32 0.0, %v821
  %823 = vmatmul.f32.gmra.mxu0 %v220
  %v824 = vpop.f32.mrf.mxu0
  %v825 = vadd.f32 0.0, %v824
  %826 = vmatmul.f32.gmra.mxu0 %v222
  %v827 = vpop.f32.mrf.mxu0
  %v828 = vadd.f32 0.0, %v827
  %829 = vmatmul.f32.gmra.mxu0 %v224
  %v830 = vpop.f32.mrf.mxu0
  %v831 = vadd.f32 0.0, %v830
  %832 = vmatmul.f32.gmra.mxu0 %v226
  %v833 = vpop.f32.mrf.mxu0
  %v834 = vadd.f32 0.0, %v833
  %835 = vmatmul.f32.gmra.mxu0 %v228
  %v836 = vpop.f32.mrf.mxu0
  %v837 = vadd.f32 0.0, %v836
  %838 = vmatmul.f32.gmra.mxu0 %v230
  %v839 = vpop.f32.mrf.mxu0
  %v840 = vadd.f32 0.0, %v839
  %841 = vmatmul.f32.gmra.mxu0 %v232
  %v842 = vpop.f32.mrf.mxu0
  %v843 = vadd.f32 0.0, %v842
  %844 = vmatmul.f32.gmra.mxu0 %v234
  %v845 = vpop.f32.mrf.mxu0
  %v846 = vadd.f32 0.0, %v845
  %847 = vmatmul.f32.gmra.mxu0 %v236
  %v848 = vpop.f32.mrf.mxu0
  %v849 = vadd.f32 0.0, %v848
  %850 = vmatmul.f32.gmra.mxu0 %v238
  %v851 = vpop.f32.mrf.mxu0
  %v852 = vadd.f32 0.0, %v851
  %853 = vmatmul.f32.gmra.mxu0 %v240
  %v854 = vpop.f32.mrf.mxu0
  %v855 = vadd.f32 0.0, %v854
  %856 = vmatmul.f32.gmra.mxu0 %v242
  %v857 = vpop.f32.mrf.mxu0
  %v858 = vadd.f32 0.0, %v857
  %859 = vmatmul.f32.gmra.mxu0 %v244
  %v860 = vpop.f32.mrf.mxu0
  %v861 = vadd.f32 0.0, %v860
  %862 = vmatmul.f32.gmra.mxu0 %v246
  %v863 = vpop.f32.mrf.mxu0
  %v864 = vadd.f32 0.0, %v863
  %865 = vmatmul.f32.gmra.mxu0 %v248
  %v866 = vpop.f32.mrf.mxu0
  %v867 = vadd.f32 0.0, %v866
  %868 = vmatmul.f32.gmra.mxu0 %v250
  %v869 = vpop.f32.mrf.mxu0
  %v870 = vadd.f32 0.0, %v869
  %871 = vmatmul.f32.gmra.mxu0 %v252
  %v872 = vpop.f32.mrf.mxu0
  %v873 = vadd.f32 0.0, %v872
  %874 = vmatmul.f32.gmra.mxu0 %v254
  %v875 = vpop.f32.mrf.mxu0
  %v876 = vadd.f32 0.0, %v875
  %877 = vmatmul.f32.gmra.mxu0 %v256
  %v878 = vpop.f32.mrf.mxu0
  %v879 = vadd.f32 0.0, %v878
  %880 = vmatmul.f32.gmra.mxu0 %v258
  %v881 = vpop.f32.mrf.mxu0
  %v882 = vadd.f32 0.0, %v881
  %883 = vmatmul.f32.gmra.mxu0 %v260
  %v884 = vpop.f32.mrf.mxu0
  %v885 = vadd.f32 0.0, %v884
  %886 = vmatmul.f32.gmra.mxu0 %v262
  %v887 = vpop.f32.mrf.mxu0
  %v888 = vadd.f32 0.0, %v887
  %889 = vmatmul.f32.gmra.mxu0 %v264
  %v890 = vpop.f32.mrf.mxu0
  %v891 = vadd.f32 0.0, %v890
  %892 = vmatmul.f32.gmra.mxu0 %v266
  %v893 = vpop.f32.mrf.mxu0
  %v894 = vadd.f32 0.0, %v893
  %895 = vmatmul.f32.gmra.mxu0 %v268
  %v896 = vpop.f32.mrf.mxu0
  %v897 = vadd.f32 0.0, %v896
  %898 = vmatmul.f32.gmra.mxu0 %v270
  %v899 = vpop.f32.mrf.mxu0
  %v900 = vadd.f32 0.0, %v899
  %901 = vmatmul.f32.gmra.mxu0 %v272
  %v902 = vpop.f32.mrf.mxu0
  %v903 = vadd.f32 0.0, %v902
  %904 = vmatmul.f32.gmra.mxu0 %v274
  %v905 = vpop.f32.mrf.mxu0
  %v906 = vadd.f32 0.0, %v905
  %907 = vmatmul.f32.gmra.mxu0 %v276
  %v908 = vpop.f32.mrf.mxu0
  %v909 = vadd.f32 0.0, %v908
  %910 = vmatmul.f32.gmra.mxu0 %v278
  %v911 = vpop.f32.mrf.mxu0
  %v912 = vadd.f32 0.0, %v911
  %913 = vmatmul.f32.gmra.mxu0 %v280
  %v914 = vpop.f32.mrf.mxu0
  %v915 = vadd.f32 0.0, %v914
  %916 = vmatmul.f32.gmra.mxu0 %v282
  %v917 = vpop.f32.mrf.mxu0
  %v918 = vadd.f32 0.0, %v917
  %919 = vmatmul.f32.gmra.mxu0 %v284
  %v920 = vpop.f32.mrf.mxu0
  %v921 = vadd.f32 0.0, %v920
  %922 = vmatmul.f32.gmra.mxu0 %v286
  %v923 = vpop.f32.mrf.mxu0
  %v924 = vadd.f32 0.0, %v923
  %925 = vmatmul.f32.gmra.mxu0 %v288
  %v926 = vpop.f32.mrf.mxu0
  %v927 = vadd.f32 0.0, %v926
  %928 = vmatmul.f32.gmra.mxu0 %v290
  %v929 = vpop.f32.mrf.mxu0
  %v930 = vadd.f32 0.0, %v929
  %931 = vmatmul.f32.gmra.mxu0 %v292
  %v932 = vpop.f32.mrf.mxu0
  %v933 = vadd.f32 0.0, %v932
  %934 = vmatmul.f32.gmra.mxu0 %v294
  %v935 = vpop.f32.mrf.mxu0
  %v936 = vadd.f32 0.0, %v935
  %937 = vmatmul.f32.gmra.mxu0 %v296
  %v938 = vpop.f32.mrf.mxu0
  %v939 = vadd.f32 0.0, %v938
  %940 = vmatmul.f32.gmra.mxu0 %v298
  %v941 = vpop.f32.mrf.mxu0
  %v942 = vadd.f32 0.0, %v941
  %943 = vmatmul.f32.gmra.mxu0 %v300
  %v944 = vpop.f32.mrf.mxu0
  %v945 = vadd.f32 0.0, %v944
  %946 = vmatmul.f32.gmra.mxu0 %v302
  %v947 = vpop.f32.mrf.mxu0
  %v948 = vadd.f32 0.0, %v947
  %949 = vmatmul.f32.gmra.mxu0 %v304
  %v950 = vpop.f32.mrf.mxu0
  %v951 = vadd.f32 0.0, %v950
  %952 = vmatmul.f32.gmra.mxu0 %v306
  %v953 = vpop.f32.mrf.mxu0
  %v954 = vadd.f32 0.0, %v953
  %955 = vmatmul.f32.gmra.mxu0 %v308
  %v956 = vpop.f32.mrf.mxu0
  %v957 = vadd.f32 0.0, %v956
  %958 = vmatmul.f32.gmra.mxu0 %v310
  %v959 = vpop.f32.mrf.mxu0
  %v960 = vadd.f32 0.0, %v959
  %961 = vmatmul.f32.gmra.mxu0 %v312
  %v962 = vpop.f32.mrf.mxu0
  %v963 = vadd.f32 0.0, %v962
  %964 = vmatmul.f32.gmra.mxu0 %v314
  %v965 = vpop.f32.mrf.mxu0
  %v966 = vadd.f32 0.0, %v965
  %967 = vmatmul.f32.gmra.mxu0 %v316
  %v968 = vpop.f32.mrf.mxu0
  %v969 = vadd.f32 0.0, %v968
  %970 = vmatmul.f32.gmra.mxu0 %v318
  %v971 = vpop.f32.mrf.mxu0
  %v972 = vadd.f32 0.0, %v971
  %973 = vmatmul.f32.gmra.mxu0 %v320
  %v974 = vpop.f32.mrf.mxu0
  %v975 = vadd.f32 0.0, %v974
  %976 = vmatmul.f32.gmra.mxu0 %v322
  %v977 = vpop.f32.mrf.mxu0
  %v978 = vadd.f32 0.0, %v977
  %979 = vmatmul.f32.gmra.mxu0 %v324
  %v980 = vpop.f32.mrf.mxu0
  %v981 = vadd.f32 0.0, %v980
  %982 = vmatmul.f32.gmra.mxu0 %v326
  %v983 = vpop.f32.mrf.mxu0
  %v984 = vadd.f32 0.0, %v983
  %985 = vmatmul.f32.gmra.mxu0 %v328
  %v986 = vpop.f32.mrf.mxu0
  %v987 = vadd.f32 0.0, %v986
  %988 = vmatmul.f32.gmra.mxu0 %v330
  %v989 = vpop.f32.mrf.mxu0
  %v990 = vadd.f32 0.0, %v989
  %991 = vmatmul.f32.gmra.mxu0 %v332
  %v992 = vpop.f32.mrf.mxu0
  %v993 = vadd.f32 0.0, %v992
  %994 = vmatmul.f32.gmra.mxu0 %v334
  %v995 = vpop.f32.mrf.mxu0
  %v996 = vadd.f32 0.0, %v995
  %997 = vmatmul.f32.gmra.mxu0 %v336
  %v998 = vpop.f32.mrf.mxu0
  %v999 = vadd.f32 0.0, %v998
  %1000 = vmatmul.f32.gmra.mxu0 %v338
  %v1001 = vpop.f32.mrf.mxu0
  %v1002 = vadd.f32 0.0, %v1001
  %1003 = vmatmul.f32.gmra.mxu0 %v340
  %v1004 = vpop.f32.mrf.mxu0
  %v1005 = vadd.f32 0.0, %v1004
  %1006 = vmatmul.f32.gmra.mxu0 %v342
  %v1007 = vpop.f32.mrf.mxu0
  %v1008 = vadd.f32 0.0, %v1007
  %1009 = vdwg.mxu0
  %1010 = vmatpush.msra.mxu0 0.0
  %1011 = vmatpush.msra.mxu0 0.0
  %1012 = vmatpush.msra.mxu0 0.0
  %1013 = vmatpush.msra.mxu0 0.0
  %1014 = vmatpush.msra.mxu0 0.0
  %1015 = vmatpush.msra.mxu0 0.0
  %1016 = vmatpush.msra.mxu0 0.0
  %1017 = vmatpush.msra.mxu0 0.0
  %1018 = vmatpush.msra.mxu0 0.0
  %1019 = vmatpush.msra.mxu0 0.0
  %1020 = vmatpush.msra.mxu0 0.0
  %1021 = vmatpush.msra.mxu0 0.0
  %1022 = vmatpush.msra.mxu0 0.0
  %1023 = vmatpush.msra.mxu0 0.0
  %1024 = vmatpush.msra.mxu0 %v126
  %1025 = vmatpush.msra.mxu0 %v124
  %1026 = vmatmul.f32.gmra.mxu0 %v346
  %v1027 = vpop.f32.mrf.mxu0
  %v1028 = vadd.f32 %v687, %v1027
  %1029 = vmatmul.f32.gmra.mxu0 %v349
  %v1030 = vpop.f32.mrf.mxu0
  %v1031 = vadd.f32 %v690, %v1030
  %1032 = vmatmul.f32.gmra.mxu0 %v352
  %v1033 = vpop.f32.mrf.mxu0
  %v1034 = vadd.f32 %v693, %v1033
  %1035 = vmatmul.f32.gmra.mxu0 %v355
  %v1036 = vpop.f32.mrf.mxu0
  %v1037 = vadd.f32 %v696, %v1036
  %1038 = vmatmul.f32.gmra.mxu0 %v358
  %v1039 = vpop.f32.mrf.mxu0
  %v1040 = vadd.f32 %v699, %v1039
  %1041 = vmatmul.f32.gmra.mxu0 %v361
  %v1042 = vpop.f32.mrf.mxu0
  %v1043 = vadd.f32 %v702, %v1042
  %1044 = vmatmul.f32.gmra.mxu0 %v364
  %v1045 = vpop.f32.mrf.mxu0
  %v1046 = vadd.f32 %v705, %v1045
  %1047 = vmatmul.f32.gmra.mxu0 %v367
  %v1048 = vpop.f32.mrf.mxu0
  %v1049 = vadd.f32 %v708, %v1048
  %1050 = vmatmul.f32.gmra.mxu0 %v370
  %v1051 = vpop.f32.mrf.mxu0
  %v1052 = vadd.f32 %v711, %v1051
  %1053 = vmatmul.f32.gmra.mxu0 %v373
  %v1054 = vpop.f32.mrf.mxu0
  %v1055 = vadd.f32 %v714, %v1054
  %1056 = vmatmul.f32.gmra.mxu0 %v376
  %v1057 = vpop.f32.mrf.mxu0
  %v1058 = vadd.f32 %v717, %v1057
  %1059 = vmatmul.f32.gmra.mxu0 %v379
  %v1060 = vpop.f32.mrf.mxu0
  %v1061 = vadd.f32 %v720, %v1060
  %1062 = vmatmul.f32.gmra.mxu0 %v382
  %v1063 = vpop.f32.mrf.mxu0
  %v1064 = vadd.f32 %v723, %v1063
  %1065 = vmatmul.f32.gmra.mxu0 %v385
  %v1066 = vpop.f32.mrf.mxu0
  %v1067 = vadd.f32 %v726, %v1066
  %1068 = vmatmul.f32.gmra.mxu0 %v388
  %v1069 = vpop.f32.mrf.mxu0
  %v1070 = vadd.f32 %v729, %v1069
  %1071 = vmatmul.f32.gmra.mxu0 %v391
  %v1072 = vpop.f32.mrf.mxu0
  %v1073 = vadd.f32 %v732, %v1072
  %1074 = vmatmul.f32.gmra.mxu0 %v394
  %v1075 = vpop.f32.mrf.mxu0
  %v1076 = vadd.f32 %v735, %v1075
  %1077 = vmatmul.f32.gmra.mxu0 %v397
  %v1078 = vpop.f32.mrf.mxu0
  %v1079 = vadd.f32 %v738, %v1078
  %1080 = vmatmul.f32.gmra.mxu0 %v400
  %v1081 = vpop.f32.mrf.mxu0
  %v1082 = vadd.f32 %v741, %v1081
  %1083 = vmatmul.f32.gmra.mxu0 %v403
  %v1084 = vpop.f32.mrf.mxu0
  %v1085 = vadd.f32 %v744, %v1084
  %1086 = vmatmul.f32.gmra.mxu0 %v406
  %v1087 = vpop.f32.mrf.mxu0
  %v1088 = vadd.f32 %v747, %v1087
  %1089 = vmatmul.f32.gmra.mxu0 %v409
  %v1090 = vpop.f32.mrf.mxu0
  %v1091 = vadd.f32 %v750, %v1090
  %1092 = vmatmul.f32.gmra.mxu0 %v412
  %v1093 = vpop.f32.mrf.mxu0
  %v1094 = vadd.f32 %v753, %v1093
  %1095 = vmatmul.f32.gmra.mxu0 %v415
  %v1096 = vpop.f32.mrf.mxu0
  %v1097 = vadd.f32 %v756, %v1096
  %1098 = vmatmul.f32.gmra.mxu0 %v418
  %v1099 = vpop.f32.mrf.mxu0
  %v1100 = vadd.f32 %v759, %v1099
  %1101 = vmatmul.f32.gmra.mxu0 %v421
  %v1102 = vpop.f32.mrf.mxu0
  %v1103 = vadd.f32 %v762, %v1102
  %1104 = vmatmul.f32.gmra.mxu0 %v424
  %v1105 = vpop.f32.mrf.mxu0
  %v1106 = vadd.f32 %v765, %v1105
  %1107 = vmatmul.f32.gmra.mxu0 %v427
  %v1108 = vpop.f32.mrf.mxu0
  %v1109 = vadd.f32 %v768, %v1108
  %1110 = vmatmul.f32.gmra.mxu0 %v430
  %v1111 = vpop.f32.mrf.mxu0
  %v1112 = vadd.f32 %v771, %v1111
  %1113 = vmatmul.f32.gmra.mxu0 %v433
  %v1114 = vpop.f32.mrf.mxu0
  %v1115 = vadd.f32 %v774, %v1114
  %1116 = vmatmul.f32.gmra.mxu0 %v436
  %v1117 = vpop.f32.mrf.mxu0
  %v1118 = vadd.f32 %v777, %v1117
  %1119 = vmatmul.f32.gmra.mxu0 %v439
  %v1120 = vpop.f32.mrf.mxu0
  %v1121 = vadd.f32 %v780, %v1120
  %1122 = vmatmul.f32.gmra.mxu0 %v442
  %v1123 = vpop.f32.mrf.mxu0
  %v1124 = vadd.f32 %v783, %v1123
  %1125 = vmatmul.f32.gmra.mxu0 %v445
  %v1126 = vpop.f32.mrf.mxu0
  %v1127 = vadd.f32 %v786, %v1126
  %1128 = vmatmul.f32.gmra.mxu0 %v448
  %v1129 = vpop.f32.mrf.mxu0
  %v1130 = vadd.f32 %v789, %v1129
  %1131 = vmatmul.f32.gmra.mxu0 %v451
  %v1132 = vpop.f32.mrf.mxu0
  %v1133 = vadd.f32 %v792, %v1132
  %1134 = vmatmul.f32.gmra.mxu0 %v454
  %v1135 = vpop.f32.mrf.mxu0
  %v1136 = vadd.f32 %v795, %v1135
  %1137 = vmatmul.f32.gmra.mxu0 %v457
  %v1138 = vpop.f32.mrf.mxu0
  %v1139 = vadd.f32 %v798, %v1138
  %1140 = vmatmul.f32.gmra.mxu0 %v460
  %v1141 = vpop.f32.mrf.mxu0
  %v1142 = vadd.f32 %v801, %v1141
  %1143 = vmatmul.f32.gmra.mxu0 %v463
  %v1144 = vpop.f32.mrf.mxu0
  %v1145 = vadd.f32 %v804, %v1144
  %1146 = vmatmul.f32.gmra.mxu0 %v466
  %v1147 = vpop.f32.mrf.mxu0
  %v1148 = vadd.f32 %v807, %v1147
  %1149 = vmatmul.f32.gmra.mxu0 %v469
  %v1150 = vpop.f32.mrf.mxu0
  %v1151 = vadd.f32 %v810, %v1150
  %1152 = vmatmul.f32.gmra.mxu0 %v472
  %v1153 = vpop.f32.mrf.mxu0
  %v1154 = vadd.f32 %v813, %v1153
  %1155 = vmatmul.f32.gmra.mxu0 %v475
  %v1156 = vpop.f32.mrf.mxu0
  %v1157 = vadd.f32 %v816, %v1156
  %1158 = vmatmul.f32.gmra.mxu0 %v478
  %v1159 = vpop.f32.mrf.mxu0
  %v1160 = vadd.f32 %v819, %v1159
  %1161 = vmatmul.f32.gmra.mxu0 %v481
  %v1162 = vpop.f32.mrf.mxu0
  %v1163 = vadd.f32 %v822, %v1162
  %1164 = vmatmul.f32.gmra.mxu0 %v484
  %v1165 = vpop.f32.mrf.mxu0
  %v1166 = vadd.f32 %v825, %v1165
  %1167 = vmatmul.f32.gmra.mxu0 %v487
  %v1168 = vpop.f32.mrf.mxu0
  %v1169 = vadd.f32 %v828, %v1168
  %1170 = vmatmul.f32.gmra.mxu0 %v490
  %v1171 = vpop.f32.mrf.mxu0
  %v1172 = vadd.f32 %v831, %v1171
  %1173 = vmatmul.f32.gmra.mxu0 %v493
  %v1174 = vpop.f32.mrf.mxu0
  %v1175 = vadd.f32 %v834, %v1174
  %1176 = vmatmul.f32.gmra.mxu0 %v496
  %v1177 = vpop.f32.mrf.mxu0
  %v1178 = vadd.f32 %v837, %v1177
  %1179 = vmatmul.f32.gmra.mxu0 %v499
  %v1180 = vpop.f32.mrf.mxu0
  %v1181 = vadd.f32 %v840, %v1180
  %1182 = vmatmul.f32.gmra.mxu0 %v502
  %v1183 = vpop.f32.mrf.mxu0
  %v1184 = vadd.f32 %v843, %v1183
  %1185 = vmatmul.f32.gmra.mxu0 %v505
  %v1186 = vpop.f32.mrf.mxu0
  %v1187 = vadd.f32 %v846, %v1186
  %1188 = vmatmul.f32.gmra.mxu0 %v508
  %v1189 = vpop.f32.mrf.mxu0
  %v1190 = vadd.f32 %v849, %v1189
  %1191 = vmatmul.f32.gmra.mxu0 %v511
  %v1192 = vpop.f32.mrf.mxu0
  %v1193 = vadd.f32 %v852, %v1192
  %1194 = vmatmul.f32.gmra.mxu0 %v514
  %v1195 = vpop.f32.mrf.mxu0
  %v1196 = vadd.f32 %v855, %v1195
  %1197 = vmatmul.f32.gmra.mxu0 %v517
  %v1198 = vpop.f32.mrf.mxu0
  %v1199 = vadd.f32 %v858, %v1198
  %1200 = vmatmul.f32.gmra.mxu0 %v520
  %v1201 = vpop.f32.mrf.mxu0
  %v1202 = vadd.f32 %v861, %v1201
  %1203 = vmatmul.f32.gmra.mxu0 %v523
  %v1204 = vpop.f32.mrf.mxu0
  %v1205 = vadd.f32 %v864, %v1204
  %1206 = vmatmul.f32.gmra.mxu0 %v526
  %v1207 = vpop.f32.mrf.mxu0
  %v1208 = vadd.f32 %v867, %v1207
  %1209 = vmatmul.f32.gmra.mxu0 %v529
  %v1210 = vpop.f32.mrf.mxu0
  %v1211 = vadd.f32 %v870, %v1210
  %1212 = vmatmul.f32.gmra.mxu0 %v532
  %v1213 = vpop.f32.mrf.mxu0
  %v1214 = vadd.f32 %v873, %v1213
  %1215 = vmatmul.f32.gmra.mxu0 %v535
  %v1216 = vpop.f32.mrf.mxu0
  %v1217 = vadd.f32 %v876, %v1216
  %1218 = vmatmul.f32.gmra.mxu0 %v538
  %v1219 = vpop.f32.mrf.mxu0
  %v1220 = vadd.f32 %v879, %v1219
  %1221 = vmatmul.f32.gmra.mxu0 %v541
  %v1222 = vpop.f32.mrf.mxu0
  %v1223 = vadd.f32 %v882, %v1222
  %1224 = vmatmul.f32.gmra.mxu0 %v544
  %v1225 = vpop.f32.mrf.mxu0
  %v1226 = vadd.f32 %v885, %v1225
  %1227 = vmatmul.f32.gmra.mxu0 %v547
  %v1228 = vpop.f32.mrf.mxu0
  %v1229 = vadd.f32 %v888, %v1228
  %1230 = vmatmul.f32.gmra.mxu0 %v550
  %v1231 = vpop.f32.mrf.mxu0
  %v1232 = vadd.f32 %v891, %v1231
  %1233 = vmatmul.f32.gmra.mxu0 %v553
  %v1234 = vpop.f32.mrf.mxu0
  %v1235 = vadd.f32 %v894, %v1234
  %1236 = vmatmul.f32.gmra.mxu0 %v556
  %v1237 = vpop.f32.mrf.mxu0
  %v1238 = vadd.f32 %v897, %v1237
  %1239 = vmatmul.f32.gmra.mxu0 %v559
  %v1240 = vpop.f32.mrf.mxu0
  %v1241 = vadd.f32 %v900, %v1240
  %1242 = vmatmul.f32.gmra.mxu0 %v562
  %v1243 = vpop.f32.mrf.mxu0
  %v1244 = vadd.f32 %v903, %v1243
  %1245 = vmatmul.f32.gmra.mxu0 %v565
  %v1246 = vpop.f32.mrf.mxu0
  %v1247 = vadd.f32 %v906, %v1246
  %1248 = vmatmul.f32.gmra.mxu0 %v568
  %v1249 = vpop.f32.mrf.mxu0
  %v1250 = vadd.f32 %v909, %v1249
  %1251 = vmatmul.f32.gmra.mxu0 %v571
  %v1252 = vpop.f32.mrf.mxu0
  %v1253 = vadd.f32 %v912, %v1252
  %1254 = vmatmul.f32.gmra.mxu0 %v574
  %v1255 = vpop.f32.mrf.mxu0
  %v1256 = vadd.f32 %v915, %v1255
  %1257 = vmatmul.f32.gmra.mxu0 %v577
  %v1258 = vpop.f32.mrf.mxu0
  %v1259 = vadd.f32 %v918, %v1258
  %1260 = vmatmul.f32.gmra.mxu0 %v580
  %v1261 = vpop.f32.mrf.mxu0
  %v1262 = vadd.f32 %v921, %v1261
  %1263 = vmatmul.f32.gmra.mxu0 %v583
  %v1264 = vpop.f32.mrf.mxu0
  %v1265 = vadd.f32 %v924, %v1264
  %1266 = vmatmul.f32.gmra.mxu0 %v586
  %v1267 = vpop.f32.mrf.mxu0
  %v1268 = vadd.f32 %v927, %v1267
  %1269 = vmatmul.f32.gmra.mxu0 %v589
  %v1270 = vpop.f32.mrf.mxu0
  %v1271 = vadd.f32 %v930, %v1270
  %1272 = vmatmul.f32.gmra.mxu0 %v592
  %v1273 = vpop.f32.mrf.mxu0
  %v1274 = vadd.f32 %v933, %v1273
  %1275 = vmatmul.f32.gmra.mxu0 %v595
  %v1276 = vpop.f32.mrf.mxu0
  %v1277 = vadd.f32 %v936, %v1276
  %1278 = vmatmul.f32.gmra.mxu0 %v598
  %v1279 = vpop.f32.mrf.mxu0
  %v1280 = vadd.f32 %v939, %v1279
  %1281 = vmatmul.f32.gmra.mxu0 %v601
  %v1282 = vpop.f32.mrf.mxu0
  %v1283 = vadd.f32 %v942, %v1282
  %1284 = vmatmul.f32.gmra.mxu0 %v604
  %v1285 = vpop.f32.mrf.mxu0
  %v1286 = vadd.f32 %v945, %v1285
  %1287 = vmatmul.f32.gmra.mxu0 %v607
  %v1288 = vpop.f32.mrf.mxu0
  %v1289 = vadd.f32 %v948, %v1288
  %1290 = vmatmul.f32.gmra.mxu0 %v610
  %v1291 = vpop.f32.mrf.mxu0
  %v1292 = vadd.f32 %v951, %v1291
  %1293 = vmatmul.f32.gmra.mxu0 %v613
  %v1294 = vpop.f32.mrf.mxu0
  %v1295 = vadd.f32 %v954, %v1294
  %1296 = vmatmul.f32.gmra.mxu0 %v616
  %v1297 = vpop.f32.mrf.mxu0
  %v1298 = vadd.f32 %v957, %v1297
  %1299 = vmatmul.f32.gmra.mxu0 %v619
  %v1300 = vpop.f32.mrf.mxu0
  %v1301 = vadd.f32 %v960, %v1300
  %1302 = vmatmul.f32.gmra.mxu0 %v622
  %v1303 = vpop.f32.mrf.mxu0
  %v1304 = vadd.f32 %v963, %v1303
  %1305 = vmatmul.f32.gmra.mxu0 %v625
  %v1306 = vpop.f32.mrf.mxu0
  %v1307 = vadd.f32 %v966, %v1306
  %1308 = vmatmul.f32.gmra.mxu0 %v628
  %v1309 = vpop.f32.mrf.mxu0
  %v1310 = vadd.f32 %v969, %v1309
  %1311 = vmatmul.f32.gmra.mxu0 %v631
  %v1312 = vpop.f32.mrf.mxu0
  %v1313 = vadd.f32 %v972, %v1312
  %1314 = vmatmul.f32.gmra.mxu0 %v634
  %v1315 = vpop.f32.mrf.mxu0
  %v1316 = vadd.f32 %v975, %v1315
  %1317 = vmatmul.f32.gmra.mxu0 %v637
  %v1318 = vpop.f32.mrf.mxu0
  %v1319 = vadd.f32 %v978, %v1318
  %1320 = vmatmul.f32.gmra.mxu0 %v640
  %v1321 = vpop.f32.mrf.mxu0
  %v1322 = vadd.f32 %v981, %v1321
  %1323 = vmatmul.f32.gmra.mxu0 %v643
  %v1324 = vpop.f32.mrf.mxu0
  %v1325 = vadd.f32 %v984, %v1324
  %1326 = vmatmul.f32.gmra.mxu0 %v646
  %v1327 = vpop.f32.mrf.mxu0
  %v1328 = vadd.f32 %v987, %v1327
  %1329 = vmatmul.f32.gmra.mxu0 %v649
  %v1330 = vpop.f32.mrf.mxu0
  %v1331 = vadd.f32 %v990, %v1330
  %1332 = vmatmul.f32.gmra.mxu0 %v652
  %v1333 = vpop.f32.mrf.mxu0
  %v1334 = vadd.f32 %v993, %v1333
  %1335 = vmatmul.f32.gmra.mxu0 %v655
  %v1336 = vpop.f32.mrf.mxu0
  %v1337 = vadd.f32 %v996, %v1336
  %1338 = vmatmul.f32.gmra.mxu0 %v658
  %v1339 = vpop.f32.mrf.mxu0
  %v1340 = vadd.f32 %v999, %v1339
  %1341 = vmatmul.f32.gmra.mxu0 %v661
  %v1342 = vpop.f32.mrf.mxu0
  %v1343 = vadd.f32 %v1002, %v1342
  %1344 = vmatmul.f32.gmra.mxu0 %v664
  %v1345 = vpop.f32.mrf.mxu0
  %v1346 = vadd.f32 %v1005, %v1345
  %1347 = vmatmul.f32.gmra.mxu0 %v667
  %v1348 = vpop.f32.mrf.mxu0
  %v1349 = vadd.f32 %v1008, %v1348
  %1350 = vdwg.mxu0
  %1351 = vmatpush.msra.mxu0 %v123
  %1352 = vmatpush.msra.mxu0 %v121
  %1353 = vmatpush.msra.mxu0 %v119
  %1354 = vmatpush.msra.mxu0 %v117
  %1355 = vmatpush.msra.mxu0 %v115
  %1356 = vmatpush.msra.mxu0 %v113
  %1357 = vmatpush.msra.mxu0 %v111
  %1358 = vmatpush.msra.mxu0 %v109
  %1359 = vmatpush.msra.mxu0 %v107
  %1360 = vmatpush.msra.mxu0 %v105
  %1361 = vmatpush.msra.mxu0 %v103
  %1362 = vmatpush.msra.mxu0 %v101
  %1363 = vmatpush.msra.mxu0 %v99
  %1364 = vmatpush.msra.mxu0 %v97
  %1365 = vmatpush.msra.mxu0 %v95
  %1366 = vmatpush.msra.mxu0 %v93
  %1367 = vmatmul.f32.gmra.mxu0 %v128
  %v1368 = vpop.f32.mrf.mxu0
  %v1369 = vadd.f32 0.0, %v1368
  %1370 = vmatmul.f32.gmra.mxu0 %v130
  %v1371 = vpop.f32.mrf.mxu0
  %v1372 = vadd.f32 0.0, %v1371
  %1373 = vmatmul.f32.gmra.mxu0 %v132
  %v1374 = vpop.f32.mrf.mxu0
  %v1375 = vadd.f32 0.0, %v1374
  %1376 = vmatmul.f32.gmra.mxu0 %v134
  %v1377 = vpop.f32.mrf.mxu0
  %v1378 = vadd.f32 0.0, %v1377
  %1379 = vmatmul.f32.gmra.mxu0 %v136
  %v1380 = vpop.f32.mrf.mxu0
  %v1381 = vadd.f32 0.0, %v1380
  %1382 = vmatmul.f32.gmra.mxu0 %v138
  %v1383 = vpop.f32.mrf.mxu0
  %v1384 = vadd.f32 0.0, %v1383
  %1385 = vmatmul.f32.gmra.mxu0 %v140
  %v1386 = vpop.f32.mrf.mxu0
  %v1387 = vadd.f32 0.0, %v1386
  %1388 = vmatmul.f32.gmra.mxu0 %v142
  %v1389 = vpop.f32.mrf.mxu0
  %v1390 = vadd.f32 0.0, %v1389
  %1391 = vmatmul.f32.gmra.mxu0 %v144
  %v1392 = vpop.f32.mrf.mxu0
  %v1393 = vadd.f32 0.0, %v1392
  %1394 = vmatmul.f32.gmra.mxu0 %v146
  %v1395 = vpop.f32.mrf.mxu0
  %v1396 = vadd.f32 0.0, %v1395
  %1397 = vmatmul.f32.gmra.mxu0 %v148
  %v1398 = vpop.f32.mrf.mxu0
  %v1399 = vadd.f32 0.0, %v1398
  %1400 = vmatmul.f32.gmra.mxu0 %v150
  %v1401 = vpop.f32.mrf.mxu0
  %v1402 = vadd.f32 0.0, %v1401
  %1403 = vmatmul.f32.gmra.mxu0 %v152
  %v1404 = vpop.f32.mrf.mxu0
  %v1405 = vadd.f32 0.0, %v1404
  %1406 = vmatmul.f32.gmra.mxu0 %v154
  %v1407 = vpop.f32.mrf.mxu0
  %v1408 = vadd.f32 0.0, %v1407
  %1409 = vmatmul.f32.gmra.mxu0 %v156
  %v1410 = vpop.f32.mrf.mxu0
  %v1411 = vadd.f32 0.0, %v1410
  %1412 = vmatmul.f32.gmra.mxu0 %v158
  %v1413 = vpop.f32.mrf.mxu0
  %v1414 = vadd.f32 0.0, %v1413
  %1415 = vmatmul.f32.gmra.mxu0 %v160
  %v1416 = vpop.f32.mrf.mxu0
  %v1417 = vadd.f32 0.0, %v1416
  %1418 = vmatmul.f32.gmra.mxu0 %v162
  %v1419 = vpop.f32.mrf.mxu0
  %v1420 = vadd.f32 0.0, %v1419
  %1421 = vmatmul.f32.gmra.mxu0 %v164
  %v1422 = vpop.f32.mrf.mxu0
  %v1423 = vadd.f32 0.0, %v1422
  %1424 = vmatmul.f32.gmra.mxu0 %v166
  %v1425 = vpop.f32.mrf.mxu0
  %v1426 = vadd.f32 0.0, %v1425
  %1427 = vmatmul.f32.gmra.mxu0 %v168
  %v1428 = vpop.f32.mrf.mxu0
  %v1429 = vadd.f32 0.0, %v1428
  %1430 = vmatmul.f32.gmra.mxu0 %v170
  %v1431 = vpop.f32.mrf.mxu0
  %v1432 = vadd.f32 0.0, %v1431
  %1433 = vmatmul.f32.gmra.mxu0 %v172
  %v1434 = vpop.f32.mrf.mxu0
  %v1435 = vadd.f32 0.0, %v1434
  %1436 = vmatmul.f32.gmra.mxu0 %v174
  %v1437 = vpop.f32.mrf.mxu0
  %v1438 = vadd.f32 0.0, %v1437
  %1439 = vmatmul.f32.gmra.mxu0 %v176
  %v1440 = vpop.f32.mrf.mxu0
  %v1441 = vadd.f32 0.0, %v1440
  %1442 = vmatmul.f32.gmra.mxu0 %v178
  %v1443 = vpop.f32.mrf.mxu0
  %v1444 = vadd.f32 0.0, %v1443
  %1445 = vmatmul.f32.gmra.mxu0 %v180
  %v1446 = vpop.f32.mrf.mxu0
  %v1447 = vadd.f32 0.0, %v1446
  %1448 = vmatmul.f32.gmra.mxu0 %v182
  %v1449 = vpop.f32.mrf.mxu0
  %v1450 = vadd.f32 0.0, %v1449
  %1451 = vmatmul.f32.gmra.mxu0 %v184
  %v1452 = vpop.f32.mrf.mxu0
  %v1453 = vadd.f32 0.0, %v1452
  %1454 = vmatmul.f32.gmra.mxu0 %v186
  %v1455 = vpop.f32.mrf.mxu0
  %v1456 = vadd.f32 0.0, %v1455
  %1457 = vmatmul.f32.gmra.mxu0 %v188
  %v1458 = vpop.f32.mrf.mxu0
  %v1459 = vadd.f32 0.0, %v1458
  %1460 = vmatmul.f32.gmra.mxu0 %v190
  %v1461 = vpop.f32.mrf.mxu0
  %v1462 = vadd.f32 0.0, %v1461
  %1463 = vmatmul.f32.gmra.mxu0 %v192
  %v1464 = vpop.f32.mrf.mxu0
  %v1465 = vadd.f32 0.0, %v1464
  %1466 = vmatmul.f32.gmra.mxu0 %v194
  %v1467 = vpop.f32.mrf.mxu0
  %v1468 = vadd.f32 0.0, %v1467
  %1469 = vmatmul.f32.gmra.mxu0 %v196
  %v1470 = vpop.f32.mrf.mxu0
  %v1471 = vadd.f32 0.0, %v1470
  %1472 = vmatmul.f32.gmra.mxu0 %v198
  %v1473 = vpop.f32.mrf.mxu0
  %v1474 = vadd.f32 0.0, %v1473
  %1475 = vmatmul.f32.gmra.mxu0 %v200
  %v1476 = vpop.f32.mrf.mxu0
  %v1477 = vadd.f32 0.0, %v1476
  %1478 = vmatmul.f32.gmra.mxu0 %v202
  %v1479 = vpop.f32.mrf.mxu0
  %v1480 = vadd.f32 0.0, %v1479
  %1481 = vmatmul.f32.gmra.mxu0 %v204
  %v1482 = vpop.f32.mrf.mxu0
  %v1483 = vadd.f32 0.0, %v1482
  %1484 = vmatmul.f32.gmra.mxu0 %v206
  %v1485 = vpop.f32.mrf.mxu0
  %v1486 = vadd.f32 0.0, %v1485
  %1487 = vmatmul.f32.gmra.mxu0 %v208
  %v1488 = vpop.f32.mrf.mxu0
  %v1489 = vadd.f32 0.0, %v1488
  %1490 = vmatmul.f32.gmra.mxu0 %v210
  %v1491 = vpop.f32.mrf.mxu0
  %v1492 = vadd.f32 0.0, %v1491
  %1493 = vmatmul.f32.gmra.mxu0 %v212
  %v1494 = vpop.f32.mrf.mxu0
  %v1495 = vadd.f32 0.0, %v1494
  %1496 = vmatmul.f32.gmra.mxu0 %v214
  %v1497 = vpop.f32.mrf.mxu0
  %v1498 = vadd.f32 0.0, %v1497
  %1499 = vmatmul.f32.gmra.mxu0 %v216
  %v1500 = vpop.f32.mrf.mxu0
  %v1501 = vadd.f32 0.0, %v1500
  %1502 = vmatmul.f32.gmra.mxu0 %v218
  %v1503 = vpop.f32.mrf.mxu0
  %v1504 = vadd.f32 0.0, %v1503
  %1505 = vmatmul.f32.gmra.mxu0 %v220
  %v1506 = vpop.f32.mrf.mxu0
  %v1507 = vadd.f32 0.0, %v1506
  %1508 = vmatmul.f32.gmra.mxu0 %v222
  %v1509 = vpop.f32.mrf.mxu0
  %v1510 = vadd.f32 0.0, %v1509
  %1511 = vmatmul.f32.gmra.mxu0 %v224
  %v1512 = vpop.f32.mrf.mxu0
  %v1513 = vadd.f32 0.0, %v1512
  %1514 = vmatmul.f32.gmra.mxu0 %v226
  %v1515 = vpop.f32.mrf.mxu0
  %v1516 = vadd.f32 0.0, %v1515
  %1517 = vmatmul.f32.gmra.mxu0 %v228
  %v1518 = vpop.f32.mrf.mxu0
  %v1519 = vadd.f32 0.0, %v1518
  %1520 = vmatmul.f32.gmra.mxu0 %v230
  %v1521 = vpop.f32.mrf.mxu0
  %v1522 = vadd.f32 0.0, %v1521
  %1523 = vmatmul.f32.gmra.mxu0 %v232
  %v1524 = vpop.f32.mrf.mxu0
  %v1525 = vadd.f32 0.0, %v1524
  %1526 = vmatmul.f32.gmra.mxu0 %v234
  %v1527 = vpop.f32.mrf.mxu0
  %v1528 = vadd.f32 0.0, %v1527
  %1529 = vmatmul.f32.gmra.mxu0 %v236
  %v1530 = vpop.f32.mrf.mxu0
  %v1531 = vadd.f32 0.0, %v1530
  %1532 = vmatmul.f32.gmra.mxu0 %v238
  %v1533 = vpop.f32.mrf.mxu0
  %v1534 = vadd.f32 0.0, %v1533
  %1535 = vmatmul.f32.gmra.mxu0 %v240
  %v1536 = vpop.f32.mrf.mxu0
  %v1537 = vadd.f32 0.0, %v1536
  %1538 = vmatmul.f32.gmra.mxu0 %v242
  %v1539 = vpop.f32.mrf.mxu0
  %v1540 = vadd.f32 0.0, %v1539
  %1541 = vmatmul.f32.gmra.mxu0 %v244
  %v1542 = vpop.f32.mrf.mxu0
  %v1543 = vadd.f32 0.0, %v1542
  %1544 = vmatmul.f32.gmra.mxu0 %v246
  %v1545 = vpop.f32.mrf.mxu0
  %v1546 = vadd.f32 0.0, %v1545
  %1547 = vmatmul.f32.gmra.mxu0 %v248
  %v1548 = vpop.f32.mrf.mxu0
  %v1549 = vadd.f32 0.0, %v1548
  %1550 = vmatmul.f32.gmra.mxu0 %v250
  %v1551 = vpop.f32.mrf.mxu0
  %v1552 = vadd.f32 0.0, %v1551
  %1553 = vmatmul.f32.gmra.mxu0 %v252
  %v1554 = vpop.f32.mrf.mxu0
  %v1555 = vadd.f32 0.0, %v1554
  %1556 = vmatmul.f32.gmra.mxu0 %v254
  %v1557 = vpop.f32.mrf.mxu0
  %v1558 = vadd.f32 0.0, %v1557
  %1559 = vmatmul.f32.gmra.mxu0 %v256
  %v1560 = vpop.f32.mrf.mxu0
  %v1561 = vadd.f32 0.0, %v1560
  %1562 = vmatmul.f32.gmra.mxu0 %v258
  %v1563 = vpop.f32.mrf.mxu0
  %v1564 = vadd.f32 0.0, %v1563
  %1565 = vmatmul.f32.gmra.mxu0 %v260
  %v1566 = vpop.f32.mrf.mxu0
  %v1567 = vadd.f32 0.0, %v1566
  %1568 = vmatmul.f32.gmra.mxu0 %v262
  %v1569 = vpop.f32.mrf.mxu0
  %v1570 = vadd.f32 0.0, %v1569
  %1571 = vmatmul.f32.gmra.mxu0 %v264
  %v1572 = vpop.f32.mrf.mxu0
  %v1573 = vadd.f32 0.0, %v1572
  %1574 = vmatmul.f32.gmra.mxu0 %v266
  %v1575 = vpop.f32.mrf.mxu0
  %v1576 = vadd.f32 0.0, %v1575
  %1577 = vmatmul.f32.gmra.mxu0 %v268
  %v1578 = vpop.f32.mrf.mxu0
  %v1579 = vadd.f32 0.0, %v1578
  %1580 = vmatmul.f32.gmra.mxu0 %v270
  %v1581 = vpop.f32.mrf.mxu0
  %v1582 = vadd.f32 0.0, %v1581
  %1583 = vmatmul.f32.gmra.mxu0 %v272
  %v1584 = vpop.f32.mrf.mxu0
  %v1585 = vadd.f32 0.0, %v1584
  %1586 = vmatmul.f32.gmra.mxu0 %v274
  %v1587 = vpop.f32.mrf.mxu0
  %v1588 = vadd.f32 0.0, %v1587
  %1589 = vmatmul.f32.gmra.mxu0 %v276
  %v1590 = vpop.f32.mrf.mxu0
  %v1591 = vadd.f32 0.0, %v1590
  %1592 = vmatmul.f32.gmra.mxu0 %v278
  %v1593 = vpop.f32.mrf.mxu0
  %v1594 = vadd.f32 0.0, %v1593
  %1595 = vmatmul.f32.gmra.mxu0 %v280
  %v1596 = vpop.f32.mrf.mxu0
  %v1597 = vadd.f32 0.0, %v1596
  %1598 = vmatmul.f32.gmra.mxu0 %v282
  %v1599 = vpop.f32.mrf.mxu0
  %v1600 = vadd.f32 0.0, %v1599
  %1601 = vmatmul.f32.gmra.mxu0 %v284
  %v1602 = vpop.f32.mrf.mxu0
  %v1603 = vadd.f32 0.0, %v1602
  %1604 = vmatmul.f32.gmra.mxu0 %v286
  %v1605 = vpop.f32.mrf.mxu0
  %v1606 = vadd.f32 0.0, %v1605
  %1607 = vmatmul.f32.gmra.mxu0 %v288
  %v1608 = vpop.f32.mrf.mxu0
  %v1609 = vadd.f32 0.0, %v1608
  %1610 = vmatmul.f32.gmra.mxu0 %v290
  %v1611 = vpop.f32.mrf.mxu0
  %v1612 = vadd.f32 0.0, %v1611
  %1613 = vmatmul.f32.gmra.mxu0 %v292
  %v1614 = vpop.f32.mrf.mxu0
  %v1615 = vadd.f32 0.0, %v1614
  %1616 = vmatmul.f32.gmra.mxu0 %v294
  %v1617 = vpop.f32.mrf.mxu0
  %v1618 = vadd.f32 0.0, %v1617
  %1619 = vmatmul.f32.gmra.mxu0 %v296
  %v1620 = vpop.f32.mrf.mxu0
  %v1621 = vadd.f32 0.0, %v1620
  %1622 = vmatmul.f32.gmra.mxu0 %v298
  %v1623 = vpop.f32.mrf.mxu0
  %v1624 = vadd.f32 0.0, %v1623
  %1625 = vmatmul.f32.gmra.mxu0 %v300
  %v1626 = vpop.f32.mrf.mxu0
  %v1627 = vadd.f32 0.0, %v1626
  %1628 = vmatmul.f32.gmra.mxu0 %v302
  %v1629 = vpop.f32.mrf.mxu0
  %v1630 = vadd.f32 0.0, %v1629
  %1631 = vmatmul.f32.gmra.mxu0 %v304
  %v1632 = vpop.f32.mrf.mxu0
  %v1633 = vadd.f32 0.0, %v1632
  %1634 = vmatmul.f32.gmra.mxu0 %v306
  %v1635 = vpop.f32.mrf.mxu0
  %v1636 = vadd.f32 0.0, %v1635
  %1637 = vmatmul.f32.gmra.mxu0 %v308
  %v1638 = vpop.f32.mrf.mxu0
  %v1639 = vadd.f32 0.0, %v1638
  %1640 = vmatmul.f32.gmra.mxu0 %v310
  %v1641 = vpop.f32.mrf.mxu0
  %v1642 = vadd.f32 0.0, %v1641
  %1643 = vmatmul.f32.gmra.mxu0 %v312
  %v1644 = vpop.f32.mrf.mxu0
  %v1645 = vadd.f32 0.0, %v1644
  %1646 = vmatmul.f32.gmra.mxu0 %v314
  %v1647 = vpop.f32.mrf.mxu0
  %v1648 = vadd.f32 0.0, %v1647
  %1649 = vmatmul.f32.gmra.mxu0 %v316
  %v1650 = vpop.f32.mrf.mxu0
  %v1651 = vadd.f32 0.0, %v1650
  %1652 = vmatmul.f32.gmra.mxu0 %v318
  %v1653 = vpop.f32.mrf.mxu0
  %v1654 = vadd.f32 0.0, %v1653
  %1655 = vmatmul.f32.gmra.mxu0 %v320
  %v1656 = vpop.f32.mrf.mxu0
  %v1657 = vadd.f32 0.0, %v1656
  %1658 = vmatmul.f32.gmra.mxu0 %v322
  %v1659 = vpop.f32.mrf.mxu0
  %v1660 = vadd.f32 0.0, %v1659
  %1661 = vmatmul.f32.gmra.mxu0 %v324
  %v1662 = vpop.f32.mrf.mxu0
  %v1663 = vadd.f32 0.0, %v1662
  %1664 = vmatmul.f32.gmra.mxu0 %v326
  %v1665 = vpop.f32.mrf.mxu0
  %v1666 = vadd.f32 0.0, %v1665
  %1667 = vmatmul.f32.gmra.mxu0 %v328
  %v1668 = vpop.f32.mrf.mxu0
  %v1669 = vadd.f32 0.0, %v1668
  %1670 = vmatmul.f32.gmra.mxu0 %v330
  %v1671 = vpop.f32.mrf.mxu0
  %v1672 = vadd.f32 0.0, %v1671
  %1673 = vmatmul.f32.gmra.mxu0 %v332
  %v1674 = vpop.f32.mrf.mxu0
  %v1675 = vadd.f32 0.0, %v1674
  %1676 = vmatmul.f32.gmra.mxu0 %v334
  %v1677 = vpop.f32.mrf.mxu0
  %v1678 = vadd.f32 0.0, %v1677
  %1679 = vmatmul.f32.gmra.mxu0 %v336
  %v1680 = vpop.f32.mrf.mxu0
  %v1681 = vadd.f32 0.0, %v1680
  %1682 = vmatmul.f32.gmra.mxu0 %v338
  %v1683 = vpop.f32.mrf.mxu0
  %v1684 = vadd.f32 0.0, %v1683
  %1685 = vmatmul.f32.gmra.mxu0 %v340
  %v1686 = vpop.f32.mrf.mxu0
  %v1687 = vadd.f32 0.0, %v1686
  %1688 = vmatmul.f32.gmra.mxu0 %v342
  %v1689 = vpop.f32.mrf.mxu0
  %v1690 = vadd.f32 0.0, %v1689
  %1691 = vdwg.mxu0
  %1692 = vmatpush.msra.mxu0 0.0
  %1693 = vmatpush.msra.mxu0 0.0
  %1694 = vmatpush.msra.mxu0 0.0
  %1695 = vmatpush.msra.mxu0 0.0
  %1696 = vmatpush.msra.mxu0 0.0
  %1697 = vmatpush.msra.mxu0 0.0
  %1698 = vmatpush.msra.mxu0 0.0
  %1699 = vmatpush.msra.mxu0 0.0
  %1700 = vmatpush.msra.mxu0 0.0
  %1701 = vmatpush.msra.mxu0 0.0
  %1702 = vmatpush.msra.mxu0 0.0
  %1703 = vmatpush.msra.mxu0 0.0
  %1704 = vmatpush.msra.mxu0 0.0
  %1705 = vmatpush.msra.mxu0 0.0
  %1706 = vmatpush.msra.mxu0 %v127
  %1707 = vmatpush.msra.mxu0 %v125
  %1708 = vmatmul.f32.gmra.mxu0 %v346
  %v1709 = vpop.f32.mrf.mxu0
  %v1710 = vadd.f32 %v1369, %v1709
  %1711 = vmatmul.f32.gmra.mxu0 %v349
  %v1712 = vpop.f32.mrf.mxu0
  %v1713 = vadd.f32 %v1372, %v1712
  %1714 = vmatmul.f32.gmra.mxu0 %v352
  %v1715 = vpop.f32.mrf.mxu0
  %v1716 = vadd.f32 %v1375, %v1715
  %1717 = vmatmul.f32.gmra.mxu0 %v355
  %v1718 = vpop.f32.mrf.mxu0
  %v1719 = vadd.f32 %v1378, %v1718
  %1720 = vmatmul.f32.gmra.mxu0 %v358
  %v1721 = vpop.f32.mrf.mxu0
  %v1722 = vadd.f32 %v1381, %v1721
  %1723 = vmatmul.f32.gmra.mxu0 %v361
  %v1724 = vpop.f32.mrf.mxu0
  %v1725 = vadd.f32 %v1384, %v1724
  %1726 = vmatmul.f32.gmra.mxu0 %v364
  %v1727 = vpop.f32.mrf.mxu0
  %v1728 = vadd.f32 %v1387, %v1727
  %1729 = vmatmul.f32.gmra.mxu0 %v367
  %v1730 = vpop.f32.mrf.mxu0
  %v1731 = vadd.f32 %v1390, %v1730
  %1732 = vmatmul.f32.gmra.mxu0 %v370
  %v1733 = vpop.f32.mrf.mxu0
  %v1734 = vadd.f32 %v1393, %v1733
  %1735 = vmatmul.f32.gmra.mxu0 %v373
  %v1736 = vpop.f32.mrf.mxu0
  %v1737 = vadd.f32 %v1396, %v1736
  %1738 = vmatmul.f32.gmra.mxu0 %v376
  %v1739 = vpop.f32.mrf.mxu0
  %v1740 = vadd.f32 %v1399, %v1739
  %1741 = vmatmul.f32.gmra.mxu0 %v379
  %v1742 = vpop.f32.mrf.mxu0
  %v1743 = vadd.f32 %v1402, %v1742
  %1744 = vmatmul.f32.gmra.mxu0 %v382
  %v1745 = vpop.f32.mrf.mxu0
  %v1746 = vadd.f32 %v1405, %v1745
  %1747 = vmatmul.f32.gmra.mxu0 %v385
  %v1748 = vpop.f32.mrf.mxu0
  %v1749 = vadd.f32 %v1408, %v1748
  %1750 = vmatmul.f32.gmra.mxu0 %v388
  %v1751 = vpop.f32.mrf.mxu0
  %v1752 = vadd.f32 %v1411, %v1751
  %1753 = vmatmul.f32.gmra.mxu0 %v391
  %v1754 = vpop.f32.mrf.mxu0
  %v1755 = vadd.f32 %v1414, %v1754
  %1756 = vmatmul.f32.gmra.mxu0 %v394
  %v1757 = vpop.f32.mrf.mxu0
  %v1758 = vadd.f32 %v1417, %v1757
  %1759 = vmatmul.f32.gmra.mxu0 %v397
  %v1760 = vpop.f32.mrf.mxu0
  %v1761 = vadd.f32 %v1420, %v1760
  %1762 = vmatmul.f32.gmra.mxu0 %v400
  %v1763 = vpop.f32.mrf.mxu0
  %v1764 = vadd.f32 %v1423, %v1763
  %1765 = vmatmul.f32.gmra.mxu0 %v403
  %v1766 = vpop.f32.mrf.mxu0
  %v1767 = vadd.f32 %v1426, %v1766
  %1768 = vmatmul.f32.gmra.mxu0 %v406
  %v1769 = vpop.f32.mrf.mxu0
  %v1770 = vadd.f32 %v1429, %v1769
  %1771 = vmatmul.f32.gmra.mxu0 %v409
  %v1772 = vpop.f32.mrf.mxu0
  %v1773 = vadd.f32 %v1432, %v1772
  %1774 = vmatmul.f32.gmra.mxu0 %v412
  %v1775 = vpop.f32.mrf.mxu0
  %v1776 = vadd.f32 %v1435, %v1775
  %1777 = vmatmul.f32.gmra.mxu0 %v415
  %v1778 = vpop.f32.mrf.mxu0
  %v1779 = vadd.f32 %v1438, %v1778
  %1780 = vmatmul.f32.gmra.mxu0 %v418
  %v1781 = vpop.f32.mrf.mxu0
  %v1782 = vadd.f32 %v1441, %v1781
  %1783 = vmatmul.f32.gmra.mxu0 %v421
  %v1784 = vpop.f32.mrf.mxu0
  %v1785 = vadd.f32 %v1444, %v1784
  %1786 = vmatmul.f32.gmra.mxu0 %v424
  %v1787 = vpop.f32.mrf.mxu0
  %v1788 = vadd.f32 %v1447, %v1787
  %1789 = vmatmul.f32.gmra.mxu0 %v427
  %v1790 = vpop.f32.mrf.mxu0
  %v1791 = vadd.f32 %v1450, %v1790
  %1792 = vmatmul.f32.gmra.mxu0 %v430
  %v1793 = vpop.f32.mrf.mxu0
  %v1794 = vadd.f32 %v1453, %v1793
  %1795 = vmatmul.f32.gmra.mxu0 %v433
  %v1796 = vpop.f32.mrf.mxu0
  %v1797 = vadd.f32 %v1456, %v1796
  %1798 = vmatmul.f32.gmra.mxu0 %v436
  %v1799 = vpop.f32.mrf.mxu0
  %v1800 = vadd.f32 %v1459, %v1799
  %1801 = vmatmul.f32.gmra.mxu0 %v439
  %v1802 = vpop.f32.mrf.mxu0
  %v1803 = vadd.f32 %v1462, %v1802
  %1804 = vmatmul.f32.gmra.mxu0 %v442
  %v1805 = vpop.f32.mrf.mxu0
  %v1806 = vadd.f32 %v1465, %v1805
  %1807 = vmatmul.f32.gmra.mxu0 %v445
  %v1808 = vpop.f32.mrf.mxu0
  %v1809 = vadd.f32 %v1468, %v1808
  %1810 = vmatmul.f32.gmra.mxu0 %v448
  %v1811 = vpop.f32.mrf.mxu0
  %v1812 = vadd.f32 %v1471, %v1811
  %1813 = vmatmul.f32.gmra.mxu0 %v451
  %v1814 = vpop.f32.mrf.mxu0
  %v1815 = vadd.f32 %v1474, %v1814
  %1816 = vmatmul.f32.gmra.mxu0 %v454
  %v1817 = vpop.f32.mrf.mxu0
  %v1818 = vadd.f32 %v1477, %v1817
  %1819 = vmatmul.f32.gmra.mxu0 %v457
  %v1820 = vpop.f32.mrf.mxu0
  %v1821 = vadd.f32 %v1480, %v1820
  %1822 = vmatmul.f32.gmra.mxu0 %v460
  %v1823 = vpop.f32.mrf.mxu0
  %v1824 = vadd.f32 %v1483, %v1823
  %1825 = vmatmul.f32.gmra.mxu0 %v463
  %v1826 = vpop.f32.mrf.mxu0
  %v1827 = vadd.f32 %v1486, %v1826
  %1828 = vmatmul.f32.gmra.mxu0 %v466
  %v1829 = vpop.f32.mrf.mxu0
  %v1830 = vadd.f32 %v1489, %v1829
  %1831 = vmatmul.f32.gmra.mxu0 %v469
  %v1832 = vpop.f32.mrf.mxu0
  %v1833 = vadd.f32 %v1492, %v1832
  %1834 = vmatmul.f32.gmra.mxu0 %v472
  %v1835 = vpop.f32.mrf.mxu0
  %v1836 = vadd.f32 %v1495, %v1835
  %1837 = vmatmul.f32.gmra.mxu0 %v475
  %v1838 = vpop.f32.mrf.mxu0
  %v1839 = vadd.f32 %v1498, %v1838
  %1840 = vmatmul.f32.gmra.mxu0 %v478
  %v1841 = vpop.f32.mrf.mxu0
  %v1842 = vadd.f32 %v1501, %v1841
  %1843 = vmatmul.f32.gmra.mxu0 %v481
  %v1844 = vpop.f32.mrf.mxu0
  %v1845 = vadd.f32 %v1504, %v1844
  %1846 = vmatmul.f32.gmra.mxu0 %v484
  %v1847 = vpop.f32.mrf.mxu0
  %v1848 = vadd.f32 %v1507, %v1847
  %1849 = vmatmul.f32.gmra.mxu0 %v487
  %v1850 = vpop.f32.mrf.mxu0
  %v1851 = vadd.f32 %v1510, %v1850
  %1852 = vmatmul.f32.gmra.mxu0 %v490
  %v1853 = vpop.f32.mrf.mxu0
  %v1854 = vadd.f32 %v1513, %v1853
  %1855 = vmatmul.f32.gmra.mxu0 %v493
  %v1856 = vpop.f32.mrf.mxu0
  %v1857 = vadd.f32 %v1516, %v1856
  %1858 = vmatmul.f32.gmra.mxu0 %v496
  %v1859 = vpop.f32.mrf.mxu0
  %v1860 = vadd.f32 %v1519, %v1859
  %1861 = vmatmul.f32.gmra.mxu0 %v499
  %v1862 = vpop.f32.mrf.mxu0
  %v1863 = vadd.f32 %v1522, %v1862
  %1864 = vmatmul.f32.gmra.mxu0 %v502
  %v1865 = vpop.f32.mrf.mxu0
  %v1866 = vadd.f32 %v1525, %v1865
  %1867 = vmatmul.f32.gmra.mxu0 %v505
  %v1868 = vpop.f32.mrf.mxu0
  %v1869 = vadd.f32 %v1528, %v1868
  %1870 = vmatmul.f32.gmra.mxu0 %v508
  %v1871 = vpop.f32.mrf.mxu0
  %v1872 = vadd.f32 %v1531, %v1871
  %1873 = vmatmul.f32.gmra.mxu0 %v511
  %v1874 = vpop.f32.mrf.mxu0
  %v1875 = vadd.f32 %v1534, %v1874
  %1876 = vmatmul.f32.gmra.mxu0 %v514
  %v1877 = vpop.f32.mrf.mxu0
  %v1878 = vadd.f32 %v1537, %v1877
  %1879 = vmatmul.f32.gmra.mxu0 %v517
  %v1880 = vpop.f32.mrf.mxu0
  %v1881 = vadd.f32 %v1540, %v1880
  %1882 = vmatmul.f32.gmra.mxu0 %v520
  %v1883 = vpop.f32.mrf.mxu0
  %v1884 = vadd.f32 %v1543, %v1883
  %1885 = vmatmul.f32.gmra.mxu0 %v523
  %v1886 = vpop.f32.mrf.mxu0
  %v1887 = vadd.f32 %v1546, %v1886
  %1888 = vmatmul.f32.gmra.mxu0 %v526
  %v1889 = vpop.f32.mrf.mxu0
  %v1890 = vadd.f32 %v1549, %v1889
  %1891 = vmatmul.f32.gmra.mxu0 %v529
  %v1892 = vpop.f32.mrf.mxu0
  %v1893 = vadd.f32 %v1552, %v1892
  %1894 = vmatmul.f32.gmra.mxu0 %v532
  %v1895 = vpop.f32.mrf.mxu0
  %v1896 = vadd.f32 %v1555, %v1895
  %1897 = vmatmul.f32.gmra.mxu0 %v535
  %v1898 = vpop.f32.mrf.mxu0
  %v1899 = vadd.f32 %v1558, %v1898
  %1900 = vmatmul.f32.gmra.mxu0 %v538
  %v1901 = vpop.f32.mrf.mxu0
  %v1902 = vadd.f32 %v1561, %v1901
  %1903 = vmatmul.f32.gmra.mxu0 %v541
  %v1904 = vpop.f32.mrf.mxu0
  %v1905 = vadd.f32 %v1564, %v1904
  %1906 = vmatmul.f32.gmra.mxu0 %v544
  %v1907 = vpop.f32.mrf.mxu0
  %v1908 = vadd.f32 %v1567, %v1907
  %1909 = vmatmul.f32.gmra.mxu0 %v547
  %v1910 = vpop.f32.mrf.mxu0
  %v1911 = vadd.f32 %v1570, %v1910
  %1912 = vmatmul.f32.gmra.mxu0 %v550
  %v1913 = vpop.f32.mrf.mxu0
  %v1914 = vadd.f32 %v1573, %v1913
  %1915 = vmatmul.f32.gmra.mxu0 %v553
  %v1916 = vpop.f32.mrf.mxu0
  %v1917 = vadd.f32 %v1576, %v1916
  %1918 = vmatmul.f32.gmra.mxu0 %v556
  %v1919 = vpop.f32.mrf.mxu0
  %v1920 = vadd.f32 %v1579, %v1919
  %1921 = vmatmul.f32.gmra.mxu0 %v559
  %v1922 = vpop.f32.mrf.mxu0
  %v1923 = vadd.f32 %v1582, %v1922
  %1924 = vmatmul.f32.gmra.mxu0 %v562
  %v1925 = vpop.f32.mrf.mxu0
  %v1926 = vadd.f32 %v1585, %v1925
  %1927 = vmatmul.f32.gmra.mxu0 %v565
  %v1928 = vpop.f32.mrf.mxu0
  %v1929 = vadd.f32 %v1588, %v1928
  %1930 = vmatmul.f32.gmra.mxu0 %v568
  %v1931 = vpop.f32.mrf.mxu0
  %v1932 = vadd.f32 %v1591, %v1931
  %1933 = vmatmul.f32.gmra.mxu0 %v571
  %v1934 = vpop.f32.mrf.mxu0
  %v1935 = vadd.f32 %v1594, %v1934
  %1936 = vmatmul.f32.gmra.mxu0 %v574
  %v1937 = vpop.f32.mrf.mxu0
  %v1938 = vadd.f32 %v1597, %v1937
  %1939 = vmatmul.f32.gmra.mxu0 %v577
  %v1940 = vpop.f32.mrf.mxu0
  %v1941 = vadd.f32 %v1600, %v1940
  %1942 = vmatmul.f32.gmra.mxu0 %v580
  %v1943 = vpop.f32.mrf.mxu0
  %v1944 = vadd.f32 %v1603, %v1943
  %1945 = vmatmul.f32.gmra.mxu0 %v583
  %v1946 = vpop.f32.mrf.mxu0
  %v1947 = vadd.f32 %v1606, %v1946
  %1948 = vmatmul.f32.gmra.mxu0 %v586
  %v1949 = vpop.f32.mrf.mxu0
  %v1950 = vadd.f32 %v1609, %v1949
  %1951 = vmatmul.f32.gmra.mxu0 %v589
  %v1952 = vpop.f32.mrf.mxu0
  %v1953 = vadd.f32 %v1612, %v1952
  %1954 = vmatmul.f32.gmra.mxu0 %v592
  %v1955 = vpop.f32.mrf.mxu0
  %v1956 = vadd.f32 %v1615, %v1955
  %1957 = vmatmul.f32.gmra.mxu0 %v595
  %v1958 = vpop.f32.mrf.mxu0
  %v1959 = vadd.f32 %v1618, %v1958
  %1960 = vmatmul.f32.gmra.mxu0 %v598
  %v1961 = vpop.f32.mrf.mxu0
  %v1962 = vadd.f32 %v1621, %v1961
  %1963 = vmatmul.f32.gmra.mxu0 %v601
  %v1964 = vpop.f32.mrf.mxu0
  %v1965 = vadd.f32 %v1624, %v1964
  %1966 = vmatmul.f32.gmra.mxu0 %v604
  %v1967 = vpop.f32.mrf.mxu0
  %v1968 = vadd.f32 %v1627, %v1967
  %1969 = vmatmul.f32.gmra.mxu0 %v607
  %v1970 = vpop.f32.mrf.mxu0
  %v1971 = vadd.f32 %v1630, %v1970
  %1972 = vmatmul.f32.gmra.mxu0 %v610
  %v1973 = vpop.f32.mrf.mxu0
  %v1974 = vadd.f32 %v1633, %v1973
  %1975 = vmatmul.f32.gmra.mxu0 %v613
  %v1976 = vpop.f32.mrf.mxu0
  %v1977 = vadd.f32 %v1636, %v1976
  %1978 = vmatmul.f32.gmra.mxu0 %v616
  %v1979 = vpop.f32.mrf.mxu0
  %v1980 = vadd.f32 %v1639, %v1979
  %1981 = vmatmul.f32.gmra.mxu0 %v619
  %v1982 = vpop.f32.mrf.mxu0
  %v1983 = vadd.f32 %v1642, %v1982
  %1984 = vmatmul.f32.gmra.mxu0 %v622
  %v1985 = vpop.f32.mrf.mxu0
  %v1986 = vadd.f32 %v1645, %v1985
  %1987 = vmatmul.f32.gmra.mxu0 %v625
  %v1988 = vpop.f32.mrf.mxu0
  %v1989 = vadd.f32 %v1648, %v1988
  %1990 = vmatmul.f32.gmra.mxu0 %v628
  %v1991 = vpop.f32.mrf.mxu0
  %v1992 = vadd.f32 %v1651, %v1991
  %1993 = vmatmul.f32.gmra.mxu0 %v631
  %v1994 = vpop.f32.mrf.mxu0
  %v1995 = vadd.f32 %v1654, %v1994
  %1996 = vmatmul.f32.gmra.mxu0 %v634
  %v1997 = vpop.f32.mrf.mxu0
  %v1998 = vadd.f32 %v1657, %v1997
  %1999 = vmatmul.f32.gmra.mxu0 %v637
  %v2000 = vpop.f32.mrf.mxu0
  %v2001 = vadd.f32 %v1660, %v2000
  %2002 = vmatmul.f32.gmra.mxu0 %v640
  %v2003 = vpop.f32.mrf.mxu0
  %v2004 = vadd.f32 %v1663, %v2003
  %2005 = vmatmul.f32.gmra.mxu0 %v643
  %v2006 = vpop.f32.mrf.mxu0
  %v2007 = vadd.f32 %v1666, %v2006
  %2008 = vmatmul.f32.gmra.mxu0 %v646
  %v2009 = vpop.f32.mrf.mxu0
  %v2010 = vadd.f32 %v1669, %v2009
  %2011 = vmatmul.f32.gmra.mxu0 %v649
  %v2012 = vpop.f32.mrf.mxu0
  %v2013 = vadd.f32 %v1672, %v2012
  %2014 = vmatmul.f32.gmra.mxu0 %v652
  %v2015 = vpop.f32.mrf.mxu0
  %v2016 = vadd.f32 %v1675, %v2015
  %2017 = vmatmul.f32.gmra.mxu0 %v655
  %v2018 = vpop.f32.mrf.mxu0
  %v2019 = vadd.f32 %v1678, %v2018
  %2020 = vmatmul.f32.gmra.mxu0 %v658
  %v2021 = vpop.f32.mrf.mxu0
  %v2022 = vadd.f32 %v1681, %v2021
  %2023 = vmatmul.f32.gmra.mxu0 %v661
  %v2024 = vpop.f32.mrf.mxu0
  %v2025 = vadd.f32 %v1684, %v2024
  %2026 = vmatmul.f32.gmra.mxu0 %v664
  %v2027 = vpop.f32.mrf.mxu0
  %v2028 = vadd.f32 %v1687, %v2027
  %2029 = vmatmul.f32.gmra.mxu0 %v667
  %v2030 = vpop.f32.mrf.mxu0
  %v2031 = vadd.f32 %v1690, %v2030
  %2032 = vdwg.mxu0
  %vm2033 = vcmask 556032
  %v2034 = vsel %vm2033, %v93, 0.0
  %v2035 = vadd.f32 %v92, %v2034
  %2036 = vadd.xlane.f32.xlu0 %v2035
  %v2037 = vpop.xlane.xlu0 %2036
  %v2038 = vsel %vm2033, %v95, 0.0
  %v2039 = vadd.f32 %v94, %v2038
  %2040 = vadd.xlane.f32.xlu0 %v2039
  %v2041 = vpop.xlane.xlu0 %2040
  %v2042 = vsel %vm2033, %v97, 0.0
  %v2043 = vadd.f32 %v96, %v2042
  %2044 = vadd.xlane.f32.xlu0 %v2043
  %v2045 = vpop.xlane.xlu0 %2044
  %v2046 = vsel %vm2033, %v99, 0.0
  %v2047 = vadd.f32 %v98, %v2046
  %2048 = vadd.xlane.f32.xlu0 %v2047
  %v2049 = vpop.xlane.xlu0 %2048
  %v2050 = vsel %vm2033, %v101, 0.0
  %v2051 = vadd.f32 %v100, %v2050
  %2052 = vadd.xlane.f32.xlu0 %v2051
  %v2053 = vpop.xlane.xlu0 %2052
  %v2054 = vsel %vm2033, %v103, 0.0
  %v2055 = vadd.f32 %v102, %v2054
  %2056 = vadd.xlane.f32.xlu0 %v2055
  %v2057 = vpop.xlane.xlu0 %2056
  %v2058 = vsel %vm2033, %v105, 0.0
  %v2059 = vadd.f32 %v104, %v2058
  %2060 = vadd.xlane.f32.xlu0 %v2059
  %v2061 = vpop.xlane.xlu0 %2060
  %v2062 = vsel %vm2033, %v107, 0.0
  %v2063 = vadd.f32 %v106, %v2062
  %2064 = vadd.xlane.f32.xlu0 %v2063
  %v2065 = vpop.xlane.xlu0 %2064
  %v2066 = vsel %vm2033, %v109, 0.0
  %v2067 = vadd.f32 %v108, %v2066
  %2068 = vadd.xlane.f32.xlu0 %v2067
  %v2069 = vpop.xlane.xlu0 %2068
  %v2070 = vsel %vm2033, %v111, 0.0
  %v2071 = vadd.f32 %v110, %v2070
  %2072 = vadd.xlane.f32.xlu0 %v2071
  %v2073 = vpop.xlane.xlu0 %2072
  %v2074 = vsel %vm2033, %v113, 0.0
  %v2075 = vadd.f32 %v112, %v2074
  %2076 = vadd.xlane.f32.xlu0 %v2075
  %v2077 = vpop.xlane.xlu0 %2076
  %v2078 = vsel %vm2033, %v115, 0.0
  %v2079 = vadd.f32 %v114, %v2078
  %2080 = vadd.xlane.f32.xlu0 %v2079
  %v2081 = vpop.xlane.xlu0 %2080
  %v2082 = vsel %vm2033, %v117, 0.0
  %v2083 = vadd.f32 %v116, %v2082
  %2084 = vadd.xlane.f32.xlu0 %v2083
  %v2085 = vpop.xlane.xlu0 %2084
  %v2086 = vsel %vm2033, %v119, 0.0
  %v2087 = vadd.f32 %v118, %v2086
  %2088 = vadd.xlane.f32.xlu0 %v2087
  %v2089 = vpop.xlane.xlu0 %2088
  %v2090 = vsel %vm2033, %v121, 0.0
  %v2091 = vadd.f32 %v120, %v2090
  %2092 = vadd.xlane.f32.xlu0 %v2091
  %v2093 = vpop.xlane.xlu0 %2092
  %v2094 = vsel %vm2033, %v123, 0.0
  %v2095 = vadd.f32 %v122, %v2094
  %2096 = vadd.xlane.f32.xlu0 %v2095
  %v2097 = vpop.xlane.xlu0 %2096
  %v2098 = vsel %vm2033, %v125, 0.0
  %v2099 = vadd.f32 %v124, %v2098
  %2100 = vadd.xlane.f32.xlu0 %v2099
  %v2101 = vpop.xlane.xlu0 %2100
  %v2102 = vsel %vm2033, %v127, 0.0
  %v2103 = vadd.f32 %v126, %v2102
  %2104 = vadd.xlane.f32.xlu0 %v2103
  %v2105 = vpop.xlane.xlu0 %2104
  %2106 = vmatpush.msra.mxu0 %v2097
  %2107 = vmatpush.msra.mxu0 %v2093
  %2108 = vmatpush.msra.mxu0 %v2089
  %2109 = vmatpush.msra.mxu0 %v2085
  %2110 = vmatpush.msra.mxu0 %v2081
  %2111 = vmatpush.msra.mxu0 %v2077
  %2112 = vmatpush.msra.mxu0 %v2073
  %2113 = vmatpush.msra.mxu0 %v2069
  %2114 = vmatpush.msra.mxu0 %v2065
  %2115 = vmatpush.msra.mxu0 %v2061
  %2116 = vmatpush.msra.mxu0 %v2057
  %2117 = vmatpush.msra.mxu0 %v2053
  %2118 = vmatpush.msra.mxu0 %v2049
  %2119 = vmatpush.msra.mxu0 %v2045
  %2120 = vmatpush.msra.mxu0 %v2041
  %2121 = vmatpush.msra.mxu0 %v2037
  %2122 = vmatmul.f32.gmra.mxu0 %v128
  %v2123 = vpop.f32.mrf.mxu0
  %v2124 = vadd.f32 0.0, %v2123
  %2125 = vmatmul.f32.gmra.mxu0 %v130
  %v2126 = vpop.f32.mrf.mxu0
  %v2127 = vadd.f32 0.0, %v2126
  %2128 = vmatmul.f32.gmra.mxu0 %v132
  %v2129 = vpop.f32.mrf.mxu0
  %v2130 = vadd.f32 0.0, %v2129
  %2131 = vmatmul.f32.gmra.mxu0 %v134
  %v2132 = vpop.f32.mrf.mxu0
  %v2133 = vadd.f32 0.0, %v2132
  %2134 = vmatmul.f32.gmra.mxu0 %v136
  %v2135 = vpop.f32.mrf.mxu0
  %v2136 = vadd.f32 0.0, %v2135
  %2137 = vmatmul.f32.gmra.mxu0 %v138
  %v2138 = vpop.f32.mrf.mxu0
  %v2139 = vadd.f32 0.0, %v2138
  %2140 = vmatmul.f32.gmra.mxu0 %v140
  %v2141 = vpop.f32.mrf.mxu0
  %v2142 = vadd.f32 0.0, %v2141
  %2143 = vmatmul.f32.gmra.mxu0 %v142
  %v2144 = vpop.f32.mrf.mxu0
  %v2145 = vadd.f32 0.0, %v2144
  %2146 = vmatmul.f32.gmra.mxu0 %v144
  %v2147 = vpop.f32.mrf.mxu0
  %v2148 = vadd.f32 0.0, %v2147
  %2149 = vmatmul.f32.gmra.mxu0 %v146
  %v2150 = vpop.f32.mrf.mxu0
  %v2151 = vadd.f32 0.0, %v2150
  %2152 = vmatmul.f32.gmra.mxu0 %v148
  %v2153 = vpop.f32.mrf.mxu0
  %v2154 = vadd.f32 0.0, %v2153
  %2155 = vmatmul.f32.gmra.mxu0 %v150
  %v2156 = vpop.f32.mrf.mxu0
  %v2157 = vadd.f32 0.0, %v2156
  %2158 = vmatmul.f32.gmra.mxu0 %v152
  %v2159 = vpop.f32.mrf.mxu0
  %v2160 = vadd.f32 0.0, %v2159
  %2161 = vmatmul.f32.gmra.mxu0 %v154
  %v2162 = vpop.f32.mrf.mxu0
  %v2163 = vadd.f32 0.0, %v2162
  %2164 = vmatmul.f32.gmra.mxu0 %v156
  %v2165 = vpop.f32.mrf.mxu0
  %v2166 = vadd.f32 0.0, %v2165
  %2167 = vmatmul.f32.gmra.mxu0 %v158
  %v2168 = vpop.f32.mrf.mxu0
  %v2169 = vadd.f32 0.0, %v2168
  %2170 = vmatmul.f32.gmra.mxu0 %v160
  %v2171 = vpop.f32.mrf.mxu0
  %v2172 = vadd.f32 0.0, %v2171
  %2173 = vmatmul.f32.gmra.mxu0 %v162
  %v2174 = vpop.f32.mrf.mxu0
  %v2175 = vadd.f32 0.0, %v2174
  %2176 = vmatmul.f32.gmra.mxu0 %v164
  %v2177 = vpop.f32.mrf.mxu0
  %v2178 = vadd.f32 0.0, %v2177
  %2179 = vmatmul.f32.gmra.mxu0 %v166
  %v2180 = vpop.f32.mrf.mxu0
  %v2181 = vadd.f32 0.0, %v2180
  %2182 = vmatmul.f32.gmra.mxu0 %v168
  %v2183 = vpop.f32.mrf.mxu0
  %v2184 = vadd.f32 0.0, %v2183
  %2185 = vmatmul.f32.gmra.mxu0 %v170
  %v2186 = vpop.f32.mrf.mxu0
  %v2187 = vadd.f32 0.0, %v2186
  %2188 = vmatmul.f32.gmra.mxu0 %v172
  %v2189 = vpop.f32.mrf.mxu0
  %v2190 = vadd.f32 0.0, %v2189
  %2191 = vmatmul.f32.gmra.mxu0 %v174
  %v2192 = vpop.f32.mrf.mxu0
  %v2193 = vadd.f32 0.0, %v2192
  %2194 = vmatmul.f32.gmra.mxu0 %v176
  %v2195 = vpop.f32.mrf.mxu0
  %v2196 = vadd.f32 0.0, %v2195
  %2197 = vmatmul.f32.gmra.mxu0 %v178
  %v2198 = vpop.f32.mrf.mxu0
  %v2199 = vadd.f32 0.0, %v2198
  %2200 = vmatmul.f32.gmra.mxu0 %v180
  %v2201 = vpop.f32.mrf.mxu0
  %v2202 = vadd.f32 0.0, %v2201
  %2203 = vmatmul.f32.gmra.mxu0 %v182
  %v2204 = vpop.f32.mrf.mxu0
  %v2205 = vadd.f32 0.0, %v2204
  %2206 = vmatmul.f32.gmra.mxu0 %v184
  %v2207 = vpop.f32.mrf.mxu0
  %v2208 = vadd.f32 0.0, %v2207
  %2209 = vmatmul.f32.gmra.mxu0 %v186
  %v2210 = vpop.f32.mrf.mxu0
  %v2211 = vadd.f32 0.0, %v2210
  %2212 = vmatmul.f32.gmra.mxu0 %v188
  %v2213 = vpop.f32.mrf.mxu0
  %v2214 = vadd.f32 0.0, %v2213
  %2215 = vmatmul.f32.gmra.mxu0 %v190
  %v2216 = vpop.f32.mrf.mxu0
  %v2217 = vadd.f32 0.0, %v2216
  %2218 = vmatmul.f32.gmra.mxu0 %v192
  %v2219 = vpop.f32.mrf.mxu0
  %v2220 = vadd.f32 0.0, %v2219
  %2221 = vmatmul.f32.gmra.mxu0 %v194
  %v2222 = vpop.f32.mrf.mxu0
  %v2223 = vadd.f32 0.0, %v2222
  %2224 = vmatmul.f32.gmra.mxu0 %v196
  %v2225 = vpop.f32.mrf.mxu0
  %v2226 = vadd.f32 0.0, %v2225
  %2227 = vmatmul.f32.gmra.mxu0 %v198
  %v2228 = vpop.f32.mrf.mxu0
  %v2229 = vadd.f32 0.0, %v2228
  %2230 = vmatmul.f32.gmra.mxu0 %v200
  %v2231 = vpop.f32.mrf.mxu0
  %v2232 = vadd.f32 0.0, %v2231
  %2233 = vmatmul.f32.gmra.mxu0 %v202
  %v2234 = vpop.f32.mrf.mxu0
  %v2235 = vadd.f32 0.0, %v2234
  %2236 = vmatmul.f32.gmra.mxu0 %v204
  %v2237 = vpop.f32.mrf.mxu0
  %v2238 = vadd.f32 0.0, %v2237
  %2239 = vmatmul.f32.gmra.mxu0 %v206
  %v2240 = vpop.f32.mrf.mxu0
  %v2241 = vadd.f32 0.0, %v2240
  %2242 = vmatmul.f32.gmra.mxu0 %v208
  %v2243 = vpop.f32.mrf.mxu0
  %v2244 = vadd.f32 0.0, %v2243
  %2245 = vmatmul.f32.gmra.mxu0 %v210
  %v2246 = vpop.f32.mrf.mxu0
  %v2247 = vadd.f32 0.0, %v2246
  %2248 = vmatmul.f32.gmra.mxu0 %v212
  %v2249 = vpop.f32.mrf.mxu0
  %v2250 = vadd.f32 0.0, %v2249
  %2251 = vmatmul.f32.gmra.mxu0 %v214
  %v2252 = vpop.f32.mrf.mxu0
  %v2253 = vadd.f32 0.0, %v2252
  %2254 = vmatmul.f32.gmra.mxu0 %v216
  %v2255 = vpop.f32.mrf.mxu0
  %v2256 = vadd.f32 0.0, %v2255
  %2257 = vmatmul.f32.gmra.mxu0 %v218
  %v2258 = vpop.f32.mrf.mxu0
  %v2259 = vadd.f32 0.0, %v2258
  %2260 = vmatmul.f32.gmra.mxu0 %v220
  %v2261 = vpop.f32.mrf.mxu0
  %v2262 = vadd.f32 0.0, %v2261
  %2263 = vmatmul.f32.gmra.mxu0 %v222
  %v2264 = vpop.f32.mrf.mxu0
  %v2265 = vadd.f32 0.0, %v2264
  %2266 = vmatmul.f32.gmra.mxu0 %v224
  %v2267 = vpop.f32.mrf.mxu0
  %v2268 = vadd.f32 0.0, %v2267
  %2269 = vmatmul.f32.gmra.mxu0 %v226
  %v2270 = vpop.f32.mrf.mxu0
  %v2271 = vadd.f32 0.0, %v2270
  %2272 = vmatmul.f32.gmra.mxu0 %v228
  %v2273 = vpop.f32.mrf.mxu0
  %v2274 = vadd.f32 0.0, %v2273
  %2275 = vmatmul.f32.gmra.mxu0 %v230
  %v2276 = vpop.f32.mrf.mxu0
  %v2277 = vadd.f32 0.0, %v2276
  %2278 = vmatmul.f32.gmra.mxu0 %v232
  %v2279 = vpop.f32.mrf.mxu0
  %v2280 = vadd.f32 0.0, %v2279
  %2281 = vmatmul.f32.gmra.mxu0 %v234
  %v2282 = vpop.f32.mrf.mxu0
  %v2283 = vadd.f32 0.0, %v2282
  %2284 = vmatmul.f32.gmra.mxu0 %v236
  %v2285 = vpop.f32.mrf.mxu0
  %v2286 = vadd.f32 0.0, %v2285
  %2287 = vmatmul.f32.gmra.mxu0 %v238
  %v2288 = vpop.f32.mrf.mxu0
  %v2289 = vadd.f32 0.0, %v2288
  %2290 = vmatmul.f32.gmra.mxu0 %v240
  %v2291 = vpop.f32.mrf.mxu0
  %v2292 = vadd.f32 0.0, %v2291
  %2293 = vmatmul.f32.gmra.mxu0 %v242
  %v2294 = vpop.f32.mrf.mxu0
  %v2295 = vadd.f32 0.0, %v2294
  %2296 = vmatmul.f32.gmra.mxu0 %v244
  %v2297 = vpop.f32.mrf.mxu0
  %v2298 = vadd.f32 0.0, %v2297
  %2299 = vmatmul.f32.gmra.mxu0 %v246
  %v2300 = vpop.f32.mrf.mxu0
  %v2301 = vadd.f32 0.0, %v2300
  %2302 = vmatmul.f32.gmra.mxu0 %v248
  %v2303 = vpop.f32.mrf.mxu0
  %v2304 = vadd.f32 0.0, %v2303
  %2305 = vmatmul.f32.gmra.mxu0 %v250
  %v2306 = vpop.f32.mrf.mxu0
  %v2307 = vadd.f32 0.0, %v2306
  %2308 = vmatmul.f32.gmra.mxu0 %v252
  %v2309 = vpop.f32.mrf.mxu0
  %v2310 = vadd.f32 0.0, %v2309
  %2311 = vmatmul.f32.gmra.mxu0 %v254
  %v2312 = vpop.f32.mrf.mxu0
  %v2313 = vadd.f32 0.0, %v2312
  %2314 = vmatmul.f32.gmra.mxu0 %v256
  %v2315 = vpop.f32.mrf.mxu0
  %v2316 = vadd.f32 0.0, %v2315
  %2317 = vmatmul.f32.gmra.mxu0 %v258
  %v2318 = vpop.f32.mrf.mxu0
  %v2319 = vadd.f32 0.0, %v2318
  %2320 = vmatmul.f32.gmra.mxu0 %v260
  %v2321 = vpop.f32.mrf.mxu0
  %v2322 = vadd.f32 0.0, %v2321
  %2323 = vmatmul.f32.gmra.mxu0 %v262
  %v2324 = vpop.f32.mrf.mxu0
  %v2325 = vadd.f32 0.0, %v2324
  %2326 = vmatmul.f32.gmra.mxu0 %v264
  %v2327 = vpop.f32.mrf.mxu0
  %v2328 = vadd.f32 0.0, %v2327
  %2329 = vmatmul.f32.gmra.mxu0 %v266
  %v2330 = vpop.f32.mrf.mxu0
  %v2331 = vadd.f32 0.0, %v2330
  %2332 = vmatmul.f32.gmra.mxu0 %v268
  %v2333 = vpop.f32.mrf.mxu0
  %v2334 = vadd.f32 0.0, %v2333
  %2335 = vmatmul.f32.gmra.mxu0 %v270
  %v2336 = vpop.f32.mrf.mxu0
  %v2337 = vadd.f32 0.0, %v2336
  %2338 = vmatmul.f32.gmra.mxu0 %v272
  %v2339 = vpop.f32.mrf.mxu0
  %v2340 = vadd.f32 0.0, %v2339
  %2341 = vmatmul.f32.gmra.mxu0 %v274
  %v2342 = vpop.f32.mrf.mxu0
  %v2343 = vadd.f32 0.0, %v2342
  %2344 = vmatmul.f32.gmra.mxu0 %v276
  %v2345 = vpop.f32.mrf.mxu0
  %v2346 = vadd.f32 0.0, %v2345
  %2347 = vmatmul.f32.gmra.mxu0 %v278
  %v2348 = vpop.f32.mrf.mxu0
  %v2349 = vadd.f32 0.0, %v2348
  %2350 = vmatmul.f32.gmra.mxu0 %v280
  %v2351 = vpop.f32.mrf.mxu0
  %v2352 = vadd.f32 0.0, %v2351
  %2353 = vmatmul.f32.gmra.mxu0 %v282
  %v2354 = vpop.f32.mrf.mxu0
  %v2355 = vadd.f32 0.0, %v2354
  %2356 = vmatmul.f32.gmra.mxu0 %v284
  %v2357 = vpop.f32.mrf.mxu0
  %v2358 = vadd.f32 0.0, %v2357
  %2359 = vmatmul.f32.gmra.mxu0 %v286
  %v2360 = vpop.f32.mrf.mxu0
  %v2361 = vadd.f32 0.0, %v2360
  %2362 = vmatmul.f32.gmra.mxu0 %v288
  %v2363 = vpop.f32.mrf.mxu0
  %v2364 = vadd.f32 0.0, %v2363
  %2365 = vmatmul.f32.gmra.mxu0 %v290
  %v2366 = vpop.f32.mrf.mxu0
  %v2367 = vadd.f32 0.0, %v2366
  %2368 = vmatmul.f32.gmra.mxu0 %v292
  %v2369 = vpop.f32.mrf.mxu0
  %v2370 = vadd.f32 0.0, %v2369
  %2371 = vmatmul.f32.gmra.mxu0 %v294
  %v2372 = vpop.f32.mrf.mxu0
  %v2373 = vadd.f32 0.0, %v2372
  %2374 = vmatmul.f32.gmra.mxu0 %v296
  %v2375 = vpop.f32.mrf.mxu0
  %v2376 = vadd.f32 0.0, %v2375
  %2377 = vmatmul.f32.gmra.mxu0 %v298
  %v2378 = vpop.f32.mrf.mxu0
  %v2379 = vadd.f32 0.0, %v2378
  %2380 = vmatmul.f32.gmra.mxu0 %v300
  %v2381 = vpop.f32.mrf.mxu0
  %v2382 = vadd.f32 0.0, %v2381
  %2383 = vmatmul.f32.gmra.mxu0 %v302
  %v2384 = vpop.f32.mrf.mxu0
  %v2385 = vadd.f32 0.0, %v2384
  %2386 = vmatmul.f32.gmra.mxu0 %v304
  %v2387 = vpop.f32.mrf.mxu0
  %v2388 = vadd.f32 0.0, %v2387
  %2389 = vmatmul.f32.gmra.mxu0 %v306
  %v2390 = vpop.f32.mrf.mxu0
  %v2391 = vadd.f32 0.0, %v2390
  %2392 = vmatmul.f32.gmra.mxu0 %v308
  %v2393 = vpop.f32.mrf.mxu0
  %v2394 = vadd.f32 0.0, %v2393
  %2395 = vmatmul.f32.gmra.mxu0 %v310
  %v2396 = vpop.f32.mrf.mxu0
  %v2397 = vadd.f32 0.0, %v2396
  %2398 = vmatmul.f32.gmra.mxu0 %v312
  %v2399 = vpop.f32.mrf.mxu0
  %v2400 = vadd.f32 0.0, %v2399
  %2401 = vmatmul.f32.gmra.mxu0 %v314
  %v2402 = vpop.f32.mrf.mxu0
  %v2403 = vadd.f32 0.0, %v2402
  %2404 = vmatmul.f32.gmra.mxu0 %v316
  %v2405 = vpop.f32.mrf.mxu0
  %v2406 = vadd.f32 0.0, %v2405
  %2407 = vmatmul.f32.gmra.mxu0 %v318
  %v2408 = vpop.f32.mrf.mxu0
  %v2409 = vadd.f32 0.0, %v2408
  %2410 = vmatmul.f32.gmra.mxu0 %v320
  %v2411 = vpop.f32.mrf.mxu0
  %v2412 = vadd.f32 0.0, %v2411
  %2413 = vmatmul.f32.gmra.mxu0 %v322
  %v2414 = vpop.f32.mrf.mxu0
  %v2415 = vadd.f32 0.0, %v2414
  %2416 = vmatmul.f32.gmra.mxu0 %v324
  %v2417 = vpop.f32.mrf.mxu0
  %v2418 = vadd.f32 0.0, %v2417
  %2419 = vmatmul.f32.gmra.mxu0 %v326
  %v2420 = vpop.f32.mrf.mxu0
  %v2421 = vadd.f32 0.0, %v2420
  %2422 = vmatmul.f32.gmra.mxu0 %v328
  %v2423 = vpop.f32.mrf.mxu0
  %v2424 = vadd.f32 0.0, %v2423
  %2425 = vmatmul.f32.gmra.mxu0 %v330
  %v2426 = vpop.f32.mrf.mxu0
  %v2427 = vadd.f32 0.0, %v2426
  %2428 = vmatmul.f32.gmra.mxu0 %v332
  %v2429 = vpop.f32.mrf.mxu0
  %v2430 = vadd.f32 0.0, %v2429
  %2431 = vmatmul.f32.gmra.mxu0 %v334
  %v2432 = vpop.f32.mrf.mxu0
  %v2433 = vadd.f32 0.0, %v2432
  %2434 = vmatmul.f32.gmra.mxu0 %v336
  %v2435 = vpop.f32.mrf.mxu0
  %v2436 = vadd.f32 0.0, %v2435
  %2437 = vmatmul.f32.gmra.mxu0 %v338
  %v2438 = vpop.f32.mrf.mxu0
  %v2439 = vadd.f32 0.0, %v2438
  %2440 = vmatmul.f32.gmra.mxu0 %v340
  %v2441 = vpop.f32.mrf.mxu0
  %v2442 = vadd.f32 0.0, %v2441
  %2443 = vmatmul.f32.gmra.mxu0 %v342
  %v2444 = vpop.f32.mrf.mxu0
  %v2445 = vadd.f32 0.0, %v2444
  %2446 = vdwg.mxu0
  %2447 = vmatpush.msra.mxu0 0.0
  %2448 = vmatpush.msra.mxu0 0.0
  %2449 = vmatpush.msra.mxu0 0.0
  %2450 = vmatpush.msra.mxu0 0.0
  %2451 = vmatpush.msra.mxu0 0.0
  %2452 = vmatpush.msra.mxu0 0.0
  %2453 = vmatpush.msra.mxu0 0.0
  %2454 = vmatpush.msra.mxu0 0.0
  %2455 = vmatpush.msra.mxu0 0.0
  %2456 = vmatpush.msra.mxu0 0.0
  %2457 = vmatpush.msra.mxu0 0.0
  %2458 = vmatpush.msra.mxu0 0.0
  %2459 = vmatpush.msra.mxu0 0.0
  %2460 = vmatpush.msra.mxu0 0.0
  %2461 = vmatpush.msra.mxu0 %v2105
  %2462 = vmatpush.msra.mxu0 %v2101
  %2463 = vmatmul.f32.gmra.mxu0 %v346
  %v2464 = vpop.f32.mrf.mxu0
  %v2465 = vadd.f32 %v2124, %v2464
  %2466 = vmatmul.f32.gmra.mxu0 %v349
  %v2467 = vpop.f32.mrf.mxu0
  %v2468 = vadd.f32 %v2127, %v2467
  %2469 = vmatmul.f32.gmra.mxu0 %v352
  %v2470 = vpop.f32.mrf.mxu0
  %v2471 = vadd.f32 %v2130, %v2470
  %2472 = vmatmul.f32.gmra.mxu0 %v355
  %v2473 = vpop.f32.mrf.mxu0
  %v2474 = vadd.f32 %v2133, %v2473
  %2475 = vmatmul.f32.gmra.mxu0 %v358
  %v2476 = vpop.f32.mrf.mxu0
  %v2477 = vadd.f32 %v2136, %v2476
  %2478 = vmatmul.f32.gmra.mxu0 %v361
  %v2479 = vpop.f32.mrf.mxu0
  %v2480 = vadd.f32 %v2139, %v2479
  %2481 = vmatmul.f32.gmra.mxu0 %v364
  %v2482 = vpop.f32.mrf.mxu0
  %v2483 = vadd.f32 %v2142, %v2482
  %2484 = vmatmul.f32.gmra.mxu0 %v367
  %v2485 = vpop.f32.mrf.mxu0
  %v2486 = vadd.f32 %v2145, %v2485
  %2487 = vmatmul.f32.gmra.mxu0 %v370
  %v2488 = vpop.f32.mrf.mxu0
  %v2489 = vadd.f32 %v2148, %v2488
  %2490 = vmatmul.f32.gmra.mxu0 %v373
  %v2491 = vpop.f32.mrf.mxu0
  %v2492 = vadd.f32 %v2151, %v2491
  %2493 = vmatmul.f32.gmra.mxu0 %v376
  %v2494 = vpop.f32.mrf.mxu0
  %v2495 = vadd.f32 %v2154, %v2494
  %2496 = vmatmul.f32.gmra.mxu0 %v379
  %v2497 = vpop.f32.mrf.mxu0
  %v2498 = vadd.f32 %v2157, %v2497
  %2499 = vmatmul.f32.gmra.mxu0 %v382
  %v2500 = vpop.f32.mrf.mxu0
  %v2501 = vadd.f32 %v2160, %v2500
  %2502 = vmatmul.f32.gmra.mxu0 %v385
  %v2503 = vpop.f32.mrf.mxu0
  %v2504 = vadd.f32 %v2163, %v2503
  %2505 = vmatmul.f32.gmra.mxu0 %v388
  %v2506 = vpop.f32.mrf.mxu0
  %v2507 = vadd.f32 %v2166, %v2506
  %2508 = vmatmul.f32.gmra.mxu0 %v391
  %v2509 = vpop.f32.mrf.mxu0
  %v2510 = vadd.f32 %v2169, %v2509
  %2511 = vmatmul.f32.gmra.mxu0 %v394
  %v2512 = vpop.f32.mrf.mxu0
  %v2513 = vadd.f32 %v2172, %v2512
  %2514 = vmatmul.f32.gmra.mxu0 %v397
  %v2515 = vpop.f32.mrf.mxu0
  %v2516 = vadd.f32 %v2175, %v2515
  %2517 = vmatmul.f32.gmra.mxu0 %v400
  %v2518 = vpop.f32.mrf.mxu0
  %v2519 = vadd.f32 %v2178, %v2518
  %2520 = vmatmul.f32.gmra.mxu0 %v403
  %v2521 = vpop.f32.mrf.mxu0
  %v2522 = vadd.f32 %v2181, %v2521
  %2523 = vmatmul.f32.gmra.mxu0 %v406
  %v2524 = vpop.f32.mrf.mxu0
  %v2525 = vadd.f32 %v2184, %v2524
  %2526 = vmatmul.f32.gmra.mxu0 %v409
  %v2527 = vpop.f32.mrf.mxu0
  %v2528 = vadd.f32 %v2187, %v2527
  %2529 = vmatmul.f32.gmra.mxu0 %v412
  %v2530 = vpop.f32.mrf.mxu0
  %v2531 = vadd.f32 %v2190, %v2530
  %2532 = vmatmul.f32.gmra.mxu0 %v415
  %v2533 = vpop.f32.mrf.mxu0
  %v2534 = vadd.f32 %v2193, %v2533
  %2535 = vmatmul.f32.gmra.mxu0 %v418
  %v2536 = vpop.f32.mrf.mxu0
  %v2537 = vadd.f32 %v2196, %v2536
  %2538 = vmatmul.f32.gmra.mxu0 %v421
  %v2539 = vpop.f32.mrf.mxu0
  %v2540 = vadd.f32 %v2199, %v2539
  %2541 = vmatmul.f32.gmra.mxu0 %v424
  %v2542 = vpop.f32.mrf.mxu0
  %v2543 = vadd.f32 %v2202, %v2542
  %2544 = vmatmul.f32.gmra.mxu0 %v427
  %v2545 = vpop.f32.mrf.mxu0
  %v2546 = vadd.f32 %v2205, %v2545
  %2547 = vmatmul.f32.gmra.mxu0 %v430
  %v2548 = vpop.f32.mrf.mxu0
  %v2549 = vadd.f32 %v2208, %v2548
  %2550 = vmatmul.f32.gmra.mxu0 %v433
  %v2551 = vpop.f32.mrf.mxu0
  %v2552 = vadd.f32 %v2211, %v2551
  %2553 = vmatmul.f32.gmra.mxu0 %v436
  %v2554 = vpop.f32.mrf.mxu0
  %v2555 = vadd.f32 %v2214, %v2554
  %2556 = vmatmul.f32.gmra.mxu0 %v439
  %v2557 = vpop.f32.mrf.mxu0
  %v2558 = vadd.f32 %v2217, %v2557
  %2559 = vmatmul.f32.gmra.mxu0 %v442
  %v2560 = vpop.f32.mrf.mxu0
  %v2561 = vadd.f32 %v2220, %v2560
  %2562 = vmatmul.f32.gmra.mxu0 %v445
  %v2563 = vpop.f32.mrf.mxu0
  %v2564 = vadd.f32 %v2223, %v2563
  %2565 = vmatmul.f32.gmra.mxu0 %v448
  %v2566 = vpop.f32.mrf.mxu0
  %v2567 = vadd.f32 %v2226, %v2566
  %2568 = vmatmul.f32.gmra.mxu0 %v451
  %v2569 = vpop.f32.mrf.mxu0
  %v2570 = vadd.f32 %v2229, %v2569
  %2571 = vmatmul.f32.gmra.mxu0 %v454
  %v2572 = vpop.f32.mrf.mxu0
  %v2573 = vadd.f32 %v2232, %v2572
  %2574 = vmatmul.f32.gmra.mxu0 %v457
  %v2575 = vpop.f32.mrf.mxu0
  %v2576 = vadd.f32 %v2235, %v2575
  %2577 = vmatmul.f32.gmra.mxu0 %v460
  %v2578 = vpop.f32.mrf.mxu0
  %v2579 = vadd.f32 %v2238, %v2578
  %2580 = vmatmul.f32.gmra.mxu0 %v463
  %v2581 = vpop.f32.mrf.mxu0
  %v2582 = vadd.f32 %v2241, %v2581
  %2583 = vmatmul.f32.gmra.mxu0 %v466
  %v2584 = vpop.f32.mrf.mxu0
  %v2585 = vadd.f32 %v2244, %v2584
  %2586 = vmatmul.f32.gmra.mxu0 %v469
  %v2587 = vpop.f32.mrf.mxu0
  %v2588 = vadd.f32 %v2247, %v2587
  %2589 = vmatmul.f32.gmra.mxu0 %v472
  %v2590 = vpop.f32.mrf.mxu0
  %v2591 = vadd.f32 %v2250, %v2590
  %2592 = vmatmul.f32.gmra.mxu0 %v475
  %v2593 = vpop.f32.mrf.mxu0
  %v2594 = vadd.f32 %v2253, %v2593
  %2595 = vmatmul.f32.gmra.mxu0 %v478
  %v2596 = vpop.f32.mrf.mxu0
  %v2597 = vadd.f32 %v2256, %v2596
  %2598 = vmatmul.f32.gmra.mxu0 %v481
  %v2599 = vpop.f32.mrf.mxu0
  %v2600 = vadd.f32 %v2259, %v2599
  %2601 = vmatmul.f32.gmra.mxu0 %v484
  %v2602 = vpop.f32.mrf.mxu0
  %v2603 = vadd.f32 %v2262, %v2602
  %2604 = vmatmul.f32.gmra.mxu0 %v487
  %v2605 = vpop.f32.mrf.mxu0
  %v2606 = vadd.f32 %v2265, %v2605
  %2607 = vmatmul.f32.gmra.mxu0 %v490
  %v2608 = vpop.f32.mrf.mxu0
  %v2609 = vadd.f32 %v2268, %v2608
  %2610 = vmatmul.f32.gmra.mxu0 %v493
  %v2611 = vpop.f32.mrf.mxu0
  %v2612 = vadd.f32 %v2271, %v2611
  %2613 = vmatmul.f32.gmra.mxu0 %v496
  %v2614 = vpop.f32.mrf.mxu0
  %v2615 = vadd.f32 %v2274, %v2614
  %2616 = vmatmul.f32.gmra.mxu0 %v499
  %v2617 = vpop.f32.mrf.mxu0
  %v2618 = vadd.f32 %v2277, %v2617
  %2619 = vmatmul.f32.gmra.mxu0 %v502
  %v2620 = vpop.f32.mrf.mxu0
  %v2621 = vadd.f32 %v2280, %v2620
  %2622 = vmatmul.f32.gmra.mxu0 %v505
  %v2623 = vpop.f32.mrf.mxu0
  %v2624 = vadd.f32 %v2283, %v2623
  %2625 = vmatmul.f32.gmra.mxu0 %v508
  %v2626 = vpop.f32.mrf.mxu0
  %v2627 = vadd.f32 %v2286, %v2626
  %2628 = vmatmul.f32.gmra.mxu0 %v511
  %v2629 = vpop.f32.mrf.mxu0
  %v2630 = vadd.f32 %v2289, %v2629
  %2631 = vmatmul.f32.gmra.mxu0 %v514
  %v2632 = vpop.f32.mrf.mxu0
  %v2633 = vadd.f32 %v2292, %v2632
  %2634 = vmatmul.f32.gmra.mxu0 %v517
  %v2635 = vpop.f32.mrf.mxu0
  %v2636 = vadd.f32 %v2295, %v2635
  %2637 = vmatmul.f32.gmra.mxu0 %v520
  %v2638 = vpop.f32.mrf.mxu0
  %v2639 = vadd.f32 %v2298, %v2638
  %2640 = vmatmul.f32.gmra.mxu0 %v523
  %v2641 = vpop.f32.mrf.mxu0
  %v2642 = vadd.f32 %v2301, %v2641
  %2643 = vmatmul.f32.gmra.mxu0 %v526
  %v2644 = vpop.f32.mrf.mxu0
  %v2645 = vadd.f32 %v2304, %v2644
  %2646 = vmatmul.f32.gmra.mxu0 %v529
  %v2647 = vpop.f32.mrf.mxu0
  %v2648 = vadd.f32 %v2307, %v2647
  %2649 = vmatmul.f32.gmra.mxu0 %v532
  %v2650 = vpop.f32.mrf.mxu0
  %v2651 = vadd.f32 %v2310, %v2650
  %2652 = vmatmul.f32.gmra.mxu0 %v535
  %v2653 = vpop.f32.mrf.mxu0
  %v2654 = vadd.f32 %v2313, %v2653
  %2655 = vmatmul.f32.gmra.mxu0 %v538
  %v2656 = vpop.f32.mrf.mxu0
  %v2657 = vadd.f32 %v2316, %v2656
  %2658 = vmatmul.f32.gmra.mxu0 %v541
  %v2659 = vpop.f32.mrf.mxu0
  %v2660 = vadd.f32 %v2319, %v2659
  %2661 = vmatmul.f32.gmra.mxu0 %v544
  %v2662 = vpop.f32.mrf.mxu0
  %v2663 = vadd.f32 %v2322, %v2662
  %2664 = vmatmul.f32.gmra.mxu0 %v547
  %v2665 = vpop.f32.mrf.mxu0
  %v2666 = vadd.f32 %v2325, %v2665
  %2667 = vmatmul.f32.gmra.mxu0 %v550
  %v2668 = vpop.f32.mrf.mxu0
  %v2669 = vadd.f32 %v2328, %v2668
  %2670 = vmatmul.f32.gmra.mxu0 %v553
  %v2671 = vpop.f32.mrf.mxu0
  %v2672 = vadd.f32 %v2331, %v2671
  %2673 = vmatmul.f32.gmra.mxu0 %v556
  %v2674 = vpop.f32.mrf.mxu0
  %v2675 = vadd.f32 %v2334, %v2674
  %2676 = vmatmul.f32.gmra.mxu0 %v559
  %v2677 = vpop.f32.mrf.mxu0
  %v2678 = vadd.f32 %v2337, %v2677
  %2679 = vmatmul.f32.gmra.mxu0 %v562
  %v2680 = vpop.f32.mrf.mxu0
  %v2681 = vadd.f32 %v2340, %v2680
  %2682 = vmatmul.f32.gmra.mxu0 %v565
  %v2683 = vpop.f32.mrf.mxu0
  %v2684 = vadd.f32 %v2343, %v2683
  %2685 = vmatmul.f32.gmra.mxu0 %v568
  %v2686 = vpop.f32.mrf.mxu0
  %v2687 = vadd.f32 %v2346, %v2686
  %2688 = vmatmul.f32.gmra.mxu0 %v571
  %v2689 = vpop.f32.mrf.mxu0
  %v2690 = vadd.f32 %v2349, %v2689
  %2691 = vmatmul.f32.gmra.mxu0 %v574
  %v2692 = vpop.f32.mrf.mxu0
  %v2693 = vadd.f32 %v2352, %v2692
  %2694 = vmatmul.f32.gmra.mxu0 %v577
  %v2695 = vpop.f32.mrf.mxu0
  %v2696 = vadd.f32 %v2355, %v2695
  %2697 = vmatmul.f32.gmra.mxu0 %v580
  %v2698 = vpop.f32.mrf.mxu0
  %v2699 = vadd.f32 %v2358, %v2698
  %2700 = vmatmul.f32.gmra.mxu0 %v583
  %v2701 = vpop.f32.mrf.mxu0
  %v2702 = vadd.f32 %v2361, %v2701
  %2703 = vmatmul.f32.gmra.mxu0 %v586
  %v2704 = vpop.f32.mrf.mxu0
  %v2705 = vadd.f32 %v2364, %v2704
  %2706 = vmatmul.f32.gmra.mxu0 %v589
  %v2707 = vpop.f32.mrf.mxu0
  %v2708 = vadd.f32 %v2367, %v2707
  %2709 = vmatmul.f32.gmra.mxu0 %v592
  %v2710 = vpop.f32.mrf.mxu0
  %v2711 = vadd.f32 %v2370, %v2710
  %2712 = vmatmul.f32.gmra.mxu0 %v595
  %v2713 = vpop.f32.mrf.mxu0
  %v2714 = vadd.f32 %v2373, %v2713
  %2715 = vmatmul.f32.gmra.mxu0 %v598
  %v2716 = vpop.f32.mrf.mxu0
  %v2717 = vadd.f32 %v2376, %v2716
  %2718 = vmatmul.f32.gmra.mxu0 %v601
  %v2719 = vpop.f32.mrf.mxu0
  %v2720 = vadd.f32 %v2379, %v2719
  %2721 = vmatmul.f32.gmra.mxu0 %v604
  %v2722 = vpop.f32.mrf.mxu0
  %v2723 = vadd.f32 %v2382, %v2722
  %2724 = vmatmul.f32.gmra.mxu0 %v607
  %v2725 = vpop.f32.mrf.mxu0
  %v2726 = vadd.f32 %v2385, %v2725
  %2727 = vmatmul.f32.gmra.mxu0 %v610
  %v2728 = vpop.f32.mrf.mxu0
  %v2729 = vadd.f32 %v2388, %v2728
  %2730 = vmatmul.f32.gmra.mxu0 %v613
  %v2731 = vpop.f32.mrf.mxu0
  %v2732 = vadd.f32 %v2391, %v2731
  %2733 = vmatmul.f32.gmra.mxu0 %v616
  %v2734 = vpop.f32.mrf.mxu0
  %v2735 = vadd.f32 %v2394, %v2734
  %2736 = vmatmul.f32.gmra.mxu0 %v619
  %v2737 = vpop.f32.mrf.mxu0
  %v2738 = vadd.f32 %v2397, %v2737
  %2739 = vmatmul.f32.gmra.mxu0 %v622
  %v2740 = vpop.f32.mrf.mxu0
  %v2741 = vadd.f32 %v2400, %v2740
  %2742 = vmatmul.f32.gmra.mxu0 %v625
  %v2743 = vpop.f32.mrf.mxu0
  %v2744 = vadd.f32 %v2403, %v2743
  %2745 = vmatmul.f32.gmra.mxu0 %v628
  %v2746 = vpop.f32.mrf.mxu0
  %v2747 = vadd.f32 %v2406, %v2746
  %2748 = vmatmul.f32.gmra.mxu0 %v631
  %v2749 = vpop.f32.mrf.mxu0
  %v2750 = vadd.f32 %v2409, %v2749
  %2751 = vmatmul.f32.gmra.mxu0 %v634
  %v2752 = vpop.f32.mrf.mxu0
  %v2753 = vadd.f32 %v2412, %v2752
  %2754 = vmatmul.f32.gmra.mxu0 %v637
  %v2755 = vpop.f32.mrf.mxu0
  %v2756 = vadd.f32 %v2415, %v2755
  %2757 = vmatmul.f32.gmra.mxu0 %v640
  %v2758 = vpop.f32.mrf.mxu0
  %v2759 = vadd.f32 %v2418, %v2758
  %2760 = vmatmul.f32.gmra.mxu0 %v643
  %v2761 = vpop.f32.mrf.mxu0
  %v2762 = vadd.f32 %v2421, %v2761
  %2763 = vmatmul.f32.gmra.mxu0 %v646
  %v2764 = vpop.f32.mrf.mxu0
  %v2765 = vadd.f32 %v2424, %v2764
  %2766 = vmatmul.f32.gmra.mxu0 %v649
  %v2767 = vpop.f32.mrf.mxu0
  %v2768 = vadd.f32 %v2427, %v2767
  %2769 = vmatmul.f32.gmra.mxu0 %v652
  %v2770 = vpop.f32.mrf.mxu0
  %v2771 = vadd.f32 %v2430, %v2770
  %2772 = vmatmul.f32.gmra.mxu0 %v655
  %v2773 = vpop.f32.mrf.mxu0
  %v2774 = vadd.f32 %v2433, %v2773
  %2775 = vmatmul.f32.gmra.mxu0 %v658
  %v2776 = vpop.f32.mrf.mxu0
  %v2777 = vadd.f32 %v2436, %v2776
  %2778 = vmatmul.f32.gmra.mxu0 %v661
  %v2779 = vpop.f32.mrf.mxu0
  %v2780 = vadd.f32 %v2439, %v2779
  %2781 = vmatmul.f32.gmra.mxu0 %v664
  %v2782 = vpop.f32.mrf.mxu0
  %v2783 = vadd.f32 %v2442, %v2782
  %2784 = vmatmul.f32.gmra.mxu0 %v667
  %v2785 = vpop.f32.mrf.mxu0
  %v2786 = vadd.f32 %v2445, %v2785
  %2787 = vdwg.mxu0
  %v2788 = vmul.f32 %v2465, 0.0051020407
  %v2789 = vmul.f32 %v2468, 0.0051020407
  %v2790 = vmul.f32 %v2471, 0.0051020407
  %v2791 = vmul.f32 %v2474, 0.0051020407
  %v2792 = vmul.f32 %v2477, 0.0051020407
  %v2793 = vmul.f32 %v2480, 0.0051020407
  %v2794 = vmul.f32 %v2483, 0.0051020407
  %v2795 = vmul.f32 %v2486, 0.0051020407
  %v2796 = vmul.f32 %v2489, 0.0051020407
  %v2797 = vmul.f32 %v2492, 0.0051020407
  %v2798 = vmul.f32 %v2495, 0.0051020407
  %v2799 = vmul.f32 %v2498, 0.0051020407
  %v2800 = vmul.f32 %v2501, 0.0051020407
  %v2801 = vmul.f32 %v2504, 0.0051020407
  %v2802 = vmul.f32 %v2507, 0.0051020407
  %v2803 = vmul.f32 %v2510, 0.0051020407
  %v2804 = vmul.f32 %v2513, 0.0051020407
  %v2805 = vmul.f32 %v2516, 0.0051020407
  %v2806 = vmul.f32 %v2519, 0.0051020407
  %v2807 = vmul.f32 %v2522, 0.0051020407
  %v2808 = vmul.f32 %v2525, 0.0051020407
  %v2809 = vmul.f32 %v2528, 0.0051020407
  %v2810 = vmul.f32 %v2531, 0.0051020407
  %v2811 = vmul.f32 %v2534, 0.0051020407
  %v2812 = vmul.f32 %v2537, 0.0051020407
  %v2813 = vmul.f32 %v2540, 0.0051020407
  %v2814 = vmul.f32 %v2543, 0.0051020407
  %v2815 = vmul.f32 %v2546, 0.0051020407
  %v2816 = vmul.f32 %v2549, 0.0051020407
  %v2817 = vmul.f32 %v2552, 0.0051020407
  %v2818 = vmul.f32 %v2555, 0.0051020407
  %v2819 = vmul.f32 %v2558, 0.0051020407
  %v2820 = vmul.f32 %v2561, 0.0051020407
  %v2821 = vmul.f32 %v2564, 0.0051020407
  %v2822 = vmul.f32 %v2567, 0.0051020407
  %v2823 = vmul.f32 %v2570, 0.0051020407
  %v2824 = vmul.f32 %v2573, 0.0051020407
  %v2825 = vmul.f32 %v2576, 0.0051020407
  %v2826 = vmul.f32 %v2579, 0.0051020407
  %v2827 = vmul.f32 %v2582, 0.0051020407
  %v2828 = vmul.f32 %v2585, 0.0051020407
  %v2829 = vmul.f32 %v2588, 0.0051020407
  %v2830 = vmul.f32 %v2591, 0.0051020407
  %v2831 = vmul.f32 %v2594, 0.0051020407
  %v2832 = vmul.f32 %v2597, 0.0051020407
  %v2833 = vmul.f32 %v2600, 0.0051020407
  %v2834 = vmul.f32 %v2603, 0.0051020407
  %v2835 = vmul.f32 %v2606, 0.0051020407
  %v2836 = vmul.f32 %v2609, 0.0051020407
  %v2837 = vmul.f32 %v2612, 0.0051020407
  %v2838 = vmul.f32 %v2615, 0.0051020407
  %v2839 = vmul.f32 %v2618, 0.0051020407
  %v2840 = vmul.f32 %v2621, 0.0051020407
  %v2841 = vmul.f32 %v2624, 0.0051020407
  %v2842 = vmul.f32 %v2627, 0.0051020407
  %v2843 = vmul.f32 %v2630, 0.0051020407
  %v2844 = vmul.f32 %v2633, 0.0051020407
  %v2845 = vmul.f32 %v2636, 0.0051020407
  %v2846 = vmul.f32 %v2639, 0.0051020407
  %v2847 = vmul.f32 %v2642, 0.0051020407
  %v2848 = vmul.f32 %v2645, 0.0051020407
  %v2849 = vmul.f32 %v2648, 0.0051020407
  %v2850 = vmul.f32 %v2651, 0.0051020407
  %v2851 = vmul.f32 %v2654, 0.0051020407
  %v2852 = vmul.f32 %v2657, 0.0051020407
  %v2853 = vmul.f32 %v2660, 0.0051020407
  %v2854 = vmul.f32 %v2663, 0.0051020407
  %v2855 = vmul.f32 %v2666, 0.0051020407
  %v2856 = vmul.f32 %v2669, 0.0051020407
  %v2857 = vmul.f32 %v2672, 0.0051020407
  %v2858 = vmul.f32 %v2675, 0.0051020407
  %v2859 = vmul.f32 %v2678, 0.0051020407
  %v2860 = vmul.f32 %v2681, 0.0051020407
  %v2861 = vmul.f32 %v2684, 0.0051020407
  %v2862 = vmul.f32 %v2687, 0.0051020407
  %v2863 = vmul.f32 %v2690, 0.0051020407
  %v2864 = vmul.f32 %v2693, 0.0051020407
  %v2865 = vmul.f32 %v2696, 0.0051020407
  %v2866 = vmul.f32 %v2699, 0.0051020407
  %v2867 = vmul.f32 %v2702, 0.0051020407
  %v2868 = vmul.f32 %v2705, 0.0051020407
  %v2869 = vmul.f32 %v2708, 0.0051020407
  %v2870 = vmul.f32 %v2711, 0.0051020407
  %v2871 = vmul.f32 %v2714, 0.0051020407
  %v2872 = vmul.f32 %v2717, 0.0051020407
  %v2873 = vmul.f32 %v2720, 0.0051020407
  %v2874 = vmul.f32 %v2723, 0.0051020407
  %v2875 = vmul.f32 %v2726, 0.0051020407
  %v2876 = vmul.f32 %v2729, 0.0051020407
  %v2877 = vmul.f32 %v2732, 0.0051020407
  %v2878 = vmul.f32 %v2735, 0.0051020407
  %v2879 = vmul.f32 %v2738, 0.0051020407
  %v2880 = vmul.f32 %v2741, 0.0051020407
  %v2881 = vmul.f32 %v2744, 0.0051020407
  %v2882 = vmul.f32 %v2747, 0.0051020407
  %v2883 = vmul.f32 %v2750, 0.0051020407
  %v2884 = vmul.f32 %v2753, 0.0051020407
  %v2885 = vmul.f32 %v2756, 0.0051020407
  %v2886 = vmul.f32 %v2759, 0.0051020407
  %v2887 = vmul.f32 %v2762, 0.0051020407
  %v2888 = vmul.f32 %v2765, 0.0051020407
  %v2889 = vmul.f32 %v2768, 0.0051020407
  %v2890 = vmul.f32 %v2771, 0.0051020407
  %v2891 = vmul.f32 %v2774, 0.0051020407
  %v2892 = vmul.f32 %v2777, 0.0051020407
  %v2893 = vmul.f32 %v2780, 0.0051020407
  %v2894 = vmul.f32 %v2783, 0.0051020407
  %v2895 = vmul.f32 %v2786, 0.0051020407
  %v2896 = vmul.f32 %v1028, %v1028
  %v2897 = vmul.f32 %v1710, %v1710
  %v2898 = vmul.f32 %v1031, %v1031
  %v2899 = vmul.f32 %v1713, %v1713
  %v2900 = vmul.f32 %v1034, %v1034
  %v2901 = vmul.f32 %v1716, %v1716
  %v2902 = vmul.f32 %v1037, %v1037
  %v2903 = vmul.f32 %v1719, %v1719
  %v2904 = vmul.f32 %v1040, %v1040
  %v2905 = vmul.f32 %v1722, %v1722
  %v2906 = vmul.f32 %v1043, %v1043
  %v2907 = vmul.f32 %v1725, %v1725
  %v2908 = vmul.f32 %v1046, %v1046
  %v2909 = vmul.f32 %v1728, %v1728
  %v2910 = vmul.f32 %v1049, %v1049
  %v2911 = vmul.f32 %v1731, %v1731
  %v2912 = vmul.f32 %v1052, %v1052
  %v2913 = vmul.f32 %v1734, %v1734
  %v2914 = vmul.f32 %v1055, %v1055
  %v2915 = vmul.f32 %v1737, %v1737
  %v2916 = vmul.f32 %v1058, %v1058
  %v2917 = vmul.f32 %v1740, %v1740
  %v2918 = vmul.f32 %v1061, %v1061
  %v2919 = vmul.f32 %v1743, %v1743
  %v2920 = vmul.f32 %v1064, %v1064
  %v2921 = vmul.f32 %v1746, %v1746
  %v2922 = vmul.f32 %v1067, %v1067
  %v2923 = vmul.f32 %v1749, %v1749
  %v2924 = vmul.f32 %v1070, %v1070
  %v2925 = vmul.f32 %v1752, %v1752
  %v2926 = vmul.f32 %v1073, %v1073
  %v2927 = vmul.f32 %v1755, %v1755
  %v2928 = vmul.f32 %v1076, %v1076
  %v2929 = vmul.f32 %v1758, %v1758
  %v2930 = vmul.f32 %v1079, %v1079
  %v2931 = vmul.f32 %v1761, %v1761
  %v2932 = vmul.f32 %v1082, %v1082
  %v2933 = vmul.f32 %v1764, %v1764
  %v2934 = vmul.f32 %v1085, %v1085
  %v2935 = vmul.f32 %v1767, %v1767
  %v2936 = vmul.f32 %v1088, %v1088
  %v2937 = vmul.f32 %v1770, %v1770
  %v2938 = vmul.f32 %v1091, %v1091
  %v2939 = vmul.f32 %v1773, %v1773
  %v2940 = vmul.f32 %v1094, %v1094
  %v2941 = vmul.f32 %v1776, %v1776
  %v2942 = vmul.f32 %v1097, %v1097
  %v2943 = vmul.f32 %v1779, %v1779
  %v2944 = vmul.f32 %v1100, %v1100
  %v2945 = vmul.f32 %v1782, %v1782
  %v2946 = vmul.f32 %v1103, %v1103
  %v2947 = vmul.f32 %v1785, %v1785
  %v2948 = vmul.f32 %v1106, %v1106
  %v2949 = vmul.f32 %v1788, %v1788
  %v2950 = vmul.f32 %v1109, %v1109
  %v2951 = vmul.f32 %v1791, %v1791
  %v2952 = vmul.f32 %v1112, %v1112
  %v2953 = vmul.f32 %v1794, %v1794
  %v2954 = vmul.f32 %v1115, %v1115
  %v2955 = vmul.f32 %v1797, %v1797
  %v2956 = vmul.f32 %v1118, %v1118
  %v2957 = vmul.f32 %v1800, %v1800
  %v2958 = vmul.f32 %v1121, %v1121
  %v2959 = vmul.f32 %v1803, %v1803
  %v2960 = vmul.f32 %v1124, %v1124
  %v2961 = vmul.f32 %v1806, %v1806
  %v2962 = vmul.f32 %v1127, %v1127
  %v2963 = vmul.f32 %v1809, %v1809
  %v2964 = vmul.f32 %v1130, %v1130
  %v2965 = vmul.f32 %v1812, %v1812
  %v2966 = vmul.f32 %v1133, %v1133
  %v2967 = vmul.f32 %v1815, %v1815
  %v2968 = vmul.f32 %v1136, %v1136
  %v2969 = vmul.f32 %v1818, %v1818
  %v2970 = vmul.f32 %v1139, %v1139
  %v2971 = vmul.f32 %v1821, %v1821
  %v2972 = vmul.f32 %v1142, %v1142
  %v2973 = vmul.f32 %v1824, %v1824
  %v2974 = vmul.f32 %v1145, %v1145
  %v2975 = vmul.f32 %v1827, %v1827
  %v2976 = vmul.f32 %v1148, %v1148
  %v2977 = vmul.f32 %v1830, %v1830
  %v2978 = vmul.f32 %v1151, %v1151
  %v2979 = vmul.f32 %v1833, %v1833
  %v2980 = vmul.f32 %v1154, %v1154
  %v2981 = vmul.f32 %v1836, %v1836
  %v2982 = vmul.f32 %v1157, %v1157
  %v2983 = vmul.f32 %v1839, %v1839
  %v2984 = vmul.f32 %v1160, %v1160
  %v2985 = vmul.f32 %v1842, %v1842
  %v2986 = vmul.f32 %v1163, %v1163
  %v2987 = vmul.f32 %v1845, %v1845
  %v2988 = vmul.f32 %v1166, %v1166
  %v2989 = vmul.f32 %v1848, %v1848
  %v2990 = vmul.f32 %v1169, %v1169
  %v2991 = vmul.f32 %v1851, %v1851
  %v2992 = vmul.f32 %v1172, %v1172
  %v2993 = vmul.f32 %v1854, %v1854
  %v2994 = vmul.f32 %v1175, %v1175
  %v2995 = vmul.f32 %v1857, %v1857
  %v2996 = vmul.f32 %v1178, %v1178
  %v2997 = vmul.f32 %v1860, %v1860
  %v2998 = vmul.f32 %v1181, %v1181
  %v2999 = vmul.f32 %v1863, %v1863
  %v3000 = vmul.f32 %v1184, %v1184
  %v3001 = vmul.f32 %v1866, %v1866
  %v3002 = vmul.f32 %v1187, %v1187
  %v3003 = vmul.f32 %v1869, %v1869
  %v3004 = vmul.f32 %v1190, %v1190
  %v3005 = vmul.f32 %v1872, %v1872
  %v3006 = vmul.f32 %v1193, %v1193
  %v3007 = vmul.f32 %v1875, %v1875
  %v3008 = vmul.f32 %v1196, %v1196
  %v3009 = vmul.f32 %v1878, %v1878
  %v3010 = vmul.f32 %v1199, %v1199
  %v3011 = vmul.f32 %v1881, %v1881
  %v3012 = vmul.f32 %v1202, %v1202
  %v3013 = vmul.f32 %v1884, %v1884
  %v3014 = vmul.f32 %v1205, %v1205
  %v3015 = vmul.f32 %v1887, %v1887
  %v3016 = vmul.f32 %v1208, %v1208
  %v3017 = vmul.f32 %v1890, %v1890
  %v3018 = vmul.f32 %v1211, %v1211
  %v3019 = vmul.f32 %v1893, %v1893
  %v3020 = vmul.f32 %v1214, %v1214
  %v3021 = vmul.f32 %v1896, %v1896
  %v3022 = vmul.f32 %v1217, %v1217
  %v3023 = vmul.f32 %v1899, %v1899
  %v3024 = vmul.f32 %v1220, %v1220
  %v3025 = vmul.f32 %v1902, %v1902
  %v3026 = vmul.f32 %v1223, %v1223
  %v3027 = vmul.f32 %v1905, %v1905
  %v3028 = vmul.f32 %v1226, %v1226
  %v3029 = vmul.f32 %v1908, %v1908
  %v3030 = vmul.f32 %v1229, %v1229
  %v3031 = vmul.f32 %v1911, %v1911
  %v3032 = vmul.f32 %v1232, %v1232
  %v3033 = vmul.f32 %v1914, %v1914
  %v3034 = vmul.f32 %v1235, %v1235
  %v3035 = vmul.f32 %v1917, %v1917
  %v3036 = vmul.f32 %v1238, %v1238
  %v3037 = vmul.f32 %v1920, %v1920
  %v3038 = vmul.f32 %v1241, %v1241
  %v3039 = vmul.f32 %v1923, %v1923
  %v3040 = vmul.f32 %v1244, %v1244
  %v3041 = vmul.f32 %v1926, %v1926
  %v3042 = vmul.f32 %v1247, %v1247
  %v3043 = vmul.f32 %v1929, %v1929
  %v3044 = vmul.f32 %v1250, %v1250
  %v3045 = vmul.f32 %v1932, %v1932
  %v3046 = vmul.f32 %v1253, %v1253
  %v3047 = vmul.f32 %v1935, %v1935
  %v3048 = vmul.f32 %v1256, %v1256
  %v3049 = vmul.f32 %v1938, %v1938
  %v3050 = vmul.f32 %v1259, %v1259
  %v3051 = vmul.f32 %v1941, %v1941
  %v3052 = vmul.f32 %v1262, %v1262
  %v3053 = vmul.f32 %v1944, %v1944
  %v3054 = vmul.f32 %v1265, %v1265
  %v3055 = vmul.f32 %v1947, %v1947
  %v3056 = vmul.f32 %v1268, %v1268
  %v3057 = vmul.f32 %v1950, %v1950
  %v3058 = vmul.f32 %v1271, %v1271
  %v3059 = vmul.f32 %v1953, %v1953
  %v3060 = vmul.f32 %v1274, %v1274
  %v3061 = vmul.f32 %v1956, %v1956
  %v3062 = vmul.f32 %v1277, %v1277
  %v3063 = vmul.f32 %v1959, %v1959
  %v3064 = vmul.f32 %v1280, %v1280
  %v3065 = vmul.f32 %v1962, %v1962
  %v3066 = vmul.f32 %v1283, %v1283
  %v3067 = vmul.f32 %v1965, %v1965
  %v3068 = vmul.f32 %v1286, %v1286
  %v3069 = vmul.f32 %v1968, %v1968
  %v3070 = vmul.f32 %v1289, %v1289
  %v3071 = vmul.f32 %v1971, %v1971
  %v3072 = vmul.f32 %v1292, %v1292
  %v3073 = vmul.f32 %v1974, %v1974
  %v3074 = vmul.f32 %v1295, %v1295
  %v3075 = vmul.f32 %v1977, %v1977
  %v3076 = vmul.f32 %v1298, %v1298
  %v3077 = vmul.f32 %v1980, %v1980
  %v3078 = vmul.f32 %v1301, %v1301
  %v3079 = vmul.f32 %v1983, %v1983
  %v3080 = vmul.f32 %v1304, %v1304
  %v3081 = vmul.f32 %v1986, %v1986
  %v3082 = vmul.f32 %v1307, %v1307
  %v3083 = vmul.f32 %v1989, %v1989
  %v3084 = vmul.f32 %v1310, %v1310
  %v3085 = vmul.f32 %v1992, %v1992
  %v3086 = vmul.f32 %v1313, %v1313
  %v3087 = vmul.f32 %v1995, %v1995
  %v3088 = vmul.f32 %v1316, %v1316
  %v3089 = vmul.f32 %v1998, %v1998
  %v3090 = vmul.f32 %v1319, %v1319
  %v3091 = vmul.f32 %v2001, %v2001
  %v3092 = vmul.f32 %v1322, %v1322
  %v3093 = vmul.f32 %v2004, %v2004
  %v3094 = vmul.f32 %v1325, %v1325
  %v3095 = vmul.f32 %v2007, %v2007
  %v3096 = vmul.f32 %v1328, %v1328
  %v3097 = vmul.f32 %v2010, %v2010
  %v3098 = vmul.f32 %v1331, %v1331
  %v3099 = vmul.f32 %v2013, %v2013
  %v3100 = vmul.f32 %v1334, %v1334
  %v3101 = vmul.f32 %v2016, %v2016
  %v3102 = vmul.f32 %v1337, %v1337
  %v3103 = vmul.f32 %v2019, %v2019
  %v3104 = vmul.f32 %v1340, %v1340
  %v3105 = vmul.f32 %v2022, %v2022
  %v3106 = vmul.f32 %v1343, %v1343
  %v3107 = vmul.f32 %v2025, %v2025
  %v3108 = vmul.f32 %v1346, %v1346
  %v3109 = vmul.f32 %v2028, %v2028
  %v3110 = vmul.f32 %v1349, %v1349
  %v3111 = vmul.f32 %v2031, %v2031
  %v3112 = vsel %vm2033, %v2897, 0.0
  %v3113 = vadd.f32 %v2896, %v3112
  %3114 = vadd.xlane.f32.xlu0 %v3113
  %v3115 = vpop.xlane.xlu0 %3114
  %v3116 = vsel %vm2033, %v2899, 0.0
  %v3117 = vadd.f32 %v2898, %v3116
  %3118 = vadd.xlane.f32.xlu0 %v3117
  %v3119 = vpop.xlane.xlu0 %3118
  %v3120 = vsel %vm2033, %v2901, 0.0
  %v3121 = vadd.f32 %v2900, %v3120
  %3122 = vadd.xlane.f32.xlu0 %v3121
  %v3123 = vpop.xlane.xlu0 %3122
  %v3124 = vsel %vm2033, %v2903, 0.0
  %v3125 = vadd.f32 %v2902, %v3124
  %3126 = vadd.xlane.f32.xlu0 %v3125
  %v3127 = vpop.xlane.xlu0 %3126
  %v3128 = vsel %vm2033, %v2905, 0.0
  %v3129 = vadd.f32 %v2904, %v3128
  %3130 = vadd.xlane.f32.xlu0 %v3129
  %v3131 = vpop.xlane.xlu0 %3130
  %v3132 = vsel %vm2033, %v2907, 0.0
  %v3133 = vadd.f32 %v2906, %v3132
  %3134 = vadd.xlane.f32.xlu0 %v3133
  %v3135 = vpop.xlane.xlu0 %3134
  %v3136 = vsel %vm2033, %v2909, 0.0
  %v3137 = vadd.f32 %v2908, %v3136
  %3138 = vadd.xlane.f32.xlu0 %v3137
  %v3139 = vpop.xlane.xlu0 %3138
  %v3140 = vsel %vm2033, %v2911, 0.0
  %v3141 = vadd.f32 %v2910, %v3140
  %3142 = vadd.xlane.f32.xlu0 %v3141
  %v3143 = vpop.xlane.xlu0 %3142
  %v3144 = vsel %vm2033, %v2913, 0.0
  %v3145 = vadd.f32 %v2912, %v3144
  %3146 = vadd.xlane.f32.xlu0 %v3145
  %v3147 = vpop.xlane.xlu0 %3146
  %v3148 = vsel %vm2033, %v2915, 0.0
  %v3149 = vadd.f32 %v2914, %v3148
  %3150 = vadd.xlane.f32.xlu0 %v3149
  %v3151 = vpop.xlane.xlu0 %3150
  %v3152 = vsel %vm2033, %v2917, 0.0
  %v3153 = vadd.f32 %v2916, %v3152
  %3154 = vadd.xlane.f32.xlu0 %v3153
  %v3155 = vpop.xlane.xlu0 %3154
  %v3156 = vsel %vm2033, %v2919, 0.0
  %v3157 = vadd.f32 %v2918, %v3156
  %3158 = vadd.xlane.f32.xlu0 %v3157
  %v3159 = vpop.xlane.xlu0 %3158
  %v3160 = vsel %vm2033, %v2921, 0.0
  %v3161 = vadd.f32 %v2920, %v3160
  %3162 = vadd.xlane.f32.xlu0 %v3161
  %v3163 = vpop.xlane.xlu0 %3162
  %v3164 = vsel %vm2033, %v2923, 0.0
  %v3165 = vadd.f32 %v2922, %v3164
  %3166 = vadd.xlane.f32.xlu0 %v3165
  %v3167 = vpop.xlane.xlu0 %3166
  %v3168 = vsel %vm2033, %v2925, 0.0
  %v3169 = vadd.f32 %v2924, %v3168
  %3170 = vadd.xlane.f32.xlu0 %v3169
  %v3171 = vpop.xlane.xlu0 %3170
  %v3172 = vsel %vm2033, %v2927, 0.0
  %v3173 = vadd.f32 %v2926, %v3172
  %3174 = vadd.xlane.f32.xlu0 %v3173
  %v3175 = vpop.xlane.xlu0 %3174
  %v3176 = vsel %vm2033, %v2929, 0.0
  %v3177 = vadd.f32 %v2928, %v3176
  %3178 = vadd.xlane.f32.xlu0 %v3177
  %v3179 = vpop.xlane.xlu0 %3178
  %v3180 = vsel %vm2033, %v2931, 0.0
  %v3181 = vadd.f32 %v2930, %v3180
  %3182 = vadd.xlane.f32.xlu0 %v3181
  %v3183 = vpop.xlane.xlu0 %3182
  %v3184 = vsel %vm2033, %v2933, 0.0
  %v3185 = vadd.f32 %v2932, %v3184
  %3186 = vadd.xlane.f32.xlu0 %v3185
  %v3187 = vpop.xlane.xlu0 %3186
  %v3188 = vsel %vm2033, %v2935, 0.0
  %v3189 = vadd.f32 %v2934, %v3188
  %3190 = vadd.xlane.f32.xlu0 %v3189
  %v3191 = vpop.xlane.xlu0 %3190
  %v3192 = vsel %vm2033, %v2937, 0.0
  %v3193 = vadd.f32 %v2936, %v3192
  %3194 = vadd.xlane.f32.xlu0 %v3193
  %v3195 = vpop.xlane.xlu0 %3194
  %v3196 = vsel %vm2033, %v2939, 0.0
  %v3197 = vadd.f32 %v2938, %v3196
  %3198 = vadd.xlane.f32.xlu0 %v3197
  %v3199 = vpop.xlane.xlu0 %3198
  %v3200 = vsel %vm2033, %v2941, 0.0
  %v3201 = vadd.f32 %v2940, %v3200
  %3202 = vadd.xlane.f32.xlu0 %v3201
  %v3203 = vpop.xlane.xlu0 %3202
  %v3204 = vsel %vm2033, %v2943, 0.0
  %v3205 = vadd.f32 %v2942, %v3204
  %3206 = vadd.xlane.f32.xlu0 %v3205
  %v3207 = vpop.xlane.xlu0 %3206
  %v3208 = vsel %vm2033, %v2945, 0.0
  %v3209 = vadd.f32 %v2944, %v3208
  %3210 = vadd.xlane.f32.xlu0 %v3209
  %v3211 = vpop.xlane.xlu0 %3210
  %v3212 = vsel %vm2033, %v2947, 0.0
  %v3213 = vadd.f32 %v2946, %v3212
  %3214 = vadd.xlane.f32.xlu0 %v3213
  %v3215 = vpop.xlane.xlu0 %3214
  %v3216 = vsel %vm2033, %v2949, 0.0
  %v3217 = vadd.f32 %v2948, %v3216
  %3218 = vadd.xlane.f32.xlu0 %v3217
  %v3219 = vpop.xlane.xlu0 %3218
  %v3220 = vsel %vm2033, %v2951, 0.0
  %v3221 = vadd.f32 %v2950, %v3220
  %3222 = vadd.xlane.f32.xlu0 %v3221
  %v3223 = vpop.xlane.xlu0 %3222
  %v3224 = vsel %vm2033, %v2953, 0.0
  %v3225 = vadd.f32 %v2952, %v3224
  %3226 = vadd.xlane.f32.xlu0 %v3225
  %v3227 = vpop.xlane.xlu0 %3226
  %v3228 = vsel %vm2033, %v2955, 0.0
  %v3229 = vadd.f32 %v2954, %v3228
  %3230 = vadd.xlane.f32.xlu0 %v3229
  %v3231 = vpop.xlane.xlu0 %3230
  %v3232 = vsel %vm2033, %v2957, 0.0
  %v3233 = vadd.f32 %v2956, %v3232
  %3234 = vadd.xlane.f32.xlu0 %v3233
  %v3235 = vpop.xlane.xlu0 %3234
  %v3236 = vsel %vm2033, %v2959, 0.0
  %v3237 = vadd.f32 %v2958, %v3236
  %3238 = vadd.xlane.f32.xlu0 %v3237
  %v3239 = vpop.xlane.xlu0 %3238
  %v3240 = vsel %vm2033, %v2961, 0.0
  %v3241 = vadd.f32 %v2960, %v3240
  %3242 = vadd.xlane.f32.xlu0 %v3241
  %v3243 = vpop.xlane.xlu0 %3242
  %v3244 = vsel %vm2033, %v2963, 0.0
  %v3245 = vadd.f32 %v2962, %v3244
  %3246 = vadd.xlane.f32.xlu0 %v3245
  %v3247 = vpop.xlane.xlu0 %3246
  %v3248 = vsel %vm2033, %v2965, 0.0
  %v3249 = vadd.f32 %v2964, %v3248
  %3250 = vadd.xlane.f32.xlu0 %v3249
  %v3251 = vpop.xlane.xlu0 %3250
  %v3252 = vsel %vm2033, %v2967, 0.0
  %v3253 = vadd.f32 %v2966, %v3252
  %3254 = vadd.xlane.f32.xlu0 %v3253
  %v3255 = vpop.xlane.xlu0 %3254
  %v3256 = vsel %vm2033, %v2969, 0.0
  %v3257 = vadd.f32 %v2968, %v3256
  %3258 = vadd.xlane.f32.xlu0 %v3257
  %v3259 = vpop.xlane.xlu0 %3258
  %v3260 = vsel %vm2033, %v2971, 0.0
  %v3261 = vadd.f32 %v2970, %v3260
  %3262 = vadd.xlane.f32.xlu0 %v3261
  %v3263 = vpop.xlane.xlu0 %3262
  %v3264 = vsel %vm2033, %v2973, 0.0
  %v3265 = vadd.f32 %v2972, %v3264
  %3266 = vadd.xlane.f32.xlu0 %v3265
  %v3267 = vpop.xlane.xlu0 %3266
  %v3268 = vsel %vm2033, %v2975, 0.0
  %v3269 = vadd.f32 %v2974, %v3268
  %3270 = vadd.xlane.f32.xlu0 %v3269
  %v3271 = vpop.xlane.xlu0 %3270
  %v3272 = vsel %vm2033, %v2977, 0.0
  %v3273 = vadd.f32 %v2976, %v3272
  %3274 = vadd.xlane.f32.xlu0 %v3273
  %v3275 = vpop.xlane.xlu0 %3274
  %v3276 = vsel %vm2033, %v2979, 0.0
  %v3277 = vadd.f32 %v2978, %v3276
  %3278 = vadd.xlane.f32.xlu0 %v3277
  %v3279 = vpop.xlane.xlu0 %3278
  %v3280 = vsel %vm2033, %v2981, 0.0
  %v3281 = vadd.f32 %v2980, %v3280
  %3282 = vadd.xlane.f32.xlu0 %v3281
  %v3283 = vpop.xlane.xlu0 %3282
  %v3284 = vsel %vm2033, %v2983, 0.0
  %v3285 = vadd.f32 %v2982, %v3284
  %3286 = vadd.xlane.f32.xlu0 %v3285
  %v3287 = vpop.xlane.xlu0 %3286
  %v3288 = vsel %vm2033, %v2985, 0.0
  %v3289 = vadd.f32 %v2984, %v3288
  %3290 = vadd.xlane.f32.xlu0 %v3289
  %v3291 = vpop.xlane.xlu0 %3290
  %v3292 = vsel %vm2033, %v2987, 0.0
  %v3293 = vadd.f32 %v2986, %v3292
  %3294 = vadd.xlane.f32.xlu0 %v3293
  %v3295 = vpop.xlane.xlu0 %3294
  %v3296 = vsel %vm2033, %v2989, 0.0
  %v3297 = vadd.f32 %v2988, %v3296
  %3298 = vadd.xlane.f32.xlu0 %v3297
  %v3299 = vpop.xlane.xlu0 %3298
  %v3300 = vsel %vm2033, %v2991, 0.0
  %v3301 = vadd.f32 %v2990, %v3300
  %3302 = vadd.xlane.f32.xlu0 %v3301
  %v3303 = vpop.xlane.xlu0 %3302
  %v3304 = vsel %vm2033, %v2993, 0.0
  %v3305 = vadd.f32 %v2992, %v3304
  %3306 = vadd.xlane.f32.xlu0 %v3305
  %v3307 = vpop.xlane.xlu0 %3306
  %v3308 = vsel %vm2033, %v2995, 0.0
  %v3309 = vadd.f32 %v2994, %v3308
  %3310 = vadd.xlane.f32.xlu0 %v3309
  %v3311 = vpop.xlane.xlu0 %3310
  %v3312 = vsel %vm2033, %v2997, 0.0
  %v3313 = vadd.f32 %v2996, %v3312
  %3314 = vadd.xlane.f32.xlu0 %v3313
  %v3315 = vpop.xlane.xlu0 %3314
  %v3316 = vsel %vm2033, %v2999, 0.0
  %v3317 = vadd.f32 %v2998, %v3316
  %3318 = vadd.xlane.f32.xlu0 %v3317
  %v3319 = vpop.xlane.xlu0 %3318
  %v3320 = vsel %vm2033, %v3001, 0.0
  %v3321 = vadd.f32 %v3000, %v3320
  %3322 = vadd.xlane.f32.xlu0 %v3321
  %v3323 = vpop.xlane.xlu0 %3322
  %v3324 = vsel %vm2033, %v3003, 0.0
  %v3325 = vadd.f32 %v3002, %v3324
  %3326 = vadd.xlane.f32.xlu0 %v3325
  %v3327 = vpop.xlane.xlu0 %3326
  %v3328 = vsel %vm2033, %v3005, 0.0
  %v3329 = vadd.f32 %v3004, %v3328
  %3330 = vadd.xlane.f32.xlu0 %v3329
  %v3331 = vpop.xlane.xlu0 %3330
  %v3332 = vsel %vm2033, %v3007, 0.0
  %v3333 = vadd.f32 %v3006, %v3332
  %3334 = vadd.xlane.f32.xlu0 %v3333
  %v3335 = vpop.xlane.xlu0 %3334
  %v3336 = vsel %vm2033, %v3009, 0.0
  %v3337 = vadd.f32 %v3008, %v3336
  %3338 = vadd.xlane.f32.xlu0 %v3337
  %v3339 = vpop.xlane.xlu0 %3338
  %v3340 = vsel %vm2033, %v3011, 0.0
  %v3341 = vadd.f32 %v3010, %v3340
  %3342 = vadd.xlane.f32.xlu0 %v3341
  %v3343 = vpop.xlane.xlu0 %3342
  %v3344 = vsel %vm2033, %v3013, 0.0
  %v3345 = vadd.f32 %v3012, %v3344
  %3346 = vadd.xlane.f32.xlu0 %v3345
  %v3347 = vpop.xlane.xlu0 %3346
  %v3348 = vsel %vm2033, %v3015, 0.0
  %v3349 = vadd.f32 %v3014, %v3348
  %3350 = vadd.xlane.f32.xlu0 %v3349
  %v3351 = vpop.xlane.xlu0 %3350
  %v3352 = vsel %vm2033, %v3017, 0.0
  %v3353 = vadd.f32 %v3016, %v3352
  %3354 = vadd.xlane.f32.xlu0 %v3353
  %v3355 = vpop.xlane.xlu0 %3354
  %v3356 = vsel %vm2033, %v3019, 0.0
  %v3357 = vadd.f32 %v3018, %v3356
  %3358 = vadd.xlane.f32.xlu0 %v3357
  %v3359 = vpop.xlane.xlu0 %3358
  %v3360 = vsel %vm2033, %v3021, 0.0
  %v3361 = vadd.f32 %v3020, %v3360
  %3362 = vadd.xlane.f32.xlu0 %v3361
  %v3363 = vpop.xlane.xlu0 %3362
  %v3364 = vsel %vm2033, %v3023, 0.0
  %v3365 = vadd.f32 %v3022, %v3364
  %3366 = vadd.xlane.f32.xlu0 %v3365
  %v3367 = vpop.xlane.xlu0 %3366
  %v3368 = vsel %vm2033, %v3025, 0.0
  %v3369 = vadd.f32 %v3024, %v3368
  %3370 = vadd.xlane.f32.xlu0 %v3369
  %v3371 = vpop.xlane.xlu0 %3370
  %v3372 = vsel %vm2033, %v3027, 0.0
  %v3373 = vadd.f32 %v3026, %v3372
  %3374 = vadd.xlane.f32.xlu0 %v3373
  %v3375 = vpop.xlane.xlu0 %3374
  %v3376 = vsel %vm2033, %v3029, 0.0
  %v3377 = vadd.f32 %v3028, %v3376
  %3378 = vadd.xlane.f32.xlu0 %v3377
  %v3379 = vpop.xlane.xlu0 %3378
  %v3380 = vsel %vm2033, %v3031, 0.0
  %v3381 = vadd.f32 %v3030, %v3380
  %3382 = vadd.xlane.f32.xlu0 %v3381
  %v3383 = vpop.xlane.xlu0 %3382
  %v3384 = vsel %vm2033, %v3033, 0.0
  %v3385 = vadd.f32 %v3032, %v3384
  %3386 = vadd.xlane.f32.xlu0 %v3385
  %v3387 = vpop.xlane.xlu0 %3386
  %v3388 = vsel %vm2033, %v3035, 0.0
  %v3389 = vadd.f32 %v3034, %v3388
  %3390 = vadd.xlane.f32.xlu0 %v3389
  %v3391 = vpop.xlane.xlu0 %3390
  %v3392 = vsel %vm2033, %v3037, 0.0
  %v3393 = vadd.f32 %v3036, %v3392
  %3394 = vadd.xlane.f32.xlu0 %v3393
  %v3395 = vpop.xlane.xlu0 %3394
  %v3396 = vsel %vm2033, %v3039, 0.0
  %v3397 = vadd.f32 %v3038, %v3396
  %3398 = vadd.xlane.f32.xlu0 %v3397
  %v3399 = vpop.xlane.xlu0 %3398
  %v3400 = vsel %vm2033, %v3041, 0.0
  %v3401 = vadd.f32 %v3040, %v3400
  %3402 = vadd.xlane.f32.xlu0 %v3401
  %v3403 = vpop.xlane.xlu0 %3402
  %v3404 = vsel %vm2033, %v3043, 0.0
  %v3405 = vadd.f32 %v3042, %v3404
  %3406 = vadd.xlane.f32.xlu0 %v3405
  %v3407 = vpop.xlane.xlu0 %3406
  %v3408 = vsel %vm2033, %v3045, 0.0
  %v3409 = vadd.f32 %v3044, %v3408
  %3410 = vadd.xlane.f32.xlu0 %v3409
  %v3411 = vpop.xlane.xlu0 %3410
  %v3412 = vsel %vm2033, %v3047, 0.0
  %v3413 = vadd.f32 %v3046, %v3412
  %3414 = vadd.xlane.f32.xlu0 %v3413
  %v3415 = vpop.xlane.xlu0 %3414
  %v3416 = vsel %vm2033, %v3049, 0.0
  %v3417 = vadd.f32 %v3048, %v3416
  %3418 = vadd.xlane.f32.xlu0 %v3417
  %v3419 = vpop.xlane.xlu0 %3418
  %v3420 = vsel %vm2033, %v3051, 0.0
  %v3421 = vadd.f32 %v3050, %v3420
  %3422 = vadd.xlane.f32.xlu0 %v3421
  %v3423 = vpop.xlane.xlu0 %3422
  %v3424 = vsel %vm2033, %v3053, 0.0
  %v3425 = vadd.f32 %v3052, %v3424
  %3426 = vadd.xlane.f32.xlu0 %v3425
  %v3427 = vpop.xlane.xlu0 %3426
  %v3428 = vsel %vm2033, %v3055, 0.0
  %v3429 = vadd.f32 %v3054, %v3428
  %3430 = vadd.xlane.f32.xlu0 %v3429
  %v3431 = vpop.xlane.xlu0 %3430
  %v3432 = vsel %vm2033, %v3057, 0.0
  %v3433 = vadd.f32 %v3056, %v3432
  %3434 = vadd.xlane.f32.xlu0 %v3433
  %v3435 = vpop.xlane.xlu0 %3434
  %v3436 = vsel %vm2033, %v3059, 0.0
  %v3437 = vadd.f32 %v3058, %v3436
  %3438 = vadd.xlane.f32.xlu0 %v3437
  %v3439 = vpop.xlane.xlu0 %3438
  %v3440 = vsel %vm2033, %v3061, 0.0
  %v3441 = vadd.f32 %v3060, %v3440
  %3442 = vadd.xlane.f32.xlu0 %v3441
  %v3443 = vpop.xlane.xlu0 %3442
  %v3444 = vsel %vm2033, %v3063, 0.0
  %v3445 = vadd.f32 %v3062, %v3444
  %3446 = vadd.xlane.f32.xlu0 %v3445
  %v3447 = vpop.xlane.xlu0 %3446
  %v3448 = vsel %vm2033, %v3065, 0.0
  %v3449 = vadd.f32 %v3064, %v3448
  %3450 = vadd.xlane.f32.xlu0 %v3449
  %v3451 = vpop.xlane.xlu0 %3450
  %v3452 = vsel %vm2033, %v3067, 0.0
  %v3453 = vadd.f32 %v3066, %v3452
  %3454 = vadd.xlane.f32.xlu0 %v3453
  %v3455 = vpop.xlane.xlu0 %3454
  %v3456 = vsel %vm2033, %v3069, 0.0
  %v3457 = vadd.f32 %v3068, %v3456
  %3458 = vadd.xlane.f32.xlu0 %v3457
  %v3459 = vpop.xlane.xlu0 %3458
  %v3460 = vsel %vm2033, %v3071, 0.0
  %v3461 = vadd.f32 %v3070, %v3460
  %3462 = vadd.xlane.f32.xlu0 %v3461
  %v3463 = vpop.xlane.xlu0 %3462
  %v3464 = vsel %vm2033, %v3073, 0.0
  %v3465 = vadd.f32 %v3072, %v3464
  %3466 = vadd.xlane.f32.xlu0 %v3465
  %v3467 = vpop.xlane.xlu0 %3466
  %v3468 = vsel %vm2033, %v3075, 0.0
  %v3469 = vadd.f32 %v3074, %v3468
  %3470 = vadd.xlane.f32.xlu0 %v3469
  %v3471 = vpop.xlane.xlu0 %3470
  %v3472 = vsel %vm2033, %v3077, 0.0
  %v3473 = vadd.f32 %v3076, %v3472
  %3474 = vadd.xlane.f32.xlu0 %v3473
  %v3475 = vpop.xlane.xlu0 %3474
  %v3476 = vsel %vm2033, %v3079, 0.0
  %v3477 = vadd.f32 %v3078, %v3476
  %3478 = vadd.xlane.f32.xlu0 %v3477
  %v3479 = vpop.xlane.xlu0 %3478
  %v3480 = vsel %vm2033, %v3081, 0.0
  %v3481 = vadd.f32 %v3080, %v3480
  %3482 = vadd.xlane.f32.xlu0 %v3481
  %v3483 = vpop.xlane.xlu0 %3482
  %v3484 = vsel %vm2033, %v3083, 0.0
  %v3485 = vadd.f32 %v3082, %v3484
  %3486 = vadd.xlane.f32.xlu0 %v3485
  %v3487 = vpop.xlane.xlu0 %3486
  %v3488 = vsel %vm2033, %v3085, 0.0
  %v3489 = vadd.f32 %v3084, %v3488
  %3490 = vadd.xlane.f32.xlu0 %v3489
  %v3491 = vpop.xlane.xlu0 %3490
  %v3492 = vsel %vm2033, %v3087, 0.0
  %v3493 = vadd.f32 %v3086, %v3492
  %3494 = vadd.xlane.f32.xlu0 %v3493
  %v3495 = vpop.xlane.xlu0 %3494
  %v3496 = vsel %vm2033, %v3089, 0.0
  %v3497 = vadd.f32 %v3088, %v3496
  %3498 = vadd.xlane.f32.xlu0 %v3497
  %v3499 = vpop.xlane.xlu0 %3498
  %v3500 = vsel %vm2033, %v3091, 0.0
  %v3501 = vadd.f32 %v3090, %v3500
  %3502 = vadd.xlane.f32.xlu0 %v3501
  %v3503 = vpop.xlane.xlu0 %3502
  %v3504 = vsel %vm2033, %v3093, 0.0
  %v3505 = vadd.f32 %v3092, %v3504
  %3506 = vadd.xlane.f32.xlu0 %v3505
  %v3507 = vpop.xlane.xlu0 %3506
  %v3508 = vsel %vm2033, %v3095, 0.0
  %v3509 = vadd.f32 %v3094, %v3508
  %3510 = vadd.xlane.f32.xlu0 %v3509
  %v3511 = vpop.xlane.xlu0 %3510
  %v3512 = vsel %vm2033, %v3097, 0.0
  %v3513 = vadd.f32 %v3096, %v3512
  %3514 = vadd.xlane.f32.xlu0 %v3513
  %v3515 = vpop.xlane.xlu0 %3514
  %v3516 = vsel %vm2033, %v3099, 0.0
  %v3517 = vadd.f32 %v3098, %v3516
  %3518 = vadd.xlane.f32.xlu0 %v3517
  %v3519 = vpop.xlane.xlu0 %3518
  %v3520 = vsel %vm2033, %v3101, 0.0
  %v3521 = vadd.f32 %v3100, %v3520
  %3522 = vadd.xlane.f32.xlu0 %v3521
  %v3523 = vpop.xlane.xlu0 %3522
  %v3524 = vsel %vm2033, %v3103, 0.0
  %v3525 = vadd.f32 %v3102, %v3524
  %3526 = vadd.xlane.f32.xlu0 %v3525
  %v3527 = vpop.xlane.xlu0 %3526
  %v3528 = vsel %vm2033, %v3105, 0.0
  %v3529 = vadd.f32 %v3104, %v3528
  %3530 = vadd.xlane.f32.xlu0 %v3529
  %v3531 = vpop.xlane.xlu0 %3530
  %v3532 = vsel %vm2033, %v3107, 0.0
  %v3533 = vadd.f32 %v3106, %v3532
  %3534 = vadd.xlane.f32.xlu0 %v3533
  %v3535 = vpop.xlane.xlu0 %3534
  %v3536 = vsel %vm2033, %v3109, 0.0
  %v3537 = vadd.f32 %v3108, %v3536
  %3538 = vadd.xlane.f32.xlu0 %v3537
  %v3539 = vpop.xlane.xlu0 %3538
  %v3540 = vsel %vm2033, %v3111, 0.0
  %v3541 = vadd.f32 %v3110, %v3540
  %3542 = vadd.xlane.f32.xlu0 %v3541
  %v3543 = vpop.xlane.xlu0 %3542
  %v3544 = vmul.f32 %v3115, 0.0051020407
  %v3545 = vmul.f32 %v3119, 0.0051020407
  %v3546 = vmul.f32 %v3123, 0.0051020407
  %v3547 = vmul.f32 %v3127, 0.0051020407
  %v3548 = vmul.f32 %v3131, 0.0051020407
  %v3549 = vmul.f32 %v3135, 0.0051020407
  %v3550 = vmul.f32 %v3139, 0.0051020407
  %v3551 = vmul.f32 %v3143, 0.0051020407
  %v3552 = vmul.f32 %v3147, 0.0051020407
  %v3553 = vmul.f32 %v3151, 0.0051020407
  %v3554 = vmul.f32 %v3155, 0.0051020407
  %v3555 = vmul.f32 %v3159, 0.0051020407
  %v3556 = vmul.f32 %v3163, 0.0051020407
  %v3557 = vmul.f32 %v3167, 0.0051020407
  %v3558 = vmul.f32 %v3171, 0.0051020407
  %v3559 = vmul.f32 %v3175, 0.0051020407
  %v3560 = vmul.f32 %v3179, 0.0051020407
  %v3561 = vmul.f32 %v3183, 0.0051020407
  %v3562 = vmul.f32 %v3187, 0.0051020407
  %v3563 = vmul.f32 %v3191, 0.0051020407
  %v3564 = vmul.f32 %v3195, 0.0051020407
  %v3565 = vmul.f32 %v3199, 0.0051020407
  %v3566 = vmul.f32 %v3203, 0.0051020407
  %v3567 = vmul.f32 %v3207, 0.0051020407
  %v3568 = vmul.f32 %v3211, 0.0051020407
  %v3569 = vmul.f32 %v3215, 0.0051020407
  %v3570 = vmul.f32 %v3219, 0.0051020407
  %v3571 = vmul.f32 %v3223, 0.0051020407
  %v3572 = vmul.f32 %v3227, 0.0051020407
  %v3573 = vmul.f32 %v3231, 0.0051020407
  %v3574 = vmul.f32 %v3235, 0.0051020407
  %v3575 = vmul.f32 %v3239, 0.0051020407
  %v3576 = vmul.f32 %v3243, 0.0051020407
  %v3577 = vmul.f32 %v3247, 0.0051020407
  %v3578 = vmul.f32 %v3251, 0.0051020407
  %v3579 = vmul.f32 %v3255, 0.0051020407
  %v3580 = vmul.f32 %v3259, 0.0051020407
  %v3581 = vmul.f32 %v3263, 0.0051020407
  %v3582 = vmul.f32 %v3267, 0.0051020407
  %v3583 = vmul.f32 %v3271, 0.0051020407
  %v3584 = vmul.f32 %v3275, 0.0051020407
  %v3585 = vmul.f32 %v3279, 0.0051020407
  %v3586 = vmul.f32 %v3283, 0.0051020407
  %v3587 = vmul.f32 %v3287, 0.0051020407
  %v3588 = vmul.f32 %v3291, 0.0051020407
  %v3589 = vmul.f32 %v3295, 0.0051020407
  %v3590 = vmul.f32 %v3299, 0.0051020407
  %v3591 = vmul.f32 %v3303, 0.0051020407
  %v3592 = vmul.f32 %v3307, 0.0051020407
  %v3593 = vmul.f32 %v3311, 0.0051020407
  %v3594 = vmul.f32 %v3315, 0.0051020407
  %v3595 = vmul.f32 %v3319, 0.0051020407
  %v3596 = vmul.f32 %v3323, 0.0051020407
  %v3597 = vmul.f32 %v3327, 0.0051020407
  %v3598 = vmul.f32 %v3331, 0.0051020407
  %v3599 = vmul.f32 %v3335, 0.0051020407
  %v3600 = vmul.f32 %v3339, 0.0051020407
  %v3601 = vmul.f32 %v3343, 0.0051020407
  %v3602 = vmul.f32 %v3347, 0.0051020407
  %v3603 = vmul.f32 %v3351, 0.0051020407
  %v3604 = vmul.f32 %v3355, 0.0051020407
  %v3605 = vmul.f32 %v3359, 0.0051020407
  %v3606 = vmul.f32 %v3363, 0.0051020407
  %v3607 = vmul.f32 %v3367, 0.0051020407
  %v3608 = vmul.f32 %v3371, 0.0051020407
  %v3609 = vmul.f32 %v3375, 0.0051020407
  %v3610 = vmul.f32 %v3379, 0.0051020407
  %v3611 = vmul.f32 %v3383, 0.0051020407
  %v3612 = vmul.f32 %v3387, 0.0051020407
  %v3613 = vmul.f32 %v3391, 0.0051020407
  %v3614 = vmul.f32 %v3395, 0.0051020407
  %v3615 = vmul.f32 %v3399, 0.0051020407
  %v3616 = vmul.f32 %v3403, 0.0051020407
  %v3617 = vmul.f32 %v3407, 0.0051020407
  %v3618 = vmul.f32 %v3411, 0.0051020407
  %v3619 = vmul.f32 %v3415, 0.0051020407
  %v3620 = vmul.f32 %v3419, 0.0051020407
  %v3621 = vmul.f32 %v3423, 0.0051020407
  %v3622 = vmul.f32 %v3427, 0.0051020407
  %v3623 = vmul.f32 %v3431, 0.0051020407
  %v3624 = vmul.f32 %v3435, 0.0051020407
  %v3625 = vmul.f32 %v3439, 0.0051020407
  %v3626 = vmul.f32 %v3443, 0.0051020407
  %v3627 = vmul.f32 %v3447, 0.0051020407
  %v3628 = vmul.f32 %v3451, 0.0051020407
  %v3629 = vmul.f32 %v3455, 0.0051020407
  %v3630 = vmul.f32 %v3459, 0.0051020407
  %v3631 = vmul.f32 %v3463, 0.0051020407
  %v3632 = vmul.f32 %v3467, 0.0051020407
  %v3633 = vmul.f32 %v3471, 0.0051020407
  %v3634 = vmul.f32 %v3475, 0.0051020407
  %v3635 = vmul.f32 %v3479, 0.0051020407
  %v3636 = vmul.f32 %v3483, 0.0051020407
  %v3637 = vmul.f32 %v3487, 0.0051020407
  %v3638 = vmul.f32 %v3491, 0.0051020407
  %v3639 = vmul.f32 %v3495, 0.0051020407
  %v3640 = vmul.f32 %v3499, 0.0051020407
  %v3641 = vmul.f32 %v3503, 0.0051020407
  %v3642 = vmul.f32 %v3507, 0.0051020407
  %v3643 = vmul.f32 %v3511, 0.0051020407
  %v3644 = vmul.f32 %v3515, 0.0051020407
  %v3645 = vmul.f32 %v3519, 0.0051020407
  %v3646 = vmul.f32 %v3523, 0.0051020407
  %v3647 = vmul.f32 %v3527, 0.0051020407
  %v3648 = vmul.f32 %v3531, 0.0051020407
  %v3649 = vmul.f32 %v3535, 0.0051020407
  %v3650 = vmul.f32 %v3539, 0.0051020407
  %v3651 = vmul.f32 %v3543, 0.0051020407
  %v3652 = vmul.f32 %v2788, %v2788
  %v3653 = vmul.f32 %v2789, %v2789
  %v3654 = vmul.f32 %v2790, %v2790
  %v3655 = vmul.f32 %v2791, %v2791
  %v3656 = vmul.f32 %v2792, %v2792
  %v3657 = vmul.f32 %v2793, %v2793
  %v3658 = vmul.f32 %v2794, %v2794
  %v3659 = vmul.f32 %v2795, %v2795
  %v3660 = vmul.f32 %v2796, %v2796
  %v3661 = vmul.f32 %v2797, %v2797
  %v3662 = vmul.f32 %v2798, %v2798
  %v3663 = vmul.f32 %v2799, %v2799
  %v3664 = vmul.f32 %v2800, %v2800
  %v3665 = vmul.f32 %v2801, %v2801
  %v3666 = vmul.f32 %v2802, %v2802
  %v3667 = vmul.f32 %v2803, %v2803
  %v3668 = vmul.f32 %v2804, %v2804
  %v3669 = vmul.f32 %v2805, %v2805
  %v3670 = vmul.f32 %v2806, %v2806
  %v3671 = vmul.f32 %v2807, %v2807
  %v3672 = vmul.f32 %v2808, %v2808
  %v3673 = vmul.f32 %v2809, %v2809
  %v3674 = vmul.f32 %v2810, %v2810
  %v3675 = vmul.f32 %v2811, %v2811
  %v3676 = vmul.f32 %v2812, %v2812
  %v3677 = vmul.f32 %v2813, %v2813
  %v3678 = vmul.f32 %v2814, %v2814
  %v3679 = vmul.f32 %v2815, %v2815
  %v3680 = vmul.f32 %v2816, %v2816
  %v3681 = vmul.f32 %v2817, %v2817
  %v3682 = vmul.f32 %v2818, %v2818
  %v3683 = vmul.f32 %v2819, %v2819
  %v3684 = vmul.f32 %v2820, %v2820
  %v3685 = vmul.f32 %v2821, %v2821
  %v3686 = vmul.f32 %v2822, %v2822
  %v3687 = vmul.f32 %v2823, %v2823
  %v3688 = vmul.f32 %v2824, %v2824
  %v3689 = vmul.f32 %v2825, %v2825
  %v3690 = vmul.f32 %v2826, %v2826
  %v3691 = vmul.f32 %v2827, %v2827
  %v3692 = vmul.f32 %v2828, %v2828
  %v3693 = vmul.f32 %v2829, %v2829
  %v3694 = vmul.f32 %v2830, %v2830
  %v3695 = vmul.f32 %v2831, %v2831
  %v3696 = vmul.f32 %v2832, %v2832
  %v3697 = vmul.f32 %v2833, %v2833
  %v3698 = vmul.f32 %v2834, %v2834
  %v3699 = vmul.f32 %v2835, %v2835
  %v3700 = vmul.f32 %v2836, %v2836
  %v3701 = vmul.f32 %v2837, %v2837
  %v3702 = vmul.f32 %v2838, %v2838
  %v3703 = vmul.f32 %v2839, %v2839
  %v3704 = vmul.f32 %v2840, %v2840
  %v3705 = vmul.f32 %v2841, %v2841
  %v3706 = vmul.f32 %v2842, %v2842
  %v3707 = vmul.f32 %v2843, %v2843
  %v3708 = vmul.f32 %v2844, %v2844
  %v3709 = vmul.f32 %v2845, %v2845
  %v3710 = vmul.f32 %v2846, %v2846
  %v3711 = vmul.f32 %v2847, %v2847
  %v3712 = vmul.f32 %v2848, %v2848
  %v3713 = vmul.f32 %v2849, %v2849
  %v3714 = vmul.f32 %v2850, %v2850
  %v3715 = vmul.f32 %v2851, %v2851
  %v3716 = vmul.f32 %v2852, %v2852
  %v3717 = vmul.f32 %v2853, %v2853
  %v3718 = vmul.f32 %v2854, %v2854
  %v3719 = vmul.f32 %v2855, %v2855
  %v3720 = vmul.f32 %v2856, %v2856
  %v3721 = vmul.f32 %v2857, %v2857
  %v3722 = vmul.f32 %v2858, %v2858
  %v3723 = vmul.f32 %v2859, %v2859
  %v3724 = vmul.f32 %v2860, %v2860
  %v3725 = vmul.f32 %v2861, %v2861
  %v3726 = vmul.f32 %v2862, %v2862
  %v3727 = vmul.f32 %v2863, %v2863
  %v3728 = vmul.f32 %v2864, %v2864
  %v3729 = vmul.f32 %v2865, %v2865
  %v3730 = vmul.f32 %v2866, %v2866
  %v3731 = vmul.f32 %v2867, %v2867
  %v3732 = vmul.f32 %v2868, %v2868
  %v3733 = vmul.f32 %v2869, %v2869
  %v3734 = vmul.f32 %v2870, %v2870
  %v3735 = vmul.f32 %v2871, %v2871
  %v3736 = vmul.f32 %v2872, %v2872
  %v3737 = vmul.f32 %v2873, %v2873
  %v3738 = vmul.f32 %v2874, %v2874
  %v3739 = vmul.f32 %v2875, %v2875
  %v3740 = vmul.f32 %v2876, %v2876
  %v3741 = vmul.f32 %v2877, %v2877
  %v3742 = vmul.f32 %v2878, %v2878
  %v3743 = vmul.f32 %v2879, %v2879
  %v3744 = vmul.f32 %v2880, %v2880
  %v3745 = vmul.f32 %v2881, %v2881
  %v3746 = vmul.f32 %v2882, %v2882
  %v3747 = vmul.f32 %v2883, %v2883
  %v3748 = vmul.f32 %v2884, %v2884
  %v3749 = vmul.f32 %v2885, %v2885
  %v3750 = vmul.f32 %v2886, %v2886
  %v3751 = vmul.f32 %v2887, %v2887
  %v3752 = vmul.f32 %v2888, %v2888
  %v3753 = vmul.f32 %v2889, %v2889
  %v3754 = vmul.f32 %v2890, %v2890
  %v3755 = vmul.f32 %v2891, %v2891
  %v3756 = vmul.f32 %v2892, %v2892
  %v3757 = vmul.f32 %v2893, %v2893
  %v3758 = vmul.f32 %v2894, %v2894
  %v3759 = vmul.f32 %v2895, %v2895
  %v3760 = vsub.f32 %v3544, %v3652
  %v3761 = vsub.f32 %v3545, %v3653
  %v3762 = vsub.f32 %v3546, %v3654
  %v3763 = vsub.f32 %v3547, %v3655
  %v3764 = vsub.f32 %v3548, %v3656
  %v3765 = vsub.f32 %v3549, %v3657
  %v3766 = vsub.f32 %v3550, %v3658
  %v3767 = vsub.f32 %v3551, %v3659
  %v3768 = vsub.f32 %v3552, %v3660
  %v3769 = vsub.f32 %v3553, %v3661
  %v3770 = vsub.f32 %v3554, %v3662
  %v3771 = vsub.f32 %v3555, %v3663
  %v3772 = vsub.f32 %v3556, %v3664
  %v3773 = vsub.f32 %v3557, %v3665
  %v3774 = vsub.f32 %v3558, %v3666
  %v3775 = vsub.f32 %v3559, %v3667
  %v3776 = vsub.f32 %v3560, %v3668
  %v3777 = vsub.f32 %v3561, %v3669
  %v3778 = vsub.f32 %v3562, %v3670
  %v3779 = vsub.f32 %v3563, %v3671
  %v3780 = vsub.f32 %v3564, %v3672
  %v3781 = vsub.f32 %v3565, %v3673
  %v3782 = vsub.f32 %v3566, %v3674
  %v3783 = vsub.f32 %v3567, %v3675
  %v3784 = vsub.f32 %v3568, %v3676
  %v3785 = vsub.f32 %v3569, %v3677
  %v3786 = vsub.f32 %v3570, %v3678
  %v3787 = vsub.f32 %v3571, %v3679
  %v3788 = vsub.f32 %v3572, %v3680
  %v3789 = vsub.f32 %v3573, %v3681
  %v3790 = vsub.f32 %v3574, %v3682
  %v3791 = vsub.f32 %v3575, %v3683
  %v3792 = vsub.f32 %v3576, %v3684
  %v3793 = vsub.f32 %v3577, %v3685
  %v3794 = vsub.f32 %v3578, %v3686
  %v3795 = vsub.f32 %v3579, %v3687
  %v3796 = vsub.f32 %v3580, %v3688
  %v3797 = vsub.f32 %v3581, %v3689
  %v3798 = vsub.f32 %v3582, %v3690
  %v3799 = vsub.f32 %v3583, %v3691
  %v3800 = vsub.f32 %v3584, %v3692
  %v3801 = vsub.f32 %v3585, %v3693
  %v3802 = vsub.f32 %v3586, %v3694
  %v3803 = vsub.f32 %v3587, %v3695
  %v3804 = vsub.f32 %v3588, %v3696
  %v3805 = vsub.f32 %v3589, %v3697
  %v3806 = vsub.f32 %v3590, %v3698
  %v3807 = vsub.f32 %v3591, %v3699
  %v3808 = vsub.f32 %v3592, %v3700
  %v3809 = vsub.f32 %v3593, %v3701
  %v3810 = vsub.f32 %v3594, %v3702
  %v3811 = vsub.f32 %v3595, %v3703
  %v3812 = vsub.f32 %v3596, %v3704
  %v3813 = vsub.f32 %v3597, %v3705
  %v3814 = vsub.f32 %v3598, %v3706
  %v3815 = vsub.f32 %v3599, %v3707
  %v3816 = vsub.f32 %v3600, %v3708
  %v3817 = vsub.f32 %v3601, %v3709
  %v3818 = vsub.f32 %v3602, %v3710
  %v3819 = vsub.f32 %v3603, %v3711
  %v3820 = vsub.f32 %v3604, %v3712
  %v3821 = vsub.f32 %v3605, %v3713
  %v3822 = vsub.f32 %v3606, %v3714
  %v3823 = vsub.f32 %v3607, %v3715
  %v3824 = vsub.f32 %v3608, %v3716
  %v3825 = vsub.f32 %v3609, %v3717
  %v3826 = vsub.f32 %v3610, %v3718
  %v3827 = vsub.f32 %v3611, %v3719
  %v3828 = vsub.f32 %v3612, %v3720
  %v3829 = vsub.f32 %v3613, %v3721
  %v3830 = vsub.f32 %v3614, %v3722
  %v3831 = vsub.f32 %v3615, %v3723
  %v3832 = vsub.f32 %v3616, %v3724
  %v3833 = vsub.f32 %v3617, %v3725
  %v3834 = vsub.f32 %v3618, %v3726
  %v3835 = vsub.f32 %v3619, %v3727
  %v3836 = vsub.f32 %v3620, %v3728
  %v3837 = vsub.f32 %v3621, %v3729
  %v3838 = vsub.f32 %v3622, %v3730
  %v3839 = vsub.f32 %v3623, %v3731
  %v3840 = vsub.f32 %v3624, %v3732
  %v3841 = vsub.f32 %v3625, %v3733
  %v3842 = vsub.f32 %v3626, %v3734
  %v3843 = vsub.f32 %v3627, %v3735
  %v3844 = vsub.f32 %v3628, %v3736
  %v3845 = vsub.f32 %v3629, %v3737
  %v3846 = vsub.f32 %v3630, %v3738
  %v3847 = vsub.f32 %v3631, %v3739
  %v3848 = vsub.f32 %v3632, %v3740
  %v3849 = vsub.f32 %v3633, %v3741
  %v3850 = vsub.f32 %v3634, %v3742
  %v3851 = vsub.f32 %v3635, %v3743
  %v3852 = vsub.f32 %v3636, %v3744
  %v3853 = vsub.f32 %v3637, %v3745
  %v3854 = vsub.f32 %v3638, %v3746
  %v3855 = vsub.f32 %v3639, %v3747
  %v3856 = vsub.f32 %v3640, %v3748
  %v3857 = vsub.f32 %v3641, %v3749
  %v3858 = vsub.f32 %v3642, %v3750
  %v3859 = vsub.f32 %v3643, %v3751
  %v3860 = vsub.f32 %v3644, %v3752
  %v3861 = vsub.f32 %v3645, %v3753
  %v3862 = vsub.f32 %v3646, %v3754
  %v3863 = vsub.f32 %v3647, %v3755
  %v3864 = vsub.f32 %v3648, %v3756
  %v3865 = vsub.f32 %v3649, %v3757
  %v3866 = vsub.f32 %v3650, %v3758
  %v3867 = vsub.f32 %v3651, %v3759
  %v3868 = vld [vmem:[%s3] sm:$0xff]
  %v3869 = vld [vmem:[%s3 + $0x8] sm:$0xff]
  %v3870 = vld [vmem:[%s3 + $0x10] sm:$0xff]
  %v3871 = vld [vmem:[%s3 + $0x18] sm:$0xff]
  %v3872 = vld [vmem:[%s3 + $0x20] sm:$0xff]
  %v3873 = vld [vmem:[%s3 + $0x28] sm:$0xff]
  %v3874 = vld [vmem:[%s3 + $0x30] sm:$0xff]
  %v3875 = vld [vmem:[%s3 + $0x38] sm:$0xff]
  %v3876 = vld [vmem:[%s3 + $0x40] sm:$0xff]
  %v3877 = vld [vmem:[%s3 + $0x48] sm:$0xff]
  %v3878 = vld [vmem:[%s3 + $0x50] sm:$0xff]
  %v3879 = vld [vmem:[%s3 + $0x58] sm:$0xff]
  %v3880 = vld [vmem:[%s3 + $0x60] sm:$0xff]
  %v3881 = vld [vmem:[%s3 + $0x68] sm:$0xff]
  %v3882 = vld [vmem:[%s3 + $0x70] sm:$0xff]
  %v3883 = vld [vmem:[%s3 + $0x78] sm:$0xff]
  %v3884 = vld [vmem:[%s3 + $0x80] sm:$0xff]
  %v3885 = vld [vmem:[%s3 + $0x88] sm:$0xff]
  %v3886 = vld [vmem:[%s3 + $0x90] sm:$0xff]
  %v3887 = vld [vmem:[%s3 + $0x98] sm:$0xff]
  %v3888 = vld [vmem:[%s3 + $0xa0] sm:$0xff]
  %v3889 = vld [vmem:[%s3 + $0xa8] sm:$0xff]
  %v3890 = vld [vmem:[%s3 + $0xb0] sm:$0xff]
  %v3891 = vld [vmem:[%s3 + $0xb8] sm:$0xff]
  %v3892 = vld [vmem:[%s3 + $0xc0] sm:$0xff]
  %v3893 = vld [vmem:[%s3 + $0xc8] sm:$0xff]
  %v3894 = vld [vmem:[%s3 + $0xd0] sm:$0xff]
  %v3895 = vld [vmem:[%s3 + $0xd8] sm:$0xff]
  %v3896 = vld [vmem:[%s3 + $0xe0] sm:$0xff]
  %v3897 = vld [vmem:[%s3 + $0xe8] sm:$0xff]
  %v3898 = vld [vmem:[%s3 + $0xf0] sm:$0xff]
  %v3899 = vld [vmem:[%s3 + $0xf8] sm:$0xff]
  %v3900 = vld [vmem:[%s3 + $0x100] sm:$0xff]
  %v3901 = vld [vmem:[%s3 + $0x108] sm:$0xff]
  %v3902 = vld [vmem:[%s3 + $0x110] sm:$0xff]
  %v3903 = vld [vmem:[%s3 + $0x118] sm:$0xff]
  %v3904 = vld [vmem:[%s3 + $0x120] sm:$0xff]
  %v3905 = vld [vmem:[%s3 + $0x128] sm:$0xff]
  %v3906 = vld [vmem:[%s3 + $0x130] sm:$0xff]
  %v3907 = vld [vmem:[%s3 + $0x138] sm:$0xff]
  %v3908 = vld [vmem:[%s3 + $0x140] sm:$0xff]
  %v3909 = vld [vmem:[%s3 + $0x148] sm:$0xff]
  %v3910 = vld [vmem:[%s3 + $0x150] sm:$0xff]
  %v3911 = vld [vmem:[%s3 + $0x158] sm:$0xff]
  %v3912 = vld [vmem:[%s3 + $0x160] sm:$0xff]
  %v3913 = vld [vmem:[%s3 + $0x168] sm:$0xff]
  %v3914 = vld [vmem:[%s3 + $0x170] sm:$0xff]
  %v3915 = vld [vmem:[%s3 + $0x178] sm:$0xff]
  %v3916 = vld [vmem:[%s3 + $0x180] sm:$0xff]
  %v3917 = vld [vmem:[%s3 + $0x188] sm:$0xff]
  %v3918 = vld [vmem:[%s3 + $0x190] sm:$0xff]
  %v3919 = vld [vmem:[%s3 + $0x198] sm:$0xff]
  %v3920 = vld [vmem:[%s3 + $0x1a0] sm:$0xff]
  %v3921 = vld [vmem:[%s3 + $0x1a8] sm:$0xff]
  %v3922 = vld [vmem:[%s3 + $0x1b0] sm:$0xff]
  %v3923 = vld [vmem:[%s3 + $0x1b8] sm:$0xff]
  %v3924 = vld [vmem:[%s3 + $0x1c0] sm:$0xff]
  %v3925 = vld [vmem:[%s3 + $0x1c8] sm:$0xff]
  %v3926 = vld [vmem:[%s3 + $0x1d0] sm:$0xff]
  %v3927 = vld [vmem:[%s3 + $0x1d8] sm:$0xff]
  %v3928 = vld [vmem:[%s3 + $0x1e0] sm:$0xff]
  %v3929 = vld [vmem:[%s3 + $0x1e8] sm:$0xff]
  %v3930 = vld [vmem:[%s3 + $0x1f0] sm:$0xff]
  %v3931 = vld [vmem:[%s3 + $0x1f8] sm:$0xff]
  %v3932 = vld [vmem:[%s3 + $0x200] sm:$0xff]
  %v3933 = vld [vmem:[%s3 + $0x208] sm:$0xff]
  %v3934 = vld [vmem:[%s3 + $0x210] sm:$0xff]
  %v3935 = vld [vmem:[%s3 + $0x218] sm:$0xff]
  %v3936 = vld [vmem:[%s3 + $0x220] sm:$0xff]
  %v3937 = vld [vmem:[%s3 + $0x228] sm:$0xff]
  %v3938 = vld [vmem:[%s3 + $0x230] sm:$0xff]
  %v3939 = vld [vmem:[%s3 + $0x238] sm:$0xff]
  %v3940 = vld [vmem:[%s3 + $0x240] sm:$0xff]
  %v3941 = vld [vmem:[%s3 + $0x248] sm:$0xff]
  %v3942 = vld [vmem:[%s3 + $0x250] sm:$0xff]
  %v3943 = vld [vmem:[%s3 + $0x258] sm:$0xff]
  %v3944 = vld [vmem:[%s3 + $0x260] sm:$0xff]
  %v3945 = vld [vmem:[%s3 + $0x268] sm:$0xff]
  %v3946 = vld [vmem:[%s3 + $0x270] sm:$0xff]
  %v3947 = vld [vmem:[%s3 + $0x278] sm:$0xff]
  %v3948 = vld [vmem:[%s3 + $0x280] sm:$0xff]
  %v3949 = vld [vmem:[%s3 + $0x288] sm:$0xff]
  %v3950 = vld [vmem:[%s3 + $0x290] sm:$0xff]
  %v3951 = vld [vmem:[%s3 + $0x298] sm:$0xff]
  %v3952 = vld [vmem:[%s3 + $0x2a0] sm:$0xff]
  %v3953 = vld [vmem:[%s3 + $0x2a8] sm:$0xff]
  %v3954 = vld [vmem:[%s3 + $0x2b0] sm:$0xff]
  %v3955 = vld [vmem:[%s3 + $0x2b8] sm:$0xff]
  %v3956 = vld [vmem:[%s3 + $0x2c0] sm:$0xff]
  %v3957 = vld [vmem:[%s3 + $0x2c8] sm:$0xff]
  %v3958 = vld [vmem:[%s3 + $0x2d0] sm:$0xff]
  %v3959 = vld [vmem:[%s3 + $0x2d8] sm:$0xff]
  %v3960 = vld [vmem:[%s3 + $0x2e0] sm:$0xff]
  %v3961 = vld [vmem:[%s3 + $0x2e8] sm:$0xff]
  %v3962 = vld [vmem:[%s3 + $0x2f0] sm:$0xff]
  %v3963 = vld [vmem:[%s3 + $0x2f8] sm:$0xff]
  %v3964 = vld [vmem:[%s3 + $0x300] sm:$0xff]
  %v3965 = vld [vmem:[%s3 + $0x308] sm:$0xff]
  %v3966 = vld [vmem:[%s3 + $0x310] sm:$0xff]
  %v3967 = vld [vmem:[%s3 + $0x318] sm:$0xff]
  %v3968 = vld [vmem:[%s3 + $0x320] sm:$0xff]
  %v3969 = vld [vmem:[%s3 + $0x328] sm:$0xff]
  %v3970 = vld [vmem:[%s3 + $0x330] sm:$0xff]
  %v3971 = vld [vmem:[%s3 + $0x338] sm:$0xff]
  %v3972 = vld [vmem:[%s3 + $0x340] sm:$0xff]
  %v3973 = vld [vmem:[%s3 + $0x348] sm:$0xff]
  %v3974 = vld [vmem:[%s3 + $0x350] sm:$0xff]
  %v3975 = vld [vmem:[%s3 + $0x358] sm:$0xff]
  %v3976 = vadd.f32 %v3760, 1e-05
  %v3977 = vadd.f32 %v3761, 1e-05
  %v3978 = vadd.f32 %v3762, 1e-05
  %v3979 = vadd.f32 %v3763, 1e-05
  %v3980 = vadd.f32 %v3764, 1e-05
  %v3981 = vadd.f32 %v3765, 1e-05
  %v3982 = vadd.f32 %v3766, 1e-05
  %v3983 = vadd.f32 %v3767, 1e-05
  %v3984 = vadd.f32 %v3768, 1e-05
  %v3985 = vadd.f32 %v3769, 1e-05
  %v3986 = vadd.f32 %v3770, 1e-05
  %v3987 = vadd.f32 %v3771, 1e-05
  %v3988 = vadd.f32 %v3772, 1e-05
  %v3989 = vadd.f32 %v3773, 1e-05
  %v3990 = vadd.f32 %v3774, 1e-05
  %v3991 = vadd.f32 %v3775, 1e-05
  %v3992 = vadd.f32 %v3776, 1e-05
  %v3993 = vadd.f32 %v3777, 1e-05
  %v3994 = vadd.f32 %v3778, 1e-05
  %v3995 = vadd.f32 %v3779, 1e-05
  %v3996 = vadd.f32 %v3780, 1e-05
  %v3997 = vadd.f32 %v3781, 1e-05
  %v3998 = vadd.f32 %v3782, 1e-05
  %v3999 = vadd.f32 %v3783, 1e-05
  %v4000 = vadd.f32 %v3784, 1e-05
  %v4001 = vadd.f32 %v3785, 1e-05
  %v4002 = vadd.f32 %v3786, 1e-05
  %v4003 = vadd.f32 %v3787, 1e-05
  %v4004 = vadd.f32 %v3788, 1e-05
  %v4005 = vadd.f32 %v3789, 1e-05
  %v4006 = vadd.f32 %v3790, 1e-05
  %v4007 = vadd.f32 %v3791, 1e-05
  %v4008 = vadd.f32 %v3792, 1e-05
  %v4009 = vadd.f32 %v3793, 1e-05
  %v4010 = vadd.f32 %v3794, 1e-05
  %v4011 = vadd.f32 %v3795, 1e-05
  %v4012 = vadd.f32 %v3796, 1e-05
  %v4013 = vadd.f32 %v3797, 1e-05
  %v4014 = vadd.f32 %v3798, 1e-05
  %v4015 = vadd.f32 %v3799, 1e-05
  %v4016 = vadd.f32 %v3800, 1e-05
  %v4017 = vadd.f32 %v3801, 1e-05
  %v4018 = vadd.f32 %v3802, 1e-05
  %v4019 = vadd.f32 %v3803, 1e-05
  %v4020 = vadd.f32 %v3804, 1e-05
  %v4021 = vadd.f32 %v3805, 1e-05
  %v4022 = vadd.f32 %v3806, 1e-05
  %v4023 = vadd.f32 %v3807, 1e-05
  %v4024 = vadd.f32 %v3808, 1e-05
  %v4025 = vadd.f32 %v3809, 1e-05
  %v4026 = vadd.f32 %v3810, 1e-05
  %v4027 = vadd.f32 %v3811, 1e-05
  %v4028 = vadd.f32 %v3812, 1e-05
  %v4029 = vadd.f32 %v3813, 1e-05
  %v4030 = vadd.f32 %v3814, 1e-05
  %v4031 = vadd.f32 %v3815, 1e-05
  %v4032 = vadd.f32 %v3816, 1e-05
  %v4033 = vadd.f32 %v3817, 1e-05
  %v4034 = vadd.f32 %v3818, 1e-05
  %v4035 = vadd.f32 %v3819, 1e-05
  %v4036 = vadd.f32 %v3820, 1e-05
  %v4037 = vadd.f32 %v3821, 1e-05
  %v4038 = vadd.f32 %v3822, 1e-05
  %v4039 = vadd.f32 %v3823, 1e-05
  %v4040 = vadd.f32 %v3824, 1e-05
  %v4041 = vadd.f32 %v3825, 1e-05
  %v4042 = vadd.f32 %v3826, 1e-05
  %v4043 = vadd.f32 %v3827, 1e-05
  %v4044 = vadd.f32 %v3828, 1e-05
  %v4045 = vadd.f32 %v3829, 1e-05
  %v4046 = vadd.f32 %v3830, 1e-05
  %v4047 = vadd.f32 %v3831, 1e-05
  %v4048 = vadd.f32 %v3832, 1e-05
  %v4049 = vadd.f32 %v3833, 1e-05
  %v4050 = vadd.f32 %v3834, 1e-05
  %v4051 = vadd.f32 %v3835, 1e-05
  %v4052 = vadd.f32 %v3836, 1e-05
  %v4053 = vadd.f32 %v3837, 1e-05
  %v4054 = vadd.f32 %v3838, 1e-05
  %v4055 = vadd.f32 %v3839, 1e-05
  %v4056 = vadd.f32 %v3840, 1e-05
  %v4057 = vadd.f32 %v3841, 1e-05
  %v4058 = vadd.f32 %v3842, 1e-05
  %v4059 = vadd.f32 %v3843, 1e-05
  %v4060 = vadd.f32 %v3844, 1e-05
  %v4061 = vadd.f32 %v3845, 1e-05
  %v4062 = vadd.f32 %v3846, 1e-05
  %v4063 = vadd.f32 %v3847, 1e-05
  %v4064 = vadd.f32 %v3848, 1e-05
  %v4065 = vadd.f32 %v3849, 1e-05
  %v4066 = vadd.f32 %v3850, 1e-05
  %v4067 = vadd.f32 %v3851, 1e-05
  %v4068 = vadd.f32 %v3852, 1e-05
  %v4069 = vadd.f32 %v3853, 1e-05
  %v4070 = vadd.f32 %v3854, 1e-05
  %v4071 = vadd.f32 %v3855, 1e-05
  %v4072 = vadd.f32 %v3856, 1e-05
  %v4073 = vadd.f32 %v3857, 1e-05
  %v4074 = vadd.f32 %v3858, 1e-05
  %v4075 = vadd.f32 %v3859, 1e-05
  %v4076 = vadd.f32 %v3860, 1e-05
  %v4077 = vadd.f32 %v3861, 1e-05
  %v4078 = vadd.f32 %v3862, 1e-05
  %v4079 = vadd.f32 %v3863, 1e-05
  %v4080 = vadd.f32 %v3864, 1e-05
  %v4081 = vadd.f32 %v3865, 1e-05
  %v4082 = vadd.f32 %v3866, 1e-05
  %v4083 = vadd.f32 %v3867, 1e-05
  %v4084 = vrsqrt.pop %v3976
  %v4085 = vmul.f32 %v4084, %v3976
  %v4086 = vmul.f32 %v4085, %v4084
  %v4087 = vmul.f32 0.5, %v4086
  %v4088 = vsub.f32 1.5, %v4087
  %v4089 = vmul.f32 %v4084, %v4088
  %vm4090 = vweird.f32 %v3976
  %vm4091 = vweird.f32 %v4084
  %vm4092 = vmor %vm4090, %vm4091
  %v4093 = vsel %vm4092, %v4084, %v4089
  %v4094 = vrsqrt.pop %v3977
  %v4095 = vmul.f32 %v4094, %v3977
  %v4096 = vmul.f32 %v4095, %v4094
  %v4097 = vmul.f32 0.5, %v4096
  %v4098 = vsub.f32 1.5, %v4097
  %v4099 = vmul.f32 %v4094, %v4098
  %vm4100 = vweird.f32 %v3977
  %vm4101 = vweird.f32 %v4094
  %vm4102 = vmor %vm4100, %vm4101
  %v4103 = vsel %vm4102, %v4094, %v4099
  %v4104 = vrsqrt.pop %v3978
  %v4105 = vmul.f32 %v4104, %v3978
  %v4106 = vmul.f32 %v4105, %v4104
  %v4107 = vmul.f32 0.5, %v4106
  %v4108 = vsub.f32 1.5, %v4107
  %v4109 = vmul.f32 %v4104, %v4108
  %vm4110 = vweird.f32 %v3978
  %vm4111 = vweird.f32 %v4104
  %vm4112 = vmor %vm4110, %vm4111
  %v4113 = vsel %vm4112, %v4104, %v4109
  %v4114 = vrsqrt.pop %v3979
  %v4115 = vmul.f32 %v4114, %v3979
  %v4116 = vmul.f32 %v4115, %v4114
  %v4117 = vmul.f32 0.5, %v4116
  %v4118 = vsub.f32 1.5, %v4117
  %v4119 = vmul.f32 %v4114, %v4118
  %vm4120 = vweird.f32 %v3979
  %vm4121 = vweird.f32 %v4114
  %vm4122 = vmor %vm4120, %vm4121
  %v4123 = vsel %vm4122, %v4114, %v4119
  %v4124 = vrsqrt.pop %v3980
  %v4125 = vmul.f32 %v4124, %v3980
  %v4126 = vmul.f32 %v4125, %v4124
  %v4127 = vmul.f32 0.5, %v4126
  %v4128 = vsub.f32 1.5, %v4127
  %v4129 = vmul.f32 %v4124, %v4128
  %vm4130 = vweird.f32 %v3980
  %vm4131 = vweird.f32 %v4124
  %vm4132 = vmor %vm4130, %vm4131
  %v4133 = vsel %vm4132, %v4124, %v4129
  %v4134 = vrsqrt.pop %v3981
  %v4135 = vmul.f32 %v4134, %v3981
  %v4136 = vmul.f32 %v4135, %v4134
  %v4137 = vmul.f32 0.5, %v4136
  %v4138 = vsub.f32 1.5, %v4137
  %v4139 = vmul.f32 %v4134, %v4138
  %vm4140 = vweird.f32 %v3981
  %vm4141 = vweird.f32 %v4134
  %vm4142 = vmor %vm4140, %vm4141
  %v4143 = vsel %vm4142, %v4134, %v4139
  %v4144 = vrsqrt.pop %v3982
  %v4145 = vmul.f32 %v4144, %v3982
  %v4146 = vmul.f32 %v4145, %v4144
  %v4147 = vmul.f32 0.5, %v4146
  %v4148 = vsub.f32 1.5, %v4147
  %v4149 = vmul.f32 %v4144, %v4148
  %vm4150 = vweird.f32 %v3982
  %vm4151 = vweird.f32 %v4144
  %vm4152 = vmor %vm4150, %vm4151
  %v4153 = vsel %vm4152, %v4144, %v4149
  %v4154 = vrsqrt.pop %v3983
  %v4155 = vmul.f32 %v4154, %v3983
  %v4156 = vmul.f32 %v4155, %v4154
  %v4157 = vmul.f32 0.5, %v4156
  %v4158 = vsub.f32 1.5, %v4157
  %v4159 = vmul.f32 %v4154, %v4158
  %vm4160 = vweird.f32 %v3983
  %vm4161 = vweird.f32 %v4154
  %vm4162 = vmor %vm4160, %vm4161
  %v4163 = vsel %vm4162, %v4154, %v4159
  %v4164 = vrsqrt.pop %v3984
  %v4165 = vmul.f32 %v4164, %v3984
  %v4166 = vmul.f32 %v4165, %v4164
  %v4167 = vmul.f32 0.5, %v4166
  %v4168 = vsub.f32 1.5, %v4167
  %v4169 = vmul.f32 %v4164, %v4168
  %vm4170 = vweird.f32 %v3984
  %vm4171 = vweird.f32 %v4164
  %vm4172 = vmor %vm4170, %vm4171
  %v4173 = vsel %vm4172, %v4164, %v4169
  %v4174 = vrsqrt.pop %v3985
  %v4175 = vmul.f32 %v4174, %v3985
  %v4176 = vmul.f32 %v4175, %v4174
  %v4177 = vmul.f32 0.5, %v4176
  %v4178 = vsub.f32 1.5, %v4177
  %v4179 = vmul.f32 %v4174, %v4178
  %vm4180 = vweird.f32 %v3985
  %vm4181 = vweird.f32 %v4174
  %vm4182 = vmor %vm4180, %vm4181
  %v4183 = vsel %vm4182, %v4174, %v4179
  %v4184 = vrsqrt.pop %v3986
  %v4185 = vmul.f32 %v4184, %v3986
  %v4186 = vmul.f32 %v4185, %v4184
  %v4187 = vmul.f32 0.5, %v4186
  %v4188 = vsub.f32 1.5, %v4187
  %v4189 = vmul.f32 %v4184, %v4188
  %vm4190 = vweird.f32 %v3986
  %vm4191 = vweird.f32 %v4184
  %vm4192 = vmor %vm4190, %vm4191
  %v4193 = vsel %vm4192, %v4184, %v4189
  %v4194 = vrsqrt.pop %v3987
  %v4195 = vmul.f32 %v4194, %v3987
  %v4196 = vmul.f32 %v4195, %v4194
  %v4197 = vmul.f32 0.5, %v4196
  %v4198 = vsub.f32 1.5, %v4197
  %v4199 = vmul.f32 %v4194, %v4198
  %vm4200 = vweird.f32 %v3987
  %vm4201 = vweird.f32 %v4194
  %vm4202 = vmor %vm4200, %vm4201
  %v4203 = vsel %vm4202, %v4194, %v4199
  %v4204 = vrsqrt.pop %v3988
  %v4205 = vmul.f32 %v4204, %v3988
  %v4206 = vmul.f32 %v4205, %v4204
  %v4207 = vmul.f32 0.5, %v4206
  %v4208 = vsub.f32 1.5, %v4207
  %v4209 = vmul.f32 %v4204, %v4208
  %vm4210 = vweird.f32 %v3988
  %vm4211 = vweird.f32 %v4204
  %vm4212 = vmor %vm4210, %vm4211
  %v4213 = vsel %vm4212, %v4204, %v4209
  %v4214 = vrsqrt.pop %v3989
  %v4215 = vmul.f32 %v4214, %v3989
  %v4216 = vmul.f32 %v4215, %v4214
  %v4217 = vmul.f32 0.5, %v4216
  %v4218 = vsub.f32 1.5, %v4217
  %v4219 = vmul.f32 %v4214, %v4218
  %vm4220 = vweird.f32 %v3989
  %vm4221 = vweird.f32 %v4214
  %vm4222 = vmor %vm4220, %vm4221
  %v4223 = vsel %vm4222, %v4214, %v4219
  %v4224 = vrsqrt.pop %v3990
  %v4225 = vmul.f32 %v4224, %v3990
  %v4226 = vmul.f32 %v4225, %v4224
  %v4227 = vmul.f32 0.5, %v4226
  %v4228 = vsub.f32 1.5, %v4227
  %v4229 = vmul.f32 %v4224, %v4228
  %vm4230 = vweird.f32 %v3990
  %vm4231 = vweird.f32 %v4224
  %vm4232 = vmor %vm4230, %vm4231
  %v4233 = vsel %vm4232, %v4224, %v4229
  %v4234 = vrsqrt.pop %v3991
  %v4235 = vmul.f32 %v4234, %v3991
  %v4236 = vmul.f32 %v4235, %v4234
  %v4237 = vmul.f32 0.5, %v4236
  %v4238 = vsub.f32 1.5, %v4237
  %v4239 = vmul.f32 %v4234, %v4238
  %vm4240 = vweird.f32 %v3991
  %vm4241 = vweird.f32 %v4234
  %vm4242 = vmor %vm4240, %vm4241
  %v4243 = vsel %vm4242, %v4234, %v4239
  %v4244 = vrsqrt.pop %v3992
  %v4245 = vmul.f32 %v4244, %v3992
  %v4246 = vmul.f32 %v4245, %v4244
  %v4247 = vmul.f32 0.5, %v4246
  %v4248 = vsub.f32 1.5, %v4247
  %v4249 = vmul.f32 %v4244, %v4248
  %vm4250 = vweird.f32 %v3992
  %vm4251 = vweird.f32 %v4244
  %vm4252 = vmor %vm4250, %vm4251
  %v4253 = vsel %vm4252, %v4244, %v4249
  %v4254 = vrsqrt.pop %v3993
  %v4255 = vmul.f32 %v4254, %v3993
  %v4256 = vmul.f32 %v4255, %v4254
  %v4257 = vmul.f32 0.5, %v4256
  %v4258 = vsub.f32 1.5, %v4257
  %v4259 = vmul.f32 %v4254, %v4258
  %vm4260 = vweird.f32 %v3993
  %vm4261 = vweird.f32 %v4254
  %vm4262 = vmor %vm4260, %vm4261
  %v4263 = vsel %vm4262, %v4254, %v4259
  %v4264 = vrsqrt.pop %v3994
  %v4265 = vmul.f32 %v4264, %v3994
  %v4266 = vmul.f32 %v4265, %v4264
  %v4267 = vmul.f32 0.5, %v4266
  %v4268 = vsub.f32 1.5, %v4267
  %v4269 = vmul.f32 %v4264, %v4268
  %vm4270 = vweird.f32 %v3994
  %vm4271 = vweird.f32 %v4264
  %vm4272 = vmor %vm4270, %vm4271
  %v4273 = vsel %vm4272, %v4264, %v4269
  %v4274 = vrsqrt.pop %v3995
  %v4275 = vmul.f32 %v4274, %v3995
  %v4276 = vmul.f32 %v4275, %v4274
  %v4277 = vmul.f32 0.5, %v4276
  %v4278 = vsub.f32 1.5, %v4277
  %v4279 = vmul.f32 %v4274, %v4278
  %vm4280 = vweird.f32 %v3995
  %vm4281 = vweird.f32 %v4274
  %vm4282 = vmor %vm4280, %vm4281
  %v4283 = vsel %vm4282, %v4274, %v4279
  %v4284 = vrsqrt.pop %v3996
  %v4285 = vmul.f32 %v4284, %v3996
  %v4286 = vmul.f32 %v4285, %v4284
  %v4287 = vmul.f32 0.5, %v4286
  %v4288 = vsub.f32 1.5, %v4287
  %v4289 = vmul.f32 %v4284, %v4288
  %vm4290 = vweird.f32 %v3996
  %vm4291 = vweird.f32 %v4284
  %vm4292 = vmor %vm4290, %vm4291
  %v4293 = vsel %vm4292, %v4284, %v4289
  %v4294 = vrsqrt.pop %v3997
  %v4295 = vmul.f32 %v4294, %v3997
  %v4296 = vmul.f32 %v4295, %v4294
  %v4297 = vmul.f32 0.5, %v4296
  %v4298 = vsub.f32 1.5, %v4297
  %v4299 = vmul.f32 %v4294, %v4298
  %vm4300 = vweird.f32 %v3997
  %vm4301 = vweird.f32 %v4294
  %vm4302 = vmor %vm4300, %vm4301
  %v4303 = vsel %vm4302, %v4294, %v4299
  %v4304 = vrsqrt.pop %v3998
  %v4305 = vmul.f32 %v4304, %v3998
  %v4306 = vmul.f32 %v4305, %v4304
  %v4307 = vmul.f32 0.5, %v4306
  %v4308 = vsub.f32 1.5, %v4307
  %v4309 = vmul.f32 %v4304, %v4308
  %vm4310 = vweird.f32 %v3998
  %vm4311 = vweird.f32 %v4304
  %vm4312 = vmor %vm4310, %vm4311
  %v4313 = vsel %vm4312, %v4304, %v4309
  %v4314 = vrsqrt.pop %v3999
  %v4315 = vmul.f32 %v4314, %v3999
  %v4316 = vmul.f32 %v4315, %v4314
  %v4317 = vmul.f32 0.5, %v4316
  %v4318 = vsub.f32 1.5, %v4317
  %v4319 = vmul.f32 %v4314, %v4318
  %vm4320 = vweird.f32 %v3999
  %vm4321 = vweird.f32 %v4314
  %vm4322 = vmor %vm4320, %vm4321
  %v4323 = vsel %vm4322, %v4314, %v4319
  %v4324 = vrsqrt.pop %v4000
  %v4325 = vmul.f32 %v4324, %v4000
  %v4326 = vmul.f32 %v4325, %v4324
  %v4327 = vmul.f32 0.5, %v4326
  %v4328 = vsub.f32 1.5, %v4327
  %v4329 = vmul.f32 %v4324, %v4328
  %vm4330 = vweird.f32 %v4000
  %vm4331 = vweird.f32 %v4324
  %vm4332 = vmor %vm4330, %vm4331
  %v4333 = vsel %vm4332, %v4324, %v4329
  %v4334 = vrsqrt.pop %v4001
  %v4335 = vmul.f32 %v4334, %v4001
  %v4336 = vmul.f32 %v4335, %v4334
  %v4337 = vmul.f32 0.5, %v4336
  %v4338 = vsub.f32 1.5, %v4337
  %v4339 = vmul.f32 %v4334, %v4338
  %vm4340 = vweird.f32 %v4001
  %vm4341 = vweird.f32 %v4334
  %vm4342 = vmor %vm4340, %vm4341
  %v4343 = vsel %vm4342, %v4334, %v4339
  %v4344 = vrsqrt.pop %v4002
  %v4345 = vmul.f32 %v4344, %v4002
  %v4346 = vmul.f32 %v4345, %v4344
  %v4347 = vmul.f32 0.5, %v4346
  %v4348 = vsub.f32 1.5, %v4347
  %v4349 = vmul.f32 %v4344, %v4348
  %vm4350 = vweird.f32 %v4002
  %vm4351 = vweird.f32 %v4344
  %vm4352 = vmor %vm4350, %vm4351
  %v4353 = vsel %vm4352, %v4344, %v4349
  %v4354 = vrsqrt.pop %v4003
  %v4355 = vmul.f32 %v4354, %v4003
  %v4356 = vmul.f32 %v4355, %v4354
  %v4357 = vmul.f32 0.5, %v4356
  %v4358 = vsub.f32 1.5, %v4357
  %v4359 = vmul.f32 %v4354, %v4358
  %vm4360 = vweird.f32 %v4003
  %vm4361 = vweird.f32 %v4354
  %vm4362 = vmor %vm4360, %vm4361
  %v4363 = vsel %vm4362, %v4354, %v4359
  %v4364 = vrsqrt.pop %v4004
  %v4365 = vmul.f32 %v4364, %v4004
  %v4366 = vmul.f32 %v4365, %v4364
  %v4367 = vmul.f32 0.5, %v4366
  %v4368 = vsub.f32 1.5, %v4367
  %v4369 = vmul.f32 %v4364, %v4368
  %vm4370 = vweird.f32 %v4004
  %vm4371 = vweird.f32 %v4364
  %vm4372 = vmor %vm4370, %vm4371
  %v4373 = vsel %vm4372, %v4364, %v4369
  %v4374 = vrsqrt.pop %v4005
  %v4375 = vmul.f32 %v4374, %v4005
  %v4376 = vmul.f32 %v4375, %v4374
  %v4377 = vmul.f32 0.5, %v4376
  %v4378 = vsub.f32 1.5, %v4377
  %v4379 = vmul.f32 %v4374, %v4378
  %vm4380 = vweird.f32 %v4005
  %vm4381 = vweird.f32 %v4374
  %vm4382 = vmor %vm4380, %vm4381
  %v4383 = vsel %vm4382, %v4374, %v4379
  %v4384 = vrsqrt.pop %v4006
  %v4385 = vmul.f32 %v4384, %v4006
  %v4386 = vmul.f32 %v4385, %v4384
  %v4387 = vmul.f32 0.5, %v4386
  %v4388 = vsub.f32 1.5, %v4387
  %v4389 = vmul.f32 %v4384, %v4388
  %vm4390 = vweird.f32 %v4006
  %vm4391 = vweird.f32 %v4384
  %vm4392 = vmor %vm4390, %vm4391
  %v4393 = vsel %vm4392, %v4384, %v4389
  %v4394 = vrsqrt.pop %v4007
  %v4395 = vmul.f32 %v4394, %v4007
  %v4396 = vmul.f32 %v4395, %v4394
  %v4397 = vmul.f32 0.5, %v4396
  %v4398 = vsub.f32 1.5, %v4397
  %v4399 = vmul.f32 %v4394, %v4398
  %vm4400 = vweird.f32 %v4007
  %vm4401 = vweird.f32 %v4394
  %vm4402 = vmor %vm4400, %vm4401
  %v4403 = vsel %vm4402, %v4394, %v4399
  %v4404 = vrsqrt.pop %v4008
  %v4405 = vmul.f32 %v4404, %v4008
  %v4406 = vmul.f32 %v4405, %v4404
  %v4407 = vmul.f32 0.5, %v4406
  %v4408 = vsub.f32 1.5, %v4407
  %v4409 = vmul.f32 %v4404, %v4408
  %vm4410 = vweird.f32 %v4008
  %vm4411 = vweird.f32 %v4404
  %vm4412 = vmor %vm4410, %vm4411
  %v4413 = vsel %vm4412, %v4404, %v4409
  %v4414 = vrsqrt.pop %v4009
  %v4415 = vmul.f32 %v4414, %v4009
  %v4416 = vmul.f32 %v4415, %v4414
  %v4417 = vmul.f32 0.5, %v4416
  %v4418 = vsub.f32 1.5, %v4417
  %v4419 = vmul.f32 %v4414, %v4418
  %vm4420 = vweird.f32 %v4009
  %vm4421 = vweird.f32 %v4414
  %vm4422 = vmor %vm4420, %vm4421
  %v4423 = vsel %vm4422, %v4414, %v4419
  %v4424 = vrsqrt.pop %v4010
  %v4425 = vmul.f32 %v4424, %v4010
  %v4426 = vmul.f32 %v4425, %v4424
  %v4427 = vmul.f32 0.5, %v4426
  %v4428 = vsub.f32 1.5, %v4427
  %v4429 = vmul.f32 %v4424, %v4428
  %vm4430 = vweird.f32 %v4010
  %vm4431 = vweird.f32 %v4424
  %vm4432 = vmor %vm4430, %vm4431
  %v4433 = vsel %vm4432, %v4424, %v4429
  %v4434 = vrsqrt.pop %v4011
  %v4435 = vmul.f32 %v4434, %v4011
  %v4436 = vmul.f32 %v4435, %v4434
  %v4437 = vmul.f32 0.5, %v4436
  %v4438 = vsub.f32 1.5, %v4437
  %v4439 = vmul.f32 %v4434, %v4438
  %vm4440 = vweird.f32 %v4011
  %vm4441 = vweird.f32 %v4434
  %vm4442 = vmor %vm4440, %vm4441
  %v4443 = vsel %vm4442, %v4434, %v4439
  %v4444 = vrsqrt.pop %v4012
  %v4445 = vmul.f32 %v4444, %v4012
  %v4446 = vmul.f32 %v4445, %v4444
  %v4447 = vmul.f32 0.5, %v4446
  %v4448 = vsub.f32 1.5, %v4447
  %v4449 = vmul.f32 %v4444, %v4448
  %vm4450 = vweird.f32 %v4012
  %vm4451 = vweird.f32 %v4444
  %vm4452 = vmor %vm4450, %vm4451
  %v4453 = vsel %vm4452, %v4444, %v4449
  %v4454 = vrsqrt.pop %v4013
  %v4455 = vmul.f32 %v4454, %v4013
  %v4456 = vmul.f32 %v4455, %v4454
  %v4457 = vmul.f32 0.5, %v4456
  %v4458 = vsub.f32 1.5, %v4457
  %v4459 = vmul.f32 %v4454, %v4458
  %vm4460 = vweird.f32 %v4013
  %vm4461 = vweird.f32 %v4454
  %vm4462 = vmor %vm4460, %vm4461
  %v4463 = vsel %vm4462, %v4454, %v4459
  %v4464 = vrsqrt.pop %v4014
  %v4465 = vmul.f32 %v4464, %v4014
  %v4466 = vmul.f32 %v4465, %v4464
  %v4467 = vmul.f32 0.5, %v4466
  %v4468 = vsub.f32 1.5, %v4467
  %v4469 = vmul.f32 %v4464, %v4468
  %vm4470 = vweird.f32 %v4014
  %vm4471 = vweird.f32 %v4464
  %vm4472 = vmor %vm4470, %vm4471
  %v4473 = vsel %vm4472, %v4464, %v4469
  %v4474 = vrsqrt.pop %v4015
  %v4475 = vmul.f32 %v4474, %v4015
  %v4476 = vmul.f32 %v4475, %v4474
  %v4477 = vmul.f32 0.5, %v4476
  %v4478 = vsub.f32 1.5, %v4477
  %v4479 = vmul.f32 %v4474, %v4478
  %vm4480 = vweird.f32 %v4015
  %vm4481 = vweird.f32 %v4474
  %vm4482 = vmor %vm4480, %vm4481
  %v4483 = vsel %vm4482, %v4474, %v4479
  %v4484 = vrsqrt.pop %v4016
  %v4485 = vmul.f32 %v4484, %v4016
  %v4486 = vmul.f32 %v4485, %v4484
  %v4487 = vmul.f32 0.5, %v4486
  %v4488 = vsub.f32 1.5, %v4487
  %v4489 = vmul.f32 %v4484, %v4488
  %vm4490 = vweird.f32 %v4016
  %vm4491 = vweird.f32 %v4484
  %vm4492 = vmor %vm4490, %vm4491
  %v4493 = vsel %vm4492, %v4484, %v4489
  %v4494 = vrsqrt.pop %v4017
  %v4495 = vmul.f32 %v4494, %v4017
  %v4496 = vmul.f32 %v4495, %v4494
  %v4497 = vmul.f32 0.5, %v4496
  %v4498 = vsub.f32 1.5, %v4497
  %v4499 = vmul.f32 %v4494, %v4498
  %vm4500 = vweird.f32 %v4017
  %vm4501 = vweird.f32 %v4494
  %vm4502 = vmor %vm4500, %vm4501
  %v4503 = vsel %vm4502, %v4494, %v4499
  %v4504 = vrsqrt.pop %v4018
  %v4505 = vmul.f32 %v4504, %v4018
  %v4506 = vmul.f32 %v4505, %v4504
  %v4507 = vmul.f32 0.5, %v4506
  %v4508 = vsub.f32 1.5, %v4507
  %v4509 = vmul.f32 %v4504, %v4508
  %vm4510 = vweird.f32 %v4018
  %vm4511 = vweird.f32 %v4504
  %vm4512 = vmor %vm4510, %vm4511
  %v4513 = vsel %vm4512, %v4504, %v4509
  %v4514 = vrsqrt.pop %v4019
  %v4515 = vmul.f32 %v4514, %v4019
  %v4516 = vmul.f32 %v4515, %v4514
  %v4517 = vmul.f32 0.5, %v4516
  %v4518 = vsub.f32 1.5, %v4517
  %v4519 = vmul.f32 %v4514, %v4518
  %vm4520 = vweird.f32 %v4019
  %vm4521 = vweird.f32 %v4514
  %vm4522 = vmor %vm4520, %vm4521
  %v4523 = vsel %vm4522, %v4514, %v4519
  %v4524 = vrsqrt.pop %v4020
  %v4525 = vmul.f32 %v4524, %v4020
  %v4526 = vmul.f32 %v4525, %v4524
  %v4527 = vmul.f32 0.5, %v4526
  %v4528 = vsub.f32 1.5, %v4527
  %v4529 = vmul.f32 %v4524, %v4528
  %vm4530 = vweird.f32 %v4020
  %vm4531 = vweird.f32 %v4524
  %vm4532 = vmor %vm4530, %vm4531
  %v4533 = vsel %vm4532, %v4524, %v4529
  %v4534 = vrsqrt.pop %v4021
  %v4535 = vmul.f32 %v4534, %v4021
  %v4536 = vmul.f32 %v4535, %v4534
  %v4537 = vmul.f32 0.5, %v4536
  %v4538 = vsub.f32 1.5, %v4537
  %v4539 = vmul.f32 %v4534, %v4538
  %vm4540 = vweird.f32 %v4021
  %vm4541 = vweird.f32 %v4534
  %vm4542 = vmor %vm4540, %vm4541
  %v4543 = vsel %vm4542, %v4534, %v4539
  %v4544 = vrsqrt.pop %v4022
  %v4545 = vmul.f32 %v4544, %v4022
  %v4546 = vmul.f32 %v4545, %v4544
  %v4547 = vmul.f32 0.5, %v4546
  %v4548 = vsub.f32 1.5, %v4547
  %v4549 = vmul.f32 %v4544, %v4548
  %vm4550 = vweird.f32 %v4022
  %vm4551 = vweird.f32 %v4544
  %vm4552 = vmor %vm4550, %vm4551
  %v4553 = vsel %vm4552, %v4544, %v4549
  %v4554 = vrsqrt.pop %v4023
  %v4555 = vmul.f32 %v4554, %v4023
  %v4556 = vmul.f32 %v4555, %v4554
  %v4557 = vmul.f32 0.5, %v4556
  %v4558 = vsub.f32 1.5, %v4557
  %v4559 = vmul.f32 %v4554, %v4558
  %vm4560 = vweird.f32 %v4023
  %vm4561 = vweird.f32 %v4554
  %vm4562 = vmor %vm4560, %vm4561
  %v4563 = vsel %vm4562, %v4554, %v4559
  %v4564 = vrsqrt.pop %v4024
  %v4565 = vmul.f32 %v4564, %v4024
  %v4566 = vmul.f32 %v4565, %v4564
  %v4567 = vmul.f32 0.5, %v4566
  %v4568 = vsub.f32 1.5, %v4567
  %v4569 = vmul.f32 %v4564, %v4568
  %vm4570 = vweird.f32 %v4024
  %vm4571 = vweird.f32 %v4564
  %vm4572 = vmor %vm4570, %vm4571
  %v4573 = vsel %vm4572, %v4564, %v4569
  %v4574 = vrsqrt.pop %v4025
  %v4575 = vmul.f32 %v4574, %v4025
  %v4576 = vmul.f32 %v4575, %v4574
  %v4577 = vmul.f32 0.5, %v4576
  %v4578 = vsub.f32 1.5, %v4577
  %v4579 = vmul.f32 %v4574, %v4578
  %vm4580 = vweird.f32 %v4025
  %vm4581 = vweird.f32 %v4574
  %vm4582 = vmor %vm4580, %vm4581
  %v4583 = vsel %vm4582, %v4574, %v4579
  %v4584 = vrsqrt.pop %v4026
  %v4585 = vmul.f32 %v4584, %v4026
  %v4586 = vmul.f32 %v4585, %v4584
  %v4587 = vmul.f32 0.5, %v4586
  %v4588 = vsub.f32 1.5, %v4587
  %v4589 = vmul.f32 %v4584, %v4588
  %vm4590 = vweird.f32 %v4026
  %vm4591 = vweird.f32 %v4584
  %vm4592 = vmor %vm4590, %vm4591
  %v4593 = vsel %vm4592, %v4584, %v4589
  %v4594 = vrsqrt.pop %v4027
  %v4595 = vmul.f32 %v4594, %v4027
  %v4596 = vmul.f32 %v4595, %v4594
  %v4597 = vmul.f32 0.5, %v4596
  %v4598 = vsub.f32 1.5, %v4597
  %v4599 = vmul.f32 %v4594, %v4598
  %vm4600 = vweird.f32 %v4027
  %vm4601 = vweird.f32 %v4594
  %vm4602 = vmor %vm4600, %vm4601
  %v4603 = vsel %vm4602, %v4594, %v4599
  %v4604 = vrsqrt.pop %v4028
  %v4605 = vmul.f32 %v4604, %v4028
  %v4606 = vmul.f32 %v4605, %v4604
  %v4607 = vmul.f32 0.5, %v4606
  %v4608 = vsub.f32 1.5, %v4607
  %v4609 = vmul.f32 %v4604, %v4608
  %vm4610 = vweird.f32 %v4028
  %vm4611 = vweird.f32 %v4604
  %vm4612 = vmor %vm4610, %vm4611
  %v4613 = vsel %vm4612, %v4604, %v4609
  %v4614 = vrsqrt.pop %v4029
  %v4615 = vmul.f32 %v4614, %v4029
  %v4616 = vmul.f32 %v4615, %v4614
  %v4617 = vmul.f32 0.5, %v4616
  %v4618 = vsub.f32 1.5, %v4617
  %v4619 = vmul.f32 %v4614, %v4618
  %vm4620 = vweird.f32 %v4029
  %vm4621 = vweird.f32 %v4614
  %vm4622 = vmor %vm4620, %vm4621
  %v4623 = vsel %vm4622, %v4614, %v4619
  %v4624 = vrsqrt.pop %v4030
  %v4625 = vmul.f32 %v4624, %v4030
  %v4626 = vmul.f32 %v4625, %v4624
  %v4627 = vmul.f32 0.5, %v4626
  %v4628 = vsub.f32 1.5, %v4627
  %v4629 = vmul.f32 %v4624, %v4628
  %vm4630 = vweird.f32 %v4030
  %vm4631 = vweird.f32 %v4624
  %vm4632 = vmor %vm4630, %vm4631
  %v4633 = vsel %vm4632, %v4624, %v4629
  %v4634 = vrsqrt.pop %v4031
  %v4635 = vmul.f32 %v4634, %v4031
  %v4636 = vmul.f32 %v4635, %v4634
  %v4637 = vmul.f32 0.5, %v4636
  %v4638 = vsub.f32 1.5, %v4637
  %v4639 = vmul.f32 %v4634, %v4638
  %vm4640 = vweird.f32 %v4031
  %vm4641 = vweird.f32 %v4634
  %vm4642 = vmor %vm4640, %vm4641
  %v4643 = vsel %vm4642, %v4634, %v4639
  %v4644 = vrsqrt.pop %v4032
  %v4645 = vmul.f32 %v4644, %v4032
  %v4646 = vmul.f32 %v4645, %v4644
  %v4647 = vmul.f32 0.5, %v4646
  %v4648 = vsub.f32 1.5, %v4647
  %v4649 = vmul.f32 %v4644, %v4648
  %vm4650 = vweird.f32 %v4032
  %vm4651 = vweird.f32 %v4644
  %vm4652 = vmor %vm4650, %vm4651
  %v4653 = vsel %vm4652, %v4644, %v4649
  %v4654 = vrsqrt.pop %v4033
  %v4655 = vmul.f32 %v4654, %v4033
  %v4656 = vmul.f32 %v4655, %v4654
  %v4657 = vmul.f32 0.5, %v4656
  %v4658 = vsub.f32 1.5, %v4657
  %v4659 = vmul.f32 %v4654, %v4658
  %vm4660 = vweird.f32 %v4033
  %vm4661 = vweird.f32 %v4654
  %vm4662 = vmor %vm4660, %vm4661
  %v4663 = vsel %vm4662, %v4654, %v4659
  %v4664 = vrsqrt.pop %v4034
  %v4665 = vmul.f32 %v4664, %v4034
  %v4666 = vmul.f32 %v4665, %v4664
  %v4667 = vmul.f32 0.5, %v4666
  %v4668 = vsub.f32 1.5, %v4667
  %v4669 = vmul.f32 %v4664, %v4668
  %vm4670 = vweird.f32 %v4034
  %vm4671 = vweird.f32 %v4664
  %vm4672 = vmor %vm4670, %vm4671
  %v4673 = vsel %vm4672, %v4664, %v4669
  %v4674 = vrsqrt.pop %v4035
  %v4675 = vmul.f32 %v4674, %v4035
  %v4676 = vmul.f32 %v4675, %v4674
  %v4677 = vmul.f32 0.5, %v4676
  %v4678 = vsub.f32 1.5, %v4677
  %v4679 = vmul.f32 %v4674, %v4678
  %vm4680 = vweird.f32 %v4035
  %vm4681 = vweird.f32 %v4674
  %vm4682 = vmor %vm4680, %vm4681
  %v4683 = vsel %vm4682, %v4674, %v4679
  %v4684 = vrsqrt.pop %v4036
  %v4685 = vmul.f32 %v4684, %v4036
  %v4686 = vmul.f32 %v4685, %v4684
  %v4687 = vmul.f32 0.5, %v4686
  %v4688 = vsub.f32 1.5, %v4687
  %v4689 = vmul.f32 %v4684, %v4688
  %vm4690 = vweird.f32 %v4036
  %vm4691 = vweird.f32 %v4684
  %vm4692 = vmor %vm4690, %vm4691
  %v4693 = vsel %vm4692, %v4684, %v4689
  %v4694 = vrsqrt.pop %v4037
  %v4695 = vmul.f32 %v4694, %v4037
  %v4696 = vmul.f32 %v4695, %v4694
  %v4697 = vmul.f32 0.5, %v4696
  %v4698 = vsub.f32 1.5, %v4697
  %v4699 = vmul.f32 %v4694, %v4698
  %vm4700 = vweird.f32 %v4037
  %vm4701 = vweird.f32 %v4694
  %vm4702 = vmor %vm4700, %vm4701
  %v4703 = vsel %vm4702, %v4694, %v4699
  %v4704 = vrsqrt.pop %v4038
  %v4705 = vmul.f32 %v4704, %v4038
  %v4706 = vmul.f32 %v4705, %v4704
  %v4707 = vmul.f32 0.5, %v4706
  %v4708 = vsub.f32 1.5, %v4707
  %v4709 = vmul.f32 %v4704, %v4708
  %vm4710 = vweird.f32 %v4038
  %vm4711 = vweird.f32 %v4704
  %vm4712 = vmor %vm4710, %vm4711
  %v4713 = vsel %vm4712, %v4704, %v4709
  %v4714 = vrsqrt.pop %v4039
  %v4715 = vmul.f32 %v4714, %v4039
  %v4716 = vmul.f32 %v4715, %v4714
  %v4717 = vmul.f32 0.5, %v4716
  %v4718 = vsub.f32 1.5, %v4717
  %v4719 = vmul.f32 %v4714, %v4718
  %vm4720 = vweird.f32 %v4039
  %vm4721 = vweird.f32 %v4714
  %vm4722 = vmor %vm4720, %vm4721
  %v4723 = vsel %vm4722, %v4714, %v4719
  %v4724 = vrsqrt.pop %v4040
  %v4725 = vmul.f32 %v4724, %v4040
  %v4726 = vmul.f32 %v4725, %v4724
  %v4727 = vmul.f32 0.5, %v4726
  %v4728 = vsub.f32 1.5, %v4727
  %v4729 = vmul.f32 %v4724, %v4728
  %vm4730 = vweird.f32 %v4040
  %vm4731 = vweird.f32 %v4724
  %vm4732 = vmor %vm4730, %vm4731
  %v4733 = vsel %vm4732, %v4724, %v4729
  %v4734 = vrsqrt.pop %v4041
  %v4735 = vmul.f32 %v4734, %v4041
  %v4736 = vmul.f32 %v4735, %v4734
  %v4737 = vmul.f32 0.5, %v4736
  %v4738 = vsub.f32 1.5, %v4737
  %v4739 = vmul.f32 %v4734, %v4738
  %vm4740 = vweird.f32 %v4041
  %vm4741 = vweird.f32 %v4734
  %vm4742 = vmor %vm4740, %vm4741
  %v4743 = vsel %vm4742, %v4734, %v4739
  %v4744 = vrsqrt.pop %v4042
  %v4745 = vmul.f32 %v4744, %v4042
  %v4746 = vmul.f32 %v4745, %v4744
  %v4747 = vmul.f32 0.5, %v4746
  %v4748 = vsub.f32 1.5, %v4747
  %v4749 = vmul.f32 %v4744, %v4748
  %vm4750 = vweird.f32 %v4042
  %vm4751 = vweird.f32 %v4744
  %vm4752 = vmor %vm4750, %vm4751
  %v4753 = vsel %vm4752, %v4744, %v4749
  %v4754 = vrsqrt.pop %v4043
  %v4755 = vmul.f32 %v4754, %v4043
  %v4756 = vmul.f32 %v4755, %v4754
  %v4757 = vmul.f32 0.5, %v4756
  %v4758 = vsub.f32 1.5, %v4757
  %v4759 = vmul.f32 %v4754, %v4758
  %vm4760 = vweird.f32 %v4043
  %vm4761 = vweird.f32 %v4754
  %vm4762 = vmor %vm4760, %vm4761
  %v4763 = vsel %vm4762, %v4754, %v4759
  %v4764 = vrsqrt.pop %v4044
  %v4765 = vmul.f32 %v4764, %v4044
  %v4766 = vmul.f32 %v4765, %v4764
  %v4767 = vmul.f32 0.5, %v4766
  %v4768 = vsub.f32 1.5, %v4767
  %v4769 = vmul.f32 %v4764, %v4768
  %vm4770 = vweird.f32 %v4044
  %vm4771 = vweird.f32 %v4764
  %vm4772 = vmor %vm4770, %vm4771
  %v4773 = vsel %vm4772, %v4764, %v4769
  %v4774 = vrsqrt.pop %v4045
  %v4775 = vmul.f32 %v4774, %v4045
  %v4776 = vmul.f32 %v4775, %v4774
  %v4777 = vmul.f32 0.5, %v4776
  %v4778 = vsub.f32 1.5, %v4777
  %v4779 = vmul.f32 %v4774, %v4778
  %vm4780 = vweird.f32 %v4045
  %vm4781 = vweird.f32 %v4774
  %vm4782 = vmor %vm4780, %vm4781
  %v4783 = vsel %vm4782, %v4774, %v4779
  %v4784 = vrsqrt.pop %v4046
  %v4785 = vmul.f32 %v4784, %v4046
  %v4786 = vmul.f32 %v4785, %v4784
  %v4787 = vmul.f32 0.5, %v4786
  %v4788 = vsub.f32 1.5, %v4787
  %v4789 = vmul.f32 %v4784, %v4788
  %vm4790 = vweird.f32 %v4046
  %vm4791 = vweird.f32 %v4784
  %vm4792 = vmor %vm4790, %vm4791
  %v4793 = vsel %vm4792, %v4784, %v4789
  %v4794 = vrsqrt.pop %v4047
  %v4795 = vmul.f32 %v4794, %v4047
  %v4796 = vmul.f32 %v4795, %v4794
  %v4797 = vmul.f32 0.5, %v4796
  %v4798 = vsub.f32 1.5, %v4797
  %v4799 = vmul.f32 %v4794, %v4798
  %vm4800 = vweird.f32 %v4047
  %vm4801 = vweird.f32 %v4794
  %vm4802 = vmor %vm4800, %vm4801
  %v4803 = vsel %vm4802, %v4794, %v4799
  %v4804 = vrsqrt.pop %v4048
  %v4805 = vmul.f32 %v4804, %v4048
  %v4806 = vmul.f32 %v4805, %v4804
  %v4807 = vmul.f32 0.5, %v4806
  %v4808 = vsub.f32 1.5, %v4807
  %v4809 = vmul.f32 %v4804, %v4808
  %vm4810 = vweird.f32 %v4048
  %vm4811 = vweird.f32 %v4804
  %vm4812 = vmor %vm4810, %vm4811
  %v4813 = vsel %vm4812, %v4804, %v4809
  %v4814 = vrsqrt.pop %v4049
  %v4815 = vmul.f32 %v4814, %v4049
  %v4816 = vmul.f32 %v4815, %v4814
  %v4817 = vmul.f32 0.5, %v4816
  %v4818 = vsub.f32 1.5, %v4817
  %v4819 = vmul.f32 %v4814, %v4818
  %vm4820 = vweird.f32 %v4049
  %vm4821 = vweird.f32 %v4814
  %vm4822 = vmor %vm4820, %vm4821
  %v4823 = vsel %vm4822, %v4814, %v4819
  %v4824 = vrsqrt.pop %v4050
  %v4825 = vmul.f32 %v4824, %v4050
  %v4826 = vmul.f32 %v4825, %v4824
  %v4827 = vmul.f32 0.5, %v4826
  %v4828 = vsub.f32 1.5, %v4827
  %v4829 = vmul.f32 %v4824, %v4828
  %vm4830 = vweird.f32 %v4050
  %vm4831 = vweird.f32 %v4824
  %vm4832 = vmor %vm4830, %vm4831
  %v4833 = vsel %vm4832, %v4824, %v4829
  %v4834 = vrsqrt.pop %v4051
  %v4835 = vmul.f32 %v4834, %v4051
  %v4836 = vmul.f32 %v4835, %v4834
  %v4837 = vmul.f32 0.5, %v4836
  %v4838 = vsub.f32 1.5, %v4837
  %v4839 = vmul.f32 %v4834, %v4838
  %vm4840 = vweird.f32 %v4051
  %vm4841 = vweird.f32 %v4834
  %vm4842 = vmor %vm4840, %vm4841
  %v4843 = vsel %vm4842, %v4834, %v4839
  %v4844 = vrsqrt.pop %v4052
  %v4845 = vmul.f32 %v4844, %v4052
  %v4846 = vmul.f32 %v4845, %v4844
  %v4847 = vmul.f32 0.5, %v4846
  %v4848 = vsub.f32 1.5, %v4847
  %v4849 = vmul.f32 %v4844, %v4848
  %vm4850 = vweird.f32 %v4052
  %vm4851 = vweird.f32 %v4844
  %vm4852 = vmor %vm4850, %vm4851
  %v4853 = vsel %vm4852, %v4844, %v4849
  %v4854 = vrsqrt.pop %v4053
  %v4855 = vmul.f32 %v4854, %v4053
  %v4856 = vmul.f32 %v4855, %v4854
  %v4857 = vmul.f32 0.5, %v4856
  %v4858 = vsub.f32 1.5, %v4857
  %v4859 = vmul.f32 %v4854, %v4858
  %vm4860 = vweird.f32 %v4053
  %vm4861 = vweird.f32 %v4854
  %vm4862 = vmor %vm4860, %vm4861
  %v4863 = vsel %vm4862, %v4854, %v4859
  %v4864 = vrsqrt.pop %v4054
  %v4865 = vmul.f32 %v4864, %v4054
  %v4866 = vmul.f32 %v4865, %v4864
  %v4867 = vmul.f32 0.5, %v4866
  %v4868 = vsub.f32 1.5, %v4867
  %v4869 = vmul.f32 %v4864, %v4868
  %vm4870 = vweird.f32 %v4054
  %vm4871 = vweird.f32 %v4864
  %vm4872 = vmor %vm4870, %vm4871
  %v4873 = vsel %vm4872, %v4864, %v4869
  %v4874 = vrsqrt.pop %v4055
  %v4875 = vmul.f32 %v4874, %v4055
  %v4876 = vmul.f32 %v4875, %v4874
  %v4877 = vmul.f32 0.5, %v4876
  %v4878 = vsub.f32 1.5, %v4877
  %v4879 = vmul.f32 %v4874, %v4878
  %vm4880 = vweird.f32 %v4055
  %vm4881 = vweird.f32 %v4874
  %vm4882 = vmor %vm4880, %vm4881
  %v4883 = vsel %vm4882, %v4874, %v4879
  %v4884 = vrsqrt.pop %v4056
  %v4885 = vmul.f32 %v4884, %v4056
  %v4886 = vmul.f32 %v4885, %v4884
  %v4887 = vmul.f32 0.5, %v4886
  %v4888 = vsub.f32 1.5, %v4887
  %v4889 = vmul.f32 %v4884, %v4888
  %vm4890 = vweird.f32 %v4056
  %vm4891 = vweird.f32 %v4884
  %vm4892 = vmor %vm4890, %vm4891
  %v4893 = vsel %vm4892, %v4884, %v4889
  %v4894 = vrsqrt.pop %v4057
  %v4895 = vmul.f32 %v4894, %v4057
  %v4896 = vmul.f32 %v4895, %v4894
  %v4897 = vmul.f32 0.5, %v4896
  %v4898 = vsub.f32 1.5, %v4897
  %v4899 = vmul.f32 %v4894, %v4898
  %vm4900 = vweird.f32 %v4057
  %vm4901 = vweird.f32 %v4894
  %vm4902 = vmor %vm4900, %vm4901
  %v4903 = vsel %vm4902, %v4894, %v4899
  %v4904 = vrsqrt.pop %v4058
  %v4905 = vmul.f32 %v4904, %v4058
  %v4906 = vmul.f32 %v4905, %v4904
  %v4907 = vmul.f32 0.5, %v4906
  %v4908 = vsub.f32 1.5, %v4907
  %v4909 = vmul.f32 %v4904, %v4908
  %vm4910 = vweird.f32 %v4058
  %vm4911 = vweird.f32 %v4904
  %vm4912 = vmor %vm4910, %vm4911
  %v4913 = vsel %vm4912, %v4904, %v4909
  %v4914 = vrsqrt.pop %v4059
  %v4915 = vmul.f32 %v4914, %v4059
  %v4916 = vmul.f32 %v4915, %v4914
  %v4917 = vmul.f32 0.5, %v4916
  %v4918 = vsub.f32 1.5, %v4917
  %v4919 = vmul.f32 %v4914, %v4918
  %vm4920 = vweird.f32 %v4059
  %vm4921 = vweird.f32 %v4914
  %vm4922 = vmor %vm4920, %vm4921
  %v4923 = vsel %vm4922, %v4914, %v4919
  %v4924 = vrsqrt.pop %v4060
  %v4925 = vmul.f32 %v4924, %v4060
  %v4926 = vmul.f32 %v4925, %v4924
  %v4927 = vmul.f32 0.5, %v4926
  %v4928 = vsub.f32 1.5, %v4927
  %v4929 = vmul.f32 %v4924, %v4928
  %vm4930 = vweird.f32 %v4060
  %vm4931 = vweird.f32 %v4924
  %vm4932 = vmor %vm4930, %vm4931
  %v4933 = vsel %vm4932, %v4924, %v4929
  %v4934 = vrsqrt.pop %v4061
  %v4935 = vmul.f32 %v4934, %v4061
  %v4936 = vmul.f32 %v4935, %v4934
  %v4937 = vmul.f32 0.5, %v4936
  %v4938 = vsub.f32 1.5, %v4937
  %v4939 = vmul.f32 %v4934, %v4938
  %vm4940 = vweird.f32 %v4061
  %vm4941 = vweird.f32 %v4934
  %vm4942 = vmor %vm4940, %vm4941
  %v4943 = vsel %vm4942, %v4934, %v4939
  %v4944 = vrsqrt.pop %v4062
  %v4945 = vmul.f32 %v4944, %v4062
  %v4946 = vmul.f32 %v4945, %v4944
  %v4947 = vmul.f32 0.5, %v4946
  %v4948 = vsub.f32 1.5, %v4947
  %v4949 = vmul.f32 %v4944, %v4948
  %vm4950 = vweird.f32 %v4062
  %vm4951 = vweird.f32 %v4944
  %vm4952 = vmor %vm4950, %vm4951
  %v4953 = vsel %vm4952, %v4944, %v4949
  %v4954 = vrsqrt.pop %v4063
  %v4955 = vmul.f32 %v4954, %v4063
  %v4956 = vmul.f32 %v4955, %v4954
  %v4957 = vmul.f32 0.5, %v4956
  %v4958 = vsub.f32 1.5, %v4957
  %v4959 = vmul.f32 %v4954, %v4958
  %vm4960 = vweird.f32 %v4063
  %vm4961 = vweird.f32 %v4954
  %vm4962 = vmor %vm4960, %vm4961
  %v4963 = vsel %vm4962, %v4954, %v4959
  %v4964 = vrsqrt.pop %v4064
  %v4965 = vmul.f32 %v4964, %v4064
  %v4966 = vmul.f32 %v4965, %v4964
  %v4967 = vmul.f32 0.5, %v4966
  %v4968 = vsub.f32 1.5, %v4967
  %v4969 = vmul.f32 %v4964, %v4968
  %vm4970 = vweird.f32 %v4064
  %vm4971 = vweird.f32 %v4964
  %vm4972 = vmor %vm4970, %vm4971
  %v4973 = vsel %vm4972, %v4964, %v4969
  %v4974 = vrsqrt.pop %v4065
  %v4975 = vmul.f32 %v4974, %v4065
  %v4976 = vmul.f32 %v4975, %v4974
  %v4977 = vmul.f32 0.5, %v4976
  %v4978 = vsub.f32 1.5, %v4977
  %v4979 = vmul.f32 %v4974, %v4978
  %vm4980 = vweird.f32 %v4065
  %vm4981 = vweird.f32 %v4974
  %vm4982 = vmor %vm4980, %vm4981
  %v4983 = vsel %vm4982, %v4974, %v4979
  %v4984 = vrsqrt.pop %v4066
  %v4985 = vmul.f32 %v4984, %v4066
  %v4986 = vmul.f32 %v4985, %v4984
  %v4987 = vmul.f32 0.5, %v4986
  %v4988 = vsub.f32 1.5, %v4987
  %v4989 = vmul.f32 %v4984, %v4988
  %vm4990 = vweird.f32 %v4066
  %vm4991 = vweird.f32 %v4984
  %vm4992 = vmor %vm4990, %vm4991
  %v4993 = vsel %vm4992, %v4984, %v4989
  %v4994 = vrsqrt.pop %v4067
  %v4995 = vmul.f32 %v4994, %v4067
  %v4996 = vmul.f32 %v4995, %v4994
  %v4997 = vmul.f32 0.5, %v4996
  %v4998 = vsub.f32 1.5, %v4997
  %v4999 = vmul.f32 %v4994, %v4998
  %vm5000 = vweird.f32 %v4067
  %vm5001 = vweird.f32 %v4994
  %vm5002 = vmor %vm5000, %vm5001
  %v5003 = vsel %vm5002, %v4994, %v4999
  %v5004 = vrsqrt.pop %v4068
  %v5005 = vmul.f32 %v5004, %v4068
  %v5006 = vmul.f32 %v5005, %v5004
  %v5007 = vmul.f32 0.5, %v5006
  %v5008 = vsub.f32 1.5, %v5007
  %v5009 = vmul.f32 %v5004, %v5008
  %vm5010 = vweird.f32 %v4068
  %vm5011 = vweird.f32 %v5004
  %vm5012 = vmor %vm5010, %vm5011
  %v5013 = vsel %vm5012, %v5004, %v5009
  %v5014 = vrsqrt.pop %v4069
  %v5015 = vmul.f32 %v5014, %v4069
  %v5016 = vmul.f32 %v5015, %v5014
  %v5017 = vmul.f32 0.5, %v5016
  %v5018 = vsub.f32 1.5, %v5017
  %v5019 = vmul.f32 %v5014, %v5018
  %vm5020 = vweird.f32 %v4069
  %vm5021 = vweird.f32 %v5014
  %vm5022 = vmor %vm5020, %vm5021
  %v5023 = vsel %vm5022, %v5014, %v5019
  %v5024 = vrsqrt.pop %v4070
  %v5025 = vmul.f32 %v5024, %v4070
  %v5026 = vmul.f32 %v5025, %v5024
  %v5027 = vmul.f32 0.5, %v5026
  %v5028 = vsub.f32 1.5, %v5027
  %v5029 = vmul.f32 %v5024, %v5028
  %vm5030 = vweird.f32 %v4070
  %vm5031 = vweird.f32 %v5024
  %vm5032 = vmor %vm5030, %vm5031
  %v5033 = vsel %vm5032, %v5024, %v5029
  %v5034 = vrsqrt.pop %v4071
  %v5035 = vmul.f32 %v5034, %v4071
  %v5036 = vmul.f32 %v5035, %v5034
  %v5037 = vmul.f32 0.5, %v5036
  %v5038 = vsub.f32 1.5, %v5037
  %v5039 = vmul.f32 %v5034, %v5038
  %vm5040 = vweird.f32 %v4071
  %vm5041 = vweird.f32 %v5034
  %vm5042 = vmor %vm5040, %vm5041
  %v5043 = vsel %vm5042, %v5034, %v5039
  %v5044 = vrsqrt.pop %v4072
  %v5045 = vmul.f32 %v5044, %v4072
  %v5046 = vmul.f32 %v5045, %v5044
  %v5047 = vmul.f32 0.5, %v5046
  %v5048 = vsub.f32 1.5, %v5047
  %v5049 = vmul.f32 %v5044, %v5048
  %vm5050 = vweird.f32 %v4072
  %vm5051 = vweird.f32 %v5044
  %vm5052 = vmor %vm5050, %vm5051
  %v5053 = vsel %vm5052, %v5044, %v5049
  %v5054 = vrsqrt.pop %v4073
  %v5055 = vmul.f32 %v5054, %v4073
  %v5056 = vmul.f32 %v5055, %v5054
  %v5057 = vmul.f32 0.5, %v5056
  %v5058 = vsub.f32 1.5, %v5057
  %v5059 = vmul.f32 %v5054, %v5058
  %vm5060 = vweird.f32 %v4073
  %vm5061 = vweird.f32 %v5054
  %vm5062 = vmor %vm5060, %vm5061
  %v5063 = vsel %vm5062, %v5054, %v5059
  %v5064 = vrsqrt.pop %v4074
  %v5065 = vmul.f32 %v5064, %v4074
  %v5066 = vmul.f32 %v5065, %v5064
  %v5067 = vmul.f32 0.5, %v5066
  %v5068 = vsub.f32 1.5, %v5067
  %v5069 = vmul.f32 %v5064, %v5068
  %vm5070 = vweird.f32 %v4074
  %vm5071 = vweird.f32 %v5064
  %vm5072 = vmor %vm5070, %vm5071
  %v5073 = vsel %vm5072, %v5064, %v5069
  %v5074 = vrsqrt.pop %v4075
  %v5075 = vmul.f32 %v5074, %v4075
  %v5076 = vmul.f32 %v5075, %v5074
  %v5077 = vmul.f32 0.5, %v5076
  %v5078 = vsub.f32 1.5, %v5077
  %v5079 = vmul.f32 %v5074, %v5078
  %vm5080 = vweird.f32 %v4075
  %vm5081 = vweird.f32 %v5074
  %vm5082 = vmor %vm5080, %vm5081
  %v5083 = vsel %vm5082, %v5074, %v5079
  %v5084 = vrsqrt.pop %v4076
  %v5085 = vmul.f32 %v5084, %v4076
  %v5086 = vmul.f32 %v5085, %v5084
  %v5087 = vmul.f32 0.5, %v5086
  %v5088 = vsub.f32 1.5, %v5087
  %v5089 = vmul.f32 %v5084, %v5088
  %vm5090 = vweird.f32 %v4076
  %vm5091 = vweird.f32 %v5084
  %vm5092 = vmor %vm5090, %vm5091
  %v5093 = vsel %vm5092, %v5084, %v5089
  %v5094 = vrsqrt.pop %v4077
  %v5095 = vmul.f32 %v5094, %v4077
  %v5096 = vmul.f32 %v5095, %v5094
  %v5097 = vmul.f32 0.5, %v5096
  %v5098 = vsub.f32 1.5, %v5097
  %v5099 = vmul.f32 %v5094, %v5098
  %vm5100 = vweird.f32 %v4077
  %vm5101 = vweird.f32 %v5094
  %vm5102 = vmor %vm5100, %vm5101
  %v5103 = vsel %vm5102, %v5094, %v5099
  %v5104 = vrsqrt.pop %v4078
  %v5105 = vmul.f32 %v5104, %v4078
  %v5106 = vmul.f32 %v5105, %v5104
  %v5107 = vmul.f32 0.5, %v5106
  %v5108 = vsub.f32 1.5, %v5107
  %v5109 = vmul.f32 %v5104, %v5108
  %vm5110 = vweird.f32 %v4078
  %vm5111 = vweird.f32 %v5104
  %vm5112 = vmor %vm5110, %vm5111
  %v5113 = vsel %vm5112, %v5104, %v5109
  %v5114 = vrsqrt.pop %v4079
  %v5115 = vmul.f32 %v5114, %v4079
  %v5116 = vmul.f32 %v5115, %v5114
  %v5117 = vmul.f32 0.5, %v5116
  %v5118 = vsub.f32 1.5, %v5117
  %v5119 = vmul.f32 %v5114, %v5118
  %vm5120 = vweird.f32 %v4079
  %vm5121 = vweird.f32 %v5114
  %vm5122 = vmor %vm5120, %vm5121
  %v5123 = vsel %vm5122, %v5114, %v5119
  %v5124 = vrsqrt.pop %v4080
  %v5125 = vmul.f32 %v5124, %v4080
  %v5126 = vmul.f32 %v5125, %v5124
  %v5127 = vmul.f32 0.5, %v5126
  %v5128 = vsub.f32 1.5, %v5127
  %v5129 = vmul.f32 %v5124, %v5128
  %vm5130 = vweird.f32 %v4080
  %vm5131 = vweird.f32 %v5124
  %vm5132 = vmor %vm5130, %vm5131
  %v5133 = vsel %vm5132, %v5124, %v5129
  %v5134 = vrsqrt.pop %v4081
  %v5135 = vmul.f32 %v5134, %v4081
  %v5136 = vmul.f32 %v5135, %v5134
  %v5137 = vmul.f32 0.5, %v5136
  %v5138 = vsub.f32 1.5, %v5137
  %v5139 = vmul.f32 %v5134, %v5138
  %vm5140 = vweird.f32 %v4081
  %vm5141 = vweird.f32 %v5134
  %vm5142 = vmor %vm5140, %vm5141
  %v5143 = vsel %vm5142, %v5134, %v5139
  %v5144 = vrsqrt.pop %v4082
  %v5145 = vmul.f32 %v5144, %v4082
  %v5146 = vmul.f32 %v5145, %v5144
  %v5147 = vmul.f32 0.5, %v5146
  %v5148 = vsub.f32 1.5, %v5147
  %v5149 = vmul.f32 %v5144, %v5148
  %vm5150 = vweird.f32 %v4082
  %vm5151 = vweird.f32 %v5144
  %vm5152 = vmor %vm5150, %vm5151
  %v5153 = vsel %vm5152, %v5144, %v5149
  %v5154 = vrsqrt.pop %v4083
  %v5155 = vmul.f32 %v5154, %v4083
  %v5156 = vmul.f32 %v5155, %v5154
  %v5157 = vmul.f32 0.5, %v5156
  %v5158 = vsub.f32 1.5, %v5157
  %v5159 = vmul.f32 %v5154, %v5158
  %vm5160 = vweird.f32 %v4083
  %vm5161 = vweird.f32 %v5154
  %vm5162 = vmor %vm5160, %vm5161
  %v5163 = vsel %vm5162, %v5154, %v5159
  %v5164 = vmul.f32 %v3868, %v4093
  %v5165 = vmul.f32 %v3869, %v4103
  %v5166 = vmul.f32 %v3870, %v4113
  %v5167 = vmul.f32 %v3871, %v4123
  %v5168 = vmul.f32 %v3872, %v4133
  %v5169 = vmul.f32 %v3873, %v4143
  %v5170 = vmul.f32 %v3874, %v4153
  %v5171 = vmul.f32 %v3875, %v4163
  %v5172 = vmul.f32 %v3876, %v4173
  %v5173 = vmul.f32 %v3877, %v4183
  %v5174 = vmul.f32 %v3878, %v4193
  %v5175 = vmul.f32 %v3879, %v4203
  %v5176 = vmul.f32 %v3880, %v4213
  %v5177 = vmul.f32 %v3881, %v4223
  %v5178 = vmul.f32 %v3882, %v4233
  %v5179 = vmul.f32 %v3883, %v4243
  %v5180 = vmul.f32 %v3884, %v4253
  %v5181 = vmul.f32 %v3885, %v4263
  %v5182 = vmul.f32 %v3886, %v4273
  %v5183 = vmul.f32 %v3887, %v4283
  %v5184 = vmul.f32 %v3888, %v4293
  %v5185 = vmul.f32 %v3889, %v4303
  %v5186 = vmul.f32 %v3890, %v4313
  %v5187 = vmul.f32 %v3891, %v4323
  %v5188 = vmul.f32 %v3892, %v4333
  %v5189 = vmul.f32 %v3893, %v4343
  %v5190 = vmul.f32 %v3894, %v4353
  %v5191 = vmul.f32 %v3895, %v4363
  %v5192 = vmul.f32 %v3896, %v4373
  %v5193 = vmul.f32 %v3897, %v4383
  %v5194 = vmul.f32 %v3898, %v4393
  %v5195 = vmul.f32 %v3899, %v4403
  %v5196 = vmul.f32 %v3900, %v4413
  %v5197 = vmul.f32 %v3901, %v4423
  %v5198 = vmul.f32 %v3902, %v4433
  %v5199 = vmul.f32 %v3903, %v4443
  %v5200 = vmul.f32 %v3904, %v4453
  %v5201 = vmul.f32 %v3905, %v4463
  %v5202 = vmul.f32 %v3906, %v4473
  %v5203 = vmul.f32 %v3907, %v4483
  %v5204 = vmul.f32 %v3908, %v4493
  %v5205 = vmul.f32 %v3909, %v4503
  %v5206 = vmul.f32 %v3910, %v4513
  %v5207 = vmul.f32 %v3911, %v4523
  %v5208 = vmul.f32 %v3912, %v4533
  %v5209 = vmul.f32 %v3913, %v4543
  %v5210 = vmul.f32 %v3914, %v4553
  %v5211 = vmul.f32 %v3915, %v4563
  %v5212 = vmul.f32 %v3916, %v4573
  %v5213 = vmul.f32 %v3917, %v4583
  %v5214 = vmul.f32 %v3918, %v4593
  %v5215 = vmul.f32 %v3919, %v4603
  %v5216 = vmul.f32 %v3920, %v4613
  %v5217 = vmul.f32 %v3921, %v4623
  %v5218 = vmul.f32 %v3922, %v4633
  %v5219 = vmul.f32 %v3923, %v4643
  %v5220 = vmul.f32 %v3924, %v4653
  %v5221 = vmul.f32 %v3925, %v4663
  %v5222 = vmul.f32 %v3926, %v4673
  %v5223 = vmul.f32 %v3927, %v4683
  %v5224 = vmul.f32 %v3928, %v4693
  %v5225 = vmul.f32 %v3929, %v4703
  %v5226 = vmul.f32 %v3930, %v4713
  %v5227 = vmul.f32 %v3931, %v4723
  %v5228 = vmul.f32 %v3932, %v4733
  %v5229 = vmul.f32 %v3933, %v4743
  %v5230 = vmul.f32 %v3934, %v4753
  %v5231 = vmul.f32 %v3935, %v4763
  %v5232 = vmul.f32 %v3936, %v4773
  %v5233 = vmul.f32 %v3937, %v4783
  %v5234 = vmul.f32 %v3938, %v4793
  %v5235 = vmul.f32 %v3939, %v4803
  %v5236 = vmul.f32 %v3940, %v4813
  %v5237 = vmul.f32 %v3941, %v4823
  %v5238 = vmul.f32 %v3942, %v4833
  %v5239 = vmul.f32 %v3943, %v4843
  %v5240 = vmul.f32 %v3944, %v4853
  %v5241 = vmul.f32 %v3945, %v4863
  %v5242 = vmul.f32 %v3946, %v4873
  %v5243 = vmul.f32 %v3947, %v4883
  %v5244 = vmul.f32 %v3948, %v4893
  %v5245 = vmul.f32 %v3949, %v4903
  %v5246 = vmul.f32 %v3950, %v4913
  %v5247 = vmul.f32 %v3951, %v4923
  %v5248 = vmul.f32 %v3952, %v4933
  %v5249 = vmul.f32 %v3953, %v4943
  %v5250 = vmul.f32 %v3954, %v4953
  %v5251 = vmul.f32 %v3955, %v4963
  %v5252 = vmul.f32 %v3956, %v4973
  %v5253 = vmul.f32 %v3957, %v4983
  %v5254 = vmul.f32 %v3958, %v4993
  %v5255 = vmul.f32 %v3959, %v5003
  %v5256 = vmul.f32 %v3960, %v5013
  %v5257 = vmul.f32 %v3961, %v5023
  %v5258 = vmul.f32 %v3962, %v5033
  %v5259 = vmul.f32 %v3963, %v5043
  %v5260 = vmul.f32 %v3964, %v5053
  %v5261 = vmul.f32 %v3965, %v5063
  %v5262 = vmul.f32 %v3966, %v5073
  %v5263 = vmul.f32 %v3967, %v5083
  %v5264 = vmul.f32 %v3968, %v5093
  %v5265 = vmul.f32 %v3969, %v5103
  %v5266 = vmul.f32 %v3970, %v5113
  %v5267 = vmul.f32 %v3971, %v5123
  %v5268 = vmul.f32 %v3972, %v5133
  %v5269 = vmul.f32 %v3973, %v5143
  %v5270 = vmul.f32 %v3974, %v5153
  %v5271 = vmul.f32 %v3975, %v5163
  %v5272 = vld [vmem:[%s4] sm:$0xff]
  %v5273 = vld [vmem:[%s4 + $0x8] sm:$0xff]
  %v5274 = vld [vmem:[%s4 + $0x10] sm:$0xff]
  %v5275 = vld [vmem:[%s4 + $0x18] sm:$0xff]
  %v5276 = vld [vmem:[%s4 + $0x20] sm:$0xff]
  %v5277 = vld [vmem:[%s4 + $0x28] sm:$0xff]
  %v5278 = vld [vmem:[%s4 + $0x30] sm:$0xff]
  %v5279 = vld [vmem:[%s4 + $0x38] sm:$0xff]
  %v5280 = vld [vmem:[%s4 + $0x40] sm:$0xff]
  %v5281 = vld [vmem:[%s4 + $0x48] sm:$0xff]
  %v5282 = vld [vmem:[%s4 + $0x50] sm:$0xff]
  %v5283 = vld [vmem:[%s4 + $0x58] sm:$0xff]
  %v5284 = vld [vmem:[%s4 + $0x60] sm:$0xff]
  %v5285 = vld [vmem:[%s4 + $0x68] sm:$0xff]
  %v5286 = vld [vmem:[%s4 + $0x70] sm:$0xff]
  %v5287 = vld [vmem:[%s4 + $0x78] sm:$0xff]
  %v5288 = vld [vmem:[%s4 + $0x80] sm:$0xff]
  %v5289 = vld [vmem:[%s4 + $0x88] sm:$0xff]
  %v5290 = vld [vmem:[%s4 + $0x90] sm:$0xff]
  %v5291 = vld [vmem:[%s4 + $0x98] sm:$0xff]
  %v5292 = vld [vmem:[%s4 + $0xa0] sm:$0xff]
  %v5293 = vld [vmem:[%s4 + $0xa8] sm:$0xff]
  %v5294 = vld [vmem:[%s4 + $0xb0] sm:$0xff]
  %v5295 = vld [vmem:[%s4 + $0xb8] sm:$0xff]
  %v5296 = vld [vmem:[%s4 + $0xc0] sm:$0xff]
  %v5297 = vld [vmem:[%s4 + $0xc8] sm:$0xff]
  %v5298 = vld [vmem:[%s4 + $0xd0] sm:$0xff]
  %v5299 = vld [vmem:[%s4 + $0xd8] sm:$0xff]
  %v5300 = vld [vmem:[%s4 + $0xe0] sm:$0xff]
  %v5301 = vld [vmem:[%s4 + $0xe8] sm:$0xff]
  %v5302 = vld [vmem:[%s4 + $0xf0] sm:$0xff]
  %v5303 = vld [vmem:[%s4 + $0xf8] sm:$0xff]
  %v5304 = vld [vmem:[%s4 + $0x100] sm:$0xff]
  %v5305 = vld [vmem:[%s4 + $0x108] sm:$0xff]
  %v5306 = vld [vmem:[%s4 + $0x110] sm:$0xff]
  %v5307 = vld [vmem:[%s4 + $0x118] sm:$0xff]
  %v5308 = vld [vmem:[%s4 + $0x120] sm:$0xff]
  %v5309 = vld [vmem:[%s4 + $0x128] sm:$0xff]
  %v5310 = vld [vmem:[%s4 + $0x130] sm:$0xff]
  %v5311 = vld [vmem:[%s4 + $0x138] sm:$0xff]
  %v5312 = vld [vmem:[%s4 + $0x140] sm:$0xff]
  %v5313 = vld [vmem:[%s4 + $0x148] sm:$0xff]
  %v5314 = vld [vmem:[%s4 + $0x150] sm:$0xff]
  %v5315 = vld [vmem:[%s4 + $0x158] sm:$0xff]
  %v5316 = vld [vmem:[%s4 + $0x160] sm:$0xff]
  %v5317 = vld [vmem:[%s4 + $0x168] sm:$0xff]
  %v5318 = vld [vmem:[%s4 + $0x170] sm:$0xff]
  %v5319 = vld [vmem:[%s4 + $0x178] sm:$0xff]
  %v5320 = vld [vmem:[%s4 + $0x180] sm:$0xff]
  %v5321 = vld [vmem:[%s4 + $0x188] sm:$0xff]
  %v5322 = vld [vmem:[%s4 + $0x190] sm:$0xff]
  %v5323 = vld [vmem:[%s4 + $0x198] sm:$0xff]
  %v5324 = vld [vmem:[%s4 + $0x1a0] sm:$0xff]
  %v5325 = vld [vmem:[%s4 + $0x1a8] sm:$0xff]
  %v5326 = vld [vmem:[%s4 + $0x1b0] sm:$0xff]
  %v5327 = vld [vmem:[%s4 + $0x1b8] sm:$0xff]
  %v5328 = vld [vmem:[%s4 + $0x1c0] sm:$0xff]
  %v5329 = vld [vmem:[%s4 + $0x1c8] sm:$0xff]
  %v5330 = vld [vmem:[%s4 + $0x1d0] sm:$0xff]
  %v5331 = vld [vmem:[%s4 + $0x1d8] sm:$0xff]
  %v5332 = vld [vmem:[%s4 + $0x1e0] sm:$0xff]
  %v5333 = vld [vmem:[%s4 + $0x1e8] sm:$0xff]
  %v5334 = vld [vmem:[%s4 + $0x1f0] sm:$0xff]
  %v5335 = vld [vmem:[%s4 + $0x1f8] sm:$0xff]
  %v5336 = vld [vmem:[%s4 + $0x200] sm:$0xff]
  %v5337 = vld [vmem:[%s4 + $0x208] sm:$0xff]
  %v5338 = vld [vmem:[%s4 + $0x210] sm:$0xff]
  %v5339 = vld [vmem:[%s4 + $0x218] sm:$0xff]
  %v5340 = vld [vmem:[%s4 + $0x220] sm:$0xff]
  %v5341 = vld [vmem:[%s4 + $0x228] sm:$0xff]
  %v5342 = vld [vmem:[%s4 + $0x230] sm:$0xff]
  %v5343 = vld [vmem:[%s4 + $0x238] sm:$0xff]
  %v5344 = vld [vmem:[%s4 + $0x240] sm:$0xff]
  %v5345 = vld [vmem:[%s4 + $0x248] sm:$0xff]
  %v5346 = vld [vmem:[%s4 + $0x250] sm:$0xff]
  %v5347 = vld [vmem:[%s4 + $0x258] sm:$0xff]
  %v5348 = vld [vmem:[%s4 + $0x260] sm:$0xff]
  %v5349 = vld [vmem:[%s4 + $0x268] sm:$0xff]
  %v5350 = vld [vmem:[%s4 + $0x270] sm:$0xff]
  %v5351 = vld [vmem:[%s4 + $0x278] sm:$0xff]
  %v5352 = vld [vmem:[%s4 + $0x280] sm:$0xff]
  %v5353 = vld [vmem:[%s4 + $0x288] sm:$0xff]
  %v5354 = vld [vmem:[%s4 + $0x290] sm:$0xff]
  %v5355 = vld [vmem:[%s4 + $0x298] sm:$0xff]
  %v5356 = vld [vmem:[%s4 + $0x2a0] sm:$0xff]
  %v5357 = vld [vmem:[%s4 + $0x2a8] sm:$0xff]
  %v5358 = vld [vmem:[%s4 + $0x2b0] sm:$0xff]
  %v5359 = vld [vmem:[%s4 + $0x2b8] sm:$0xff]
  %v5360 = vld [vmem:[%s4 + $0x2c0] sm:$0xff]
  %v5361 = vld [vmem:[%s4 + $0x2c8] sm:$0xff]
  %v5362 = vld [vmem:[%s4 + $0x2d0] sm:$0xff]
  %v5363 = vld [vmem:[%s4 + $0x2d8] sm:$0xff]
  %v5364 = vld [vmem:[%s4 + $0x2e0] sm:$0xff]
  %v5365 = vld [vmem:[%s4 + $0x2e8] sm:$0xff]
  %v5366 = vld [vmem:[%s4 + $0x2f0] sm:$0xff]
  %v5367 = vld [vmem:[%s4 + $0x2f8] sm:$0xff]
  %v5368 = vld [vmem:[%s4 + $0x300] sm:$0xff]
  %v5369 = vld [vmem:[%s4 + $0x308] sm:$0xff]
  %v5370 = vld [vmem:[%s4 + $0x310] sm:$0xff]
  %v5371 = vld [vmem:[%s4 + $0x318] sm:$0xff]
  %v5372 = vld [vmem:[%s4 + $0x320] sm:$0xff]
  %v5373 = vld [vmem:[%s4 + $0x328] sm:$0xff]
  %v5374 = vld [vmem:[%s4 + $0x330] sm:$0xff]
  %v5375 = vld [vmem:[%s4 + $0x338] sm:$0xff]
  %v5376 = vld [vmem:[%s4 + $0x340] sm:$0xff]
  %v5377 = vld [vmem:[%s4 + $0x348] sm:$0xff]
  %v5378 = vld [vmem:[%s4 + $0x350] sm:$0xff]
  %v5379 = vld [vmem:[%s4 + $0x358] sm:$0xff]
  %v5380 = vmul.f32 %v2788, %v5164
  %v5381 = vmul.f32 %v2789, %v5165
  %v5382 = vmul.f32 %v2790, %v5166
  %v5383 = vmul.f32 %v2791, %v5167
  %v5384 = vmul.f32 %v2792, %v5168
  %v5385 = vmul.f32 %v2793, %v5169
  %v5386 = vmul.f32 %v2794, %v5170
  %v5387 = vmul.f32 %v2795, %v5171
  %v5388 = vmul.f32 %v2796, %v5172
  %v5389 = vmul.f32 %v2797, %v5173
  %v5390 = vmul.f32 %v2798, %v5174
  %v5391 = vmul.f32 %v2799, %v5175
  %v5392 = vmul.f32 %v2800, %v5176
  %v5393 = vmul.f32 %v2801, %v5177
  %v5394 = vmul.f32 %v2802, %v5178
  %v5395 = vmul.f32 %v2803, %v5179
  %v5396 = vmul.f32 %v2804, %v5180
  %v5397 = vmul.f32 %v2805, %v5181
  %v5398 = vmul.f32 %v2806, %v5182
  %v5399 = vmul.f32 %v2807, %v5183
  %v5400 = vmul.f32 %v2808, %v5184
  %v5401 = vmul.f32 %v2809, %v5185
  %v5402 = vmul.f32 %v2810, %v5186
  %v5403 = vmul.f32 %v2811, %v5187
  %v5404 = vmul.f32 %v2812, %v5188
  %v5405 = vmul.f32 %v2813, %v5189
  %v5406 = vmul.f32 %v2814, %v5190
  %v5407 = vmul.f32 %v2815, %v5191
  %v5408 = vmul.f32 %v2816, %v5192
  %v5409 = vmul.f32 %v2817, %v5193
  %v5410 = vmul.f32 %v2818, %v5194
  %v5411 = vmul.f32 %v2819, %v5195
  %v5412 = vmul.f32 %v2820, %v5196
  %v5413 = vmul.f32 %v2821, %v5197
  %v5414 = vmul.f32 %v2822, %v5198
  %v5415 = vmul.f32 %v2823, %v5199
  %v5416 = vmul.f32 %v2824, %v5200
  %v5417 = vmul.f32 %v2825, %v5201
  %v5418 = vmul.f32 %v2826, %v5202
  %v5419 = vmul.f32 %v2827, %v5203
  %v5420 = vmul.f32 %v2828, %v5204
  %v5421 = vmul.f32 %v2829, %v5205
  %v5422 = vmul.f32 %v2830, %v5206
  %v5423 = vmul.f32 %v2831, %v5207
  %v5424 = vmul.f32 %v2832, %v5208
  %v5425 = vmul.f32 %v2833, %v5209
  %v5426 = vmul.f32 %v2834, %v5210
  %v5427 = vmul.f32 %v2835, %v5211
  %v5428 = vmul.f32 %v2836, %v5212
  %v5429 = vmul.f32 %v2837, %v5213
  %v5430 = vmul.f32 %v2838, %v5214
  %v5431 = vmul.f32 %v2839, %v5215
  %v5432 = vmul.f32 %v2840, %v5216
  %v5433 = vmul.f32 %v2841, %v5217
  %v5434 = vmul.f32 %v2842, %v5218
  %v5435 = vmul.f32 %v2843, %v5219
  %v5436 = vmul.f32 %v2844, %v5220
  %v5437 = vmul.f32 %v2845, %v5221
  %v5438 = vmul.f32 %v2846, %v5222
  %v5439 = vmul.f32 %v2847, %v5223
  %v5440 = vmul.f32 %v2848, %v5224
  %v5441 = vmul.f32 %v2849, %v5225
  %v5442 = vmul.f32 %v2850, %v5226
  %v5443 = vmul.f32 %v2851, %v5227
  %v5444 = vmul.f32 %v2852, %v5228
  %v5445 = vmul.f32 %v2853, %v5229
  %v5446 = vmul.f32 %v2854, %v5230
  %v5447 = vmul.f32 %v2855, %v5231
  %v5448 = vmul.f32 %v2856, %v5232
  %v5449 = vmul.f32 %v2857, %v5233
  %v5450 = vmul.f32 %v2858, %v5234
  %v5451 = vmul.f32 %v2859, %v5235
  %v5452 = vmul.f32 %v2860, %v5236
  %v5453 = vmul.f32 %v2861, %v5237
  %v5454 = vmul.f32 %v2862, %v5238
  %v5455 = vmul.f32 %v2863, %v5239
  %v5456 = vmul.f32 %v2864, %v5240
  %v5457 = vmul.f32 %v2865, %v5241
  %v5458 = vmul.f32 %v2866, %v5242
  %v5459 = vmul.f32 %v2867, %v5243
  %v5460 = vmul.f32 %v2868, %v5244
  %v5461 = vmul.f32 %v2869, %v5245
  %v5462 = vmul.f32 %v2870, %v5246
  %v5463 = vmul.f32 %v2871, %v5247
  %v5464 = vmul.f32 %v2872, %v5248
  %v5465 = vmul.f32 %v2873, %v5249
  %v5466 = vmul.f32 %v2874, %v5250
  %v5467 = vmul.f32 %v2875, %v5251
  %v5468 = vmul.f32 %v2876, %v5252
  %v5469 = vmul.f32 %v2877, %v5253
  %v5470 = vmul.f32 %v2878, %v5254
  %v5471 = vmul.f32 %v2879, %v5255
  %v5472 = vmul.f32 %v2880, %v5256
  %v5473 = vmul.f32 %v2881, %v5257
  %v5474 = vmul.f32 %v2882, %v5258
  %v5475 = vmul.f32 %v2883, %v5259
  %v5476 = vmul.f32 %v2884, %v5260
  %v5477 = vmul.f32 %v2885, %v5261
  %v5478 = vmul.f32 %v2886, %v5262
  %v5479 = vmul.f32 %v2887, %v5263
  %v5480 = vmul.f32 %v2888, %v5264
  %v5481 = vmul.f32 %v2889, %v5265
  %v5482 = vmul.f32 %v2890, %v5266
  %v5483 = vmul.f32 %v2891, %v5267
  %v5484 = vmul.f32 %v2892, %v5268
  %v5485 = vmul.f32 %v2893, %v5269
  %v5486 = vmul.f32 %v2894, %v5270
  %v5487 = vmul.f32 %v2895, %v5271
  %v5488 = vsub.f32 %v5272, %v5380
  %v5489 = vsub.f32 %v5273, %v5381
  %v5490 = vsub.f32 %v5274, %v5382
  %v5491 = vsub.f32 %v5275, %v5383
  %v5492 = vsub.f32 %v5276, %v5384
  %v5493 = vsub.f32 %v5277, %v5385
  %v5494 = vsub.f32 %v5278, %v5386
  %v5495 = vsub.f32 %v5279, %v5387
  %v5496 = vsub.f32 %v5280, %v5388
  %v5497 = vsub.f32 %v5281, %v5389
  %v5498 = vsub.f32 %v5282, %v5390
  %v5499 = vsub.f32 %v5283, %v5391
  %v5500 = vsub.f32 %v5284, %v5392
  %v5501 = vsub.f32 %v5285, %v5393
  %v5502 = vsub.f32 %v5286, %v5394
  %v5503 = vsub.f32 %v5287, %v5395
  %v5504 = vsub.f32 %v5288, %v5396
  %v5505 = vsub.f32 %v5289, %v5397
  %v5506 = vsub.f32 %v5290, %v5398
  %v5507 = vsub.f32 %v5291, %v5399
  %v5508 = vsub.f32 %v5292, %v5400
  %v5509 = vsub.f32 %v5293, %v5401
  %v5510 = vsub.f32 %v5294, %v5402
  %v5511 = vsub.f32 %v5295, %v5403
  %v5512 = vsub.f32 %v5296, %v5404
  %v5513 = vsub.f32 %v5297, %v5405
  %v5514 = vsub.f32 %v5298, %v5406
  %v5515 = vsub.f32 %v5299, %v5407
  %v5516 = vsub.f32 %v5300, %v5408
  %v5517 = vsub.f32 %v5301, %v5409
  %v5518 = vsub.f32 %v5302, %v5410
  %v5519 = vsub.f32 %v5303, %v5411
  %v5520 = vsub.f32 %v5304, %v5412
  %v5521 = vsub.f32 %v5305, %v5413
  %v5522 = vsub.f32 %v5306, %v5414
  %v5523 = vsub.f32 %v5307, %v5415
  %v5524 = vsub.f32 %v5308, %v5416
  %v5525 = vsub.f32 %v5309, %v5417
  %v5526 = vsub.f32 %v5310, %v5418
  %v5527 = vsub.f32 %v5311, %v5419
  %v5528 = vsub.f32 %v5312, %v5420
  %v5529 = vsub.f32 %v5313, %v5421
  %v5530 = vsub.f32 %v5314, %v5422
  %v5531 = vsub.f32 %v5315, %v5423
  %v5532 = vsub.f32 %v5316, %v5424
  %v5533 = vsub.f32 %v5317, %v5425
  %v5534 = vsub.f32 %v5318, %v5426
  %v5535 = vsub.f32 %v5319, %v5427
  %v5536 = vsub.f32 %v5320, %v5428
  %v5537 = vsub.f32 %v5321, %v5429
  %v5538 = vsub.f32 %v5322, %v5430
  %v5539 = vsub.f32 %v5323, %v5431
  %v5540 = vsub.f32 %v5324, %v5432
  %v5541 = vsub.f32 %v5325, %v5433
  %v5542 = vsub.f32 %v5326, %v5434
  %v5543 = vsub.f32 %v5327, %v5435
  %v5544 = vsub.f32 %v5328, %v5436
  %v5545 = vsub.f32 %v5329, %v5437
  %v5546 = vsub.f32 %v5330, %v5438
  %v5547 = vsub.f32 %v5331, %v5439
  %v5548 = vsub.f32 %v5332, %v5440
  %v5549 = vsub.f32 %v5333, %v5441
  %v5550 = vsub.f32 %v5334, %v5442
  %v5551 = vsub.f32 %v5335, %v5443
  %v5552 = vsub.f32 %v5336, %v5444
  %v5553 = vsub.f32 %v5337, %v5445
  %v5554 = vsub.f32 %v5338, %v5446
  %v5555 = vsub.f32 %v5339, %v5447
  %v5556 = vsub.f32 %v5340, %v5448
  %v5557 = vsub.f32 %v5341, %v5449
  %v5558 = vsub.f32 %v5342, %v5450
  %v5559 = vsub.f32 %v5343, %v5451
  %v5560 = vsub.f32 %v5344, %v5452
  %v5561 = vsub.f32 %v5345, %v5453
  %v5562 = vsub.f32 %v5346, %v5454
  %v5563 = vsub.f32 %v5347, %v5455
  %v5564 = vsub.f32 %v5348, %v5456
  %v5565 = vsub.f32 %v5349, %v5457
  %v5566 = vsub.f32 %v5350, %v5458
  %v5567 = vsub.f32 %v5351, %v5459
  %v5568 = vsub.f32 %v5352, %v5460
  %v5569 = vsub.f32 %v5353, %v5461
  %v5570 = vsub.f32 %v5354, %v5462
  %v5571 = vsub.f32 %v5355, %v5463
  %v5572 = vsub.f32 %v5356, %v5464
  %v5573 = vsub.f32 %v5357, %v5465
  %v5574 = vsub.f32 %v5358, %v5466
  %v5575 = vsub.f32 %v5359, %v5467
  %v5576 = vsub.f32 %v5360, %v5468
  %v5577 = vsub.f32 %v5361, %v5469
  %v5578 = vsub.f32 %v5362, %v5470
  %v5579 = vsub.f32 %v5363, %v5471
  %v5580 = vsub.f32 %v5364, %v5472
  %v5581 = vsub.f32 %v5365, %v5473
  %v5582 = vsub.f32 %v5366, %v5474
  %v5583 = vsub.f32 %v5367, %v5475
  %v5584 = vsub.f32 %v5368, %v5476
  %v5585 = vsub.f32 %v5369, %v5477
  %v5586 = vsub.f32 %v5370, %v5478
  %v5587 = vsub.f32 %v5371, %v5479
  %v5588 = vsub.f32 %v5372, %v5480
  %v5589 = vsub.f32 %v5373, %v5481
  %v5590 = vsub.f32 %v5374, %v5482
  %v5591 = vsub.f32 %v5375, %v5483
  %v5592 = vsub.f32 %v5376, %v5484
  %v5593 = vsub.f32 %v5377, %v5485
  %v5594 = vsub.f32 %v5378, %v5486
  %v5595 = vsub.f32 %v5379, %v5487
  %5597 = vset.pattern.permute.xlu0 0
  %5598 = vperm.xlu0 %5597, %v5164
  %v5599 = vpop.permute.xlu0 %5598
  %5602 = vset.pattern.permute.xlu0 0
  %5603 = vperm.xlu0 %5602, %v5165
  %v5604 = vpop.permute.xlu0 %5603
  %5607 = vset.pattern.permute.xlu0 0
  %5608 = vperm.xlu0 %5607, %v5166
  %v5609 = vpop.permute.xlu0 %5608
  %5612 = vset.pattern.permute.xlu0 0
  %5613 = vperm.xlu0 %5612, %v5167
  %v5614 = vpop.permute.xlu0 %5613
  %5617 = vset.pattern.permute.xlu0 0
  %5618 = vperm.xlu0 %5617, %v5168
  %v5619 = vpop.permute.xlu0 %5618
  %5622 = vset.pattern.permute.xlu0 0
  %5623 = vperm.xlu0 %5622, %v5169
  %v5624 = vpop.permute.xlu0 %5623
  %5627 = vset.pattern.permute.xlu0 0
  %5628 = vperm.xlu0 %5627, %v5170
  %v5629 = vpop.permute.xlu0 %5628
  %5632 = vset.pattern.permute.xlu0 0
  %5633 = vperm.xlu0 %5632, %v5171
  %v5634 = vpop.permute.xlu0 %5633
  %5637 = vset.pattern.permute.xlu0 0
  %5638 = vperm.xlu0 %5637, %v5172
  %v5639 = vpop.permute.xlu0 %5638
  %5642 = vset.pattern.permute.xlu0 0
  %5643 = vperm.xlu0 %5642, %v5173
  %v5644 = vpop.permute.xlu0 %5643
  %5647 = vset.pattern.permute.xlu0 0
  %5648 = vperm.xlu0 %5647, %v5174
  %v5649 = vpop.permute.xlu0 %5648
  %5652 = vset.pattern.permute.xlu0 0
  %5653 = vperm.xlu0 %5652, %v5175
  %v5654 = vpop.permute.xlu0 %5653
  %5657 = vset.pattern.permute.xlu0 0
  %5658 = vperm.xlu0 %5657, %v5176
  %v5659 = vpop.permute.xlu0 %5658
  %5662 = vset.pattern.permute.xlu0 0
  %5663 = vperm.xlu0 %5662, %v5177
  %v5664 = vpop.permute.xlu0 %5663
  %5667 = vset.pattern.permute.xlu0 0
  %5668 = vperm.xlu0 %5667, %v5178
  %v5669 = vpop.permute.xlu0 %5668
  %5672 = vset.pattern.permute.xlu0 0
  %5673 = vperm.xlu0 %5672, %v5179
  %v5674 = vpop.permute.xlu0 %5673
  %5677 = vset.pattern.permute.xlu0 0
  %5678 = vperm.xlu0 %5677, %v5180
  %v5679 = vpop.permute.xlu0 %5678
  %5682 = vset.pattern.permute.xlu0 0
  %5683 = vperm.xlu0 %5682, %v5181
  %v5684 = vpop.permute.xlu0 %5683
  %5687 = vset.pattern.permute.xlu0 0
  %5688 = vperm.xlu0 %5687, %v5182
  %v5689 = vpop.permute.xlu0 %5688
  %5692 = vset.pattern.permute.xlu0 0
  %5693 = vperm.xlu0 %5692, %v5183
  %v5694 = vpop.permute.xlu0 %5693
  %5697 = vset.pattern.permute.xlu0 0
  %5698 = vperm.xlu0 %5697, %v5184
  %v5699 = vpop.permute.xlu0 %5698
  %5702 = vset.pattern.permute.xlu0 0
  %5703 = vperm.xlu0 %5702, %v5185
  %v5704 = vpop.permute.xlu0 %5703
  %5707 = vset.pattern.permute.xlu0 0
  %5708 = vperm.xlu0 %5707, %v5186
  %v5709 = vpop.permute.xlu0 %5708
  %5712 = vset.pattern.permute.xlu0 0
  %5713 = vperm.xlu0 %5712, %v5187
  %v5714 = vpop.permute.xlu0 %5713
  %5717 = vset.pattern.permute.xlu0 0
  %5718 = vperm.xlu0 %5717, %v5188
  %v5719 = vpop.permute.xlu0 %5718
  %5722 = vset.pattern.permute.xlu0 0
  %5723 = vperm.xlu0 %5722, %v5189
  %v5724 = vpop.permute.xlu0 %5723
  %5727 = vset.pattern.permute.xlu0 0
  %5728 = vperm.xlu0 %5727, %v5190
  %v5729 = vpop.permute.xlu0 %5728
  %5732 = vset.pattern.permute.xlu0 0
  %5733 = vperm.xlu0 %5732, %v5191
  %v5734 = vpop.permute.xlu0 %5733
  %5737 = vset.pattern.permute.xlu0 0
  %5738 = vperm.xlu0 %5737, %v5192
  %v5739 = vpop.permute.xlu0 %5738
  %5742 = vset.pattern.permute.xlu0 0
  %5743 = vperm.xlu0 %5742, %v5193
  %v5744 = vpop.permute.xlu0 %5743
  %5747 = vset.pattern.permute.xlu0 0
  %5748 = vperm.xlu0 %5747, %v5194
  %v5749 = vpop.permute.xlu0 %5748
  %5752 = vset.pattern.permute.xlu0 0
  %5753 = vperm.xlu0 %5752, %v5195
  %v5754 = vpop.permute.xlu0 %5753
  %5757 = vset.pattern.permute.xlu0 0
  %5758 = vperm.xlu0 %5757, %v5196
  %v5759 = vpop.permute.xlu0 %5758
  %5762 = vset.pattern.permute.xlu0 0
  %5763 = vperm.xlu0 %5762, %v5197
  %v5764 = vpop.permute.xlu0 %5763
  %5767 = vset.pattern.permute.xlu0 0
  %5768 = vperm.xlu0 %5767, %v5198
  %v5769 = vpop.permute.xlu0 %5768
  %5772 = vset.pattern.permute.xlu0 0
  %5773 = vperm.xlu0 %5772, %v5199
  %v5774 = vpop.permute.xlu0 %5773
  %5777 = vset.pattern.permute.xlu0 0
  %5778 = vperm.xlu0 %5777, %v5200
  %v5779 = vpop.permute.xlu0 %5778
  %5782 = vset.pattern.permute.xlu0 0
  %5783 = vperm.xlu0 %5782, %v5201
  %v5784 = vpop.permute.xlu0 %5783
  %5787 = vset.pattern.permute.xlu0 0
  %5788 = vperm.xlu0 %5787, %v5202
  %v5789 = vpop.permute.xlu0 %5788
  %5792 = vset.pattern.permute.xlu0 0
  %5793 = vperm.xlu0 %5792, %v5203
  %v5794 = vpop.permute.xlu0 %5793
  %5797 = vset.pattern.permute.xlu0 0
  %5798 = vperm.xlu0 %5797, %v5204
  %v5799 = vpop.permute.xlu0 %5798
  %5802 = vset.pattern.permute.xlu0 0
  %5803 = vperm.xlu0 %5802, %v5205
  %v5804 = vpop.permute.xlu0 %5803
  %5807 = vset.pattern.permute.xlu0 0
  %5808 = vperm.xlu0 %5807, %v5206
  %v5809 = vpop.permute.xlu0 %5808
  %5812 = vset.pattern.permute.xlu0 0
  %5813 = vperm.xlu0 %5812, %v5207
  %v5814 = vpop.permute.xlu0 %5813
  %5817 = vset.pattern.permute.xlu0 0
  %5818 = vperm.xlu0 %5817, %v5208
  %v5819 = vpop.permute.xlu0 %5818
  %5822 = vset.pattern.permute.xlu0 0
  %5823 = vperm.xlu0 %5822, %v5209
  %v5824 = vpop.permute.xlu0 %5823
  %5827 = vset.pattern.permute.xlu0 0
  %5828 = vperm.xlu0 %5827, %v5210
  %v5829 = vpop.permute.xlu0 %5828
  %5832 = vset.pattern.permute.xlu0 0
  %5833 = vperm.xlu0 %5832, %v5211
  %v5834 = vpop.permute.xlu0 %5833
  %5837 = vset.pattern.permute.xlu0 0
  %5838 = vperm.xlu0 %5837, %v5212
  %v5839 = vpop.permute.xlu0 %5838
  %5842 = vset.pattern.permute.xlu0 0
  %5843 = vperm.xlu0 %5842, %v5213
  %v5844 = vpop.permute.xlu0 %5843
  %5847 = vset.pattern.permute.xlu0 0
  %5848 = vperm.xlu0 %5847, %v5214
  %v5849 = vpop.permute.xlu0 %5848
  %5852 = vset.pattern.permute.xlu0 0
  %5853 = vperm.xlu0 %5852, %v5215
  %v5854 = vpop.permute.xlu0 %5853
  %5857 = vset.pattern.permute.xlu0 0
  %5858 = vperm.xlu0 %5857, %v5216
  %v5859 = vpop.permute.xlu0 %5858
  %5862 = vset.pattern.permute.xlu0 0
  %5863 = vperm.xlu0 %5862, %v5217
  %v5864 = vpop.permute.xlu0 %5863
  %5867 = vset.pattern.permute.xlu0 0
  %5868 = vperm.xlu0 %5867, %v5218
  %v5869 = vpop.permute.xlu0 %5868
  %5872 = vset.pattern.permute.xlu0 0
  %5873 = vperm.xlu0 %5872, %v5219
  %v5874 = vpop.permute.xlu0 %5873
  %5877 = vset.pattern.permute.xlu0 0
  %5878 = vperm.xlu0 %5877, %v5220
  %v5879 = vpop.permute.xlu0 %5878
  %5882 = vset.pattern.permute.xlu0 0
  %5883 = vperm.xlu0 %5882, %v5221
  %v5884 = vpop.permute.xlu0 %5883
  %5887 = vset.pattern.permute.xlu0 0
  %5888 = vperm.xlu0 %5887, %v5222
  %v5889 = vpop.permute.xlu0 %5888
  %5892 = vset.pattern.permute.xlu0 0
  %5893 = vperm.xlu0 %5892, %v5223
  %v5894 = vpop.permute.xlu0 %5893
  %5897 = vset.pattern.permute.xlu0 0
  %5898 = vperm.xlu0 %5897, %v5224
  %v5899 = vpop.permute.xlu0 %5898
  %5902 = vset.pattern.permute.xlu0 0
  %5903 = vperm.xlu0 %5902, %v5225
  %v5904 = vpop.permute.xlu0 %5903
  %5907 = vset.pattern.permute.xlu0 0
  %5908 = vperm.xlu0 %5907, %v5226
  %v5909 = vpop.permute.xlu0 %5908
  %5912 = vset.pattern.permute.xlu0 0
  %5913 = vperm.xlu0 %5912, %v5227
  %v5914 = vpop.permute.xlu0 %5913
  %5917 = vset.pattern.permute.xlu0 0
  %5918 = vperm.xlu0 %5917, %v5228
  %v5919 = vpop.permute.xlu0 %5918
  %5922 = vset.pattern.permute.xlu0 0
  %5923 = vperm.xlu0 %5922, %v5229
  %v5924 = vpop.permute.xlu0 %5923
  %5927 = vset.pattern.permute.xlu0 0
  %5928 = vperm.xlu0 %5927, %v5230
  %v5929 = vpop.permute.xlu0 %5928
  %5932 = vset.pattern.permute.xlu0 0
  %5933 = vperm.xlu0 %5932, %v5231
  %v5934 = vpop.permute.xlu0 %5933
  %5937 = vset.pattern.permute.xlu0 0
  %5938 = vperm.xlu0 %5937, %v5232
  %v5939 = vpop.permute.xlu0 %5938
  %5942 = vset.pattern.permute.xlu0 0
  %5943 = vperm.xlu0 %5942, %v5233
  %v5944 = vpop.permute.xlu0 %5943
  %5947 = vset.pattern.permute.xlu0 0
  %5948 = vperm.xlu0 %5947, %v5234
  %v5949 = vpop.permute.xlu0 %5948
  %5952 = vset.pattern.permute.xlu0 0
  %5953 = vperm.xlu0 %5952, %v5235
  %v5954 = vpop.permute.xlu0 %5953
  %5957 = vset.pattern.permute.xlu0 0
  %5958 = vperm.xlu0 %5957, %v5236
  %v5959 = vpop.permute.xlu0 %5958
  %5962 = vset.pattern.permute.xlu0 0
  %5963 = vperm.xlu0 %5962, %v5237
  %v5964 = vpop.permute.xlu0 %5963
  %5967 = vset.pattern.permute.xlu0 0
  %5968 = vperm.xlu0 %5967, %v5238
  %v5969 = vpop.permute.xlu0 %5968
  %5972 = vset.pattern.permute.xlu0 0
  %5973 = vperm.xlu0 %5972, %v5239
  %v5974 = vpop.permute.xlu0 %5973
  %5977 = vset.pattern.permute.xlu0 0
  %5978 = vperm.xlu0 %5977, %v5240
  %v5979 = vpop.permute.xlu0 %5978
  %5982 = vset.pattern.permute.xlu0 0
  %5983 = vperm.xlu0 %5982, %v5241
  %v5984 = vpop.permute.xlu0 %5983
  %5987 = vset.pattern.permute.xlu0 0
  %5988 = vperm.xlu0 %5987, %v5242
  %v5989 = vpop.permute.xlu0 %5988
  %5992 = vset.pattern.permute.xlu0 0
  %5993 = vperm.xlu0 %5992, %v5243
  %v5994 = vpop.permute.xlu0 %5993
  %5997 = vset.pattern.permute.xlu0 0
  %5998 = vperm.xlu0 %5997, %v5244
  %v5999 = vpop.permute.xlu0 %5998
  %6002 = vset.pattern.permute.xlu0 0
  %6003 = vperm.xlu0 %6002, %v5245
  %v6004 = vpop.permute.xlu0 %6003
  %6007 = vset.pattern.permute.xlu0 0
  %6008 = vperm.xlu0 %6007, %v5246
  %v6009 = vpop.permute.xlu0 %6008
  %6012 = vset.pattern.permute.xlu0 0
  %6013 = vperm.xlu0 %6012, %v5247
  %v6014 = vpop.permute.xlu0 %6013
  %6017 = vset.pattern.permute.xlu0 0
  %6018 = vperm.xlu0 %6017, %v5248
  %v6019 = vpop.permute.xlu0 %6018
  %6022 = vset.pattern.permute.xlu0 0
  %6023 = vperm.xlu0 %6022, %v5249
  %v6024 = vpop.permute.xlu0 %6023
  %6027 = vset.pattern.permute.xlu0 0
  %6028 = vperm.xlu0 %6027, %v5250
  %v6029 = vpop.permute.xlu0 %6028
  %6032 = vset.pattern.permute.xlu0 0
  %6033 = vperm.xlu0 %6032, %v5251
  %v6034 = vpop.permute.xlu0 %6033
  %6037 = vset.pattern.permute.xlu0 0
  %6038 = vperm.xlu0 %6037, %v5252
  %v6039 = vpop.permute.xlu0 %6038
  %6042 = vset.pattern.permute.xlu0 0
  %6043 = vperm.xlu0 %6042, %v5253
  %v6044 = vpop.permute.xlu0 %6043
  %6047 = vset.pattern.permute.xlu0 0
  %6048 = vperm.xlu0 %6047, %v5254
  %v6049 = vpop.permute.xlu0 %6048
  %6052 = vset.pattern.permute.xlu0 0
  %6053 = vperm.xlu0 %6052, %v5255
  %v6054 = vpop.permute.xlu0 %6053
  %6057 = vset.pattern.permute.xlu0 0
  %6058 = vperm.xlu0 %6057, %v5256
  %v6059 = vpop.permute.xlu0 %6058
  %6062 = vset.pattern.permute.xlu0 0
  %6063 = vperm.xlu0 %6062, %v5257
  %v6064 = vpop.permute.xlu0 %6063
  %6067 = vset.pattern.permute.xlu0 0
  %6068 = vperm.xlu0 %6067, %v5258
  %v6069 = vpop.permute.xlu0 %6068
  %6072 = vset.pattern.permute.xlu0 0
  %6073 = vperm.xlu0 %6072, %v5259
  %v6074 = vpop.permute.xlu0 %6073
  %6077 = vset.pattern.permute.xlu0 0
  %6078 = vperm.xlu0 %6077, %v5260
  %v6079 = vpop.permute.xlu0 %6078
  %6082 = vset.pattern.permute.xlu0 0
  %6083 = vperm.xlu0 %6082, %v5261
  %v6084 = vpop.permute.xlu0 %6083
  %6087 = vset.pattern.permute.xlu0 0
  %6088 = vperm.xlu0 %6087, %v5262
  %v6089 = vpop.permute.xlu0 %6088
  %6092 = vset.pattern.permute.xlu0 0
  %6093 = vperm.xlu0 %6092, %v5263
  %v6094 = vpop.permute.xlu0 %6093
  %6097 = vset.pattern.permute.xlu0 0
  %6098 = vperm.xlu0 %6097, %v5264
  %v6099 = vpop.permute.xlu0 %6098
  %6102 = vset.pattern.permute.xlu0 0
  %6103 = vperm.xlu0 %6102, %v5265
  %v6104 = vpop.permute.xlu0 %6103
  %6107 = vset.pattern.permute.xlu0 0
  %6108 = vperm.xlu0 %6107, %v5266
  %v6109 = vpop.permute.xlu0 %6108
  %6112 = vset.pattern.permute.xlu0 0
  %6113 = vperm.xlu0 %6112, %v5267
  %v6114 = vpop.permute.xlu0 %6113
  %6117 = vset.pattern.permute.xlu0 0
  %6118 = vperm.xlu0 %6117, %v5268
  %v6119 = vpop.permute.xlu0 %6118
  %6122 = vset.pattern.permute.xlu0 0
  %6123 = vperm.xlu0 %6122, %v5269
  %v6124 = vpop.permute.xlu0 %6123
  %6127 = vset.pattern.permute.xlu0 0
  %6128 = vperm.xlu0 %6127, %v5270
  %v6129 = vpop.permute.xlu0 %6128
  %6132 = vset.pattern.permute.xlu0 0
  %6133 = vperm.xlu0 %6132, %v5271
  %v6134 = vpop.permute.xlu0 %6133
  %v6136 = vmul.f32 %v1028, %v5599
  %v6137 = vmul.f32 %v1710, %v5599
  %v6138 = vmul.f32 %v1031, %v5604
  %v6139 = vmul.f32 %v1713, %v5604
  %v6140 = vmul.f32 %v1034, %v5609
  %v6141 = vmul.f32 %v1716, %v5609
  %v6142 = vmul.f32 %v1037, %v5614
  %v6143 = vmul.f32 %v1719, %v5614
  %v6144 = vmul.f32 %v1040, %v5619
  %v6145 = vmul.f32 %v1722, %v5619
  %v6146 = vmul.f32 %v1043, %v5624
  %v6147 = vmul.f32 %v1725, %v5624
  %v6148 = vmul.f32 %v1046, %v5629
  %v6149 = vmul.f32 %v1728, %v5629
  %v6150 = vmul.f32 %v1049, %v5634
  %v6151 = vmul.f32 %v1731, %v5634
  %v6152 = vmul.f32 %v1052, %v5639
  %v6153 = vmul.f32 %v1734, %v5639
  %v6154 = vmul.f32 %v1055, %v5644
  %v6155 = vmul.f32 %v1737, %v5644
  %v6156 = vmul.f32 %v1058, %v5649
  %v6157 = vmul.f32 %v1740, %v5649
  %v6158 = vmul.f32 %v1061, %v5654
  %v6159 = vmul.f32 %v1743, %v5654
  %v6160 = vmul.f32 %v1064, %v5659
  %v6161 = vmul.f32 %v1746, %v5659
  %v6162 = vmul.f32 %v1067, %v5664
  %v6163 = vmul.f32 %v1749, %v5664
  %v6164 = vmul.f32 %v1070, %v5669
  %v6165 = vmul.f32 %v1752, %v5669
  %v6166 = vmul.f32 %v1073, %v5674
  %v6167 = vmul.f32 %v1755, %v5674
  %v6168 = vmul.f32 %v1076, %v5679
  %v6169 = vmul.f32 %v1758, %v5679
  %v6170 = vmul.f32 %v1079, %v5684
  %v6171 = vmul.f32 %v1761, %v5684
  %v6172 = vmul.f32 %v1082, %v5689
  %v6173 = vmul.f32 %v1764, %v5689
  %v6174 = vmul.f32 %v1085, %v5694
  %v6175 = vmul.f32 %v1767, %v5694
  %v6176 = vmul.f32 %v1088, %v5699
  %v6177 = vmul.f32 %v1770, %v5699
  %v6178 = vmul.f32 %v1091, %v5704
  %v6179 = vmul.f32 %v1773, %v5704
  %v6180 = vmul.f32 %v1094, %v5709
  %v6181 = vmul.f32 %v1776, %v5709
  %v6182 = vmul.f32 %v1097, %v5714
  %v6183 = vmul.f32 %v1779, %v5714
  %v6184 = vmul.f32 %v1100, %v5719
  %v6185 = vmul.f32 %v1782, %v5719
  %v6186 = vmul.f32 %v1103, %v5724
  %v6187 = vmul.f32 %v1785, %v5724
  %v6188 = vmul.f32 %v1106, %v5729
  %v6189 = vmul.f32 %v1788, %v5729
  %v6190 = vmul.f32 %v1109, %v5734
  %v6191 = vmul.f32 %v1791, %v5734
  %v6192 = vmul.f32 %v1112, %v5739
  %v6193 = vmul.f32 %v1794, %v5739
  %v6194 = vmul.f32 %v1115, %v5744
  %v6195 = vmul.f32 %v1797, %v5744
  %v6196 = vmul.f32 %v1118, %v5749
  %v6197 = vmul.f32 %v1800, %v5749
  %v6198 = vmul.f32 %v1121, %v5754
  %v6199 = vmul.f32 %v1803, %v5754
  %v6200 = vmul.f32 %v1124, %v5759
  %v6201 = vmul.f32 %v1806, %v5759
  %v6202 = vmul.f32 %v1127, %v5764
  %v6203 = vmul.f32 %v1809, %v5764
  %v6204 = vmul.f32 %v1130, %v5769
  %v6205 = vmul.f32 %v1812, %v5769
  %v6206 = vmul.f32 %v1133, %v5774
  %v6207 = vmul.f32 %v1815, %v5774
  %v6208 = vmul.f32 %v1136, %v5779
  %v6209 = vmul.f32 %v1818, %v5779
  %v6210 = vmul.f32 %v1139, %v5784
  %v6211 = vmul.f32 %v1821, %v5784
  %v6212 = vmul.f32 %v1142, %v5789
  %v6213 = vmul.f32 %v1824, %v5789
  %v6214 = vmul.f32 %v1145, %v5794
  %v6215 = vmul.f32 %v1827, %v5794
  %v6216 = vmul.f32 %v1148, %v5799
  %v6217 = vmul.f32 %v1830, %v5799
  %v6218 = vmul.f32 %v1151, %v5804
  %v6219 = vmul.f32 %v1833, %v5804
  %v6220 = vmul.f32 %v1154, %v5809
  %v6221 = vmul.f32 %v1836, %v5809
  %v6222 = vmul.f32 %v1157, %v5814
  %v6223 = vmul.f32 %v1839, %v5814
  %v6224 = vmul.f32 %v1160, %v5819
  %v6225 = vmul.f32 %v1842, %v5819
  %v6226 = vmul.f32 %v1163, %v5824
  %v6227 = vmul.f32 %v1845, %v5824
  %v6228 = vmul.f32 %v1166, %v5829
  %v6229 = vmul.f32 %v1848, %v5829
  %v6230 = vmul.f32 %v1169, %v5834
  %v6231 = vmul.f32 %v1851, %v5834
  %v6232 = vmul.f32 %v1172, %v5839
  %v6233 = vmul.f32 %v1854, %v5839
  %v6234 = vmul.f32 %v1175, %v5844
  %v6235 = vmul.f32 %v1857, %v5844
  %v6236 = vmul.f32 %v1178, %v5849
  %v6237 = vmul.f32 %v1860, %v5849
  %v6238 = vmul.f32 %v1181, %v5854
  %v6239 = vmul.f32 %v1863, %v5854
  %v6240 = vmul.f32 %v1184, %v5859
  %v6241 = vmul.f32 %v1866, %v5859
  %v6242 = vmul.f32 %v1187, %v5864
  %v6243 = vmul.f32 %v1869, %v5864
  %v6244 = vmul.f32 %v1190, %v5869
  %v6245 = vmul.f32 %v1872, %v5869
  %v6246 = vmul.f32 %v1193, %v5874
  %v6247 = vmul.f32 %v1875, %v5874
  %v6248 = vmul.f32 %v1196, %v5879
  %v6249 = vmul.f32 %v1878, %v5879
  %v6250 = vmul.f32 %v1199, %v5884
  %v6251 = vmul.f32 %v1881, %v5884
  %v6252 = vmul.f32 %v1202, %v5889
  %v6253 = vmul.f32 %v1884, %v5889
  %v6254 = vmul.f32 %v1205, %v5894
  %v6255 = vmul.f32 %v1887, %v5894
  %v6256 = vmul.f32 %v1208, %v5899
  %v6257 = vmul.f32 %v1890, %v5899
  %v6258 = vmul.f32 %v1211, %v5904
  %v6259 = vmul.f32 %v1893, %v5904
  %v6260 = vmul.f32 %v1214, %v5909
  %v6261 = vmul.f32 %v1896, %v5909
  %v6262 = vmul.f32 %v1217, %v5914
  %v6263 = vmul.f32 %v1899, %v5914
  %v6264 = vmul.f32 %v1220, %v5919
  %v6265 = vmul.f32 %v1902, %v5919
  %v6266 = vmul.f32 %v1223, %v5924
  %v6267 = vmul.f32 %v1905, %v5924
  %v6268 = vmul.f32 %v1226, %v5929
  %v6269 = vmul.f32 %v1908, %v5929
  %v6270 = vmul.f32 %v1229, %v5934
  %v6271 = vmul.f32 %v1911, %v5934
  %v6272 = vmul.f32 %v1232, %v5939
  %v6273 = vmul.f32 %v1914, %v5939
  %v6274 = vmul.f32 %v1235, %v5944
  %v6275 = vmul.f32 %v1917, %v5944
  %v6276 = vmul.f32 %v1238, %v5949
  %v6277 = vmul.f32 %v1920, %v5949
  %v6278 = vmul.f32 %v1241, %v5954
  %v6279 = vmul.f32 %v1923, %v5954
  %v6280 = vmul.f32 %v1244, %v5959
  %v6281 = vmul.f32 %v1926, %v5959
  %v6282 = vmul.f32 %v1247, %v5964
  %v6283 = vmul.f32 %v1929, %v5964
  %v6284 = vmul.f32 %v1250, %v5969
  %v6285 = vmul.f32 %v1932, %v5969
  %v6286 = vmul.f32 %v1253, %v5974
  %v6287 = vmul.f32 %v1935, %v5974
  %v6288 = vmul.f32 %v1256, %v5979
  %v6289 = vmul.f32 %v1938, %v5979
  %v6290 = vmul.f32 %v1259, %v5984
  %v6291 = vmul.f32 %v1941, %v5984
  %v6292 = vmul.f32 %v1262, %v5989
  %v6293 = vmul.f32 %v1944, %v5989
  %v6294 = vmul.f32 %v1265, %v5994
  %v6295 = vmul.f32 %v1947, %v5994
  %v6296 = vmul.f32 %v1268, %v5999
  %v6297 = vmul.f32 %v1950, %v5999
  %v6298 = vmul.f32 %v1271, %v6004
  %v6299 = vmul.f32 %v1953, %v6004
  %v6300 = vmul.f32 %v1274, %v6009
  %v6301 = vmul.f32 %v1956, %v6009
  %v6302 = vmul.f32 %v1277, %v6014
  %v6303 = vmul.f32 %v1959, %v6014
  %v6304 = vmul.f32 %v1280, %v6019
  %v6305 = vmul.f32 %v1962, %v6019
  %v6306 = vmul.f32 %v1283, %v6024
  %v6307 = vmul.f32 %v1965, %v6024
  %v6308 = vmul.f32 %v1286, %v6029
  %v6309 = vmul.f32 %v1968, %v6029
  %v6310 = vmul.f32 %v1289, %v6034
  %v6311 = vmul.f32 %v1971, %v6034
  %v6312 = vmul.f32 %v1292, %v6039
  %v6313 = vmul.f32 %v1974, %v6039
  %v6314 = vmul.f32 %v1295, %v6044
  %v6315 = vmul.f32 %v1977, %v6044
  %v6316 = vmul.f32 %v1298, %v6049
  %v6317 = vmul.f32 %v1980, %v6049
  %v6318 = vmul.f32 %v1301, %v6054
  %v6319 = vmul.f32 %v1983, %v6054
  %v6320 = vmul.f32 %v1304, %v6059
  %v6321 = vmul.f32 %v1986, %v6059
  %v6322 = vmul.f32 %v1307, %v6064
  %v6323 = vmul.f32 %v1989, %v6064
  %v6324 = vmul.f32 %v1310, %v6069
  %v6325 = vmul.f32 %v1992, %v6069
  %v6326 = vmul.f32 %v1313, %v6074
  %v6327 = vmul.f32 %v1995, %v6074
  %v6328 = vmul.f32 %v1316, %v6079
  %v6329 = vmul.f32 %v1998, %v6079
  %v6330 = vmul.f32 %v1319, %v6084
  %v6331 = vmul.f32 %v2001, %v6084
  %v6332 = vmul.f32 %v1322, %v6089
  %v6333 = vmul.f32 %v2004, %v6089
  %v6334 = vmul.f32 %v1325, %v6094
  %v6335 = vmul.f32 %v2007, %v6094
  %v6336 = vmul.f32 %v1328, %v6099
  %v6337 = vmul.f32 %v2010, %v6099
  %v6338 = vmul.f32 %v1331, %v6104
  %v6339 = vmul.f32 %v2013, %v6104
  %v6340 = vmul.f32 %v1334, %v6109
  %v6341 = vmul.f32 %v2016, %v6109
  %v6342 = vmul.f32 %v1337, %v6114
  %v6343 = vmul.f32 %v2019, %v6114
  %v6344 = vmul.f32 %v1340, %v6119
  %v6345 = vmul.f32 %v2022, %v6119
  %v6346 = vmul.f32 %v1343, %v6124
  %v6347 = vmul.f32 %v2025, %v6124
  %v6348 = vmul.f32 %v1346, %v6129
  %v6349 = vmul.f32 %v2028, %v6129
  %v6350 = vmul.f32 %v1349, %v6134
  %v6351 = vmul.f32 %v2031, %v6134
  %6353 = vset.pattern.permute.xlu0 0
  %6354 = vperm.xlu0 %6353, %v5488
  %v6355 = vpop.permute.xlu0 %6354
  %6358 = vset.pattern.permute.xlu0 0
  %6359 = vperm.xlu0 %6358, %v5489
  %v6360 = vpop.permute.xlu0 %6359
  %6363 = vset.pattern.permute.xlu0 0
  %6364 = vperm.xlu0 %6363, %v5490
  %v6365 = vpop.permute.xlu0 %6364
  %6368 = vset.pattern.permute.xlu0 0
  %6369 = vperm.xlu0 %6368, %v5491
  %v6370 = vpop.permute.xlu0 %6369
  %6373 = vset.pattern.permute.xlu0 0
  %6374 = vperm.xlu0 %6373, %v5492
  %v6375 = vpop.permute.xlu0 %6374
  %6378 = vset.pattern.permute.xlu0 0
  %6379 = vperm.xlu0 %6378, %v5493
  %v6380 = vpop.permute.xlu0 %6379
  %6383 = vset.pattern.permute.xlu0 0
  %6384 = vperm.xlu0 %6383, %v5494
  %v6385 = vpop.permute.xlu0 %6384
  %6388 = vset.pattern.permute.xlu0 0
  %6389 = vperm.xlu0 %6388, %v5495
  %v6390 = vpop.permute.xlu0 %6389
  %6393 = vset.pattern.permute.xlu0 0
  %6394 = vperm.xlu0 %6393, %v5496
  %v6395 = vpop.permute.xlu0 %6394
  %6398 = vset.pattern.permute.xlu0 0
  %6399 = vperm.xlu0 %6398, %v5497
  %v6400 = vpop.permute.xlu0 %6399
  %6403 = vset.pattern.permute.xlu0 0
  %6404 = vperm.xlu0 %6403, %v5498
  %v6405 = vpop.permute.xlu0 %6404
  %6408 = vset.pattern.permute.xlu0 0
  %6409 = vperm.xlu0 %6408, %v5499
  %v6410 = vpop.permute.xlu0 %6409
  %6413 = vset.pattern.permute.xlu0 0
  %6414 = vperm.xlu0 %6413, %v5500
  %v6415 = vpop.permute.xlu0 %6414
  %6418 = vset.pattern.permute.xlu0 0
  %6419 = vperm.xlu0 %6418, %v5501
  %v6420 = vpop.permute.xlu0 %6419
  %6423 = vset.pattern.permute.xlu0 0
  %6424 = vperm.xlu0 %6423, %v5502
  %v6425 = vpop.permute.xlu0 %6424
  %6428 = vset.pattern.permute.xlu0 0
  %6429 = vperm.xlu0 %6428, %v5503
  %v6430 = vpop.permute.xlu0 %6429
  %6433 = vset.pattern.permute.xlu0 0
  %6434 = vperm.xlu0 %6433, %v5504
  %v6435 = vpop.permute.xlu0 %6434
  %6438 = vset.pattern.permute.xlu0 0
  %6439 = vperm.xlu0 %6438, %v5505
  %v6440 = vpop.permute.xlu0 %6439
  %6443 = vset.pattern.permute.xlu0 0
  %6444 = vperm.xlu0 %6443, %v5506
  %v6445 = vpop.permute.xlu0 %6444
  %6448 = vset.pattern.permute.xlu0 0
  %6449 = vperm.xlu0 %6448, %v5507
  %v6450 = vpop.permute.xlu0 %6449
  %6453 = vset.pattern.permute.xlu0 0
  %6454 = vperm.xlu0 %6453, %v5508
  %v6455 = vpop.permute.xlu0 %6454
  %6458 = vset.pattern.permute.xlu0 0
  %6459 = vperm.xlu0 %6458, %v5509
  %v6460 = vpop.permute.xlu0 %6459
  %6463 = vset.pattern.permute.xlu0 0
  %6464 = vperm.xlu0 %6463, %v5510
  %v6465 = vpop.permute.xlu0 %6464
  %6468 = vset.pattern.permute.xlu0 0
  %6469 = vperm.xlu0 %6468, %v5511
  %v6470 = vpop.permute.xlu0 %6469
  %6473 = vset.pattern.permute.xlu0 0
  %6474 = vperm.xlu0 %6473, %v5512
  %v6475 = vpop.permute.xlu0 %6474
  %6478 = vset.pattern.permute.xlu0 0
  %6479 = vperm.xlu0 %6478, %v5513
  %v6480 = vpop.permute.xlu0 %6479
  %6483 = vset.pattern.permute.xlu0 0
  %6484 = vperm.xlu0 %6483, %v5514
  %v6485 = vpop.permute.xlu0 %6484
  %6488 = vset.pattern.permute.xlu0 0
  %6489 = vperm.xlu0 %6488, %v5515
  %v6490 = vpop.permute.xlu0 %6489
  %6493 = vset.pattern.permute.xlu0 0
  %6494 = vperm.xlu0 %6493, %v5516
  %v6495 = vpop.permute.xlu0 %6494
  %6498 = vset.pattern.permute.xlu0 0
  %6499 = vperm.xlu0 %6498, %v5517
  %v6500 = vpop.permute.xlu0 %6499
  %6503 = vset.pattern.permute.xlu0 0
  %6504 = vperm.xlu0 %6503, %v5518
  %v6505 = vpop.permute.xlu0 %6504
  %6508 = vset.pattern.permute.xlu0 0
  %6509 = vperm.xlu0 %6508, %v5519
  %v6510 = vpop.permute.xlu0 %6509
  %6513 = vset.pattern.permute.xlu0 0
  %6514 = vperm.xlu0 %6513, %v5520
  %v6515 = vpop.permute.xlu0 %6514
  %6518 = vset.pattern.permute.xlu0 0
  %6519 = vperm.xlu0 %6518, %v5521
  %v6520 = vpop.permute.xlu0 %6519
  %6523 = vset.pattern.permute.xlu0 0
  %6524 = vperm.xlu0 %6523, %v5522
  %v6525 = vpop.permute.xlu0 %6524
  %6528 = vset.pattern.permute.xlu0 0
  %6529 = vperm.xlu0 %6528, %v5523
  %v6530 = vpop.permute.xlu0 %6529
  %6533 = vset.pattern.permute.xlu0 0
  %6534 = vperm.xlu0 %6533, %v5524
  %v6535 = vpop.permute.xlu0 %6534
  %6538 = vset.pattern.permute.xlu0 0
  %6539 = vperm.xlu0 %6538, %v5525
  %v6540 = vpop.permute.xlu0 %6539
  %6543 = vset.pattern.permute.xlu0 0
  %6544 = vperm.xlu0 %6543, %v5526
  %v6545 = vpop.permute.xlu0 %6544
  %6548 = vset.pattern.permute.xlu0 0
  %6549 = vperm.xlu0 %6548, %v5527
  %v6550 = vpop.permute.xlu0 %6549
  %6553 = vset.pattern.permute.xlu0 0
  %6554 = vperm.xlu0 %6553, %v5528
  %v6555 = vpop.permute.xlu0 %6554
  %6558 = vset.pattern.permute.xlu0 0
  %6559 = vperm.xlu0 %6558, %v5529
  %v6560 = vpop.permute.xlu0 %6559
  %6563 = vset.pattern.permute.xlu0 0
  %6564 = vperm.xlu0 %6563, %v5530
  %v6565 = vpop.permute.xlu0 %6564
  %6568 = vset.pattern.permute.xlu0 0
  %6569 = vperm.xlu0 %6568, %v5531
  %v6570 = vpop.permute.xlu0 %6569
  %6573 = vset.pattern.permute.xlu0 0
  %6574 = vperm.xlu0 %6573, %v5532
  %v6575 = vpop.permute.xlu0 %6574
  %6578 = vset.pattern.permute.xlu0 0
  %6579 = vperm.xlu0 %6578, %v5533
  %v6580 = vpop.permute.xlu0 %6579
  %6583 = vset.pattern.permute.xlu0 0
  %6584 = vperm.xlu0 %6583, %v5534
  %v6585 = vpop.permute.xlu0 %6584
  %6588 = vset.pattern.permute.xlu0 0
  %6589 = vperm.xlu0 %6588, %v5535
  %v6590 = vpop.permute.xlu0 %6589
  %6593 = vset.pattern.permute.xlu0 0
  %6594 = vperm.xlu0 %6593, %v5536
  %v6595 = vpop.permute.xlu0 %6594
  %6598 = vset.pattern.permute.xlu0 0
  %6599 = vperm.xlu0 %6598, %v5537
  %v6600 = vpop.permute.xlu0 %6599
  %6603 = vset.pattern.permute.xlu0 0
  %6604 = vperm.xlu0 %6603, %v5538
  %v6605 = vpop.permute.xlu0 %6604
  %6608 = vset.pattern.permute.xlu0 0
  %6609 = vperm.xlu0 %6608, %v5539
  %v6610 = vpop.permute.xlu0 %6609
  %6613 = vset.pattern.permute.xlu0 0
  %6614 = vperm.xlu0 %6613, %v5540
  %v6615 = vpop.permute.xlu0 %6614
  %6618 = vset.pattern.permute.xlu0 0
  %6619 = vperm.xlu0 %6618, %v5541
  %v6620 = vpop.permute.xlu0 %6619
  %6623 = vset.pattern.permute.xlu0 0
  %6624 = vperm.xlu0 %6623, %v5542
  %v6625 = vpop.permute.xlu0 %6624
  %6628 = vset.pattern.permute.xlu0 0
  %6629 = vperm.xlu0 %6628, %v5543
  %v6630 = vpop.permute.xlu0 %6629
  %6633 = vset.pattern.permute.xlu0 0
  %6634 = vperm.xlu0 %6633, %v5544
  %v6635 = vpop.permute.xlu0 %6634
  %6638 = vset.pattern.permute.xlu0 0
  %6639 = vperm.xlu0 %6638, %v5545
  %v6640 = vpop.permute.xlu0 %6639
  %6643 = vset.pattern.permute.xlu0 0
  %6644 = vperm.xlu0 %6643, %v5546
  %v6645 = vpop.permute.xlu0 %6644
  %6648 = vset.pattern.permute.xlu0 0
  %6649 = vperm.xlu0 %6648, %v5547
  %v6650 = vpop.permute.xlu0 %6649
  %6653 = vset.pattern.permute.xlu0 0
  %6654 = vperm.xlu0 %6653, %v5548
  %v6655 = vpop.permute.xlu0 %6654
  %6658 = vset.pattern.permute.xlu0 0
  %6659 = vperm.xlu0 %6658, %v5549
  %v6660 = vpop.permute.xlu0 %6659
  %6663 = vset.pattern.permute.xlu0 0
  %6664 = vperm.xlu0 %6663, %v5550
  %v6665 = vpop.permute.xlu0 %6664
  %6668 = vset.pattern.permute.xlu0 0
  %6669 = vperm.xlu0 %6668, %v5551
  %v6670 = vpop.permute.xlu0 %6669
  %6673 = vset.pattern.permute.xlu0 0
  %6674 = vperm.xlu0 %6673, %v5552
  %v6675 = vpop.permute.xlu0 %6674
  %6678 = vset.pattern.permute.xlu0 0
  %6679 = vperm.xlu0 %6678, %v5553
  %v6680 = vpop.permute.xlu0 %6679
  %6683 = vset.pattern.permute.xlu0 0
  %6684 = vperm.xlu0 %6683, %v5554
  %v6685 = vpop.permute.xlu0 %6684
  %6688 = vset.pattern.permute.xlu0 0
  %6689 = vperm.xlu0 %6688, %v5555
  %v6690 = vpop.permute.xlu0 %6689
  %6693 = vset.pattern.permute.xlu0 0
  %6694 = vperm.xlu0 %6693, %v5556
  %v6695 = vpop.permute.xlu0 %6694
  %6698 = vset.pattern.permute.xlu0 0
  %6699 = vperm.xlu0 %6698, %v5557
  %v6700 = vpop.permute.xlu0 %6699
  %6703 = vset.pattern.permute.xlu0 0
  %6704 = vperm.xlu0 %6703, %v5558
  %v6705 = vpop.permute.xlu0 %6704
  %6708 = vset.pattern.permute.xlu0 0
  %6709 = vperm.xlu0 %6708, %v5559
  %v6710 = vpop.permute.xlu0 %6709
  %6713 = vset.pattern.permute.xlu0 0
  %6714 = vperm.xlu0 %6713, %v5560
  %v6715 = vpop.permute.xlu0 %6714
  %6718 = vset.pattern.permute.xlu0 0
  %6719 = vperm.xlu0 %6718, %v5561
  %v6720 = vpop.permute.xlu0 %6719
  %6723 = vset.pattern.permute.xlu0 0
  %6724 = vperm.xlu0 %6723, %v5562
  %v6725 = vpop.permute.xlu0 %6724
  %6728 = vset.pattern.permute.xlu0 0
  %6729 = vperm.xlu0 %6728, %v5563
  %v6730 = vpop.permute.xlu0 %6729
  %6733 = vset.pattern.permute.xlu0 0
  %6734 = vperm.xlu0 %6733, %v5564
  %v6735 = vpop.permute.xlu0 %6734
  %6738 = vset.pattern.permute.xlu0 0
  %6739 = vperm.xlu0 %6738, %v5565
  %v6740 = vpop.permute.xlu0 %6739
  %6743 = vset.pattern.permute.xlu0 0
  %6744 = vperm.xlu0 %6743, %v5566
  %v6745 = vpop.permute.xlu0 %6744
  %6748 = vset.pattern.permute.xlu0 0
  %6749 = vperm.xlu0 %6748, %v5567
  %v6750 = vpop.permute.xlu0 %6749
  %6753 = vset.pattern.permute.xlu0 0
  %6754 = vperm.xlu0 %6753, %v5568
  %v6755 = vpop.permute.xlu0 %6754
  %6758 = vset.pattern.permute.xlu0 0
  %6759 = vperm.xlu0 %6758, %v5569
  %v6760 = vpop.permute.xlu0 %6759
  %6763 = vset.pattern.permute.xlu0 0
  %6764 = vperm.xlu0 %6763, %v5570
  %v6765 = vpop.permute.xlu0 %6764
  %6768 = vset.pattern.permute.xlu0 0
  %6769 = vperm.xlu0 %6768, %v5571
  %v6770 = vpop.permute.xlu0 %6769
  %6773 = vset.pattern.permute.xlu0 0
  %6774 = vperm.xlu0 %6773, %v5572
  %v6775 = vpop.permute.xlu0 %6774
  %6778 = vset.pattern.permute.xlu0 0
  %6779 = vperm.xlu0 %6778, %v5573
  %v6780 = vpop.permute.xlu0 %6779
  %6783 = vset.pattern.permute.xlu0 0
  %6784 = vperm.xlu0 %6783, %v5574
  %v6785 = vpop.permute.xlu0 %6784
  %6788 = vset.pattern.permute.xlu0 0
  %6789 = vperm.xlu0 %6788, %v5575
  %v6790 = vpop.permute.xlu0 %6789
  %6793 = vset.pattern.permute.xlu0 0
  %6794 = vperm.xlu0 %6793, %v5576
  %v6795 = vpop.permute.xlu0 %6794
  %6798 = vset.pattern.permute.xlu0 0
  %6799 = vperm.xlu0 %6798, %v5577
  %v6800 = vpop.permute.xlu0 %6799
  %6803 = vset.pattern.permute.xlu0 0
  %6804 = vperm.xlu0 %6803, %v5578
  %v6805 = vpop.permute.xlu0 %6804
  %6808 = vset.pattern.permute.xlu0 0
  %6809 = vperm.xlu0 %6808, %v5579
  %v6810 = vpop.permute.xlu0 %6809
  %6813 = vset.pattern.permute.xlu0 0
  %6814 = vperm.xlu0 %6813, %v5580
  %v6815 = vpop.permute.xlu0 %6814
  %6818 = vset.pattern.permute.xlu0 0
  %6819 = vperm.xlu0 %6818, %v5581
  %v6820 = vpop.permute.xlu0 %6819
  %6823 = vset.pattern.permute.xlu0 0
  %6824 = vperm.xlu0 %6823, %v5582
  %v6825 = vpop.permute.xlu0 %6824
  %6828 = vset.pattern.permute.xlu0 0
  %6829 = vperm.xlu0 %6828, %v5583
  %v6830 = vpop.permute.xlu0 %6829
  %6833 = vset.pattern.permute.xlu0 0
  %6834 = vperm.xlu0 %6833, %v5584
  %v6835 = vpop.permute.xlu0 %6834
  %6838 = vset.pattern.permute.xlu0 0
  %6839 = vperm.xlu0 %6838, %v5585
  %v6840 = vpop.permute.xlu0 %6839
  %6843 = vset.pattern.permute.xlu0 0
  %6844 = vperm.xlu0 %6843, %v5586
  %v6845 = vpop.permute.xlu0 %6844
  %6848 = vset.pattern.permute.xlu0 0
  %6849 = vperm.xlu0 %6848, %v5587
  %v6850 = vpop.permute.xlu0 %6849
  %6853 = vset.pattern.permute.xlu0 0
  %6854 = vperm.xlu0 %6853, %v5588
  %v6855 = vpop.permute.xlu0 %6854
  %6858 = vset.pattern.permute.xlu0 0
  %6859 = vperm.xlu0 %6858, %v5589
  %v6860 = vpop.permute.xlu0 %6859
  %6863 = vset.pattern.permute.xlu0 0
  %6864 = vperm.xlu0 %6863, %v5590
  %v6865 = vpop.permute.xlu0 %6864
  %6868 = vset.pattern.permute.xlu0 0
  %6869 = vperm.xlu0 %6868, %v5591
  %v6870 = vpop.permute.xlu0 %6869
  %6873 = vset.pattern.permute.xlu0 0
  %6874 = vperm.xlu0 %6873, %v5592
  %v6875 = vpop.permute.xlu0 %6874
  %6878 = vset.pattern.permute.xlu0 0
  %6879 = vperm.xlu0 %6878, %v5593
  %v6880 = vpop.permute.xlu0 %6879
  %6883 = vset.pattern.permute.xlu0 0
  %6884 = vperm.xlu0 %6883, %v5594
  %v6885 = vpop.permute.xlu0 %6884
  %6888 = vset.pattern.permute.xlu0 0
  %6889 = vperm.xlu0 %6888, %v5595
  %v6890 = vpop.permute.xlu0 %6889
  %v6892 = vadd.f32 %v6136, %v6355
  %v6893 = vadd.f32 %v6137, %v6355
  %v6894 = vadd.f32 %v6138, %v6360
  %v6895 = vadd.f32 %v6139, %v6360
  %v6896 = vadd.f32 %v6140, %v6365
  %v6897 = vadd.f32 %v6141, %v6365
  %v6898 = vadd.f32 %v6142, %v6370
  %v6899 = vadd.f32 %v6143, %v6370
  %v6900 = vadd.f32 %v6144, %v6375
  %v6901 = vadd.f32 %v6145, %v6375
  %v6902 = vadd.f32 %v6146, %v6380
  %v6903 = vadd.f32 %v6147, %v6380
  %v6904 = vadd.f32 %v6148, %v6385
  %v6905 = vadd.f32 %v6149, %v6385
  %v6906 = vadd.f32 %v6150, %v6390
  %v6907 = vadd.f32 %v6151, %v6390
  %v6908 = vadd.f32 %v6152, %v6395
  %v6909 = vadd.f32 %v6153, %v6395
  %v6910 = vadd.f32 %v6154, %v6400
  %v6911 = vadd.f32 %v6155, %v6400
  %v6912 = vadd.f32 %v6156, %v6405
  %v6913 = vadd.f32 %v6157, %v6405
  %v6914 = vadd.f32 %v6158, %v6410
  %v6915 = vadd.f32 %v6159, %v6410
  %v6916 = vadd.f32 %v6160, %v6415
  %v6917 = vadd.f32 %v6161, %v6415
  %v6918 = vadd.f32 %v6162, %v6420
  %v6919 = vadd.f32 %v6163, %v6420
  %v6920 = vadd.f32 %v6164, %v6425
  %v6921 = vadd.f32 %v6165, %v6425
  %v6922 = vadd.f32 %v6166, %v6430
  %v6923 = vadd.f32 %v6167, %v6430
  %v6924 = vadd.f32 %v6168, %v6435
  %v6925 = vadd.f32 %v6169, %v6435
  %v6926 = vadd.f32 %v6170, %v6440
  %v6927 = vadd.f32 %v6171, %v6440
  %v6928 = vadd.f32 %v6172, %v6445
  %v6929 = vadd.f32 %v6173, %v6445
  %v6930 = vadd.f32 %v6174, %v6450
  %v6931 = vadd.f32 %v6175, %v6450
  %v6932 = vadd.f32 %v6176, %v6455
  %v6933 = vadd.f32 %v6177, %v6455
  %v6934 = vadd.f32 %v6178, %v6460
  %v6935 = vadd.f32 %v6179, %v6460
  %v6936 = vadd.f32 %v6180, %v6465
  %v6937 = vadd.f32 %v6181, %v6465
  %v6938 = vadd.f32 %v6182, %v6470
  %v6939 = vadd.f32 %v6183, %v6470
  %v6940 = vadd.f32 %v6184, %v6475
  %v6941 = vadd.f32 %v6185, %v6475
  %v6942 = vadd.f32 %v6186, %v6480
  %v6943 = vadd.f32 %v6187, %v6480
  %v6944 = vadd.f32 %v6188, %v6485
  %v6945 = vadd.f32 %v6189, %v6485
  %v6946 = vadd.f32 %v6190, %v6490
  %v6947 = vadd.f32 %v6191, %v6490
  %v6948 = vadd.f32 %v6192, %v6495
  %v6949 = vadd.f32 %v6193, %v6495
  %v6950 = vadd.f32 %v6194, %v6500
  %v6951 = vadd.f32 %v6195, %v6500
  %v6952 = vadd.f32 %v6196, %v6505
  %v6953 = vadd.f32 %v6197, %v6505
  %v6954 = vadd.f32 %v6198, %v6510
  %v6955 = vadd.f32 %v6199, %v6510
  %v6956 = vadd.f32 %v6200, %v6515
  %v6957 = vadd.f32 %v6201, %v6515
  %v6958 = vadd.f32 %v6202, %v6520
  %v6959 = vadd.f32 %v6203, %v6520
  %v6960 = vadd.f32 %v6204, %v6525
  %v6961 = vadd.f32 %v6205, %v6525
  %v6962 = vadd.f32 %v6206, %v6530
  %v6963 = vadd.f32 %v6207, %v6530
  %v6964 = vadd.f32 %v6208, %v6535
  %v6965 = vadd.f32 %v6209, %v6535
  %v6966 = vadd.f32 %v6210, %v6540
  %v6967 = vadd.f32 %v6211, %v6540
  %v6968 = vadd.f32 %v6212, %v6545
  %v6969 = vadd.f32 %v6213, %v6545
  %v6970 = vadd.f32 %v6214, %v6550
  %v6971 = vadd.f32 %v6215, %v6550
  %v6972 = vadd.f32 %v6216, %v6555
  %v6973 = vadd.f32 %v6217, %v6555
  %v6974 = vadd.f32 %v6218, %v6560
  %v6975 = vadd.f32 %v6219, %v6560
  %v6976 = vadd.f32 %v6220, %v6565
  %v6977 = vadd.f32 %v6221, %v6565
  %v6978 = vadd.f32 %v6222, %v6570
  %v6979 = vadd.f32 %v6223, %v6570
  %v6980 = vadd.f32 %v6224, %v6575
  %v6981 = vadd.f32 %v6225, %v6575
  %v6982 = vadd.f32 %v6226, %v6580
  %v6983 = vadd.f32 %v6227, %v6580
  %v6984 = vadd.f32 %v6228, %v6585
  %v6985 = vadd.f32 %v6229, %v6585
  %v6986 = vadd.f32 %v6230, %v6590
  %v6987 = vadd.f32 %v6231, %v6590
  %v6988 = vadd.f32 %v6232, %v6595
  %v6989 = vadd.f32 %v6233, %v6595
  %v6990 = vadd.f32 %v6234, %v6600
  %v6991 = vadd.f32 %v6235, %v6600
  %v6992 = vadd.f32 %v6236, %v6605
  %v6993 = vadd.f32 %v6237, %v6605
  %v6994 = vadd.f32 %v6238, %v6610
  %v6995 = vadd.f32 %v6239, %v6610
  %v6996 = vadd.f32 %v6240, %v6615
  %v6997 = vadd.f32 %v6241, %v6615
  %v6998 = vadd.f32 %v6242, %v6620
  %v6999 = vadd.f32 %v6243, %v6620
  %v7000 = vadd.f32 %v6244, %v6625
  %v7001 = vadd.f32 %v6245, %v6625
  %v7002 = vadd.f32 %v6246, %v6630
  %v7003 = vadd.f32 %v6247, %v6630
  %v7004 = vadd.f32 %v6248, %v6635
  %v7005 = vadd.f32 %v6249, %v6635
  %v7006 = vadd.f32 %v6250, %v6640
  %v7007 = vadd.f32 %v6251, %v6640
  %v7008 = vadd.f32 %v6252, %v6645
  %v7009 = vadd.f32 %v6253, %v6645
  %v7010 = vadd.f32 %v6254, %v6650
  %v7011 = vadd.f32 %v6255, %v6650
  %v7012 = vadd.f32 %v6256, %v6655
  %v7013 = vadd.f32 %v6257, %v6655
  %v7014 = vadd.f32 %v6258, %v6660
  %v7015 = vadd.f32 %v6259, %v6660
  %v7016 = vadd.f32 %v6260, %v6665
  %v7017 = vadd.f32 %v6261, %v6665
  %v7018 = vadd.f32 %v6262, %v6670
  %v7019 = vadd.f32 %v6263, %v6670
  %v7020 = vadd.f32 %v6264, %v6675
  %v7021 = vadd.f32 %v6265, %v6675
  %v7022 = vadd.f32 %v6266, %v6680
  %v7023 = vadd.f32 %v6267, %v6680
  %v7024 = vadd.f32 %v6268, %v6685
  %v7025 = vadd.f32 %v6269, %v6685
  %v7026 = vadd.f32 %v6270, %v6690
  %v7027 = vadd.f32 %v6271, %v6690
  %v7028 = vadd.f32 %v6272, %v6695
  %v7029 = vadd.f32 %v6273, %v6695
  %v7030 = vadd.f32 %v6274, %v6700
  %v7031 = vadd.f32 %v6275, %v6700
  %v7032 = vadd.f32 %v6276, %v6705
  %v7033 = vadd.f32 %v6277, %v6705
  %v7034 = vadd.f32 %v6278, %v6710
  %v7035 = vadd.f32 %v6279, %v6710
  %v7036 = vadd.f32 %v6280, %v6715
  %v7037 = vadd.f32 %v6281, %v6715
  %v7038 = vadd.f32 %v6282, %v6720
  %v7039 = vadd.f32 %v6283, %v6720
  %v7040 = vadd.f32 %v6284, %v6725
  %v7041 = vadd.f32 %v6285, %v6725
  %v7042 = vadd.f32 %v6286, %v6730
  %v7043 = vadd.f32 %v6287, %v6730
  %v7044 = vadd.f32 %v6288, %v6735
  %v7045 = vadd.f32 %v6289, %v6735
  %v7046 = vadd.f32 %v6290, %v6740
  %v7047 = vadd.f32 %v6291, %v6740
  %v7048 = vadd.f32 %v6292, %v6745
  %v7049 = vadd.f32 %v6293, %v6745
  %v7050 = vadd.f32 %v6294, %v6750
  %v7051 = vadd.f32 %v6295, %v6750
  %v7052 = vadd.f32 %v6296, %v6755
  %v7053 = vadd.f32 %v6297, %v6755
  %v7054 = vadd.f32 %v6298, %v6760
  %v7055 = vadd.f32 %v6299, %v6760
  %v7056 = vadd.f32 %v6300, %v6765
  %v7057 = vadd.f32 %v6301, %v6765
  %v7058 = vadd.f32 %v6302, %v6770
  %v7059 = vadd.f32 %v6303, %v6770
  %v7060 = vadd.f32 %v6304, %v6775
  %v7061 = vadd.f32 %v6305, %v6775
  %v7062 = vadd.f32 %v6306, %v6780
  %v7063 = vadd.f32 %v6307, %v6780
  %v7064 = vadd.f32 %v6308, %v6785
  %v7065 = vadd.f32 %v6309, %v6785
  %v7066 = vadd.f32 %v6310, %v6790
  %v7067 = vadd.f32 %v6311, %v6790
  %v7068 = vadd.f32 %v6312, %v6795
  %v7069 = vadd.f32 %v6313, %v6795
  %v7070 = vadd.f32 %v6314, %v6800
  %v7071 = vadd.f32 %v6315, %v6800
  %v7072 = vadd.f32 %v6316, %v6805
  %v7073 = vadd.f32 %v6317, %v6805
  %v7074 = vadd.f32 %v6318, %v6810
  %v7075 = vadd.f32 %v6319, %v6810
  %v7076 = vadd.f32 %v6320, %v6815
  %v7077 = vadd.f32 %v6321, %v6815
  %v7078 = vadd.f32 %v6322, %v6820
  %v7079 = vadd.f32 %v6323, %v6820
  %v7080 = vadd.f32 %v6324, %v6825
  %v7081 = vadd.f32 %v6325, %v6825
  %v7082 = vadd.f32 %v6326, %v6830
  %v7083 = vadd.f32 %v6327, %v6830
  %v7084 = vadd.f32 %v6328, %v6835
  %v7085 = vadd.f32 %v6329, %v6835
  %v7086 = vadd.f32 %v6330, %v6840
  %v7087 = vadd.f32 %v6331, %v6840
  %v7088 = vadd.f32 %v6332, %v6845
  %v7089 = vadd.f32 %v6333, %v6845
  %v7090 = vadd.f32 %v6334, %v6850
  %v7091 = vadd.f32 %v6335, %v6850
  %v7092 = vadd.f32 %v6336, %v6855
  %v7093 = vadd.f32 %v6337, %v6855
  %v7094 = vadd.f32 %v6338, %v6860
  %v7095 = vadd.f32 %v6339, %v6860
  %v7096 = vadd.f32 %v6340, %v6865
  %v7097 = vadd.f32 %v6341, %v6865
  %v7098 = vadd.f32 %v6342, %v6870
  %v7099 = vadd.f32 %v6343, %v6870
  %v7100 = vadd.f32 %v6344, %v6875
  %v7101 = vadd.f32 %v6345, %v6875
  %v7102 = vadd.f32 %v6346, %v6880
  %v7103 = vadd.f32 %v6347, %v6880
  %v7104 = vadd.f32 %v6348, %v6885
  %v7105 = vadd.f32 %v6349, %v6885
  %v7106 = vadd.f32 %v6350, %v6890
  %v7107 = vadd.f32 %v6351, %v6890
  %7108 = vst [vmem:[%s5] sm:$0xff] %v6892
  %7109 = vst.msk [vmem:[%s5 + $0x8] sm:$0xff] %vm2033, %v6893
  %7110 = vst [vmem:[%s5 + $0x10] sm:$0xff] %v6894
  %7111 = vst.msk [vmem:[%s5 + $0x18] sm:$0xff] %vm2033, %v6895
  %7112 = vst [vmem:[%s5 + $0x20] sm:$0xff] %v6896
  %7113 = vst.msk [vmem:[%s5 + $0x28] sm:$0xff] %vm2033, %v6897
  %7114 = vst [vmem:[%s5 + $0x30] sm:$0xff] %v6898
  %7115 = vst.msk [vmem:[%s5 + $0x38] sm:$0xff] %vm2033, %v6899
  %7116 = vst [vmem:[%s5 + $0x40] sm:$0xff] %v6900
  %7117 = vst.msk [vmem:[%s5 + $0x48] sm:$0xff] %vm2033, %v6901
  %7118 = vst [vmem:[%s5 + $0x50] sm:$0xff] %v6902
  %7119 = vst.msk [vmem:[%s5 + $0x58] sm:$0xff] %vm2033, %v6903
  %7120 = vst [vmem:[%s5 + $0x60] sm:$0xff] %v6904
  %7121 = vst.msk [vmem:[%s5 + $0x68] sm:$0xff] %vm2033, %v6905
  %7122 = vst [vmem:[%s5 + $0x70] sm:$0xff] %v6906
  %7123 = vst.msk [vmem:[%s5 + $0x78] sm:$0xff] %vm2033, %v6907
  %7124 = vst [vmem:[%s5 + $0x80] sm:$0xff] %v6908
  %7125 = vst.msk [vmem:[%s5 + $0x88] sm:$0xff] %vm2033, %v6909
  %7126 = vst [vmem:[%s5 + $0x90] sm:$0xff] %v6910
  %7127 = vst.msk [vmem:[%s5 + $0x98] sm:$0xff] %vm2033, %v6911
  %7128 = vst [vmem:[%s5 + $0xa0] sm:$0xff] %v6912
  %7129 = vst.msk [vmem:[%s5 + $0xa8] sm:$0xff] %vm2033, %v6913
  %7130 = vst [vmem:[%s5 + $0xb0] sm:$0xff] %v6914
  %7131 = vst.msk [vmem:[%s5 + $0xb8] sm:$0xff] %vm2033, %v6915
  %7132 = vst [vmem:[%s5 + $0xc0] sm:$0xff] %v6916
  %7133 = vst.msk [vmem:[%s5 + $0xc8] sm:$0xff] %vm2033, %v6917
  %7134 = vst [vmem:[%s5 + $0xd0] sm:$0xff] %v6918
  %7135 = vst.msk [vmem:[%s5 + $0xd8] sm:$0xff] %vm2033, %v6919
  %7136 = vst [vmem:[%s5 + $0xe0] sm:$0xff] %v6920
  %7137 = vst.msk [vmem:[%s5 + $0xe8] sm:$0xff] %vm2033, %v6921
  %7138 = vst [vmem:[%s5 + $0xf0] sm:$0xff] %v6922
  %7139 = vst.msk [vmem:[%s5 + $0xf8] sm:$0xff] %vm2033, %v6923
  %7140 = vst [vmem:[%s5 + $0x100] sm:$0xff] %v6924
  %7141 = vst.msk [vmem:[%s5 + $0x108] sm:$0xff] %vm2033, %v6925
  %7142 = vst [vmem:[%s5 + $0x110] sm:$0xff] %v6926
  %7143 = vst.msk [vmem:[%s5 + $0x118] sm:$0xff] %vm2033, %v6927
  %7144 = vst [vmem:[%s5 + $0x120] sm:$0xff] %v6928
  %7145 = vst.msk [vmem:[%s5 + $0x128] sm:$0xff] %vm2033, %v6929
  %7146 = vst [vmem:[%s5 + $0x130] sm:$0xff] %v6930
  %7147 = vst.msk [vmem:[%s5 + $0x138] sm:$0xff] %vm2033, %v6931
  %7148 = vst [vmem:[%s5 + $0x140] sm:$0xff] %v6932
  %7149 = vst.msk [vmem:[%s5 + $0x148] sm:$0xff] %vm2033, %v6933
  %7150 = vst [vmem:[%s5 + $0x150] sm:$0xff] %v6934
  %7151 = vst.msk [vmem:[%s5 + $0x158] sm:$0xff] %vm2033, %v6935
  %7152 = vst [vmem:[%s5 + $0x160] sm:$0xff] %v6936
  %7153 = vst.msk [vmem:[%s5 + $0x168] sm:$0xff] %vm2033, %v6937
  %7154 = vst [vmem:[%s5 + $0x170] sm:$0xff] %v6938
  %7155 = vst.msk [vmem:[%s5 + $0x178] sm:$0xff] %vm2033, %v6939
  %7156 = vst [vmem:[%s5 + $0x180] sm:$0xff] %v6940
  %7157 = vst.msk [vmem:[%s5 + $0x188] sm:$0xff] %vm2033, %v6941
  %7158 = vst [vmem:[%s5 + $0x190] sm:$0xff] %v6942
  %7159 = vst.msk [vmem:[%s5 + $0x198] sm:$0xff] %vm2033, %v6943
  %7160 = vst [vmem:[%s5 + $0x1a0] sm:$0xff] %v6944
  %7161 = vst.msk [vmem:[%s5 + $0x1a8] sm:$0xff] %vm2033, %v6945
  %7162 = vst [vmem:[%s5 + $0x1b0] sm:$0xff] %v6946
  %7163 = vst.msk [vmem:[%s5 + $0x1b8] sm:$0xff] %vm2033, %v6947
  %7164 = vst [vmem:[%s5 + $0x1c0] sm:$0xff] %v6948
  %7165 = vst.msk [vmem:[%s5 + $0x1c8] sm:$0xff] %vm2033, %v6949
  %7166 = vst [vmem:[%s5 + $0x1d0] sm:$0xff] %v6950
  %7167 = vst.msk [vmem:[%s5 + $0x1d8] sm:$0xff] %vm2033, %v6951
  %7168 = vst [vmem:[%s5 + $0x1e0] sm:$0xff] %v6952
  %7169 = vst.msk [vmem:[%s5 + $0x1e8] sm:$0xff] %vm2033, %v6953
  %7170 = vst [vmem:[%s5 + $0x1f0] sm:$0xff] %v6954
  %7171 = vst.msk [vmem:[%s5 + $0x1f8] sm:$0xff] %vm2033, %v6955
  %7172 = vst [vmem:[%s5 + $0x200] sm:$0xff] %v6956
  %7173 = vst.msk [vmem:[%s5 + $0x208] sm:$0xff] %vm2033, %v6957
  %7174 = vst [vmem:[%s5 + $0x210] sm:$0xff] %v6958
  %7175 = vst.msk [vmem:[%s5 + $0x218] sm:$0xff] %vm2033, %v6959
  %7176 = vst [vmem:[%s5 + $0x220] sm:$0xff] %v6960
  %7177 = vst.msk [vmem:[%s5 + $0x228] sm:$0xff] %vm2033, %v6961
  %7178 = vst [vmem:[%s5 + $0x230] sm:$0xff] %v6962
  %7179 = vst.msk [vmem:[%s5 + $0x238] sm:$0xff] %vm2033, %v6963
  %7180 = vst [vmem:[%s5 + $0x240] sm:$0xff] %v6964
  %7181 = vst.msk [vmem:[%s5 + $0x248] sm:$0xff] %vm2033, %v6965
  %7182 = vst [vmem:[%s5 + $0x250] sm:$0xff] %v6966
  %7183 = vst.msk [vmem:[%s5 + $0x258] sm:$0xff] %vm2033, %v6967
  %7184 = vst [vmem:[%s5 + $0x260] sm:$0xff] %v6968
  %7185 = vst.msk [vmem:[%s5 + $0x268] sm:$0xff] %vm2033, %v6969
  %7186 = vst [vmem:[%s5 + $0x270] sm:$0xff] %v6970
  %7187 = vst.msk [vmem:[%s5 + $0x278] sm:$0xff] %vm2033, %v6971
  %7188 = vst [vmem:[%s5 + $0x280] sm:$0xff] %v6972
  %7189 = vst.msk [vmem:[%s5 + $0x288] sm:$0xff] %vm2033, %v6973
  %7190 = vst [vmem:[%s5 + $0x290] sm:$0xff] %v6974
  %7191 = vst.msk [vmem:[%s5 + $0x298] sm:$0xff] %vm2033, %v6975
  %7192 = vst [vmem:[%s5 + $0x2a0] sm:$0xff] %v6976
  %7193 = vst.msk [vmem:[%s5 + $0x2a8] sm:$0xff] %vm2033, %v6977
  %7194 = vst [vmem:[%s5 + $0x2b0] sm:$0xff] %v6978
  %7195 = vst.msk [vmem:[%s5 + $0x2b8] sm:$0xff] %vm2033, %v6979
  %7196 = vst [vmem:[%s5 + $0x2c0] sm:$0xff] %v6980
  %7197 = vst.msk [vmem:[%s5 + $0x2c8] sm:$0xff] %vm2033, %v6981
  %7198 = vst [vmem:[%s5 + $0x2d0] sm:$0xff] %v6982
  %7199 = vst.msk [vmem:[%s5 + $0x2d8] sm:$0xff] %vm2033, %v6983
  %7200 = vst [vmem:[%s5 + $0x2e0] sm:$0xff] %v6984
  %7201 = vst.msk [vmem:[%s5 + $0x2e8] sm:$0xff] %vm2033, %v6985
  %7202 = vst [vmem:[%s5 + $0x2f0] sm:$0xff] %v6986
  %7203 = vst.msk [vmem:[%s5 + $0x2f8] sm:$0xff] %vm2033, %v6987
  %7204 = vst [vmem:[%s5 + $0x300] sm:$0xff] %v6988
  %7205 = vst.msk [vmem:[%s5 + $0x308] sm:$0xff] %vm2033, %v6989
  %7206 = vst [vmem:[%s5 + $0x310] sm:$0xff] %v6990
  %7207 = vst.msk [vmem:[%s5 + $0x318] sm:$0xff] %vm2033, %v6991
  %7208 = vst [vmem:[%s5 + $0x320] sm:$0xff] %v6992
  %7209 = vst.msk [vmem:[%s5 + $0x328] sm:$0xff] %vm2033, %v6993
  %7210 = vst [vmem:[%s5 + $0x330] sm:$0xff] %v6994
  %7211 = vst.msk [vmem:[%s5 + $0x338] sm:$0xff] %vm2033, %v6995
  %7212 = vst [vmem:[%s5 + $0x340] sm:$0xff] %v6996
  %7213 = vst.msk [vmem:[%s5 + $0x348] sm:$0xff] %vm2033, %v6997
  %7214 = vst [vmem:[%s5 + $0x350] sm:$0xff] %v6998
  %7215 = vst.msk [vmem:[%s5 + $0x358] sm:$0xff] %vm2033, %v6999
  %7216 = vst [vmem:[%s5 + $0x360] sm:$0xff] %v7000
  %7217 = vst.msk [vmem:[%s5 + $0x368] sm:$0xff] %vm2033, %v7001
  %7218 = vst [vmem:[%s5 + $0x370] sm:$0xff] %v7002
  %7219 = vst.msk [vmem:[%s5 + $0x378] sm:$0xff] %vm2033, %v7003
  %7220 = vst [vmem:[%s5 + $0x380] sm:$0xff] %v7004
  %7221 = vst.msk [vmem:[%s5 + $0x388] sm:$0xff] %vm2033, %v7005
  %7222 = vst [vmem:[%s5 + $0x390] sm:$0xff] %v7006
  %7223 = vst.msk [vmem:[%s5 + $0x398] sm:$0xff] %vm2033, %v7007
  %7224 = vst [vmem:[%s5 + $0x3a0] sm:$0xff] %v7008
  %7225 = vst.msk [vmem:[%s5 + $0x3a8] sm:$0xff] %vm2033, %v7009
  %7226 = vst [vmem:[%s5 + $0x3b0] sm:$0xff] %v7010
  %7227 = vst.msk [vmem:[%s5 + $0x3b8] sm:$0xff] %vm2033, %v7011
  %7228 = vst [vmem:[%s5 + $0x3c0] sm:$0xff] %v7012
  %7229 = vst.msk [vmem:[%s5 + $0x3c8] sm:$0xff] %vm2033, %v7013
  %7230 = vst [vmem:[%s5 + $0x3d0] sm:$0xff] %v7014
  %7231 = vst.msk [vmem:[%s5 + $0x3d8] sm:$0xff] %vm2033, %v7015
  %7232 = vst [vmem:[%s5 + $0x3e0] sm:$0xff] %v7016
  %7233 = vst.msk [vmem:[%s5 + $0x3e8] sm:$0xff] %vm2033, %v7017
  %7234 = vst [vmem:[%s5 + $0x3f0] sm:$0xff] %v7018
  %7235 = vst.msk [vmem:[%s5 + $0x3f8] sm:$0xff] %vm2033, %v7019
  %7236 = vst [vmem:[%s5 + $0x400] sm:$0xff] %v7020
  %7237 = vst.msk [vmem:[%s5 + $0x408] sm:$0xff] %vm2033, %v7021
  %7238 = vst [vmem:[%s5 + $0x410] sm:$0xff] %v7022
  %7239 = vst.msk [vmem:[%s5 + $0x418] sm:$0xff] %vm2033, %v7023
  %7240 = vst [vmem:[%s5 + $0x420] sm:$0xff] %v7024
  %7241 = vst.msk [vmem:[%s5 + $0x428] sm:$0xff] %vm2033, %v7025
  %7242 = vst [vmem:[%s5 + $0x430] sm:$0xff] %v7026
  %7243 = vst.msk [vmem:[%s5 + $0x438] sm:$0xff] %vm2033, %v7027
  %7244 = vst [vmem:[%s5 + $0x440] sm:$0xff] %v7028
  %7245 = vst.msk [vmem:[%s5 + $0x448] sm:$0xff] %vm2033, %v7029
  %7246 = vst [vmem:[%s5 + $0x450] sm:$0xff] %v7030
  %7247 = vst.msk [vmem:[%s5 + $0x458] sm:$0xff] %vm2033, %v7031
  %7248 = vst [vmem:[%s5 + $0x460] sm:$0xff] %v7032
  %7249 = vst.msk [vmem:[%s5 + $0x468] sm:$0xff] %vm2033, %v7033
  %7250 = vst [vmem:[%s5 + $0x470] sm:$0xff] %v7034
  %7251 = vst.msk [vmem:[%s5 + $0x478] sm:$0xff] %vm2033, %v7035
  %7252 = vst [vmem:[%s5 + $0x480] sm:$0xff] %v7036
  %7253 = vst.msk [vmem:[%s5 + $0x488] sm:$0xff] %vm2033, %v7037
  %7254 = vst [vmem:[%s5 + $0x490] sm:$0xff] %v7038
  %7255 = vst.msk [vmem:[%s5 + $0x498] sm:$0xff] %vm2033, %v7039
  %7256 = vst [vmem:[%s5 + $0x4a0] sm:$0xff] %v7040
  %7257 = vst.msk [vmem:[%s5 + $0x4a8] sm:$0xff] %vm2033, %v7041
  %7258 = vst [vmem:[%s5 + $0x4b0] sm:$0xff] %v7042
  %7259 = vst.msk [vmem:[%s5 + $0x4b8] sm:$0xff] %vm2033, %v7043
  %7260 = vst [vmem:[%s5 + $0x4c0] sm:$0xff] %v7044
  %7261 = vst.msk [vmem:[%s5 + $0x4c8] sm:$0xff] %vm2033, %v7045
  %7262 = vst [vmem:[%s5 + $0x4d0] sm:$0xff] %v7046
  %7263 = vst.msk [vmem:[%s5 + $0x4d8] sm:$0xff] %vm2033, %v7047
  %7264 = vst [vmem:[%s5 + $0x4e0] sm:$0xff] %v7048
  %7265 = vst.msk [vmem:[%s5 + $0x4e8] sm:$0xff] %vm2033, %v7049
  %7266 = vst [vmem:[%s5 + $0x4f0] sm:$0xff] %v7050
  %7267 = vst.msk [vmem:[%s5 + $0x4f8] sm:$0xff] %vm2033, %v7051
  %7268 = vst [vmem:[%s5 + $0x500] sm:$0xff] %v7052
  %7269 = vst.msk [vmem:[%s5 + $0x508] sm:$0xff] %vm2033, %v7053
  %7270 = vst [vmem:[%s5 + $0x510] sm:$0xff] %v7054
  %7271 = vst.msk [vmem:[%s5 + $0x518] sm:$0xff] %vm2033, %v7055
  %7272 = vst [vmem:[%s5 + $0x520] sm:$0xff] %v7056
  %7273 = vst.msk [vmem:[%s5 + $0x528] sm:$0xff] %vm2033, %v7057
  %7274 = vst [vmem:[%s5 + $0x530] sm:$0xff] %v7058
  %7275 = vst.msk [vmem:[%s5 + $0x538] sm:$0xff] %vm2033, %v7059
  %7276 = vst [vmem:[%s5 + $0x540] sm:$0xff] %v7060
  %7277 = vst.msk [vmem:[%s5 + $0x548] sm:$0xff] %vm2033, %v7061
  %7278 = vst [vmem:[%s5 + $0x550] sm:$0xff] %v7062
  %7279 = vst.msk [vmem:[%s5 + $0x558] sm:$0xff] %vm2033, %v7063
  %7280 = vst [vmem:[%s5 + $0x560] sm:$0xff] %v7064
  %7281 = vst.msk [vmem:[%s5 + $0x568] sm:$0xff] %vm2033, %v7065
  %7282 = vst [vmem:[%s5 + $0x570] sm:$0xff] %v7066
  %7283 = vst.msk [vmem:[%s5 + $0x578] sm:$0xff] %vm2033, %v7067
  %7284 = vst [vmem:[%s5 + $0x580] sm:$0xff] %v7068
  %7285 = vst.msk [vmem:[%s5 + $0x588] sm:$0xff] %vm2033, %v7069
  %7286 = vst [vmem:[%s5 + $0x590] sm:$0xff] %v7070
  %7287 = vst.msk [vmem:[%s5 + $0x598] sm:$0xff] %vm2033, %v7071
  %7288 = vst [vmem:[%s5 + $0x5a0] sm:$0xff] %v7072
  %7289 = vst.msk [vmem:[%s5 + $0x5a8] sm:$0xff] %vm2033, %v7073
  %7290 = vst [vmem:[%s5 + $0x5b0] sm:$0xff] %v7074
  %7291 = vst.msk [vmem:[%s5 + $0x5b8] sm:$0xff] %vm2033, %v7075
  %7292 = vst [vmem:[%s5 + $0x5c0] sm:$0xff] %v7076
  %7293 = vst.msk [vmem:[%s5 + $0x5c8] sm:$0xff] %vm2033, %v7077
  %7294 = vst [vmem:[%s5 + $0x5d0] sm:$0xff] %v7078
  %7295 = vst.msk [vmem:[%s5 + $0x5d8] sm:$0xff] %vm2033, %v7079
  %7296 = vst [vmem:[%s5 + $0x5e0] sm:$0xff] %v7080
  %7297 = vst.msk [vmem:[%s5 + $0x5e8] sm:$0xff] %vm2033, %v7081
  %7298 = vst [vmem:[%s5 + $0x5f0] sm:$0xff] %v7082
  %7299 = vst.msk [vmem:[%s5 + $0x5f8] sm:$0xff] %vm2033, %v7083
  %7300 = vst [vmem:[%s5 + $0x600] sm:$0xff] %v7084
  %7301 = vst.msk [vmem:[%s5 + $0x608] sm:$0xff] %vm2033, %v7085
  %7302 = vst [vmem:[%s5 + $0x610] sm:$0xff] %v7086
  %7303 = vst.msk [vmem:[%s5 + $0x618] sm:$0xff] %vm2033, %v7087
  %7304 = vst [vmem:[%s5 + $0x620] sm:$0xff] %v7088
  %7305 = vst.msk [vmem:[%s5 + $0x628] sm:$0xff] %vm2033, %v7089
  %7306 = vst [vmem:[%s5 + $0x630] sm:$0xff] %v7090
  %7307 = vst.msk [vmem:[%s5 + $0x638] sm:$0xff] %vm2033, %v7091
  %7308 = vst [vmem:[%s5 + $0x640] sm:$0xff] %v7092
  %7309 = vst.msk [vmem:[%s5 + $0x648] sm:$0xff] %vm2033, %v7093
  %7310 = vst [vmem:[%s5 + $0x650] sm:$0xff] %v7094
  %7311 = vst.msk [vmem:[%s5 + $0x658] sm:$0xff] %vm2033, %v7095
  %7312 = vst [vmem:[%s5 + $0x660] sm:$0xff] %v7096
  %7313 = vst.msk [vmem:[%s5 + $0x668] sm:$0xff] %vm2033, %v7097
  %7314 = vst [vmem:[%s5 + $0x670] sm:$0xff] %v7098
  %7315 = vst.msk [vmem:[%s5 + $0x678] sm:$0xff] %vm2033, %v7099
  %7316 = vst [vmem:[%s5 + $0x680] sm:$0xff] %v7100
  %7317 = vst.msk [vmem:[%s5 + $0x688] sm:$0xff] %vm2033, %v7101
  %7318 = vst [vmem:[%s5 + $0x690] sm:$0xff] %v7102
  %7319 = vst.msk [vmem:[%s5 + $0x698] sm:$0xff] %vm2033, %v7103
  %7320 = vst [vmem:[%s5 + $0x6a0] sm:$0xff] %v7104
  %7321 = vst.msk [vmem:[%s5 + $0x6a8] sm:$0xff] %vm2033, %v7105
  %7322 = vst [vmem:[%s5 + $0x6b0] sm:$0xff] %v7106
  %7323 = vst.msk [vmem:[%s5 + $0x6b8] sm:$0xff] %vm2033, %v7107
  // Predicated region
  $region22: #{tpu_custom_call.1} parent=0 // pred_check
    _
  $region23: #{tpu_custom_call.1} parent=0 // pred_check_branch
    %7325 = sbr.rel (0) target = $region25
  $region24: #{tpu_custom_call.1} parent=0 // pred_region
    _
  $region25: #{tpu_custom_call.1} parent=0 // pred_fallthru
    _
  // Predicated region
  $region26: #{tpu_custom_call.1} parent=0 // pred_check
    _
  $region27: #{tpu_custom_call.1} parent=0 // pred_check_branch
    %7327 = sbr.rel (0) target = $region29
  $region28: #{tpu_custom_call.1} parent=0 // pred_region
    _
  $region29: #{tpu_custom_call.1} parent=0 // pred_fallthru
    _

</llo_original>
